<compile_context>
chip_gen: v6e
topology: v6e:2x2x1
jax: 0.10.0
libtpu: 0.0.40
codegen_flags: <defaults>
</compile_context>

<pallas_src>
import jax
import jax.numpy as jnp
from jax import lax
from jax.experimental import pallas as pl
from jax.experimental.pallas import tpu as pltpu


# ---------------------------------------------------------------------------
# In-kernel building blocks
# ---------------------------------------------------------------------------

def _conv3x3_rows(in_ref, w_ref, s_ref, b_ref, out_ref, *, hout, wout, cout):
    """Valid 3x3 conv + folded-BN affine + ReLU; one output row per loop step.

    in_ref : (Hin, Win, Cin) VMEM scratch
    w_ref  : (9, Cin, Cout)  taps in (dy, dx) row-major order
    s_ref, b_ref : (1, Cout) folded BatchNorm scale / bias (conv bias included)
    out_ref: (hout, wout, Cout)
    """
    s = s_ref[...]
    b = b_ref[...]

    @pl.loop(0, hout)
    def _(h):
        acc = jnp.zeros((wout, cout), jnp.float32)
        for dy in range(3):
            row = in_ref[h + dy]                              # (Win, Cin)
            for dx in range(3):
                acc = acc + jnp.dot(row[dx:dx + wout, :], w_ref[3 * dy + dx],
                                    preferred_element_type=jnp.float32)
        out_ref[h] = jnp.maximum(acc * s + b, 0.0)


def _maxpool2x2(in_ref, out_ref, rowbuf_ref, *, hout, wout):
    """2x2 / stride-2 max pool: (2*hout, 2*wout, C) -> (hout, wout, C)."""
    @pl.loop(0, hout)
    def _(i):
        # Pool along H (leading dim of the ref).
        rowbuf_ref[...] = jnp.maximum(in_ref[2 * i], in_ref[2 * i + 1])
        # Pool along W with stride-2 sublane loads.
        even = rowbuf_ref[pl.ds(0, wout, stride=2), :]
        odd = rowbuf_ref[pl.ds(1, wout, stride=2), :]
        out_ref[i] = jnp.maximum(even, odd)


# ---------------------------------------------------------------------------
# Fused whole-network kernel (one sample per grid step)
# ---------------------------------------------------------------------------

def _chestcnn_kernel(xp_ref,
                     w1_ref, s1_ref, b1_ref,
                     w2_ref, s2_ref, b2_ref,
                     w3_ref, s3_ref, b3_ref,
                     w4_ref, s4_ref, b4_ref,
                     w5_ref, s5_ref, b5_ref,
                     fw1_ref, fb1_ref, fw2_ref, fb2_ref, fw3_ref, fb3_ref,
                     out_ref,
                     a1, a2, a2p, a3, a4, a4p, a5, a5p, rb1, rb2):
    # ---- layer1: conv 1->16 on pre-im2col'd patches, fused BN + ReLU ------
    s1 = s1_ref[...]
    b1 = b1_ref[...]

    @pl.loop(0, 26)
    def _(h):
        y = jnp.dot(xp_ref[0, h], w1_ref[...],
                    preferred_element_type=jnp.float32)        # (26, 16)
        a1[h] = jnp.maximum(y * s1 + b1, 0.0)

    # ---- layer2: conv 16->16 + BN + ReLU, then 2x2 maxpool ---------------
    _conv3x3_rows(a1, w2_ref, s2_ref, b2_ref, a2, hout=24, wout=24, cout=16)
    _maxpool2x2(a2, a2p, rb1, hout=12, wout=12)

    # ---- layer3 / layer4 --------------------------------------------------
    _conv3x3_rows(a2p, w3_ref, s3_ref, b3_ref, a3, hout=10, wout=10, cout=64)
    _conv3x3_rows(a3, w4_ref, s4_ref, b4_ref, a4, hout=8, wout=8, cout=64)

    # ---- layer5: pad=1 conv 64->64 + BN + ReLU, then 2x2 maxpool ----------
    a4p[...] = jnp.zeros_like(a4p)
    a4p[1:9, 1:9, :] = a4[...]
    _conv3x3_rows(a4p, w5_ref, s5_ref, b5_ref, a5, hout=8, wout=8, cout=64)
    _maxpool2x2(a5, a5p, rb2, hout=4, wout=4)

    # ---- fc head: 1024 -> 128 -> 128 -> num_classes -----------------------
    acc = fb1_ref[...]                                          # (1, 128)
    for p in range(16):                                         # 16 = 4x4 spatial
        i, j = divmod(p, 4)
        v = a5p[i, j:j + 1, :]                                  # (1, 64)
        acc = acc + jnp.dot(v, fw1_ref[p], preferred_element_type=jnp.float32)
    h1 = jnp.maximum(acc, 0.0)
    h2 = jnp.maximum(
        jnp.dot(h1, fw2_ref[...], preferred_element_type=jnp.float32)
        + fb2_ref[...], 0.0)
    logits = (jnp.dot(h2, fw3_ref[...], preferred_element_type=jnp.float32)
              + fb3_ref[...])
    out_ref[0] = logits.astype(out_ref.dtype)


# ---------------------------------------------------------------------------
# Wrapper: weight re-layout, BN folding, pallas_call
# ---------------------------------------------------------------------------

def _conv_taps(w):
    """(Cout, Cin, 3, 3) torch layout -> (9, Cin, Cout) tap-major layout."""
    cout, cin = w.shape[0], w.shape[1]
    return jnp.transpose(w, (2, 3, 1, 0)).reshape(9, cin, cout)


def _fold_bn(conv_b, gamma, beta, mean, var, eps=1e-5):
    scale = gamma * lax.rsqrt(var + eps)
    bias = beta + scale * (conv_b - mean)
    return (scale.reshape(1, -1).astype(jnp.float32),
            bias.reshape(1, -1).astype(jnp.float32))


def _full_spec(shape):
    n = len(shape)
    return pl.BlockSpec(shape, lambda b, n=n: (0,) * n)


@jax.jit
def chestcnn_forward(x, params):
    """Pallas forward pass matching ChestCNN.forward (inference / BN eval)."""
    B = x.shape[0]

    # Layer-1 im2col (pure layout plumbing, done once in XLA): (B, 26, 26, 9)
    x2 = x[:, 0].astype(jnp.float32)                            # in_channels == 1
    patches = jnp.stack(
        [x2[:, dy:dy + 26, dx:dx + 26] for dy in range(3) for dx in range(3)],
        axis=-1)

    # Conv weights -> tap-major, BN folded into per-channel scale / bias.
    w1 = jnp.transpose(params["conv1_w"], (2, 3, 1, 0)).reshape(9, 16)
    s1, b1 = _fold_bn(params["conv1_b"], params["bn1_g"], params["bn1_b"],
                      params["bn1_m"], params["bn1_v"])
    w2 = _conv_taps(params["conv2_w"])
    s2, b2 = _fold_bn(params["conv2_b"], params["bn2_g"], params["bn2_b"],
                      params["bn2_m"], params["bn2_v"])
    w3 = _conv_taps(params["conv3_w"])
    s3, b3 = _fold_bn(params["conv3_b"], params["bn3_g"], params["bn3_b"],
                      params["bn3_m"], params["bn3_v"])
    w4 = _conv_taps(params["conv4_w"])
    s4, b4 = _fold_bn(params["conv4_b"], params["bn4_g"], params["bn4_b"],
                      params["bn4_m"], params["bn4_v"])
    w5 = _conv_taps(params["conv5_w"])
    s5, b5 = _fold_bn(params["conv5_b"], params["bn5_g"], params["bn5_b"],
                      params["bn5_m"], params["bn5_v"])

    # FC weights: torch (out, in) -> (in, out); fc1 rows re-permuted from the
    # PyTorch (C, H, W) flatten order to the kernel's (H, W, C) access order.
    fw1 = (params["fc1_w"].T.reshape(64, 4, 4, 128)
           .transpose(1, 2, 0, 3).reshape(16, 64, 128))
    fb1 = params["fc1_b"].reshape(1, 128)
    fw2 = params["fc2_w"].T
    fb2 = params["fc2_b"].reshape(1, 128)
    fw3 = params["fc3_w"].T
    fb3 = params["fc3_b"].reshape(1, -1)
    num_classes = fw3.shape[1]

    inputs = (patches, w1, s1, b1, w2, s2, b2, w3, s3, b3,
              w4, s4, b4, w5, s5, b5, fw1, fb1, fw2, fb2, fw3, fb3)

    in_specs = [pl.BlockSpec((1, 26, 26, 9), lambda b: (b, 0, 0, 0))]
    in_specs += [_full_spec(a.shape) for a in inputs[1:]]       # VMEM-resident

    out = pl.pallas_call(
        _chestcnn_kernel,
        out_shape=jax.ShapeDtypeStruct((B, 1, num_classes), jnp.float32),
        grid=(B,),
        in_specs=in_specs,
        out_specs=pl.BlockSpec((1, 1, num_classes), lambda b: (b, 0, 0)),
        scratch_shapes=[
            pltpu.VMEM((26, 26, 16), jnp.float32),   # a1  : layer1 out
            pltpu.VMEM((24, 24, 16), jnp.float32),   # a2  : layer2 pre-pool
            pltpu.VMEM((12, 12, 16), jnp.float32),   # a2p : layer2 post-pool
            pltpu.VMEM((10, 10, 64), jnp.float32),   # a3  : layer3 out
            pltpu.VMEM((8, 8, 64), jnp.float32),     # a4  : layer4 out
            pltpu.VMEM((10, 10, 64), jnp.float32),   # a4p : zero-padded layer4
            pltpu.VMEM((8, 8, 64), jnp.float32),     # a5  : layer5 pre-pool
            pltpu.VMEM((4, 4, 64), jnp.float32),     # a5p : layer5 post-pool
            pltpu.VMEM((24, 16), jnp.float32),       # rb1 : pool1 row buffer
            pltpu.VMEM((8, 64), jnp.float32),        # rb2 : pool2 row buffer
        ],
        compiler_params=pltpu.CompilerParams(
            dimension_semantics=("parallel",)),
    )(*inputs)

    return out[:, 0, :]


# ---------------------------------------------------------------------------
# Pure-JAX reference mirroring the PyTorch module (BatchNorm eval mode)
# ---------------------------------------------------------------------------

@jax.jit
def reference_forward(x, params):
    eps = 1e-5

    def conv(t, w, b, pad):
        y = lax.conv_general_dilated(
            t, w, window_strides=(1, 1), padding=[(pad, pad), (pad, pad)],
            dimension_numbers=("NCHW", "OIHW", "NCHW"))
        return y + b[None, :, None, None]

    def bn(t, g, bt, m, v):
        return ((t - m[None, :, None, None])
                * (g[None, :, None, None] / jnp.sqrt(v[None, :, None, None] + eps))
                + bt[None, :, None, None])

    def pool(t):
        return lax.reduce_window(t, -jnp.inf, lax.max,
                                 (1, 1, 2, 2), (1, 1, 2, 2), "VALID")

    relu = lambda t: jnp.maximum(t, 0.0)

    def block(t, i, pad):
        return relu(bn(conv(t, params[f"conv{i}_w"], params[f"conv{i}_b"], pad),
                       params[f"bn{i}_g"], params[f"bn{i}_b"],
                       params[f"bn{i}_m"], params[f"bn{i}_v"]))

    t = block(x, 1, 0)
    t = pool(block(t, 2, 0))
    t = block(t, 3, 0)
    t = block(t, 4, 0)
    t = pool(block(t, 5, 1))
    t = t.reshape(t.shape[0], -1)                       # NCHW flatten -> (B, 1024)
    t = relu(t @ params["fc1_w"].T + params["fc1_b"])
    t = relu(t @ params["fc2_w"].T + params["fc2_b"])
    return t @ params["fc3_w"].T + params["fc3_b"]


# ---------------------------------------------------------------------------
# Main
# ---------------------------------------------------------------------------

if __name__ == "__main__":
    B, num_classes = 4, 14
    key = jax.random.PRNGKey(0)
    keys = iter(jax.random.split(key, 64))

    def nrm(shape, scale):
        return scale * jax.random.normal(next(keys), shape, dtype=jnp.float32)

    def bn_params(c):
        return (1.0 + 0.1 * jax.random.normal(next(keys), (c,), jnp.float32),
                0.1 * jax.random.normal(next(keys), (c,), jnp.float32),
                0.1 * jax.random.normal(next(keys), (c,), jnp.float32),
                1.0 + 0.1 * jnp.abs(jax.random.normal(next(keys), (c,), jnp.float32)))

    params = {}
    conv_dims = [(16, 1), (16, 16), (64, 16), (64, 64), (64, 64)]
    for li, (cout, cin) in enumerate(conv_dims, start=1):
        params[f"conv{li}_w"] = nrm((cout, cin, 3, 3), (2.0 / (9 * cin)) ** 0.5)
        params[f"conv{li}_b"] = nrm((cout,), 0.05)
        g, bt, m, v = bn_params(cout)
        params[f"bn{li}_g"], params[f"bn{li}_b"] = g, bt
        params[f"bn{li}_m"], params[f"bn{li}_v"] = m, v

    params["fc1_w"] = nrm((128, 1024), (2.0 / 1024.0) ** 0.5)
    params["fc1_b"] = nrm((128,), 0.05)
    params["fc2_w"] = nrm((128, 128), (2.0 / 128.0) ** 0.5)
    params["fc2_b"] = nrm((128,), 0.05)
    params["fc3_w"] = nrm((num_classes, 128), (1.0 / 128.0) ** 0.5)
    params["fc3_b"] = nrm((num_classes,), 0.05)

    x = jax.random.normal(next(keys), (B, 1, 28, 28), dtype=jnp.float32)

    out = jax.block_until_ready(chestcnn_forward(x, params))
    ref = jax.block_until_ready(reference_forward(x, params))

    assert out.shape == (B, num_classes)
    max_err = float(jnp.max(jnp.abs(out - ref)))
    assert jnp.allclose(out, ref, atol=2e-3, rtol=2e-3), max_err

    print("KERNEL_OK")
</pallas_src>

<mosaic_0001>
module attributes {stable_mosaic.version = 11 : i64} {
  func.func @_chestcnn_kernel(%arg0: i32, %arg1: memref<1x26x26x9xf32, #tpu.memory_space<vmem>>, %arg2: memref<9x16xf32, #tpu.memory_space<vmem>>, %arg3: memref<1x16xf32, #tpu.memory_space<vmem>>, %arg4: memref<1x16xf32, #tpu.memory_space<vmem>>, %arg5: memref<9x16x16xf32, #tpu.memory_space<vmem>>, %arg6: memref<1x16xf32, #tpu.memory_space<vmem>>, %arg7: memref<1x16xf32, #tpu.memory_space<vmem>>, %arg8: memref<9x16x64xf32, #tpu.memory_space<vmem>>, %arg9: memref<1x64xf32, #tpu.memory_space<vmem>>, %arg10: memref<1x64xf32, #tpu.memory_space<vmem>>, %arg11: memref<9x64x64xf32, #tpu.memory_space<vmem>>, %arg12: memref<1x64xf32, #tpu.memory_space<vmem>>, %arg13: memref<1x64xf32, #tpu.memory_space<vmem>>, %arg14: memref<9x64x64xf32, #tpu.memory_space<vmem>>, %arg15: memref<1x64xf32, #tpu.memory_space<vmem>>, %arg16: memref<1x64xf32, #tpu.memory_space<vmem>>, %arg17: memref<16x64x128xf32, #tpu.memory_space<vmem>>, %arg18: memref<1x128xf32, #tpu.memory_space<vmem>>, %arg19: memref<128x128xf32, #tpu.memory_space<vmem>>, %arg20: memref<1x128xf32, #tpu.memory_space<vmem>>, %arg21: memref<128x14xf32, #tpu.memory_space<vmem>>, %arg22: memref<1x14xf32, #tpu.memory_space<vmem>>, %arg23: memref<1x1x14xf32, #tpu.memory_space<vmem>>, %arg24: memref<26x26x16xf32, #tpu.memory_space<vmem>>, %arg25: memref<24x24x16xf32, #tpu.memory_space<vmem>>, %arg26: memref<12x12x16xf32, #tpu.memory_space<vmem>>, %arg27: memref<10x10x64xf32, #tpu.memory_space<vmem>>, %arg28: memref<8x8x64xf32, #tpu.memory_space<vmem>>, %arg29: memref<10x10x64xf32, #tpu.memory_space<vmem>>, %arg30: memref<8x8x64xf32, #tpu.memory_space<vmem>>, %arg31: memref<4x4x64xf32, #tpu.memory_space<vmem>>, %arg32: memref<24x16xf32, #tpu.memory_space<vmem>>, %arg33: memref<8x64xf32, #tpu.memory_space<vmem>>) attributes {dimension_semantics = [#tpu.dimension_semantics<parallel>], iteration_bounds = array<i64: 4>, scalar_prefetch = 0 : i64, scratch_operands = 10 : i64, tpu.core_type = #tpu.core_type<tc>, window_params = [{transform_indices = @transform_0, window_bounds = array<i64: 1, 26, 26, 9>}, {pipeline_mode = #tpu.pipeline_mode<synchronous>, transform_indices = @transform_1, window_bounds = array<i64: 9, 16>}, {pipeline_mode = #tpu.pipeline_mode<synchronous>, transform_indices = @transform_2, window_bounds = array<i64: 1, 16>}, {pipeline_mode = #tpu.pipeline_mode<synchronous>, transform_indices = @transform_3, window_bounds = array<i64: 1, 16>}, {pipeline_mode = #tpu.pipeline_mode<synchronous>, transform_indices = @transform_4, window_bounds = array<i64: 9, 16, 16>}, {pipeline_mode = #tpu.pipeline_mode<synchronous>, transform_indices = @transform_5, window_bounds = array<i64: 1, 16>}, {pipeline_mode = #tpu.pipeline_mode<synchronous>, transform_indices = @transform_6, window_bounds = array<i64: 1, 16>}, {pipeline_mode = #tpu.pipeline_mode<synchronous>, transform_indices = @transform_7, window_bounds = array<i64: 9, 16, 64>}, {pipeline_mode = #tpu.pipeline_mode<synchronous>, transform_indices = @transform_8, window_bounds = array<i64: 1, 64>}, {pipeline_mode = #tpu.pipeline_mode<synchronous>, transform_indices = @transform_9, window_bounds = array<i64: 1, 64>}, {pipeline_mode = #tpu.pipeline_mode<synchronous>, transform_indices = @transform_10, window_bounds = array<i64: 9, 64, 64>}, {pipeline_mode = #tpu.pipeline_mode<synchronous>, transform_indices = @transform_11, window_bounds = array<i64: 1, 64>}, {pipeline_mode = #tpu.pipeline_mode<synchronous>, transform_indices = @transform_12, window_bounds = array<i64: 1, 64>}, {pipeline_mode = #tpu.pipeline_mode<synchronous>, transform_indices = @transform_13, window_bounds = array<i64: 9, 64, 64>}, {pipeline_mode = #tpu.pipeline_mode<synchronous>, transform_indices = @transform_14, window_bounds = array<i64: 1, 64>}, {pipeline_mode = #tpu.pipeline_mode<synchronous>, transform_indices = @transform_15, window_bounds = array<i64: 1, 64>}, {pipeline_mode = #tpu.pipeline_mode<synchronous>, transform_indices = @transform_16, window_bounds = array<i64: 16, 64, 128>}, {pipeline_mode = #tpu.pipeline_mode<synchronous>, transform_indices = @transform_17, window_bounds = array<i64: 1, 128>}, {pipeline_mode = #tpu.pipeline_mode<synchronous>, transform_indices = @transform_18, window_bounds = array<i64: 128, 128>}, {pipeline_mode = #tpu.pipeline_mode<synchronous>, transform_indices = @transform_19, window_bounds = array<i64: 1, 128>}, {pipeline_mode = #tpu.pipeline_mode<synchronous>, transform_indices = @transform_20, window_bounds = array<i64: 128, 14>}, {pipeline_mode = #tpu.pipeline_mode<synchronous>, transform_indices = @transform_21, window_bounds = array<i64: 1, 14>}, {transform_indices = @transform_22, window_bounds = array<i64: 1, 1, 14>}]} {
    %c0 = arith.constant 0 : index
    %c0_0 = arith.constant 0 : index
    %0 = vector.load %arg3[%c0, %c0_0] : memref<1x16xf32, #tpu.memory_space<vmem>>, vector<1x16xf32>
    %c0_1 = arith.constant 0 : index
    %c0_2 = arith.constant 0 : index
    %1 = vector.load %arg4[%c0_1, %c0_2] : memref<1x16xf32, #tpu.memory_space<vmem>>, vector<1x16xf32>
    %c0_i32 = arith.constant 0 : i32
    %c26_i32 = arith.constant 26 : i32
    %2 = arith.addi %c0_i32, %c26_i32 : i32
    %c1_i32 = arith.constant 1 : i32
    scf.for %arg34 = %c0_i32 to %2 step %c1_i32  : i32 {
      %c1_i32_162 = arith.constant 1 : i32
      %133 = arith.muli %arg34, %c1_i32_162 : i32
      %c0_i32_163 = arith.constant 0 : i32
      %134 = arith.addi %c0_i32_163, %133 : i32
      %c0_164 = arith.constant 0 : index
      %135 = arith.index_cast %134 : i32 to index
      %c0_165 = arith.constant 0 : index
      %c0_166 = arith.constant 0 : index
      %136 = vector.load %arg1[%c0_164, %135, %c0_165, %c0_166] : memref<1x26x26x9xf32, #tpu.memory_space<vmem>>, vector<1x1x26x9xf32>
      %137 = vector.shape_cast %136 : vector<1x1x26x9xf32> to vector<26x9xf32>
      %c0_167 = arith.constant 0 : index
      %c0_168 = arith.constant 0 : index
      %138 = vector.load %arg2[%c0_167, %c0_168] : memref<9x16xf32, #tpu.memory_space<vmem>>, vector<9x16xf32>
      %cst_169 = arith.constant dense<0.000000e+00> : vector<26x16xf32>
      %139 = tpu.matmul %137, %138, %cst_169 {dimension_numbers = #tpu.dot_dimension_numbers<[1], [0], [0], [1], [0, 0, 1, 1], [], []>} : vector<26x9xf32>, vector<9x16xf32>, vector<26x16xf32> -> vector<26x16xf32>
      %140 = vector.broadcast %0 : vector<1x16xf32> to vector<26x16xf32>
      %141 = arith.mulf %139, %140 : vector<26x16xf32>
      %142 = vector.broadcast %1 : vector<1x16xf32> to vector<26x16xf32>
      %143 = arith.addf %141, %142 : vector<26x16xf32>
      %cst_170 = arith.constant 0.000000e+00 : f32
      %144 = vector.broadcast %cst_170 : f32 to vector<26x16xf32>
      %145 = arith.maximumf %143, %144 : vector<26x16xf32>
      %146 = arith.index_cast %134 : i32 to index
      %c0_171 = arith.constant 0 : index
      %c0_172 = arith.constant 0 : index
      %147 = vector.load %arg24[%146, %c0_171, %c0_172] : memref<26x26x16xf32, #tpu.memory_space<vmem>>, vector<1x26x16xf32>
      %148 = vector.shape_cast %147 : vector<1x26x16xf32> to vector<26x16xf32>
      %149 = vector.shape_cast %145 : vector<26x16xf32> to vector<1x26x16xf32>
      tpu.vector_store %arg24[%146, %c0_171, %c0_172], %149 {strides = array<i32>} : memref<26x26x16xf32, #tpu.memory_space<vmem>>, vector<1x26x16xf32>,
    }
    %c26_i32_3 = arith.constant 26 : i32
    %c0_4 = arith.constant 0 : index
    %c0_5 = arith.constant 0 : index
    %3 = vector.load %arg6[%c0_4, %c0_5] : memref<1x16xf32, #tpu.memory_space<vmem>>, vector<1x16xf32>
    %c0_6 = arith.constant 0 : index
    %c0_7 = arith.constant 0 : index
    %4 = vector.load %arg7[%c0_6, %c0_7] : memref<1x16xf32, #tpu.memory_space<vmem>>, vector<1x16xf32>
    %c0_i32_8 = arith.constant 0 : i32
    %c24_i32 = arith.constant 24 : i32
    %5 = arith.addi %c0_i32_8, %c24_i32 : i32
    %c1_i32_9 = arith.constant 1 : i32
    scf.for %arg34 = %c0_i32_8 to %5 step %c1_i32_9  : i32 {
      %c1_i32_162 = arith.constant 1 : i32
      %133 = arith.muli %arg34, %c1_i32_162 : i32
      %c0_i32_163 = arith.constant 0 : i32
      %134 = arith.addi %c0_i32_163, %133 : i32
      %cst_164 = arith.constant 0.000000e+00 : f32
      %135 = vector.broadcast %cst_164 : f32 to vector<24x16xf32>
      %c0_i32_165 = arith.constant 0 : i32
      %136 = arith.addi %134, %c0_i32_165 : i32
      %137 = arith.index_cast %136 : i32 to index
      %c0_166 = arith.constant 0 : index
      %c0_167 = arith.constant 0 : index
      %138 = vector.load %arg24[%137, %c0_166, %c0_167] : memref<26x26x16xf32, #tpu.memory_space<vmem>>, vector<1x26x16xf32>
      %139 = vector.shape_cast %138 : vector<1x26x16xf32> to vector<26x16xf32>
      %140 = vector.extract_strided_slice %139 {offsets = [0, 0], sizes = [24, 16], strides = [1, 1]} : vector<26x16xf32> to vector<24x16xf32>
      %c0_168 = arith.constant 0 : index
      %c0_169 = arith.constant 0 : index
      %c0_170 = arith.constant 0 : index
      %141 = vector.load %arg5[%c0_168, %c0_169, %c0_170] : memref<9x16x16xf32, #tpu.memory_space<vmem>>, vector<1x16x16xf32>
      %142 = vector.shape_cast %141 : vector<1x16x16xf32> to vector<16x16xf32>
      %cst_171 = arith.constant dense<0.000000e+00> : vector<24x16xf32>
      %143 = tpu.matmul %140, %142, %cst_171 {dimension_numbers = #tpu.dot_dimension_numbers<[1], [0], [0], [1], [0, 0, 1, 1], [], []>} : vector<24x16xf32>, vector<16x16xf32>, vector<24x16xf32> -> vector<24x16xf32>
      %144 = arith.addf %135, %143 : vector<24x16xf32>
      %145 = vector.extract_strided_slice %139 {offsets = [1, 0], sizes = [24, 16], strides = [1, 1]} : vector<26x16xf32> to vector<24x16xf32>
      %c1_172 = arith.constant 1 : index
      %c0_173 = arith.constant 0 : index
      %c0_174 = arith.constant 0 : index
      %146 = vector.load %arg5[%c1_172, %c0_173, %c0_174] : memref<9x16x16xf32, #tpu.memory_space<vmem>>, vector<1x16x16xf32>
      %147 = vector.shape_cast %146 : vector<1x16x16xf32> to vector<16x16xf32>
      %cst_175 = arith.constant dense<0.000000e+00> : vector<24x16xf32>
      %148 = tpu.matmul %145, %147, %cst_175 {dimension_numbers = #tpu.dot_dimension_numbers<[1], [0], [0], [1], [0, 0, 1, 1], [], []>} : vector<24x16xf32>, vector<16x16xf32>, vector<24x16xf32> -> vector<24x16xf32>
      %149 = arith.addf %144, %148 : vector<24x16xf32>
      %150 = vector.extract_strided_slice %139 {offsets = [2, 0], sizes = [24, 16], strides = [1, 1]} : vector<26x16xf32> to vector<24x16xf32>
      %c2_176 = arith.constant 2 : index
      %c0_177 = arith.constant 0 : index
      %c0_178 = arith.constant 0 : index
      %151 = vector.load %arg5[%c2_176, %c0_177, %c0_178] : memref<9x16x16xf32, #tpu.memory_space<vmem>>, vector<1x16x16xf32>
      %152 = vector.shape_cast %151 : vector<1x16x16xf32> to vector<16x16xf32>
      %cst_179 = arith.constant dense<0.000000e+00> : vector<24x16xf32>
      %153 = tpu.matmul %150, %152, %cst_179 {dimension_numbers = #tpu.dot_dimension_numbers<[1], [0], [0], [1], [0, 0, 1, 1], [], []>} : vector<24x16xf32>, vector<16x16xf32>, vector<24x16xf32> -> vector<24x16xf32>
      %154 = arith.addf %149, %153 : vector<24x16xf32>
      %c1_i32_180 = arith.constant 1 : i32
      %155 = arith.addi %134, %c1_i32_180 : i32
      %156 = arith.index_cast %155 : i32 to index
      %c0_181 = arith.constant 0 : index
      %c0_182 = arith.constant 0 : index
      %157 = vector.load %arg24[%156, %c0_181, %c0_182] : memref<26x26x16xf32, #tpu.memory_space<vmem>>, vector<1x26x16xf32>
      %158 = vector.shape_cast %157 : vector<1x26x16xf32> to vector<26x16xf32>
      %159 = vector.extract_strided_slice %158 {offsets = [0, 0], sizes = [24, 16], strides = [1, 1]} : vector<26x16xf32> to vector<24x16xf32>
      %c3_183 = arith.constant 3 : index
      %c0_184 = arith.constant 0 : index
      %c0_185 = arith.constant 0 : index
      %160 = vector.load %arg5[%c3_183, %c0_184, %c0_185] : memref<9x16x16xf32, #tpu.memory_space<vmem>>, vector<1x16x16xf32>
      %161 = vector.shape_cast %160 : vector<1x16x16xf32> to vector<16x16xf32>
      %cst_186 = arith.constant dense<0.000000e+00> : vector<24x16xf32>
      %162 = tpu.matmul %159, %161, %cst_186 {dimension_numbers = #tpu.dot_dimension_numbers<[1], [0], [0], [1], [0, 0, 1, 1], [], []>} : vector<24x16xf32>, vector<16x16xf32>, vector<24x16xf32> -> vector<24x16xf32>
      %163 = arith.addf %154, %162 : vector<24x16xf32>
      %164 = vector.extract_strided_slice %158 {offsets = [1, 0], sizes = [24, 16], strides = [1, 1]} : vector<26x16xf32> to vector<24x16xf32>
      %c4_187 = arith.constant 4 : index
      %c0_188 = arith.constant 0 : index
      %c0_189 = arith.constant 0 : index
      %165 = vector.load %arg5[%c4_187, %c0_188, %c0_189] : memref<9x16x16xf32, #tpu.memory_space<vmem>>, vector<1x16x16xf32>
      %166 = vector.shape_cast %165 : vector<1x16x16xf32> to vector<16x16xf32>
      %cst_190 = arith.constant dense<0.000000e+00> : vector<24x16xf32>
      %167 = tpu.matmul %164, %166, %cst_190 {dimension_numbers = #tpu.dot_dimension_numbers<[1], [0], [0], [1], [0, 0, 1, 1], [], []>} : vector<24x16xf32>, vector<16x16xf32>, vector<24x16xf32> -> vector<24x16xf32>
      %168 = arith.addf %163, %167 : vector<24x16xf32>
      %169 = vector.extract_strided_slice %158 {offsets = [2, 0], sizes = [24, 16], strides = [1, 1]} : vector<26x16xf32> to vector<24x16xf32>
      %c5_191 = arith.constant 5 : index
      %c0_192 = arith.constant 0 : index
      %c0_193 = arith.constant 0 : index
      %170 = vector.load %arg5[%c5_191, %c0_192, %c0_193] : memref<9x16x16xf32, #tpu.memory_space<vmem>>, vector<1x16x16xf32>
      %171 = vector.shape_cast %170 : vector<1x16x16xf32> to vector<16x16xf32>
      %cst_194 = arith.constant dense<0.000000e+00> : vector<24x16xf32>
      %172 = tpu.matmul %169, %171, %cst_194 {dimension_numbers = #tpu.dot_dimension_numbers<[1], [0], [0], [1], [0, 0, 1, 1], [], []>} : vector<24x16xf32>, vector<16x16xf32>, vector<24x16xf32> -> vector<24x16xf32>
      %173 = arith.addf %168, %172 : vector<24x16xf32>
      %c2_i32 = arith.constant 2 : i32
      %174 = arith.addi %134, %c2_i32 : i32
      %175 = arith.index_cast %174 : i32 to index
      %c0_195 = arith.constant 0 : index
      %c0_196 = arith.constant 0 : index
      %176 = vector.load %arg24[%175, %c0_195, %c0_196] : memref<26x26x16xf32, #tpu.memory_space<vmem>>, vector<1x26x16xf32>
      %177 = vector.shape_cast %176 : vector<1x26x16xf32> to vector<26x16xf32>
      %178 = vector.extract_strided_slice %177 {offsets = [0, 0], sizes = [24, 16], strides = [1, 1]} : vector<26x16xf32> to vector<24x16xf32>
      %c6_197 = arith.constant 6 : index
      %c0_198 = arith.constant 0 : index
      %c0_199 = arith.constant 0 : index
      %179 = vector.load %arg5[%c6_197, %c0_198, %c0_199] : memref<9x16x16xf32, #tpu.memory_space<vmem>>, vector<1x16x16xf32>
      %180 = vector.shape_cast %179 : vector<1x16x16xf32> to vector<16x16xf32>
      %cst_200 = arith.constant dense<0.000000e+00> : vector<24x16xf32>
      %181 = tpu.matmul %178, %180, %cst_200 {dimension_numbers = #tpu.dot_dimension_numbers<[1], [0], [0], [1], [0, 0, 1, 1], [], []>} : vector<24x16xf32>, vector<16x16xf32>, vector<24x16xf32> -> vector<24x16xf32>
      %182 = arith.addf %173, %181 : vector<24x16xf32>
      %183 = vector.extract_strided_slice %177 {offsets = [1, 0], sizes = [24, 16], strides = [1, 1]} : vector<26x16xf32> to vector<24x16xf32>
      %c7_201 = arith.constant 7 : index
      %c0_202 = arith.constant 0 : index
      %c0_203 = arith.constant 0 : index
      %184 = vector.load %arg5[%c7_201, %c0_202, %c0_203] : memref<9x16x16xf32, #tpu.memory_space<vmem>>, vector<1x16x16xf32>
      %185 = vector.shape_cast %184 : vector<1x16x16xf32> to vector<16x16xf32>
      %cst_204 = arith.constant dense<0.000000e+00> : vector<24x16xf32>
      %186 = tpu.matmul %183, %185, %cst_204 {dimension_numbers = #tpu.dot_dimension_numbers<[1], [0], [0], [1], [0, 0, 1, 1], [], []>} : vector<24x16xf32>, vector<16x16xf32>, vector<24x16xf32> -> vector<24x16xf32>
      %187 = arith.addf %182, %186 : vector<24x16xf32>
      %188 = vector.extract_strided_slice %177 {offsets = [2, 0], sizes = [24, 16], strides = [1, 1]} : vector<26x16xf32> to vector<24x16xf32>
      %c8_205 = arith.constant 8 : index
      %c0_206 = arith.constant 0 : index
      %c0_207 = arith.constant 0 : index
      %189 = vector.load %arg5[%c8_205, %c0_206, %c0_207] : memref<9x16x16xf32, #tpu.memory_space<vmem>>, vector<1x16x16xf32>
      %190 = vector.shape_cast %189 : vector<1x16x16xf32> to vector<16x16xf32>
      %cst_208 = arith.constant dense<0.000000e+00> : vector<24x16xf32>
      %191 = tpu.matmul %188, %190, %cst_208 {dimension_numbers = #tpu.dot_dimension_numbers<[1], [0], [0], [1], [0, 0, 1, 1], [], []>} : vector<24x16xf32>, vector<16x16xf32>, vector<24x16xf32> -> vector<24x16xf32>
      %192 = arith.addf %187, %191 : vector<24x16xf32>
      %193 = vector.broadcast %3 : vector<1x16xf32> to vector<24x16xf32>
      %194 = arith.mulf %192, %193 : vector<24x16xf32>
      %195 = vector.broadcast %4 : vector<1x16xf32> to vector<24x16xf32>
      %196 = arith.addf %194, %195 : vector<24x16xf32>
      %cst_209 = arith.constant 0.000000e+00 : f32
      %197 = vector.broadcast %cst_209 : f32 to vector<24x16xf32>
      %198 = arith.maximumf %196, %197 : vector<24x16xf32>
      %199 = arith.index_cast %134 : i32 to index
      %c0_210 = arith.constant 0 : index
      %c0_211 = arith.constant 0 : index
      %200 = vector.load %arg25[%199, %c0_210, %c0_211] : memref<24x24x16xf32, #tpu.memory_space<vmem>>, vector<1x24x16xf32>
      %201 = vector.shape_cast %200 : vector<1x24x16xf32> to vector<24x16xf32>
      %202 = vector.shape_cast %198 : vector<24x16xf32> to vector<1x24x16xf32>
      tpu.vector_store %arg25[%199, %c0_210, %c0_211], %202 {strides = array<i32>} : memref<24x24x16xf32, #tpu.memory_space<vmem>>, vector<1x24x16xf32>,
    }
    %c24_i32_10 = arith.constant 24 : i32
    %c0_i32_11 = arith.constant 0 : i32
    %c12_i32 = arith.constant 12 : i32
    %6 = arith.addi %c0_i32_11, %c12_i32 : i32
    %c1_i32_12 = arith.constant 1 : i32
    scf.for %arg34 = %c0_i32_11 to %6 step %c1_i32_12  : i32 {
      %c1_i32_162 = arith.constant 1 : i32
      %133 = arith.muli %arg34, %c1_i32_162 : i32
      %c0_i32_163 = arith.constant 0 : i32
      %134 = arith.addi %c0_i32_163, %133 : i32
      %c2_i32 = arith.constant 2 : i32
      %135 = arith.muli %c2_i32, %134 : i32
      %136 = arith.index_cast %135 : i32 to index
      %c0_164 = arith.constant 0 : index
      %c0_165 = arith.constant 0 : index
      %137 = vector.load %arg25[%136, %c0_164, %c0_165] : memref<24x24x16xf32, #tpu.memory_space<vmem>>, vector<1x24x16xf32>
      %138 = vector.shape_cast %137 : vector<1x24x16xf32> to vector<24x16xf32>
      %c2_i32_166 = arith.constant 2 : i32
      %139 = arith.muli %c2_i32_166, %134 : i32
      %c1_i32_167 = arith.constant 1 : i32
      %140 = arith.addi %139, %c1_i32_167 : i32
      %141 = arith.index_cast %140 : i32 to index
      %c0_168 = arith.constant 0 : index
      %c0_169 = arith.constant 0 : index
      %142 = vector.load %arg25[%141, %c0_168, %c0_169] : memref<24x24x16xf32, #tpu.memory_space<vmem>>, vector<1x24x16xf32>
      %143 = vector.shape_cast %142 : vector<1x24x16xf32> to vector<24x16xf32>
      %144 = arith.maximumf %138, %143 : vector<24x16xf32>
      %c0_170 = arith.constant 0 : index
      %c0_171 = arith.constant 0 : index
      %145 = vector.load %arg32[%c0_170, %c0_171] : memref<24x16xf32, #tpu.memory_space<vmem>>, vector<24x16xf32>
      tpu.vector_store %arg32[%c0_170, %c0_171], %144 {strides = array<i32>} : memref<24x16xf32, #tpu.memory_space<vmem>>, vector<24x16xf32>,
      %c0_172 = arith.constant 0 : index
      %c0_173 = arith.constant 0 : index
      %146 = tpu.strided_load %arg32[%c0_172, %c0_173] {strides = array<i32: 2, 1>} : memref<24x16xf32, #tpu.memory_space<vmem>>, vector<12x16xf32>
      %c1_174 = arith.constant 1 : index
      %c0_175 = arith.constant 0 : index
      %147 = tpu.strided_load %arg32[%c1_174, %c0_175] {strides = array<i32: 2, 1>} : memref<24x16xf32, #tpu.memory_space<vmem>>, vector<12x16xf32>
      %148 = arith.maximumf %146, %147 : vector<12x16xf32>
      %149 = arith.index_cast %134 : i32 to index
      %c0_176 = arith.constant 0 : index
      %c0_177 = arith.constant 0 : index
      %150 = vector.load %arg26[%149, %c0_176, %c0_177] : memref<12x12x16xf32, #tpu.memory_space<vmem>>, vector<1x12x16xf32>
      %151 = vector.shape_cast %150 : vector<1x12x16xf32> to vector<12x16xf32>
      %152 = vector.shape_cast %148 : vector<12x16xf32> to vector<1x12x16xf32>
      tpu.vector_store %arg26[%149, %c0_176, %c0_177], %152 {strides = array<i32>} : memref<12x12x16xf32, #tpu.memory_space<vmem>>, vector<1x12x16xf32>,
    }
    %c12_i32_13 = arith.constant 12 : i32
    %c0_14 = arith.constant 0 : index
    %c0_15 = arith.constant 0 : index
    %7 = vector.load %arg9[%c0_14, %c0_15] : memref<1x64xf32, #tpu.memory_space<vmem>>, vector<1x64xf32>
    %c0_16 = arith.constant 0 : index
    %c0_17 = arith.constant 0 : index
    %8 = vector.load %arg10[%c0_16, %c0_17] : memref<1x64xf32, #tpu.memory_space<vmem>>, vector<1x64xf32>
    %c0_i32_18 = arith.constant 0 : i32
    %c10_i32 = arith.constant 10 : i32
    %9 = arith.addi %c0_i32_18, %c10_i32 : i32
    %c1_i32_19 = arith.constant 1 : i32
    scf.for %arg34 = %c0_i32_18 to %9 step %c1_i32_19  : i32 {
      %c1_i32_162 = arith.constant 1 : i32
      %133 = arith.muli %arg34, %c1_i32_162 : i32
      %c0_i32_163 = arith.constant 0 : i32
      %134 = arith.addi %c0_i32_163, %133 : i32
      %cst_164 = arith.constant 0.000000e+00 : f32
      %135 = vector.broadcast %cst_164 : f32 to vector<10x64xf32>
      %c0_i32_165 = arith.constant 0 : i32
      %136 = arith.addi %134, %c0_i32_165 : i32
      %137 = arith.index_cast %136 : i32 to index
      %c0_166 = arith.constant 0 : index
      %c0_167 = arith.constant 0 : index
      %138 = vector.load %arg26[%137, %c0_166, %c0_167] : memref<12x12x16xf32, #tpu.memory_space<vmem>>, vector<1x12x16xf32>
      %139 = vector.shape_cast %138 : vector<1x12x16xf32> to vector<12x16xf32>
      %140 = vector.extract_strided_slice %139 {offsets = [0, 0], sizes = [10, 16], strides = [1, 1]} : vector<12x16xf32> to vector<10x16xf32>
      %c0_168 = arith.constant 0 : index
      %c0_169 = arith.constant 0 : index
      %c0_170 = arith.constant 0 : index
      %141 = vector.load %arg8[%c0_168, %c0_169, %c0_170] : memref<9x16x64xf32, #tpu.memory_space<vmem>>, vector<1x16x64xf32>
      %142 = vector.shape_cast %141 : vector<1x16x64xf32> to vector<16x64xf32>
      %cst_171 = arith.constant dense<0.000000e+00> : vector<10x64xf32>
      %143 = tpu.matmul %140, %142, %cst_171 {dimension_numbers = #tpu.dot_dimension_numbers<[1], [0], [0], [1], [0, 0, 1, 1], [], []>} : vector<10x16xf32>, vector<16x64xf32>, vector<10x64xf32> -> vector<10x64xf32>
      %144 = arith.addf %135, %143 : vector<10x64xf32>
      %145 = vector.extract_strided_slice %139 {offsets = [1, 0], sizes = [10, 16], strides = [1, 1]} : vector<12x16xf32> to vector<10x16xf32>
      %c1_172 = arith.constant 1 : index
      %c0_173 = arith.constant 0 : index
      %c0_174 = arith.constant 0 : index
      %146 = vector.load %arg8[%c1_172, %c0_173, %c0_174] : memref<9x16x64xf32, #tpu.memory_space<vmem>>, vector<1x16x64xf32>
      %147 = vector.shape_cast %146 : vector<1x16x64xf32> to vector<16x64xf32>
      %cst_175 = arith.constant dense<0.000000e+00> : vector<10x64xf32>
      %148 = tpu.matmul %145, %147, %cst_175 {dimension_numbers = #tpu.dot_dimension_numbers<[1], [0], [0], [1], [0, 0, 1, 1], [], []>} : vector<10x16xf32>, vector<16x64xf32>, vector<10x64xf32> -> vector<10x64xf32>
      %149 = arith.addf %144, %148 : vector<10x64xf32>
      %150 = vector.extract_strided_slice %139 {offsets = [2, 0], sizes = [10, 16], strides = [1, 1]} : vector<12x16xf32> to vector<10x16xf32>
      %c2_176 = arith.constant 2 : index
      %c0_177 = arith.constant 0 : index
      %c0_178 = arith.constant 0 : index
      %151 = vector.load %arg8[%c2_176, %c0_177, %c0_178] : memref<9x16x64xf32, #tpu.memory_space<vmem>>, vector<1x16x64xf32>
      %152 = vector.shape_cast %151 : vector<1x16x64xf32> to vector<16x64xf32>
      %cst_179 = arith.constant dense<0.000000e+00> : vector<10x64xf32>
      %153 = tpu.matmul %150, %152, %cst_179 {dimension_numbers = #tpu.dot_dimension_numbers<[1], [0], [0], [1], [0, 0, 1, 1], [], []>} : vector<10x16xf32>, vector<16x64xf32>, vector<10x64xf32> -> vector<10x64xf32>
      %154 = arith.addf %149, %153 : vector<10x64xf32>
      %c1_i32_180 = arith.constant 1 : i32
      %155 = arith.addi %134, %c1_i32_180 : i32
      %156 = arith.index_cast %155 : i32 to index
      %c0_181 = arith.constant 0 : index
      %c0_182 = arith.constant 0 : index
      %157 = vector.load %arg26[%156, %c0_181, %c0_182] : memref<12x12x16xf32, #tpu.memory_space<vmem>>, vector<1x12x16xf32>
      %158 = vector.shape_cast %157 : vector<1x12x16xf32> to vector<12x16xf32>
      %159 = vector.extract_strided_slice %158 {offsets = [0, 0], sizes = [10, 16], strides = [1, 1]} : vector<12x16xf32> to vector<10x16xf32>
      %c3_183 = arith.constant 3 : index
      %c0_184 = arith.constant 0 : index
      %c0_185 = arith.constant 0 : index
      %160 = vector.load %arg8[%c3_183, %c0_184, %c0_185] : memref<9x16x64xf32, #tpu.memory_space<vmem>>, vector<1x16x64xf32>
      %161 = vector.shape_cast %160 : vector<1x16x64xf32> to vector<16x64xf32>
      %cst_186 = arith.constant dense<0.000000e+00> : vector<10x64xf32>
      %162 = tpu.matmul %159, %161, %cst_186 {dimension_numbers = #tpu.dot_dimension_numbers<[1], [0], [0], [1], [0, 0, 1, 1], [], []>} : vector<10x16xf32>, vector<16x64xf32>, vector<10x64xf32> -> vector<10x64xf32>
      %163 = arith.addf %154, %162 : vector<10x64xf32>
      %164 = vector.extract_strided_slice %158 {offsets = [1, 0], sizes = [10, 16], strides = [1, 1]} : vector<12x16xf32> to vector<10x16xf32>
      %c4_187 = arith.constant 4 : index
      %c0_188 = arith.constant 0 : index
      %c0_189 = arith.constant 0 : index
      %165 = vector.load %arg8[%c4_187, %c0_188, %c0_189] : memref<9x16x64xf32, #tpu.memory_space<vmem>>, vector<1x16x64xf32>
      %166 = vector.shape_cast %165 : vector<1x16x64xf32> to vector<16x64xf32>
      %cst_190 = arith.constant dense<0.000000e+00> : vector<10x64xf32>
      %167 = tpu.matmul %164, %166, %cst_190 {dimension_numbers = #tpu.dot_dimension_numbers<[1], [0], [0], [1], [0, 0, 1, 1], [], []>} : vector<10x16xf32>, vector<16x64xf32>, vector<10x64xf32> -> vector<10x64xf32>
      %168 = arith.addf %163, %167 : vector<10x64xf32>
      %169 = vector.extract_strided_slice %158 {offsets = [2, 0], sizes = [10, 16], strides = [1, 1]} : vector<12x16xf32> to vector<10x16xf32>
      %c5_191 = arith.constant 5 : index
      %c0_192 = arith.constant 0 : index
      %c0_193 = arith.constant 0 : index
      %170 = vector.load %arg8[%c5_191, %c0_192, %c0_193] : memref<9x16x64xf32, #tpu.memory_space<vmem>>, vector<1x16x64xf32>
      %171 = vector.shape_cast %170 : vector<1x16x64xf32> to vector<16x64xf32>
      %cst_194 = arith.constant dense<0.000000e+00> : vector<10x64xf32>
      %172 = tpu.matmul %169, %171, %cst_194 {dimension_numbers = #tpu.dot_dimension_numbers<[1], [0], [0], [1], [0, 0, 1, 1], [], []>} : vector<10x16xf32>, vector<16x64xf32>, vector<10x64xf32> -> vector<10x64xf32>
      %173 = arith.addf %168, %172 : vector<10x64xf32>
      %c2_i32 = arith.constant 2 : i32
      %174 = arith.addi %134, %c2_i32 : i32
      %175 = arith.index_cast %174 : i32 to index
      %c0_195 = arith.constant 0 : index
      %c0_196 = arith.constant 0 : index
      %176 = vector.load %arg26[%175, %c0_195, %c0_196] : memref<12x12x16xf32, #tpu.memory_space<vmem>>, vector<1x12x16xf32>
      %177 = vector.shape_cast %176 : vector<1x12x16xf32> to vector<12x16xf32>
      %178 = vector.extract_strided_slice %177 {offsets = [0, 0], sizes = [10, 16], strides = [1, 1]} : vector<12x16xf32> to vector<10x16xf32>
      %c6_197 = arith.constant 6 : index
      %c0_198 = arith.constant 0 : index
      %c0_199 = arith.constant 0 : index
      %179 = vector.load %arg8[%c6_197, %c0_198, %c0_199] : memref<9x16x64xf32, #tpu.memory_space<vmem>>, vector<1x16x64xf32>
      %180 = vector.shape_cast %179 : vector<1x16x64xf32> to vector<16x64xf32>
      %cst_200 = arith.constant dense<0.000000e+00> : vector<10x64xf32>
      %181 = tpu.matmul %178, %180, %cst_200 {dimension_numbers = #tpu.dot_dimension_numbers<[1], [0], [0], [1], [0, 0, 1, 1], [], []>} : vector<10x16xf32>, vector<16x64xf32>, vector<10x64xf32> -> vector<10x64xf32>
      %182 = arith.addf %173, %181 : vector<10x64xf32>
      %183 = vector.extract_strided_slice %177 {offsets = [1, 0], sizes = [10, 16], strides = [1, 1]} : vector<12x16xf32> to vector<10x16xf32>
      %c7_201 = arith.constant 7 : index
      %c0_202 = arith.constant 0 : index
      %c0_203 = arith.constant 0 : index
      %184 = vector.load %arg8[%c7_201, %c0_202, %c0_203] : memref<9x16x64xf32, #tpu.memory_space<vmem>>, vector<1x16x64xf32>
      %185 = vector.shape_cast %184 : vector<1x16x64xf32> to vector<16x64xf32>
      %cst_204 = arith.constant dense<0.000000e+00> : vector<10x64xf32>
      %186 = tpu.matmul %183, %185, %cst_204 {dimension_numbers = #tpu.dot_dimension_numbers<[1], [0], [0], [1], [0, 0, 1, 1], [], []>} : vector<10x16xf32>, vector<16x64xf32>, vector<10x64xf32> -> vector<10x64xf32>
      %187 = arith.addf %182, %186 : vector<10x64xf32>
      %188 = vector.extract_strided_slice %177 {offsets = [2, 0], sizes = [10, 16], strides = [1, 1]} : vector<12x16xf32> to vector<10x16xf32>
      %c8_205 = arith.constant 8 : index
      %c0_206 = arith.constant 0 : index
      %c0_207 = arith.constant 0 : index
      %189 = vector.load %arg8[%c8_205, %c0_206, %c0_207] : memref<9x16x64xf32, #tpu.memory_space<vmem>>, vector<1x16x64xf32>
      %190 = vector.shape_cast %189 : vector<1x16x64xf32> to vector<16x64xf32>
      %cst_208 = arith.constant dense<0.000000e+00> : vector<10x64xf32>
      %191 = tpu.matmul %188, %190, %cst_208 {dimension_numbers = #tpu.dot_dimension_numbers<[1], [0], [0], [1], [0, 0, 1, 1], [], []>} : vector<10x16xf32>, vector<16x64xf32>, vector<10x64xf32> -> vector<10x64xf32>
      %192 = arith.addf %187, %191 : vector<10x64xf32>
      %193 = vector.broadcast %7 : vector<1x64xf32> to vector<10x64xf32>
      %194 = arith.mulf %192, %193 : vector<10x64xf32>
      %195 = vector.broadcast %8 : vector<1x64xf32> to vector<10x64xf32>
      %196 = arith.addf %194, %195 : vector<10x64xf32>
      %cst_209 = arith.constant 0.000000e+00 : f32
      %197 = vector.broadcast %cst_209 : f32 to vector<10x64xf32>
      %198 = arith.maximumf %196, %197 : vector<10x64xf32>
      %199 = arith.index_cast %134 : i32 to index
      %c0_210 = arith.constant 0 : index
      %c0_211 = arith.constant 0 : index
      %200 = vector.load %arg27[%199, %c0_210, %c0_211] : memref<10x10x64xf32, #tpu.memory_space<vmem>>, vector<1x10x64xf32>
      %201 = vector.shape_cast %200 : vector<1x10x64xf32> to vector<10x64xf32>
      %202 = vector.shape_cast %198 : vector<10x64xf32> to vector<1x10x64xf32>
      tpu.vector_store %arg27[%199, %c0_210, %c0_211], %202 {strides = array<i32>} : memref<10x10x64xf32, #tpu.memory_space<vmem>>, vector<1x10x64xf32>,
    }
    %c10_i32_20 = arith.constant 10 : i32
    %c0_21 = arith.constant 0 : index
    %c0_22 = arith.constant 0 : index
    %10 = vector.load %arg12[%c0_21, %c0_22] : memref<1x64xf32, #tpu.memory_space<vmem>>, vector<1x64xf32>
    %c0_23 = arith.constant 0 : index
    %c0_24 = arith.constant 0 : index
    %11 = vector.load %arg13[%c0_23, %c0_24] : memref<1x64xf32, #tpu.memory_space<vmem>>, vector<1x64xf32>
    %c0_i32_25 = arith.constant 0 : i32
    %c8_i32 = arith.constant 8 : i32
    %12 = arith.addi %c0_i32_25, %c8_i32 : i32
    %c1_i32_26 = arith.constant 1 : i32
    scf.for %arg34 = %c0_i32_25 to %12 step %c1_i32_26  : i32 {
      %c1_i32_162 = arith.constant 1 : i32
      %133 = arith.muli %arg34, %c1_i32_162 : i32
      %c0_i32_163 = arith.constant 0 : i32
      %134 = arith.addi %c0_i32_163, %133 : i32
      %cst_164 = arith.constant 0.000000e+00 : f32
      %135 = vector.broadcast %cst_164 : f32 to vector<8x64xf32>
      %c0_i32_165 = arith.constant 0 : i32
      %136 = arith.addi %134, %c0_i32_165 : i32
      %137 = arith.index_cast %136 : i32 to index
      %c0_166 = arith.constant 0 : index
      %c0_167 = arith.constant 0 : index
      %138 = vector.load %arg27[%137, %c0_166, %c0_167] : memref<10x10x64xf32, #tpu.memory_space<vmem>>, vector<1x10x64xf32>
      %139 = vector.shape_cast %138 : vector<1x10x64xf32> to vector<10x64xf32>
      %140 = vector.extract_strided_slice %139 {offsets = [0, 0], sizes = [8, 64], strides = [1, 1]} : vector<10x64xf32> to vector<8x64xf32>
      %c0_168 = arith.constant 0 : index
      %c0_169 = arith.constant 0 : index
      %c0_170 = arith.constant 0 : index
      %141 = vector.load %arg11[%c0_168, %c0_169, %c0_170] : memref<9x64x64xf32, #tpu.memory_space<vmem>>, vector<1x64x64xf32>
      %142 = vector.shape_cast %141 : vector<1x64x64xf32> to vector<64x64xf32>
      %cst_171 = arith.constant dense<0.000000e+00> : vector<8x64xf32>
      %143 = tpu.matmul %140, %142, %cst_171 {dimension_numbers = #tpu.dot_dimension_numbers<[1], [0], [0], [1], [0, 0, 1, 1], [], []>} : vector<8x64xf32>, vector<64x64xf32>, vector<8x64xf32> -> vector<8x64xf32>
      %144 = arith.addf %135, %143 : vector<8x64xf32>
      %145 = vector.extract_strided_slice %139 {offsets = [1, 0], sizes = [8, 64], strides = [1, 1]} : vector<10x64xf32> to vector<8x64xf32>
      %c1_172 = arith.constant 1 : index
      %c0_173 = arith.constant 0 : index
      %c0_174 = arith.constant 0 : index
      %146 = vector.load %arg11[%c1_172, %c0_173, %c0_174] : memref<9x64x64xf32, #tpu.memory_space<vmem>>, vector<1x64x64xf32>
      %147 = vector.shape_cast %146 : vector<1x64x64xf32> to vector<64x64xf32>
      %cst_175 = arith.constant dense<0.000000e+00> : vector<8x64xf32>
      %148 = tpu.matmul %145, %147, %cst_175 {dimension_numbers = #tpu.dot_dimension_numbers<[1], [0], [0], [1], [0, 0, 1, 1], [], []>} : vector<8x64xf32>, vector<64x64xf32>, vector<8x64xf32> -> vector<8x64xf32>
      %149 = arith.addf %144, %148 : vector<8x64xf32>
      %150 = vector.extract_strided_slice %139 {offsets = [2, 0], sizes = [8, 64], strides = [1, 1]} : vector<10x64xf32> to vector<8x64xf32>
      %c2_176 = arith.constant 2 : index
      %c0_177 = arith.constant 0 : index
      %c0_178 = arith.constant 0 : index
      %151 = vector.load %arg11[%c2_176, %c0_177, %c0_178] : memref<9x64x64xf32, #tpu.memory_space<vmem>>, vector<1x64x64xf32>
      %152 = vector.shape_cast %151 : vector<1x64x64xf32> to vector<64x64xf32>
      %cst_179 = arith.constant dense<0.000000e+00> : vector<8x64xf32>
      %153 = tpu.matmul %150, %152, %cst_179 {dimension_numbers = #tpu.dot_dimension_numbers<[1], [0], [0], [1], [0, 0, 1, 1], [], []>} : vector<8x64xf32>, vector<64x64xf32>, vector<8x64xf32> -> vector<8x64xf32>
      %154 = arith.addf %149, %153 : vector<8x64xf32>
      %c1_i32_180 = arith.constant 1 : i32
      %155 = arith.addi %134, %c1_i32_180 : i32
      %156 = arith.index_cast %155 : i32 to index
      %c0_181 = arith.constant 0 : index
      %c0_182 = arith.constant 0 : index
      %157 = vector.load %arg27[%156, %c0_181, %c0_182] : memref<10x10x64xf32, #tpu.memory_space<vmem>>, vector<1x10x64xf32>
      %158 = vector.shape_cast %157 : vector<1x10x64xf32> to vector<10x64xf32>
      %159 = vector.extract_strided_slice %158 {offsets = [0, 0], sizes = [8, 64], strides = [1, 1]} : vector<10x64xf32> to vector<8x64xf32>
      %c3_183 = arith.constant 3 : index
      %c0_184 = arith.constant 0 : index
      %c0_185 = arith.constant 0 : index
      %160 = vector.load %arg11[%c3_183, %c0_184, %c0_185] : memref<9x64x64xf32, #tpu.memory_space<vmem>>, vector<1x64x64xf32>
      %161 = vector.shape_cast %160 : vector<1x64x64xf32> to vector<64x64xf32>
      %cst_186 = arith.constant dense<0.000000e+00> : vector<8x64xf32>
      %162 = tpu.matmul %159, %161, %cst_186 {dimension_numbers = #tpu.dot_dimension_numbers<[1], [0], [0], [1], [0, 0, 1, 1], [], []>} : vector<8x64xf32>, vector<64x64xf32>, vector<8x64xf32> -> vector<8x64xf32>
      %163 = arith.addf %154, %162 : vector<8x64xf32>
      %164 = vector.extract_strided_slice %158 {offsets = [1, 0], sizes = [8, 64], strides = [1, 1]} : vector<10x64xf32> to vector<8x64xf32>
      %c4_187 = arith.constant 4 : index
      %c0_188 = arith.constant 0 : index
      %c0_189 = arith.constant 0 : index
      %165 = vector.load %arg11[%c4_187, %c0_188, %c0_189] : memref<9x64x64xf32, #tpu.memory_space<vmem>>, vector<1x64x64xf32>
      %166 = vector.shape_cast %165 : vector<1x64x64xf32> to vector<64x64xf32>
      %cst_190 = arith.constant dense<0.000000e+00> : vector<8x64xf32>
      %167 = tpu.matmul %164, %166, %cst_190 {dimension_numbers = #tpu.dot_dimension_numbers<[1], [0], [0], [1], [0, 0, 1, 1], [], []>} : vector<8x64xf32>, vector<64x64xf32>, vector<8x64xf32> -> vector<8x64xf32>
      %168 = arith.addf %163, %167 : vector<8x64xf32>
      %169 = vector.extract_strided_slice %158 {offsets = [2, 0], sizes = [8, 64], strides = [1, 1]} : vector<10x64xf32> to vector<8x64xf32>
      %c5_191 = arith.constant 5 : index
      %c0_192 = arith.constant 0 : index
      %c0_193 = arith.constant 0 : index
      %170 = vector.load %arg11[%c5_191, %c0_192, %c0_193] : memref<9x64x64xf32, #tpu.memory_space<vmem>>, vector<1x64x64xf32>
      %171 = vector.shape_cast %170 : vector<1x64x64xf32> to vector<64x64xf32>
      %cst_194 = arith.constant dense<0.000000e+00> : vector<8x64xf32>
      %172 = tpu.matmul %169, %171, %cst_194 {dimension_numbers = #tpu.dot_dimension_numbers<[1], [0], [0], [1], [0, 0, 1, 1], [], []>} : vector<8x64xf32>, vector<64x64xf32>, vector<8x64xf32> -> vector<8x64xf32>
      %173 = arith.addf %168, %172 : vector<8x64xf32>
      %c2_i32 = arith.constant 2 : i32
      %174 = arith.addi %134, %c2_i32 : i32
      %175 = arith.index_cast %174 : i32 to index
      %c0_195 = arith.constant 0 : index
      %c0_196 = arith.constant 0 : index
      %176 = vector.load %arg27[%175, %c0_195, %c0_196] : memref<10x10x64xf32, #tpu.memory_space<vmem>>, vector<1x10x64xf32>
      %177 = vector.shape_cast %176 : vector<1x10x64xf32> to vector<10x64xf32>
      %178 = vector.extract_strided_slice %177 {offsets = [0, 0], sizes = [8, 64], strides = [1, 1]} : vector<10x64xf32> to vector<8x64xf32>
      %c6_197 = arith.constant 6 : index
      %c0_198 = arith.constant 0 : index
      %c0_199 = arith.constant 0 : index
      %179 = vector.load %arg11[%c6_197, %c0_198, %c0_199] : memref<9x64x64xf32, #tpu.memory_space<vmem>>, vector<1x64x64xf32>
      %180 = vector.shape_cast %179 : vector<1x64x64xf32> to vector<64x64xf32>
      %cst_200 = arith.constant dense<0.000000e+00> : vector<8x64xf32>
      %181 = tpu.matmul %178, %180, %cst_200 {dimension_numbers = #tpu.dot_dimension_numbers<[1], [0], [0], [1], [0, 0, 1, 1], [], []>} : vector<8x64xf32>, vector<64x64xf32>, vector<8x64xf32> -> vector<8x64xf32>
      %182 = arith.addf %173, %181 : vector<8x64xf32>
      %183 = vector.extract_strided_slice %177 {offsets = [1, 0], sizes = [8, 64], strides = [1, 1]} : vector<10x64xf32> to vector<8x64xf32>
      %c7_201 = arith.constant 7 : index
      %c0_202 = arith.constant 0 : index
      %c0_203 = arith.constant 0 : index
      %184 = vector.load %arg11[%c7_201, %c0_202, %c0_203] : memref<9x64x64xf32, #tpu.memory_space<vmem>>, vector<1x64x64xf32>
      %185 = vector.shape_cast %184 : vector<1x64x64xf32> to vector<64x64xf32>
      %cst_204 = arith.constant dense<0.000000e+00> : vector<8x64xf32>
      %186 = tpu.matmul %183, %185, %cst_204 {dimension_numbers = #tpu.dot_dimension_numbers<[1], [0], [0], [1], [0, 0, 1, 1], [], []>} : vector<8x64xf32>, vector<64x64xf32>, vector<8x64xf32> -> vector<8x64xf32>
      %187 = arith.addf %182, %186 : vector<8x64xf32>
      %188 = vector.extract_strided_slice %177 {offsets = [2, 0], sizes = [8, 64], strides = [1, 1]} : vector<10x64xf32> to vector<8x64xf32>
      %c8_205 = arith.constant 8 : index
      %c0_206 = arith.constant 0 : index
      %c0_207 = arith.constant 0 : index
      %189 = vector.load %arg11[%c8_205, %c0_206, %c0_207] : memref<9x64x64xf32, #tpu.memory_space<vmem>>, vector<1x64x64xf32>
      %190 = vector.shape_cast %189 : vector<1x64x64xf32> to vector<64x64xf32>
      %cst_208 = arith.constant dense<0.000000e+00> : vector<8x64xf32>
      %191 = tpu.matmul %188, %190, %cst_208 {dimension_numbers = #tpu.dot_dimension_numbers<[1], [0], [0], [1], [0, 0, 1, 1], [], []>} : vector<8x64xf32>, vector<64x64xf32>, vector<8x64xf32> -> vector<8x64xf32>
      %192 = arith.addf %187, %191 : vector<8x64xf32>
      %193 = vector.broadcast %10 : vector<1x64xf32> to vector<8x64xf32>
      %194 = arith.mulf %192, %193 : vector<8x64xf32>
      %195 = vector.broadcast %11 : vector<1x64xf32> to vector<8x64xf32>
      %196 = arith.addf %194, %195 : vector<8x64xf32>
      %cst_209 = arith.constant 0.000000e+00 : f32
      %197 = vector.broadcast %cst_209 : f32 to vector<8x64xf32>
      %198 = arith.maximumf %196, %197 : vector<8x64xf32>
      %199 = arith.index_cast %134 : i32 to index
      %c0_210 = arith.constant 0 : index
      %c0_211 = arith.constant 0 : index
      %200 = vector.load %arg28[%199, %c0_210, %c0_211] : memref<8x8x64xf32, #tpu.memory_space<vmem>>, vector<1x8x64xf32>
      %201 = vector.shape_cast %200 : vector<1x8x64xf32> to vector<8x64xf32>
      %202 = vector.shape_cast %198 : vector<8x64xf32> to vector<1x8x64xf32>
      tpu.vector_store %arg28[%199, %c0_210, %c0_211], %202 {strides = array<i32>} : memref<8x8x64xf32, #tpu.memory_space<vmem>>, vector<1x8x64xf32>,
    }
    %c8_i32_27 = arith.constant 8 : i32
    %cst = arith.constant 0.000000e+00 : f32
    %13 = vector.broadcast %cst : f32 to vector<10x10x64xf32>
    %c0_28 = arith.constant 0 : index
    %c0_29 = arith.constant 0 : index
    %c0_30 = arith.constant 0 : index
    %14 = vector.load %arg29[%c0_28, %c0_29, %c0_30] : memref<10x10x64xf32, #tpu.memory_space<vmem>>, vector<10x10x64xf32>
    tpu.vector_store %arg29[%c0_28, %c0_29, %c0_30], %13 {strides = array<i32>} : memref<10x10x64xf32, #tpu.memory_space<vmem>>, vector<10x10x64xf32>,
    %c0_31 = arith.constant 0 : index
    %c0_32 = arith.constant 0 : index
    %c0_33 = arith.constant 0 : index
    %15 = vector.load %arg28[%c0_31, %c0_32, %c0_33] : memref<8x8x64xf32, #tpu.memory_space<vmem>>, vector<8x8x64xf32>
    %c1 = arith.constant 1 : index
    %c1_34 = arith.constant 1 : index
    %c0_35 = arith.constant 0 : index
    %16 = vector.load %arg29[%c1, %c1_34, %c0_35] : memref<10x10x64xf32, #tpu.memory_space<vmem>>, vector<8x8x64xf32>
    tpu.vector_store %arg29[%c1, %c1_34, %c0_35], %15 {strides = array<i32>} : memref<10x10x64xf32, #tpu.memory_space<vmem>>, vector<8x8x64xf32>,
    %c0_36 = arith.constant 0 : index
    %c0_37 = arith.constant 0 : index
    %17 = vector.load %arg15[%c0_36, %c0_37] : memref<1x64xf32, #tpu.memory_space<vmem>>, vector<1x64xf32>
    %c0_38 = arith.constant 0 : index
    %c0_39 = arith.constant 0 : index
    %18 = vector.load %arg16[%c0_38, %c0_39] : memref<1x64xf32, #tpu.memory_space<vmem>>, vector<1x64xf32>
    %c0_i32_40 = arith.constant 0 : i32
    %c8_i32_41 = arith.constant 8 : i32
    %19 = arith.addi %c0_i32_40, %c8_i32_41 : i32
    %c1_i32_42 = arith.constant 1 : i32
    scf.for %arg34 = %c0_i32_40 to %19 step %c1_i32_42  : i32 {
      %c1_i32_162 = arith.constant 1 : i32
      %133 = arith.muli %arg34, %c1_i32_162 : i32
      %c0_i32_163 = arith.constant 0 : i32
      %134 = arith.addi %c0_i32_163, %133 : i32
      %cst_164 = arith.constant 0.000000e+00 : f32
      %135 = vector.broadcast %cst_164 : f32 to vector<8x64xf32>
      %c0_i32_165 = arith.constant 0 : i32
      %136 = arith.addi %134, %c0_i32_165 : i32
      %137 = arith.index_cast %136 : i32 to index
      %c0_166 = arith.constant 0 : index
      %c0_167 = arith.constant 0 : index
      %138 = vector.load %arg29[%137, %c0_166, %c0_167] : memref<10x10x64xf32, #tpu.memory_space<vmem>>, vector<1x10x64xf32>
      %139 = vector.shape_cast %138 : vector<1x10x64xf32> to vector<10x64xf32>
      %140 = vector.extract_strided_slice %139 {offsets = [0, 0], sizes = [8, 64], strides = [1, 1]} : vector<10x64xf32> to vector<8x64xf32>
      %c0_168 = arith.constant 0 : index
      %c0_169 = arith.constant 0 : index
      %c0_170 = arith.constant 0 : index
      %141 = vector.load %arg14[%c0_168, %c0_169, %c0_170] : memref<9x64x64xf32, #tpu.memory_space<vmem>>, vector<1x64x64xf32>
      %142 = vector.shape_cast %141 : vector<1x64x64xf32> to vector<64x64xf32>
      %cst_171 = arith.constant dense<0.000000e+00> : vector<8x64xf32>
      %143 = tpu.matmul %140, %142, %cst_171 {dimension_numbers = #tpu.dot_dimension_numbers<[1], [0], [0], [1], [0, 0, 1, 1], [], []>} : vector<8x64xf32>, vector<64x64xf32>, vector<8x64xf32> -> vector<8x64xf32>
      %144 = arith.addf %135, %143 : vector<8x64xf32>
      %145 = vector.extract_strided_slice %139 {offsets = [1, 0], sizes = [8, 64], strides = [1, 1]} : vector<10x64xf32> to vector<8x64xf32>
      %c1_172 = arith.constant 1 : index
      %c0_173 = arith.constant 0 : index
      %c0_174 = arith.constant 0 : index
      %146 = vector.load %arg14[%c1_172, %c0_173, %c0_174] : memref<9x64x64xf32, #tpu.memory_space<vmem>>, vector<1x64x64xf32>
      %147 = vector.shape_cast %146 : vector<1x64x64xf32> to vector<64x64xf32>
      %cst_175 = arith.constant dense<0.000000e+00> : vector<8x64xf32>
      %148 = tpu.matmul %145, %147, %cst_175 {dimension_numbers = #tpu.dot_dimension_numbers<[1], [0], [0], [1], [0, 0, 1, 1], [], []>} : vector<8x64xf32>, vector<64x64xf32>, vector<8x64xf32> -> vector<8x64xf32>
      %149 = arith.addf %144, %148 : vector<8x64xf32>
      %150 = vector.extract_strided_slice %139 {offsets = [2, 0], sizes = [8, 64], strides = [1, 1]} : vector<10x64xf32> to vector<8x64xf32>
      %c2_176 = arith.constant 2 : index
      %c0_177 = arith.constant 0 : index
      %c0_178 = arith.constant 0 : index
      %151 = vector.load %arg14[%c2_176, %c0_177, %c0_178] : memref<9x64x64xf32, #tpu.memory_space<vmem>>, vector<1x64x64xf32>
      %152 = vector.shape_cast %151 : vector<1x64x64xf32> to vector<64x64xf32>
      %cst_179 = arith.constant dense<0.000000e+00> : vector<8x64xf32>
      %153 = tpu.matmul %150, %152, %cst_179 {dimension_numbers = #tpu.dot_dimension_numbers<[1], [0], [0], [1], [0, 0, 1, 1], [], []>} : vector<8x64xf32>, vector<64x64xf32>, vector<8x64xf32> -> vector<8x64xf32>
      %154 = arith.addf %149, %153 : vector<8x64xf32>
      %c1_i32_180 = arith.constant 1 : i32
      %155 = arith.addi %134, %c1_i32_180 : i32
      %156 = arith.index_cast %155 : i32 to index
      %c0_181 = arith.constant 0 : index
      %c0_182 = arith.constant 0 : index
      %157 = vector.load %arg29[%156, %c0_181, %c0_182] : memref<10x10x64xf32, #tpu.memory_space<vmem>>, vector<1x10x64xf32>
      %158 = vector.shape_cast %157 : vector<1x10x64xf32> to vector<10x64xf32>
      %159 = vector.extract_strided_slice %158 {offsets = [0, 0], sizes = [8, 64], strides = [1, 1]} : vector<10x64xf32> to vector<8x64xf32>
      %c3_183 = arith.constant 3 : index
      %c0_184 = arith.constant 0 : index
      %c0_185 = arith.constant 0 : index
      %160 = vector.load %arg14[%c3_183, %c0_184, %c0_185] : memref<9x64x64xf32, #tpu.memory_space<vmem>>, vector<1x64x64xf32>
      %161 = vector.shape_cast %160 : vector<1x64x64xf32> to vector<64x64xf32>
      %cst_186 = arith.constant dense<0.000000e+00> : vector<8x64xf32>
      %162 = tpu.matmul %159, %161, %cst_186 {dimension_numbers = #tpu.dot_dimension_numbers<[1], [0], [0], [1], [0, 0, 1, 1], [], []>} : vector<8x64xf32>, vector<64x64xf32>, vector<8x64xf32> -> vector<8x64xf32>
      %163 = arith.addf %154, %162 : vector<8x64xf32>
      %164 = vector.extract_strided_slice %158 {offsets = [1, 0], sizes = [8, 64], strides = [1, 1]} : vector<10x64xf32> to vector<8x64xf32>
      %c4_187 = arith.constant 4 : index
      %c0_188 = arith.constant 0 : index
      %c0_189 = arith.constant 0 : index
      %165 = vector.load %arg14[%c4_187, %c0_188, %c0_189] : memref<9x64x64xf32, #tpu.memory_space<vmem>>, vector<1x64x64xf32>
      %166 = vector.shape_cast %165 : vector<1x64x64xf32> to vector<64x64xf32>
      %cst_190 = arith.constant dense<0.000000e+00> : vector<8x64xf32>
      %167 = tpu.matmul %164, %166, %cst_190 {dimension_numbers = #tpu.dot_dimension_numbers<[1], [0], [0], [1], [0, 0, 1, 1], [], []>} : vector<8x64xf32>, vector<64x64xf32>, vector<8x64xf32> -> vector<8x64xf32>
      %168 = arith.addf %163, %167 : vector<8x64xf32>
      %169 = vector.extract_strided_slice %158 {offsets = [2, 0], sizes = [8, 64], strides = [1, 1]} : vector<10x64xf32> to vector<8x64xf32>
      %c5_191 = arith.constant 5 : index
      %c0_192 = arith.constant 0 : index
      %c0_193 = arith.constant 0 : index
      %170 = vector.load %arg14[%c5_191, %c0_192, %c0_193] : memref<9x64x64xf32, #tpu.memory_space<vmem>>, vector<1x64x64xf32>
      %171 = vector.shape_cast %170 : vector<1x64x64xf32> to vector<64x64xf32>
      %cst_194 = arith.constant dense<0.000000e+00> : vector<8x64xf32>
      %172 = tpu.matmul %169, %171, %cst_194 {dimension_numbers = #tpu.dot_dimension_numbers<[1], [0], [0], [1], [0, 0, 1, 1], [], []>} : vector<8x64xf32>, vector<64x64xf32>, vector<8x64xf32> -> vector<8x64xf32>
      %173 = arith.addf %168, %172 : vector<8x64xf32>
      %c2_i32 = arith.constant 2 : i32
      %174 = arith.addi %134, %c2_i32 : i32
      %175 = arith.index_cast %174 : i32 to index
      %c0_195 = arith.constant 0 : index
      %c0_196 = arith.constant 0 : index
      %176 = vector.load %arg29[%175, %c0_195, %c0_196] : memref<10x10x64xf32, #tpu.memory_space<vmem>>, vector<1x10x64xf32>
      %177 = vector.shape_cast %176 : vector<1x10x64xf32> to vector<10x64xf32>
      %178 = vector.extract_strided_slice %177 {offsets = [0, 0], sizes = [8, 64], strides = [1, 1]} : vector<10x64xf32> to vector<8x64xf32>
      %c6_197 = arith.constant 6 : index
      %c0_198 = arith.constant 0 : index
      %c0_199 = arith.constant 0 : index
      %179 = vector.load %arg14[%c6_197, %c0_198, %c0_199] : memref<9x64x64xf32, #tpu.memory_space<vmem>>, vector<1x64x64xf32>
      %180 = vector.shape_cast %179 : vector<1x64x64xf32> to vector<64x64xf32>
      %cst_200 = arith.constant dense<0.000000e+00> : vector<8x64xf32>
      %181 = tpu.matmul %178, %180, %cst_200 {dimension_numbers = #tpu.dot_dimension_numbers<[1], [0], [0], [1], [0, 0, 1, 1], [], []>} : vector<8x64xf32>, vector<64x64xf32>, vector<8x64xf32> -> vector<8x64xf32>
      %182 = arith.addf %173, %181 : vector<8x64xf32>
      %183 = vector.extract_strided_slice %177 {offsets = [1, 0], sizes = [8, 64], strides = [1, 1]} : vector<10x64xf32> to vector<8x64xf32>
      %c7_201 = arith.constant 7 : index
      %c0_202 = arith.constant 0 : index
      %c0_203 = arith.constant 0 : index
      %184 = vector.load %arg14[%c7_201, %c0_202, %c0_203] : memref<9x64x64xf32, #tpu.memory_space<vmem>>, vector<1x64x64xf32>
      %185 = vector.shape_cast %184 : vector<1x64x64xf32> to vector<64x64xf32>
      %cst_204 = arith.constant dense<0.000000e+00> : vector<8x64xf32>
      %186 = tpu.matmul %183, %185, %cst_204 {dimension_numbers = #tpu.dot_dimension_numbers<[1], [0], [0], [1], [0, 0, 1, 1], [], []>} : vector<8x64xf32>, vector<64x64xf32>, vector<8x64xf32> -> vector<8x64xf32>
      %187 = arith.addf %182, %186 : vector<8x64xf32>
      %188 = vector.extract_strided_slice %177 {offsets = [2, 0], sizes = [8, 64], strides = [1, 1]} : vector<10x64xf32> to vector<8x64xf32>
      %c8_205 = arith.constant 8 : index
      %c0_206 = arith.constant 0 : index
      %c0_207 = arith.constant 0 : index
      %189 = vector.load %arg14[%c8_205, %c0_206, %c0_207] : memref<9x64x64xf32, #tpu.memory_space<vmem>>, vector<1x64x64xf32>
      %190 = vector.shape_cast %189 : vector<1x64x64xf32> to vector<64x64xf32>
      %cst_208 = arith.constant dense<0.000000e+00> : vector<8x64xf32>
      %191 = tpu.matmul %188, %190, %cst_208 {dimension_numbers = #tpu.dot_dimension_numbers<[1], [0], [0], [1], [0, 0, 1, 1], [], []>} : vector<8x64xf32>, vector<64x64xf32>, vector<8x64xf32> -> vector<8x64xf32>
      %192 = arith.addf %187, %191 : vector<8x64xf32>
      %193 = vector.broadcast %17 : vector<1x64xf32> to vector<8x64xf32>
      %194 = arith.mulf %192, %193 : vector<8x64xf32>
      %195 = vector.broadcast %18 : vector<1x64xf32> to vector<8x64xf32>
      %196 = arith.addf %194, %195 : vector<8x64xf32>
      %cst_209 = arith.constant 0.000000e+00 : f32
      %197 = vector.broadcast %cst_209 : f32 to vector<8x64xf32>
      %198 = arith.maximumf %196, %197 : vector<8x64xf32>
      %199 = arith.index_cast %134 : i32 to index
      %c0_210 = arith.constant 0 : index
      %c0_211 = arith.constant 0 : index
      %200 = vector.load %arg30[%199, %c0_210, %c0_211] : memref<8x8x64xf32, #tpu.memory_space<vmem>>, vector<1x8x64xf32>
      %201 = vector.shape_cast %200 : vector<1x8x64xf32> to vector<8x64xf32>
      %202 = vector.shape_cast %198 : vector<8x64xf32> to vector<1x8x64xf32>
      tpu.vector_store %arg30[%199, %c0_210, %c0_211], %202 {strides = array<i32>} : memref<8x8x64xf32, #tpu.memory_space<vmem>>, vector<1x8x64xf32>,
    }
    %c8_i32_43 = arith.constant 8 : i32
    %c0_i32_44 = arith.constant 0 : i32
    %c4_i32 = arith.constant 4 : i32
    %20 = arith.addi %c0_i32_44, %c4_i32 : i32
    %c1_i32_45 = arith.constant 1 : i32
    scf.for %arg34 = %c0_i32_44 to %20 step %c1_i32_45  : i32 {
      %c1_i32_162 = arith.constant 1 : i32
      %133 = arith.muli %arg34, %c1_i32_162 : i32
      %c0_i32_163 = arith.constant 0 : i32
      %134 = arith.addi %c0_i32_163, %133 : i32
      %c2_i32 = arith.constant 2 : i32
      %135 = arith.muli %c2_i32, %134 : i32
      %136 = arith.index_cast %135 : i32 to index
      %c0_164 = arith.constant 0 : index
      %c0_165 = arith.constant 0 : index
      %137 = vector.load %arg30[%136, %c0_164, %c0_165] : memref<8x8x64xf32, #tpu.memory_space<vmem>>, vector<1x8x64xf32>
      %138 = vector.shape_cast %137 : vector<1x8x64xf32> to vector<8x64xf32>
      %c2_i32_166 = arith.constant 2 : i32
      %139 = arith.muli %c2_i32_166, %134 : i32
      %c1_i32_167 = arith.constant 1 : i32
      %140 = arith.addi %139, %c1_i32_167 : i32
      %141 = arith.index_cast %140 : i32 to index
      %c0_168 = arith.constant 0 : index
      %c0_169 = arith.constant 0 : index
      %142 = vector.load %arg30[%141, %c0_168, %c0_169] : memref<8x8x64xf32, #tpu.memory_space<vmem>>, vector<1x8x64xf32>
      %143 = vector.shape_cast %142 : vector<1x8x64xf32> to vector<8x64xf32>
      %144 = arith.maximumf %138, %143 : vector<8x64xf32>
      %c0_170 = arith.constant 0 : index
      %c0_171 = arith.constant 0 : index
      %145 = vector.load %arg33[%c0_170, %c0_171] : memref<8x64xf32, #tpu.memory_space<vmem>>, vector<8x64xf32>
      tpu.vector_store %arg33[%c0_170, %c0_171], %144 {strides = array<i32>} : memref<8x64xf32, #tpu.memory_space<vmem>>, vector<8x64xf32>,
      %c0_172 = arith.constant 0 : index
      %c0_173 = arith.constant 0 : index
      %146 = tpu.strided_load %arg33[%c0_172, %c0_173] {strides = array<i32: 2, 1>} : memref<8x64xf32, #tpu.memory_space<vmem>>, vector<4x64xf32>
      %c1_174 = arith.constant 1 : index
      %c0_175 = arith.constant 0 : index
      %147 = tpu.strided_load %arg33[%c1_174, %c0_175] {strides = array<i32: 2, 1>} : memref<8x64xf32, #tpu.memory_space<vmem>>, vector<4x64xf32>
      %148 = arith.maximumf %146, %147 : vector<4x64xf32>
      %149 = arith.index_cast %134 : i32 to index
      %c0_176 = arith.constant 0 : index
      %c0_177 = arith.constant 0 : index
      %150 = vector.load %arg31[%149, %c0_176, %c0_177] : memref<4x4x64xf32, #tpu.memory_space<vmem>>, vector<1x4x64xf32>
      %151 = vector.shape_cast %150 : vector<1x4x64xf32> to vector<4x64xf32>
      %152 = vector.shape_cast %148 : vector<4x64xf32> to vector<1x4x64xf32>
      tpu.vector_store %arg31[%149, %c0_176, %c0_177], %152 {strides = array<i32>} : memref<4x4x64xf32, #tpu.memory_space<vmem>>, vector<1x4x64xf32>,
    }
    %c4_i32_46 = arith.constant 4 : i32
    %c0_47 = arith.constant 0 : index
    %c0_48 = arith.constant 0 : index
    %21 = vector.load %arg18[%c0_47, %c0_48] : memref<1x128xf32, #tpu.memory_space<vmem>>, vector<1x128xf32>
    %c0_49 = arith.constant 0 : index
    %c0_50 = arith.constant 0 : index
    %c0_51 = arith.constant 0 : index
    %22 = vector.load %arg31[%c0_49, %c0_50, %c0_51] : memref<4x4x64xf32, #tpu.memory_space<vmem>>, vector<1x1x64xf32>
    %23 = vector.shape_cast %22 : vector<1x1x64xf32> to vector<1x64xf32>
    %c0_52 = arith.constant 0 : index
    %c0_53 = arith.constant 0 : index
    %c0_54 = arith.constant 0 : index
    %24 = vector.load %arg17[%c0_52, %c0_53, %c0_54] : memref<16x64x128xf32, #tpu.memory_space<vmem>>, vector<1x64x128xf32>
    %25 = vector.shape_cast %24 : vector<1x64x128xf32> to vector<64x128xf32>
    %cst_55 = arith.constant dense<0.000000e+00> : vector<1x128xf32>
    %26 = tpu.matmul %23, %25, %cst_55 {dimension_numbers = #tpu.dot_dimension_numbers<[1], [0], [0], [1], [0, 0, 1, 1], [], []>} : vector<1x64xf32>, vector<64x128xf32>, vector<1x128xf32> -> vector<1x128xf32>
    %27 = arith.addf %21, %26 : vector<1x128xf32>
    %c0_56 = arith.constant 0 : index
    %c1_57 = arith.constant 1 : index
    %c0_58 = arith.constant 0 : index
    %28 = vector.load %arg31[%c0_56, %c1_57, %c0_58] : memref<4x4x64xf32, #tpu.memory_space<vmem>>, vector<1x1x64xf32>
    %29 = vector.shape_cast %28 : vector<1x1x64xf32> to vector<1x64xf32>
    %c1_59 = arith.constant 1 : index
    %c0_60 = arith.constant 0 : index
    %c0_61 = arith.constant 0 : index
    %30 = vector.load %arg17[%c1_59, %c0_60, %c0_61] : memref<16x64x128xf32, #tpu.memory_space<vmem>>, vector<1x64x128xf32>
    %31 = vector.shape_cast %30 : vector<1x64x128xf32> to vector<64x128xf32>
    %cst_62 = arith.constant dense<0.000000e+00> : vector<1x128xf32>
    %32 = tpu.matmul %29, %31, %cst_62 {dimension_numbers = #tpu.dot_dimension_numbers<[1], [0], [0], [1], [0, 0, 1, 1], [], []>} : vector<1x64xf32>, vector<64x128xf32>, vector<1x128xf32> -> vector<1x128xf32>
    %33 = arith.addf %27, %32 : vector<1x128xf32>
    %c0_63 = arith.constant 0 : index
    %c2 = arith.constant 2 : index
    %c0_64 = arith.constant 0 : index
    %34 = vector.load %arg31[%c0_63, %c2, %c0_64] : memref<4x4x64xf32, #tpu.memory_space<vmem>>, vector<1x1x64xf32>
    %35 = vector.shape_cast %34 : vector<1x1x64xf32> to vector<1x64xf32>
    %c2_65 = arith.constant 2 : index
    %c0_66 = arith.constant 0 : index
    %c0_67 = arith.constant 0 : index
    %36 = vector.load %arg17[%c2_65, %c0_66, %c0_67] : memref<16x64x128xf32, #tpu.memory_space<vmem>>, vector<1x64x128xf32>
    %37 = vector.shape_cast %36 : vector<1x64x128xf32> to vector<64x128xf32>
    %cst_68 = arith.constant dense<0.000000e+00> : vector<1x128xf32>
    %38 = tpu.matmul %35, %37, %cst_68 {dimension_numbers = #tpu.dot_dimension_numbers<[1], [0], [0], [1], [0, 0, 1, 1], [], []>} : vector<1x64xf32>, vector<64x128xf32>, vector<1x128xf32> -> vector<1x128xf32>
    %39 = arith.addf %33, %38 : vector<1x128xf32>
    %c0_69 = arith.constant 0 : index
    %c3 = arith.constant 3 : index
    %c0_70 = arith.constant 0 : index
    %40 = vector.load %arg31[%c0_69, %c3, %c0_70] : memref<4x4x64xf32, #tpu.memory_space<vmem>>, vector<1x1x64xf32>
    %41 = vector.shape_cast %40 : vector<1x1x64xf32> to vector<1x64xf32>
    %c3_71 = arith.constant 3 : index
    %c0_72 = arith.constant 0 : index
    %c0_73 = arith.constant 0 : index
    %42 = vector.load %arg17[%c3_71, %c0_72, %c0_73] : memref<16x64x128xf32, #tpu.memory_space<vmem>>, vector<1x64x128xf32>
    %43 = vector.shape_cast %42 : vector<1x64x128xf32> to vector<64x128xf32>
    %cst_74 = arith.constant dense<0.000000e+00> : vector<1x128xf32>
    %44 = tpu.matmul %41, %43, %cst_74 {dimension_numbers = #tpu.dot_dimension_numbers<[1], [0], [0], [1], [0, 0, 1, 1], [], []>} : vector<1x64xf32>, vector<64x128xf32>, vector<1x128xf32> -> vector<1x128xf32>
    %45 = arith.addf %39, %44 : vector<1x128xf32>
    %c1_75 = arith.constant 1 : index
    %c0_76 = arith.constant 0 : index
    %c0_77 = arith.constant 0 : index
    %46 = vector.load %arg31[%c1_75, %c0_76, %c0_77] : memref<4x4x64xf32, #tpu.memory_space<vmem>>, vector<1x1x64xf32>
    %47 = vector.shape_cast %46 : vector<1x1x64xf32> to vector<1x64xf32>
    %c4 = arith.constant 4 : index
    %c0_78 = arith.constant 0 : index
    %c0_79 = arith.constant 0 : index
    %48 = vector.load %arg17[%c4, %c0_78, %c0_79] : memref<16x64x128xf32, #tpu.memory_space<vmem>>, vector<1x64x128xf32>
    %49 = vector.shape_cast %48 : vector<1x64x128xf32> to vector<64x128xf32>
    %cst_80 = arith.constant dense<0.000000e+00> : vector<1x128xf32>
    %50 = tpu.matmul %47, %49, %cst_80 {dimension_numbers = #tpu.dot_dimension_numbers<[1], [0], [0], [1], [0, 0, 1, 1], [], []>} : vector<1x64xf32>, vector<64x128xf32>, vector<1x128xf32> -> vector<1x128xf32>
    %51 = arith.addf %45, %50 : vector<1x128xf32>
    %c1_81 = arith.constant 1 : index
    %c1_82 = arith.constant 1 : index
    %c0_83 = arith.constant 0 : index
    %52 = vector.load %arg31[%c1_81, %c1_82, %c0_83] : memref<4x4x64xf32, #tpu.memory_space<vmem>>, vector<1x1x64xf32>
    %53 = vector.shape_cast %52 : vector<1x1x64xf32> to vector<1x64xf32>
    %c5 = arith.constant 5 : index
    %c0_84 = arith.constant 0 : index
    %c0_85 = arith.constant 0 : index
    %54 = vector.load %arg17[%c5, %c0_84, %c0_85] : memref<16x64x128xf32, #tpu.memory_space<vmem>>, vector<1x64x128xf32>
    %55 = vector.shape_cast %54 : vector<1x64x128xf32> to vector<64x128xf32>
    %cst_86 = arith.constant dense<0.000000e+00> : vector<1x128xf32>
    %56 = tpu.matmul %53, %55, %cst_86 {dimension_numbers = #tpu.dot_dimension_numbers<[1], [0], [0], [1], [0, 0, 1, 1], [], []>} : vector<1x64xf32>, vector<64x128xf32>, vector<1x128xf32> -> vector<1x128xf32>
    %57 = arith.addf %51, %56 : vector<1x128xf32>
    %c1_87 = arith.constant 1 : index
    %c2_88 = arith.constant 2 : index
    %c0_89 = arith.constant 0 : index
    %58 = vector.load %arg31[%c1_87, %c2_88, %c0_89] : memref<4x4x64xf32, #tpu.memory_space<vmem>>, vector<1x1x64xf32>
    %59 = vector.shape_cast %58 : vector<1x1x64xf32> to vector<1x64xf32>
    %c6 = arith.constant 6 : index
    %c0_90 = arith.constant 0 : index
    %c0_91 = arith.constant 0 : index
    %60 = vector.load %arg17[%c6, %c0_90, %c0_91] : memref<16x64x128xf32, #tpu.memory_space<vmem>>, vector<1x64x128xf32>
    %61 = vector.shape_cast %60 : vector<1x64x128xf32> to vector<64x128xf32>
    %cst_92 = arith.constant dense<0.000000e+00> : vector<1x128xf32>
    %62 = tpu.matmul %59, %61, %cst_92 {dimension_numbers = #tpu.dot_dimension_numbers<[1], [0], [0], [1], [0, 0, 1, 1], [], []>} : vector<1x64xf32>, vector<64x128xf32>, vector<1x128xf32> -> vector<1x128xf32>
    %63 = arith.addf %57, %62 : vector<1x128xf32>
    %c1_93 = arith.constant 1 : index
    %c3_94 = arith.constant 3 : index
    %c0_95 = arith.constant 0 : index
    %64 = vector.load %arg31[%c1_93, %c3_94, %c0_95] : memref<4x4x64xf32, #tpu.memory_space<vmem>>, vector<1x1x64xf32>
    %65 = vector.shape_cast %64 : vector<1x1x64xf32> to vector<1x64xf32>
    %c7 = arith.constant 7 : index
    %c0_96 = arith.constant 0 : index
    %c0_97 = arith.constant 0 : index
    %66 = vector.load %arg17[%c7, %c0_96, %c0_97] : memref<16x64x128xf32, #tpu.memory_space<vmem>>, vector<1x64x128xf32>
    %67 = vector.shape_cast %66 : vector<1x64x128xf32> to vector<64x128xf32>
    %cst_98 = arith.constant dense<0.000000e+00> : vector<1x128xf32>
    %68 = tpu.matmul %65, %67, %cst_98 {dimension_numbers = #tpu.dot_dimension_numbers<[1], [0], [0], [1], [0, 0, 1, 1], [], []>} : vector<1x64xf32>, vector<64x128xf32>, vector<1x128xf32> -> vector<1x128xf32>
    %69 = arith.addf %63, %68 : vector<1x128xf32>
    %c2_99 = arith.constant 2 : index
    %c0_100 = arith.constant 0 : index
    %c0_101 = arith.constant 0 : index
    %70 = vector.load %arg31[%c2_99, %c0_100, %c0_101] : memref<4x4x64xf32, #tpu.memory_space<vmem>>, vector<1x1x64xf32>
    %71 = vector.shape_cast %70 : vector<1x1x64xf32> to vector<1x64xf32>
    %c8 = arith.constant 8 : index
    %c0_102 = arith.constant 0 : index
    %c0_103 = arith.constant 0 : index
    %72 = vector.load %arg17[%c8, %c0_102, %c0_103] : memref<16x64x128xf32, #tpu.memory_space<vmem>>, vector<1x64x128xf32>
    %73 = vector.shape_cast %72 : vector<1x64x128xf32> to vector<64x128xf32>
    %cst_104 = arith.constant dense<0.000000e+00> : vector<1x128xf32>
    %74 = tpu.matmul %71, %73, %cst_104 {dimension_numbers = #tpu.dot_dimension_numbers<[1], [0], [0], [1], [0, 0, 1, 1], [], []>} : vector<1x64xf32>, vector<64x128xf32>, vector<1x128xf32> -> vector<1x128xf32>
    %75 = arith.addf %69, %74 : vector<1x128xf32>
    %c2_105 = arith.constant 2 : index
    %c1_106 = arith.constant 1 : index
    %c0_107 = arith.constant 0 : index
    %76 = vector.load %arg31[%c2_105, %c1_106, %c0_107] : memref<4x4x64xf32, #tpu.memory_space<vmem>>, vector<1x1x64xf32>
    %77 = vector.shape_cast %76 : vector<1x1x64xf32> to vector<1x64xf32>
    %c9 = arith.constant 9 : index
    %c0_108 = arith.constant 0 : index
    %c0_109 = arith.constant 0 : index
    %78 = vector.load %arg17[%c9, %c0_108, %c0_109] : memref<16x64x128xf32, #tpu.memory_space<vmem>>, vector<1x64x128xf32>
    %79 = vector.shape_cast %78 : vector<1x64x128xf32> to vector<64x128xf32>
    %cst_110 = arith.constant dense<0.000000e+00> : vector<1x128xf32>
    %80 = tpu.matmul %77, %79, %cst_110 {dimension_numbers = #tpu.dot_dimension_numbers<[1], [0], [0], [1], [0, 0, 1, 1], [], []>} : vector<1x64xf32>, vector<64x128xf32>, vector<1x128xf32> -> vector<1x128xf32>
    %81 = arith.addf %75, %80 : vector<1x128xf32>
    %c2_111 = arith.constant 2 : index
    %c2_112 = arith.constant 2 : index
    %c0_113 = arith.constant 0 : index
    %82 = vector.load %arg31[%c2_111, %c2_112, %c0_113] : memref<4x4x64xf32, #tpu.memory_space<vmem>>, vector<1x1x64xf32>
    %83 = vector.shape_cast %82 : vector<1x1x64xf32> to vector<1x64xf32>
    %c10 = arith.constant 10 : index
    %c0_114 = arith.constant 0 : index
    %c0_115 = arith.constant 0 : index
    %84 = vector.load %arg17[%c10, %c0_114, %c0_115] : memref<16x64x128xf32, #tpu.memory_space<vmem>>, vector<1x64x128xf32>
    %85 = vector.shape_cast %84 : vector<1x64x128xf32> to vector<64x128xf32>
    %cst_116 = arith.constant dense<0.000000e+00> : vector<1x128xf32>
    %86 = tpu.matmul %83, %85, %cst_116 {dimension_numbers = #tpu.dot_dimension_numbers<[1], [0], [0], [1], [0, 0, 1, 1], [], []>} : vector<1x64xf32>, vector<64x128xf32>, vector<1x128xf32> -> vector<1x128xf32>
    %87 = arith.addf %81, %86 : vector<1x128xf32>
    %c2_117 = arith.constant 2 : index
    %c3_118 = arith.constant 3 : index
    %c0_119 = arith.constant 0 : index
    %88 = vector.load %arg31[%c2_117, %c3_118, %c0_119] : memref<4x4x64xf32, #tpu.memory_space<vmem>>, vector<1x1x64xf32>
    %89 = vector.shape_cast %88 : vector<1x1x64xf32> to vector<1x64xf32>
    %c11 = arith.constant 11 : index
    %c0_120 = arith.constant 0 : index
    %c0_121 = arith.constant 0 : index
    %90 = vector.load %arg17[%c11, %c0_120, %c0_121] : memref<16x64x128xf32, #tpu.memory_space<vmem>>, vector<1x64x128xf32>
    %91 = vector.shape_cast %90 : vector<1x64x128xf32> to vector<64x128xf32>
    %cst_122 = arith.constant dense<0.000000e+00> : vector<1x128xf32>
    %92 = tpu.matmul %89, %91, %cst_122 {dimension_numbers = #tpu.dot_dimension_numbers<[1], [0], [0], [1], [0, 0, 1, 1], [], []>} : vector<1x64xf32>, vector<64x128xf32>, vector<1x128xf32> -> vector<1x128xf32>
    %93 = arith.addf %87, %92 : vector<1x128xf32>
    %c3_123 = arith.constant 3 : index
    %c0_124 = arith.constant 0 : index
    %c0_125 = arith.constant 0 : index
    %94 = vector.load %arg31[%c3_123, %c0_124, %c0_125] : memref<4x4x64xf32, #tpu.memory_space<vmem>>, vector<1x1x64xf32>
    %95 = vector.shape_cast %94 : vector<1x1x64xf32> to vector<1x64xf32>
    %c12 = arith.constant 12 : index
    %c0_126 = arith.constant 0 : index
    %c0_127 = arith.constant 0 : index
    %96 = vector.load %arg17[%c12, %c0_126, %c0_127] : memref<16x64x128xf32, #tpu.memory_space<vmem>>, vector<1x64x128xf32>
    %97 = vector.shape_cast %96 : vector<1x64x128xf32> to vector<64x128xf32>
    %cst_128 = arith.constant dense<0.000000e+00> : vector<1x128xf32>
    %98 = tpu.matmul %95, %97, %cst_128 {dimension_numbers = #tpu.dot_dimension_numbers<[1], [0], [0], [1], [0, 0, 1, 1], [], []>} : vector<1x64xf32>, vector<64x128xf32>, vector<1x128xf32> -> vector<1x128xf32>
    %99 = arith.addf %93, %98 : vector<1x128xf32>
    %c3_129 = arith.constant 3 : index
    %c1_130 = arith.constant 1 : index
    %c0_131 = arith.constant 0 : index
    %100 = vector.load %arg31[%c3_129, %c1_130, %c0_131] : memref<4x4x64xf32, #tpu.memory_space<vmem>>, vector<1x1x64xf32>
    %101 = vector.shape_cast %100 : vector<1x1x64xf32> to vector<1x64xf32>
    %c13 = arith.constant 13 : index
    %c0_132 = arith.constant 0 : index
    %c0_133 = arith.constant 0 : index
    %102 = vector.load %arg17[%c13, %c0_132, %c0_133] : memref<16x64x128xf32, #tpu.memory_space<vmem>>, vector<1x64x128xf32>
    %103 = vector.shape_cast %102 : vector<1x64x128xf32> to vector<64x128xf32>
    %cst_134 = arith.constant dense<0.000000e+00> : vector<1x128xf32>
    %104 = tpu.matmul %101, %103, %cst_134 {dimension_numbers = #tpu.dot_dimension_numbers<[1], [0], [0], [1], [0, 0, 1, 1], [], []>} : vector<1x64xf32>, vector<64x128xf32>, vector<1x128xf32> -> vector<1x128xf32>
    %105 = arith.addf %99, %104 : vector<1x128xf32>
    %c3_135 = arith.constant 3 : index
    %c2_136 = arith.constant 2 : index
    %c0_137 = arith.constant 0 : index
    %106 = vector.load %arg31[%c3_135, %c2_136, %c0_137] : memref<4x4x64xf32, #tpu.memory_space<vmem>>, vector<1x1x64xf32>
    %107 = vector.shape_cast %106 : vector<1x1x64xf32> to vector<1x64xf32>
    %c14 = arith.constant 14 : index
    %c0_138 = arith.constant 0 : index
    %c0_139 = arith.constant 0 : index
    %108 = vector.load %arg17[%c14, %c0_138, %c0_139] : memref<16x64x128xf32, #tpu.memory_space<vmem>>, vector<1x64x128xf32>
    %109 = vector.shape_cast %108 : vector<1x64x128xf32> to vector<64x128xf32>
    %cst_140 = arith.constant dense<0.000000e+00> : vector<1x128xf32>
    %110 = tpu.matmul %107, %109, %cst_140 {dimension_numbers = #tpu.dot_dimension_numbers<[1], [0], [0], [1], [0, 0, 1, 1], [], []>} : vector<1x64xf32>, vector<64x128xf32>, vector<1x128xf32> -> vector<1x128xf32>
    %111 = arith.addf %105, %110 : vector<1x128xf32>
    %c3_141 = arith.constant 3 : index
    %c3_142 = arith.constant 3 : index
    %c0_143 = arith.constant 0 : index
    %112 = vector.load %arg31[%c3_141, %c3_142, %c0_143] : memref<4x4x64xf32, #tpu.memory_space<vmem>>, vector<1x1x64xf32>
    %113 = vector.shape_cast %112 : vector<1x1x64xf32> to vector<1x64xf32>
    %c15 = arith.constant 15 : index
    %c0_144 = arith.constant 0 : index
    %c0_145 = arith.constant 0 : index
    %114 = vector.load %arg17[%c15, %c0_144, %c0_145] : memref<16x64x128xf32, #tpu.memory_space<vmem>>, vector<1x64x128xf32>
    %115 = vector.shape_cast %114 : vector<1x64x128xf32> to vector<64x128xf32>
    %cst_146 = arith.constant dense<0.000000e+00> : vector<1x128xf32>
    %116 = tpu.matmul %113, %115, %cst_146 {dimension_numbers = #tpu.dot_dimension_numbers<[1], [0], [0], [1], [0, 0, 1, 1], [], []>} : vector<1x64xf32>, vector<64x128xf32>, vector<1x128xf32> -> vector<1x128xf32>
    %117 = arith.addf %111, %116 : vector<1x128xf32>
    %cst_147 = arith.constant 0.000000e+00 : f32
    %118 = vector.broadcast %cst_147 : f32 to vector<1x128xf32>
    %119 = arith.maximumf %117, %118 : vector<1x128xf32>
    %c0_148 = arith.constant 0 : index
    %c0_149 = arith.constant 0 : index
    %120 = vector.load %arg19[%c0_148, %c0_149] : memref<128x128xf32, #tpu.memory_space<vmem>>, vector<128x128xf32>
    %cst_150 = arith.constant dense<0.000000e+00> : vector<1x128xf32>
    %121 = tpu.matmul %119, %120, %cst_150 {dimension_numbers = #tpu.dot_dimension_numbers<[1], [0], [0], [1], [0, 0, 1, 1], [], []>} : vector<1x128xf32>, vector<128x128xf32>, vector<1x128xf32> -> vector<1x128xf32>
    %c0_151 = arith.constant 0 : index
    %c0_152 = arith.constant 0 : index
    %122 = vector.load %arg20[%c0_151, %c0_152] : memref<1x128xf32, #tpu.memory_space<vmem>>, vector<1x128xf32>
    %123 = arith.addf %121, %122 : vector<1x128xf32>
    %cst_153 = arith.constant 0.000000e+00 : f32
    %124 = vector.broadcast %cst_153 : f32 to vector<1x128xf32>
    %125 = arith.maximumf %123, %124 : vector<1x128xf32>
    %c0_154 = arith.constant 0 : index
    %c0_155 = arith.constant 0 : index
    %126 = vector.load %arg21[%c0_154, %c0_155] : memref<128x14xf32, #tpu.memory_space<vmem>>, vector<128x14xf32>
    %cst_156 = arith.constant dense<0.000000e+00> : vector<1x14xf32>
    %127 = tpu.matmul %125, %126, %cst_156 {dimension_numbers = #tpu.dot_dimension_numbers<[1], [0], [0], [1], [0, 0, 1, 1], [], []>} : vector<1x128xf32>, vector<128x14xf32>, vector<1x14xf32> -> vector<1x14xf32>
    %c0_157 = arith.constant 0 : index
    %c0_158 = arith.constant 0 : index
    %128 = vector.load %arg22[%c0_157, %c0_158] : memref<1x14xf32, #tpu.memory_space<vmem>>, vector<1x14xf32>
    %129 = arith.addf %127, %128 : vector<1x14xf32>
    %c0_159 = arith.constant 0 : index
    %c0_160 = arith.constant 0 : index
    %c0_161 = arith.constant 0 : index
    %130 = vector.load %arg23[%c0_159, %c0_160, %c0_161] : memref<1x1x14xf32, #tpu.memory_space<vmem>>, vector<1x1x14xf32>
    %131 = vector.shape_cast %130 : vector<1x1x14xf32> to vector<1x14xf32>
    %132 = vector.shape_cast %129 : vector<1x14xf32> to vector<1x1x14xf32>
    tpu.vector_store %arg23[%c0_159, %c0_160, %c0_161], %132 {strides = array<i32>} : memref<1x1x14xf32, #tpu.memory_space<vmem>>, vector<1x1x14xf32>,
    return
  }
  func.func @transform_0(%arg0: i32) -> (i32, i32, i32, i32) {
    %c0_i32 = arith.constant 0 : i32
    %c0_i32_0 = arith.constant 0 : i32
    %c0_i32_1 = arith.constant 0 : i32
    %c0_i32_2 = arith.constant 0 : i32
    return %arg0, %c0_i32, %c0_i32_0, %c0_i32_1 : i32, i32, i32, i32
  }
  func.func @transform_1(%arg0: i32) -> (i32, i32) {
    %c0_i32 = arith.constant 0 : i32
    %c0_i32_0 = arith.constant 0 : i32
    %c0_i32_1 = arith.constant 0 : i32
    return %c0_i32, %c0_i32_0 : i32, i32
  }
  func.func @transform_2(%arg0: i32) -> (i32, i32) {
    %c0_i32 = arith.constant 0 : i32
    %c0_i32_0 = arith.constant 0 : i32
    %c0_i32_1 = arith.constant 0 : i32
    return %c0_i32, %c0_i32_0 : i32, i32
  }
  func.func @transform_3(%arg0: i32) -> (i32, i32) {
    %c0_i32 = arith.constant 0 : i32
    %c0_i32_0 = arith.constant 0 : i32
    %c0_i32_1 = arith.constant 0 : i32
    return %c0_i32, %c0_i32_0 : i32, i32
  }
  func.func @transform_4(%arg0: i32) -> (i32, i32, i32) {
    %c0_i32 = arith.constant 0 : i32
    %c0_i32_0 = arith.constant 0 : i32
    %c0_i32_1 = arith.constant 0 : i32
    %c0_i32_2 = arith.constant 0 : i32
    return %c0_i32, %c0_i32_0, %c0_i32_1 : i32, i32, i32
  }
  func.func @transform_5(%arg0: i32) -> (i32, i32) {
    %c0_i32 = arith.constant 0 : i32
    %c0_i32_0 = arith.constant 0 : i32
    %c0_i32_1 = arith.constant 0 : i32
    return %c0_i32, %c0_i32_0 : i32, i32
  }
  func.func @transform_6(%arg0: i32) -> (i32, i32) {
    %c0_i32 = arith.constant 0 : i32
    %c0_i32_0 = arith.constant 0 : i32
    %c0_i32_1 = arith.constant 0 : i32
    return %c0_i32, %c0_i32_0 : i32, i32
  }
  func.func @transform_7(%arg0: i32) -> (i32, i32, i32) {
    %c0_i32 = arith.constant 0 : i32
    %c0_i32_0 = arith.constant 0 : i32
    %c0_i32_1 = arith.constant 0 : i32
    %c0_i32_2 = arith.constant 0 : i32
    return %c0_i32, %c0_i32_0, %c0_i32_1 : i32, i32, i32
  }
  func.func @transform_8(%arg0: i32) -> (i32, i32) {
    %c0_i32 = arith.constant 0 : i32
    %c0_i32_0 = arith.constant 0 : i32
    %c0_i32_1 = arith.constant 0 : i32
    return %c0_i32, %c0_i32_0 : i32, i32
  }
  func.func @transform_9(%arg0: i32) -> (i32, i32) {
    %c0_i32 = arith.constant 0 : i32
    %c0_i32_0 = arith.constant 0 : i32
    %c0_i32_1 = arith.constant 0 : i32
    return %c0_i32, %c0_i32_0 : i32, i32
  }
  func.func @transform_10(%arg0: i32) -> (i32, i32, i32) {
    %c0_i32 = arith.constant 0 : i32
    %c0_i32_0 = arith.constant 0 : i32
    %c0_i32_1 = arith.constant 0 : i32
    %c0_i32_2 = arith.constant 0 : i32
    return %c0_i32, %c0_i32_0, %c0_i32_1 : i32, i32, i32
  }
  func.func @transform_11(%arg0: i32) -> (i32, i32) {
    %c0_i32 = arith.constant 0 : i32
    %c0_i32_0 = arith.constant 0 : i32
    %c0_i32_1 = arith.constant 0 : i32
    return %c0_i32, %c0_i32_0 : i32, i32
  }
  func.func @transform_12(%arg0: i32) -> (i32, i32) {
    %c0_i32 = arith.constant 0 : i32
    %c0_i32_0 = arith.constant 0 : i32
    %c0_i32_1 = arith.constant 0 : i32
    return %c0_i32, %c0_i32_0 : i32, i32
  }
  func.func @transform_13(%arg0: i32) -> (i32, i32, i32) {
    %c0_i32 = arith.constant 0 : i32
    %c0_i32_0 = arith.constant 0 : i32
    %c0_i32_1 = arith.constant 0 : i32
    %c0_i32_2 = arith.constant 0 : i32
    return %c0_i32, %c0_i32_0, %c0_i32_1 : i32, i32, i32
  }
  func.func @transform_14(%arg0: i32) -> (i32, i32) {
    %c0_i32 = arith.constant 0 : i32
    %c0_i32_0 = arith.constant 0 : i32
    %c0_i32_1 = arith.constant 0 : i32
    return %c0_i32, %c0_i32_0 : i32, i32
  }
  func.func @transform_15(%arg0: i32) -> (i32, i32) {
    %c0_i32 = arith.constant 0 : i32
    %c0_i32_0 = arith.constant 0 : i32
    %c0_i32_1 = arith.constant 0 : i32
    return %c0_i32, %c0_i32_0 : i32, i32
  }
  func.func @transform_16(%arg0: i32) -> (i32, i32, i32) {
    %c0_i32 = arith.constant 0 : i32
    %c0_i32_0 = arith.constant 0 : i32
    %c0_i32_1 = arith.constant 0 : i32
    %c0_i32_2 = arith.constant 0 : i32
    return %c0_i32, %c0_i32_0, %c0_i32_1 : i32, i32, i32
  }
  func.func @transform_17(%arg0: i32) -> (i32, i32) {
    %c0_i32 = arith.constant 0 : i32
    %c0_i32_0 = arith.constant 0 : i32
    %c0_i32_1 = arith.constant 0 : i32
    return %c0_i32, %c0_i32_0 : i32, i32
  }
  func.func @transform_18(%arg0: i32) -> (i32, i32) {
    %c0_i32 = arith.constant 0 : i32
    %c0_i32_0 = arith.constant 0 : i32
    %c0_i32_1 = arith.constant 0 : i32
    return %c0_i32, %c0_i32_0 : i32, i32
  }
  func.func @transform_19(%arg0: i32) -> (i32, i32) {
    %c0_i32 = arith.constant 0 : i32
    %c0_i32_0 = arith.constant 0 : i32
    %c0_i32_1 = arith.constant 0 : i32
    return %c0_i32, %c0_i32_0 : i32, i32
  }
  func.func @transform_20(%arg0: i32) -> (i32, i32) {
    %c0_i32 = arith.constant 0 : i32
    %c0_i32_0 = arith.constant 0 : i32
    %c0_i32_1 = arith.constant 0 : i32
    return %c0_i32, %c0_i32_0 : i32, i32
  }
  func.func @transform_21(%arg0: i32) -> (i32, i32) {
    %c0_i32 = arith.constant 0 : i32
    %c0_i32_0 = arith.constant 0 : i32
    %c0_i32_1 = arith.constant 0 : i32
    return %c0_i32, %c0_i32_0 : i32, i32
  }
  func.func @transform_22(%arg0: i32) -> (i32, i32, i32) {
    %c0_i32 = arith.constant 0 : i32
    %c0_i32_0 = arith.constant 0 : i32
    %c0_i32_1 = arith.constant 0 : i32
    return %arg0, %c0_i32, %c0_i32_0 : i32, i32, i32
  }
}

</mosaic_0001>

<llo_original>
// kernel: chestcnn_forward.1
$region0: #{chestcnn_forward.1}
  #allocation0 [shape = 'u32[]', space=smem, size = 0x4, offset = 0x4, fixed_abs, tag = 'smem constant byte address 0x4 - core index']
  #allocation1 [shape = 'u32[144,128]{1,0:T(1,128)}', space=vmem, size = 0x12000, scoped, tag = 'internal scratch']
  #allocation2 [shape = 'f32[26,26,16]{2,1,0:T(8,128)}', space=vmem, size = 0x68000, scoped, tag = 'scratch operand']
  #allocation3 [shape = 'f32[24,24,16]{2,1,0:T(8,128)}', space=vmem, size = 0x48000, scoped, tag = 'scratch operand']
  #allocation4 [shape = 'f32[12,12,16]{2,1,0:T(8,128)}', space=vmem, size = 0x18000, scoped, tag = 'scratch operand']
  #allocation5 [shape = 'f32[10,10,64]{2,1,0:T(8,128)}', space=vmem, size = 0x14000, scoped, tag = 'scratch operand']
  #allocation6 [shape = 'f32[8,8,64]{2,1,0:T(8,128)}', space=vmem, size = 0x8000, scoped, tag = 'scratch operand']
  #allocation7 [shape = 'f32[10,10,64]{2,1,0:T(8,128)}', space=vmem, size = 0x14000, scoped, tag = 'scratch operand']
  #allocation8 [shape = 'f32[8,8,64]{2,1,0:T(8,128)}', space=vmem, size = 0x8000, scoped, tag = 'scratch operand']
  #allocation9 [shape = 'f32[4,4,64]{2,1,0:T(4,128)}', space=vmem, size = 0x2000, scoped, tag = 'scratch operand']
  #allocation10 [shape = 'f32[24,16]{1,0:T(8,128)}', space=vmem, size = 0x3000, scoped, tag = 'scratch operand']
  #allocation11 [shape = 'f32[8,64]{1,0:T(8,128)}', space=vmem, size = 0x1000, scoped, tag = 'scratch operand']
  %s0 = inlined_call_operand.vmem [shape: f32[4,26,26,9], index: 0, kind: input, shape index: {}]
  %s1 = inlined_call_operand.vmem [shape: f32[9,16], index: 1, kind: input, shape index: {}]
  %s2 = inlined_call_operand.vmem [shape: f32[1,16], index: 2, kind: input, shape index: {}]
  %s3 = inlined_call_operand.vmem [shape: f32[1,16], index: 3, kind: input, shape index: {}]
  %s4 = inlined_call_operand.vmem [shape: f32[9,16,16], index: 4, kind: input, shape index: {}]
  %s5 = inlined_call_operand.vmem [shape: f32[1,16], index: 5, kind: input, shape index: {}]
  %s6 = inlined_call_operand.vmem [shape: f32[1,16], index: 6, kind: input, shape index: {}]
  %s7 = inlined_call_operand.vmem [shape: f32[9,16,64], index: 7, kind: input, shape index: {}]
  %s8 = inlined_call_operand.vmem [shape: f32[1,64], index: 8, kind: input, shape index: {}]
  %s9 = inlined_call_operand.vmem [shape: f32[1,64], index: 9, kind: input, shape index: {}]
  %s10 = inlined_call_operand.vmem [shape: f32[9,64,64], index: 10, kind: input, shape index: {}]
  %s11 = inlined_call_operand.vmem [shape: f32[1,64], index: 11, kind: input, shape index: {}]
  %s12 = inlined_call_operand.vmem [shape: f32[1,64], index: 12, kind: input, shape index: {}]
  %s13 = inlined_call_operand.vmem [shape: f32[9,64,64], index: 13, kind: input, shape index: {}]
  %s14 = inlined_call_operand.vmem [shape: f32[1,64], index: 14, kind: input, shape index: {}]
  %s15 = inlined_call_operand.vmem [shape: f32[1,64], index: 15, kind: input, shape index: {}]
  %s16 = inlined_call_operand.vmem [shape: f32[16,64,128], index: 16, kind: input, shape index: {}]
  %s17 = inlined_call_operand.vmem [shape: f32[1,128], index: 17, kind: input, shape index: {}]
  %s18 = inlined_call_operand.vmem [shape: f32[128,128], index: 18, kind: input, shape index: {}]
  %s19 = inlined_call_operand.vmem [shape: f32[1,128], index: 19, kind: input, shape index: {}]
  %s20 = inlined_call_operand.vmem [shape: f32[128,14], index: 20, kind: input, shape index: {}]
  %s21 = inlined_call_operand.vmem [shape: f32[1,14], index: 21, kind: input, shape index: {}]
  %s22 = inlined_call_operand.hbm [shape: f32[4,1,14], index: 22, kind: output, shape index: {}]
  %s23 = sld [smem:[#allocation0]]
  $region170: #{chestcnn_forward.1} parent=0
    _
  %s25 = ssub.s32 1, %s23
  %s26 = scalar_select 0, %s25, %s23
  $region1: #{chestcnn_forward.1} parent=0
    #allocation12 [shape = 'u8[1024]{0}', space=vmem, size = 0x400, scoped, tag = 'output window, operand 0']
    #allocation13 [shape = 's32[2]{0}', space=sflag, size = 0x8, scoped, tag = 'scoped memory for chestcnn_forward.1']
    %27 = vsyncpa [#allocation13], 0
    %s28 = scalar_lea.sflag [#allocation13], 1
    %29 = vsyncpa %s28, 0
    loop: start=0, step=1, limit=6
    $region2: #{chestcnn_forward.1} parent=1 // loop_pre_header
      _
    $region3: #{chestcnn_forward.1} parent=1 // loop_header
      %s31 = sphi 0, %s35
      %p32 = scmp.ge.s32.totalorder %s31, 6
      %s41 = sphi 0, %s43
      %s44 = sphi 0, %s41
      %s45 = sphi 0, %s44
      %s61 = sphi 0, %s45
      %s65 = sphi 0, %s65
      %s67 = sphi 0, %s65
      %s68 = sphi 0, %s67
      %s82 = sphi 0, %s68
      %s86 = sphi 0, %s86
      %s88 = sphi 0, %s86
      %s89 = sphi 0, %s88
      %s103 = sphi 0, %s89
      %s107 = sphi 0, %s107
      %s109 = sphi 0, %s107
      %s110 = sphi 0, %s109
      %s124 = sphi 0, %s110
      %s128 = sphi 0, %s128
      %s130 = sphi 0, %s128
      %s131 = sphi 0, %s130
      %s145 = sphi 0, %s131
      %s149 = sphi 0, %s149
      %s151 = sphi 0, %s149
      %s152 = sphi 0, %s151
      %s166 = sphi 0, %s152
      %s170 = sphi 0, %s170
      %s172 = sphi 0, %s170
      %s173 = sphi 0, %s172
      %s187 = sphi 0, %s173
      %s191 = sphi 0, %s191
      %s193 = sphi 0, %s191
      %s194 = sphi 0, %s193
      %s208 = sphi 0, %s194
      %s212 = sphi 0, %s212
      %s214 = sphi 0, %s212
      %s215 = sphi 0, %s214
      %s229 = sphi 0, %s215
      %s233 = sphi 0, %s233
      %s235 = sphi 0, %s233
      %s236 = sphi 0, %s235
      %s250 = sphi 0, %s236
      %s254 = sphi 0, %s254
      %s256 = sphi 0, %s254
      %s257 = sphi 0, %s256
      %s271 = sphi 0, %s257
      %s275 = sphi 0, %s275
      %s277 = sphi 0, %s275
      %s278 = sphi 0, %s277
      %s292 = sphi 0, %s278
      %s296 = sphi 0, %s296
      %s298 = sphi 0, %s296
      %s299 = sphi 0, %s298
      %s313 = sphi 0, %s299
      %s317 = sphi 0, %s317
      %s319 = sphi 0, %s317
      %s320 = sphi 0, %s319
      %s334 = sphi 0, %s320
      %s338 = sphi 0, %s338
      %s340 = sphi 0, %s338
      %s341 = sphi 0, %s340
      %s355 = sphi 0, %s341
      %s359 = sphi 0, %s359
      %s361 = sphi 0, %s359
      %s362 = sphi 0, %s361
      %s376 = sphi 0, %s362
      %s380 = sphi 0, %s380
      %s382 = sphi 0, %s380
      %s383 = sphi 0, %s382
      %s397 = sphi 0, %s383
      %s401 = sphi 0, %s401
      %s403 = sphi 0, %s401
      %s404 = sphi 0, %s403
      %s418 = sphi 0, %s404
      %s422 = sphi 0, %s422
      %s424 = sphi 0, %s422
      %s425 = sphi 0, %s424
      %s439 = sphi 0, %s425
      %s443 = sphi 0, %s443
      %s445 = sphi 0, %s443
      %s446 = sphi 0, %s445
      %s460 = sphi 0, %s446
      %s464 = sphi 0, %s464
      %s466 = sphi 0, %s464
      %s467 = sphi 0, %s466
      %s481 = sphi 0, %s467
      %s485 = sphi 0, %s485
      %s487 = sphi 0, %s485
      %s488 = sphi 0, %s487
      %s502 = sphi 0, %s488
      %s508 = sphi 0, %s510
      %s511 = sphi 0, %s508
      %s512 = sphi 0, %s511
      %s528 = sphi 0, %s512
    $region4: #{chestcnn_forward.1} parent=1 // loop_header_branch
      %34 = sbr.rel (%p32) target = $region8
    $region5: #{chestcnn_forward.1} parent=1 // loop_body
      %s36 = ssub.s32 %s31, 1
      %s37 = ssub.s32 %s31, 2
      %s38 = sadd.s32 %s31, 1
      %s39 = ssub.s32 %s31, %s38
      %p40 = scmp.eq.s32.totalorder %s39, 0
      %s42 = sadd.s32 %s41, 1
      %s43 = scalar_select %p40, %s41, %s42
      %p46 = pneg %p40
      %p47 = scmp.eq.s32.totalorder %s31, 3
      %p48 = por %p46, %p47
      %p49 = scmp.ne.s32.totalorder %s41, %s44
      %p50 = scmp.eq.s32.totalorder %s31, 0
      %p51 = por %p49, %p50
      %p52 = scmp.ne.s32.totalorder %s41, %s44
      %p53 = scmp.eq.s32.totalorder %s36, 3
      %p54 = por %p52, %p53
      %p55 = scmp.ne.s32.totalorder %s44, %s45
      %p56 = scmp.eq.s32.totalorder %s36, 0
      %p57 = por %p55, %p56
      %p58 = scmp.ne.s32.totalorder %s44, %s45
      %p59 = scmp.eq.s32.totalorder %s37, 3
      %p60 = por %p58, %p59
      %p62 = scmp.ne.s32.totalorder %s45, %s61
      %p63 = scmp.eq.s32.totalorder %s37, 0
      %p64 = por %p62, %p63
      %s66 = sadd.s32 %s65, 1
      %p69 = scmp.eq.s32.totalorder %s31, 3
      %p70 = scmp.ne.s32.totalorder %s65, %s67
      %p71 = scmp.eq.s32.totalorder %s31, 0
      %p72 = por %p70, %p71
      %p73 = scmp.ne.s32.totalorder %s65, %s67
      %p74 = scmp.eq.s32.totalorder %s36, 3
      %p75 = por %p73, %p74
      %p76 = scmp.ne.s32.totalorder %s67, %s68
      %p77 = scmp.eq.s32.totalorder %s36, 0
      %p78 = por %p76, %p77
      %p79 = scmp.ne.s32.totalorder %s67, %s68
      %p80 = scmp.eq.s32.totalorder %s37, 3
      %p81 = por %p79, %p80
      %p83 = scmp.ne.s32.totalorder %s68, %s82
      %p84 = scmp.eq.s32.totalorder %s37, 0
      %p85 = por %p83, %p84
      %s87 = sadd.s32 %s86, 1
      %p90 = scmp.eq.s32.totalorder %s31, 3
      %p91 = scmp.ne.s32.totalorder %s86, %s88
      %p92 = scmp.eq.s32.totalorder %s31, 0
      %p93 = por %p91, %p92
      %p94 = scmp.ne.s32.totalorder %s86, %s88
      %p95 = scmp.eq.s32.totalorder %s36, 3
      %p96 = por %p94, %p95
      %p97 = scmp.ne.s32.totalorder %s88, %s89
      %p98 = scmp.eq.s32.totalorder %s36, 0
      %p99 = por %p97, %p98
      %p100 = scmp.ne.s32.totalorder %s88, %s89
      %p101 = scmp.eq.s32.totalorder %s37, 3
      %p102 = por %p100, %p101
      %p104 = scmp.ne.s32.totalorder %s89, %s103
      %p105 = scmp.eq.s32.totalorder %s37, 0
      %p106 = por %p104, %p105
      %s108 = sadd.s32 %s107, 1
      %p111 = scmp.eq.s32.totalorder %s31, 3
      %p112 = scmp.ne.s32.totalorder %s107, %s109
      %p113 = scmp.eq.s32.totalorder %s31, 0
      %p114 = por %p112, %p113
      %p115 = scmp.ne.s32.totalorder %s107, %s109
      %p116 = scmp.eq.s32.totalorder %s36, 3
      %p117 = por %p115, %p116
      %p118 = scmp.ne.s32.totalorder %s109, %s110
      %p119 = scmp.eq.s32.totalorder %s36, 0
      %p120 = por %p118, %p119
      %p121 = scmp.ne.s32.totalorder %s109, %s110
      %p122 = scmp.eq.s32.totalorder %s37, 3
      %p123 = por %p121, %p122
      %p125 = scmp.ne.s32.totalorder %s110, %s124
      %p126 = scmp.eq.s32.totalorder %s37, 0
      %p127 = por %p125, %p126
      %s129 = sadd.s32 %s128, 1
      %p132 = scmp.eq.s32.totalorder %s31, 3
      %p133 = scmp.ne.s32.totalorder %s128, %s130
      %p134 = scmp.eq.s32.totalorder %s31, 0
      %p135 = por %p133, %p134
      %p136 = scmp.ne.s32.totalorder %s128, %s130
      %p137 = scmp.eq.s32.totalorder %s36, 3
      %p138 = por %p136, %p137
      %p139 = scmp.ne.s32.totalorder %s130, %s131
      %p140 = scmp.eq.s32.totalorder %s36, 0
      %p141 = por %p139, %p140
      %p142 = scmp.ne.s32.totalorder %s130, %s131
      %p143 = scmp.eq.s32.totalorder %s37, 3
      %p144 = por %p142, %p143
      %p146 = scmp.ne.s32.totalorder %s131, %s145
      %p147 = scmp.eq.s32.totalorder %s37, 0
      %p148 = por %p146, %p147
      %s150 = sadd.s32 %s149, 1
      %p153 = scmp.eq.s32.totalorder %s31, 3
      %p154 = scmp.ne.s32.totalorder %s149, %s151
      %p155 = scmp.eq.s32.totalorder %s31, 0
      %p156 = por %p154, %p155
      %p157 = scmp.ne.s32.totalorder %s149, %s151
      %p158 = scmp.eq.s32.totalorder %s36, 3
      %p159 = por %p157, %p158
      %p160 = scmp.ne.s32.totalorder %s151, %s152
      %p161 = scmp.eq.s32.totalorder %s36, 0
      %p162 = por %p160, %p161
      %p163 = scmp.ne.s32.totalorder %s151, %s152
      %p164 = scmp.eq.s32.totalorder %s37, 3
      %p165 = por %p163, %p164
      %p167 = scmp.ne.s32.totalorder %s152, %s166
      %p168 = scmp.eq.s32.totalorder %s37, 0
      %p169 = por %p167, %p168
      %s171 = sadd.s32 %s170, 1
      %p174 = scmp.eq.s32.totalorder %s31, 3
      %p175 = scmp.ne.s32.totalorder %s170, %s172
      %p176 = scmp.eq.s32.totalorder %s31, 0
      %p177 = por %p175, %p176
      %p178 = scmp.ne.s32.totalorder %s170, %s172
      %p179 = scmp.eq.s32.totalorder %s36, 3
      %p180 = por %p178, %p179
      %p181 = scmp.ne.s32.totalorder %s172, %s173
      %p182 = scmp.eq.s32.totalorder %s36, 0
      %p183 = por %p181, %p182
      %p184 = scmp.ne.s32.totalorder %s172, %s173
      %p185 = scmp.eq.s32.totalorder %s37, 3
      %p186 = por %p184, %p185
      %p188 = scmp.ne.s32.totalorder %s173, %s187
      %p189 = scmp.eq.s32.totalorder %s37, 0
      %p190 = por %p188, %p189
      %s192 = sadd.s32 %s191, 1
      %p195 = scmp.eq.s32.totalorder %s31, 3
      %p196 = scmp.ne.s32.totalorder %s191, %s193
      %p197 = scmp.eq.s32.totalorder %s31, 0
      %p198 = por %p196, %p197
      %p199 = scmp.ne.s32.totalorder %s191, %s193
      %p200 = scmp.eq.s32.totalorder %s36, 3
      %p201 = por %p199, %p200
      %p202 = scmp.ne.s32.totalorder %s193, %s194
      %p203 = scmp.eq.s32.totalorder %s36, 0
      %p204 = por %p202, %p203
      %p205 = scmp.ne.s32.totalorder %s193, %s194
      %p206 = scmp.eq.s32.totalorder %s37, 3
      %p207 = por %p205, %p206
      %p209 = scmp.ne.s32.totalorder %s194, %s208
      %p210 = scmp.eq.s32.totalorder %s37, 0
      %p211 = por %p209, %p210
      %s213 = sadd.s32 %s212, 1
      %p216 = scmp.eq.s32.totalorder %s31, 3
      %p217 = scmp.ne.s32.totalorder %s212, %s214
      %p218 = scmp.eq.s32.totalorder %s31, 0
      %p219 = por %p217, %p218
      %p220 = scmp.ne.s32.totalorder %s212, %s214
      %p221 = scmp.eq.s32.totalorder %s36, 3
      %p222 = por %p220, %p221
      %p223 = scmp.ne.s32.totalorder %s214, %s215
      %p224 = scmp.eq.s32.totalorder %s36, 0
      %p225 = por %p223, %p224
      %p226 = scmp.ne.s32.totalorder %s214, %s215
      %p227 = scmp.eq.s32.totalorder %s37, 3
      %p228 = por %p226, %p227
      %p230 = scmp.ne.s32.totalorder %s215, %s229
      %p231 = scmp.eq.s32.totalorder %s37, 0
      %p232 = por %p230, %p231
      %s234 = sadd.s32 %s233, 1
      %p237 = scmp.eq.s32.totalorder %s31, 3
      %p238 = scmp.ne.s32.totalorder %s233, %s235
      %p239 = scmp.eq.s32.totalorder %s31, 0
      %p240 = por %p238, %p239
      %p241 = scmp.ne.s32.totalorder %s233, %s235
      %p242 = scmp.eq.s32.totalorder %s36, 3
      %p243 = por %p241, %p242
      %p244 = scmp.ne.s32.totalorder %s235, %s236
      %p245 = scmp.eq.s32.totalorder %s36, 0
      %p246 = por %p244, %p245
      %p247 = scmp.ne.s32.totalorder %s235, %s236
      %p248 = scmp.eq.s32.totalorder %s37, 3
      %p249 = por %p247, %p248
      %p251 = scmp.ne.s32.totalorder %s236, %s250
      %p252 = scmp.eq.s32.totalorder %s37, 0
      %p253 = por %p251, %p252
      %s255 = sadd.s32 %s254, 1
      %p258 = scmp.eq.s32.totalorder %s31, 3
      %p259 = scmp.ne.s32.totalorder %s254, %s256
      %p260 = scmp.eq.s32.totalorder %s31, 0
      %p261 = por %p259, %p260
      %p262 = scmp.ne.s32.totalorder %s254, %s256
      %p263 = scmp.eq.s32.totalorder %s36, 3
      %p264 = por %p262, %p263
      %p265 = scmp.ne.s32.totalorder %s256, %s257
      %p266 = scmp.eq.s32.totalorder %s36, 0
      %p267 = por %p265, %p266
      %p268 = scmp.ne.s32.totalorder %s256, %s257
      %p269 = scmp.eq.s32.totalorder %s37, 3
      %p270 = por %p268, %p269
      %p272 = scmp.ne.s32.totalorder %s257, %s271
      %p273 = scmp.eq.s32.totalorder %s37, 0
      %p274 = por %p272, %p273
      %s276 = sadd.s32 %s275, 1
      %p279 = scmp.eq.s32.totalorder %s31, 3
      %p280 = scmp.ne.s32.totalorder %s275, %s277
      %p281 = scmp.eq.s32.totalorder %s31, 0
      %p282 = por %p280, %p281
      %p283 = scmp.ne.s32.totalorder %s275, %s277
      %p284 = scmp.eq.s32.totalorder %s36, 3
      %p285 = por %p283, %p284
      %p286 = scmp.ne.s32.totalorder %s277, %s278
      %p287 = scmp.eq.s32.totalorder %s36, 0
      %p288 = por %p286, %p287
      %p289 = scmp.ne.s32.totalorder %s277, %s278
      %p290 = scmp.eq.s32.totalorder %s37, 3
      %p291 = por %p289, %p290
      %p293 = scmp.ne.s32.totalorder %s278, %s292
      %p294 = scmp.eq.s32.totalorder %s37, 0
      %p295 = por %p293, %p294
      %s297 = sadd.s32 %s296, 1
      %p300 = scmp.eq.s32.totalorder %s31, 3
      %p301 = scmp.ne.s32.totalorder %s296, %s298
      %p302 = scmp.eq.s32.totalorder %s31, 0
      %p303 = por %p301, %p302
      %p304 = scmp.ne.s32.totalorder %s296, %s298
      %p305 = scmp.eq.s32.totalorder %s36, 3
      %p306 = por %p304, %p305
      %p307 = scmp.ne.s32.totalorder %s298, %s299
      %p308 = scmp.eq.s32.totalorder %s36, 0
      %p309 = por %p307, %p308
      %p310 = scmp.ne.s32.totalorder %s298, %s299
      %p311 = scmp.eq.s32.totalorder %s37, 3
      %p312 = por %p310, %p311
      %p314 = scmp.ne.s32.totalorder %s299, %s313
      %p315 = scmp.eq.s32.totalorder %s37, 0
      %p316 = por %p314, %p315
      %s318 = sadd.s32 %s317, 1
      %p321 = scmp.eq.s32.totalorder %s31, 3
      %p322 = scmp.ne.s32.totalorder %s317, %s319
      %p323 = scmp.eq.s32.totalorder %s31, 0
      %p324 = por %p322, %p323
      %p325 = scmp.ne.s32.totalorder %s317, %s319
      %p326 = scmp.eq.s32.totalorder %s36, 3
      %p327 = por %p325, %p326
      %p328 = scmp.ne.s32.totalorder %s319, %s320
      %p329 = scmp.eq.s32.totalorder %s36, 0
      %p330 = por %p328, %p329
      %p331 = scmp.ne.s32.totalorder %s319, %s320
      %p332 = scmp.eq.s32.totalorder %s37, 3
      %p333 = por %p331, %p332
      %p335 = scmp.ne.s32.totalorder %s320, %s334
      %p336 = scmp.eq.s32.totalorder %s37, 0
      %p337 = por %p335, %p336
      %s339 = sadd.s32 %s338, 1
      %p342 = scmp.eq.s32.totalorder %s31, 3
      %p343 = scmp.ne.s32.totalorder %s338, %s340
      %p344 = scmp.eq.s32.totalorder %s31, 0
      %p345 = por %p343, %p344
      %p346 = scmp.ne.s32.totalorder %s338, %s340
      %p347 = scmp.eq.s32.totalorder %s36, 3
      %p348 = por %p346, %p347
      %p349 = scmp.ne.s32.totalorder %s340, %s341
      %p350 = scmp.eq.s32.totalorder %s36, 0
      %p351 = por %p349, %p350
      %p352 = scmp.ne.s32.totalorder %s340, %s341
      %p353 = scmp.eq.s32.totalorder %s37, 3
      %p354 = por %p352, %p353
      %p356 = scmp.ne.s32.totalorder %s341, %s355
      %p357 = scmp.eq.s32.totalorder %s37, 0
      %p358 = por %p356, %p357
      %s360 = sadd.s32 %s359, 1
      %p363 = scmp.eq.s32.totalorder %s31, 3
      %p364 = scmp.ne.s32.totalorder %s359, %s361
      %p365 = scmp.eq.s32.totalorder %s31, 0
      %p366 = por %p364, %p365
      %p367 = scmp.ne.s32.totalorder %s359, %s361
      %p368 = scmp.eq.s32.totalorder %s36, 3
      %p369 = por %p367, %p368
      %p370 = scmp.ne.s32.totalorder %s361, %s362
      %p371 = scmp.eq.s32.totalorder %s36, 0
      %p372 = por %p370, %p371
      %p373 = scmp.ne.s32.totalorder %s361, %s362
      %p374 = scmp.eq.s32.totalorder %s37, 3
      %p375 = por %p373, %p374
      %p377 = scmp.ne.s32.totalorder %s362, %s376
      %p378 = scmp.eq.s32.totalorder %s37, 0
      %p379 = por %p377, %p378
      %s381 = sadd.s32 %s380, 1
      %p384 = scmp.eq.s32.totalorder %s31, 3
      %p385 = scmp.ne.s32.totalorder %s380, %s382
      %p386 = scmp.eq.s32.totalorder %s31, 0
      %p387 = por %p385, %p386
      %p388 = scmp.ne.s32.totalorder %s380, %s382
      %p389 = scmp.eq.s32.totalorder %s36, 3
      %p390 = por %p388, %p389
      %p391 = scmp.ne.s32.totalorder %s382, %s383
      %p392 = scmp.eq.s32.totalorder %s36, 0
      %p393 = por %p391, %p392
      %p394 = scmp.ne.s32.totalorder %s382, %s383
      %p395 = scmp.eq.s32.totalorder %s37, 3
      %p396 = por %p394, %p395
      %p398 = scmp.ne.s32.totalorder %s383, %s397
      %p399 = scmp.eq.s32.totalorder %s37, 0
      %p400 = por %p398, %p399
      %s402 = sadd.s32 %s401, 1
      %p405 = scmp.eq.s32.totalorder %s31, 3
      %p406 = scmp.ne.s32.totalorder %s401, %s403
      %p407 = scmp.eq.s32.totalorder %s31, 0
      %p408 = por %p406, %p407
      %p409 = scmp.ne.s32.totalorder %s401, %s403
      %p410 = scmp.eq.s32.totalorder %s36, 3
      %p411 = por %p409, %p410
      %p412 = scmp.ne.s32.totalorder %s403, %s404
      %p413 = scmp.eq.s32.totalorder %s36, 0
      %p414 = por %p412, %p413
      %p415 = scmp.ne.s32.totalorder %s403, %s404
      %p416 = scmp.eq.s32.totalorder %s37, 3
      %p417 = por %p415, %p416
      %p419 = scmp.ne.s32.totalorder %s404, %s418
      %p420 = scmp.eq.s32.totalorder %s37, 0
      %p421 = por %p419, %p420
      %s423 = sadd.s32 %s422, 1
      %p426 = scmp.eq.s32.totalorder %s31, 3
      %p427 = scmp.ne.s32.totalorder %s422, %s424
      %p428 = scmp.eq.s32.totalorder %s31, 0
      %p429 = por %p427, %p428
      %p430 = scmp.ne.s32.totalorder %s422, %s424
      %p431 = scmp.eq.s32.totalorder %s36, 3
      %p432 = por %p430, %p431
      %p433 = scmp.ne.s32.totalorder %s424, %s425
      %p434 = scmp.eq.s32.totalorder %s36, 0
      %p435 = por %p433, %p434
      %p436 = scmp.ne.s32.totalorder %s424, %s425
      %p437 = scmp.eq.s32.totalorder %s37, 3
      %p438 = por %p436, %p437
      %p440 = scmp.ne.s32.totalorder %s425, %s439
      %p441 = scmp.eq.s32.totalorder %s37, 0
      %p442 = por %p440, %p441
      %s444 = sadd.s32 %s443, 1
      %p447 = scmp.eq.s32.totalorder %s31, 3
      %p448 = scmp.ne.s32.totalorder %s443, %s445
      %p449 = scmp.eq.s32.totalorder %s31, 0
      %p450 = por %p448, %p449
      %p451 = scmp.ne.s32.totalorder %s443, %s445
      %p452 = scmp.eq.s32.totalorder %s36, 3
      %p453 = por %p451, %p452
      %p454 = scmp.ne.s32.totalorder %s445, %s446
      %p455 = scmp.eq.s32.totalorder %s36, 0
      %p456 = por %p454, %p455
      %p457 = scmp.ne.s32.totalorder %s445, %s446
      %p458 = scmp.eq.s32.totalorder %s37, 3
      %p459 = por %p457, %p458
      %p461 = scmp.ne.s32.totalorder %s446, %s460
      %p462 = scmp.eq.s32.totalorder %s37, 0
      %p463 = por %p461, %p462
      %s465 = sadd.s32 %s464, 1
      %p468 = scmp.eq.s32.totalorder %s31, 3
      %p469 = scmp.ne.s32.totalorder %s464, %s466
      %p470 = scmp.eq.s32.totalorder %s31, 0
      %p471 = por %p469, %p470
      %p472 = scmp.ne.s32.totalorder %s464, %s466
      %p473 = scmp.eq.s32.totalorder %s36, 3
      %p474 = por %p472, %p473
      %p475 = scmp.ne.s32.totalorder %s466, %s467
      %p476 = scmp.eq.s32.totalorder %s36, 0
      %p477 = por %p475, %p476
      %p478 = scmp.ne.s32.totalorder %s466, %s467
      %p479 = scmp.eq.s32.totalorder %s37, 3
      %p480 = por %p478, %p479
      %p482 = scmp.ne.s32.totalorder %s467, %s481
      %p483 = scmp.eq.s32.totalorder %s37, 0
      %p484 = por %p482, %p483
      %s486 = sadd.s32 %s485, 1
      %p489 = scmp.eq.s32.totalorder %s31, 3
      %p490 = scmp.ne.s32.totalorder %s485, %s487
      %p491 = scmp.eq.s32.totalorder %s31, 0
      %p492 = por %p490, %p491
      %p493 = scmp.ne.s32.totalorder %s485, %s487
      %p494 = scmp.eq.s32.totalorder %s36, 3
      %p495 = por %p493, %p494
      %p496 = scmp.ne.s32.totalorder %s487, %s488
      %p497 = scmp.eq.s32.totalorder %s36, 0
      %p498 = por %p496, %p497
      %p499 = scmp.ne.s32.totalorder %s487, %s488
      %p500 = scmp.eq.s32.totalorder %s37, 3
      %p501 = por %p499, %p500
      %p503 = scmp.ne.s32.totalorder %s488, %s502
      %p504 = scmp.eq.s32.totalorder %s37, 0
      %p505 = por %p503, %p504
      %s506 = ssub.s32 %s31, %s38
      %p507 = scmp.eq.s32.totalorder %s506, 0
      %s509 = sadd.s32 %s508, 1
      %s510 = scalar_select %p507, %s508, %s509
      %p513 = pneg %p507
      %p514 = scmp.eq.s32.totalorder %s31, 3
      %p515 = por %p513, %p514
      %p516 = scmp.ne.s32.totalorder %s508, %s511
      %p517 = scmp.eq.s32.totalorder %s31, 0
      %p518 = por %p516, %p517
      %p519 = scmp.ne.s32.totalorder %s508, %s511
      %p520 = scmp.eq.s32.totalorder %s36, 3
      %p521 = por %p519, %p520
      %p522 = scmp.ne.s32.totalorder %s511, %s512
      %p523 = scmp.eq.s32.totalorder %s36, 0
      %p524 = por %p522, %p523
      %p525 = scmp.ne.s32.totalorder %s511, %s512
      %p526 = scmp.eq.s32.totalorder %s37, 3
      %p527 = por %p525, %p526
      %p529 = scmp.ne.s32.totalorder %s512, %s528
      %p530 = scmp.eq.s32.totalorder %s37, 0
      %p531 = por %p529, %p530
      %p532 = scmp.le.s32.totalorder 1, %s31
      %p533 = scmp.lt.s32.totalorder %s31, 5
      %p534 = pnand %p532, %p533
      %p535 = pneg %p534
      // Predicated region
      $region9: #{chestcnn_forward.1} parent=5 // pred_check
        _
      $region10: #{chestcnn_forward.1} parent=5 // pred_check_branch
        %537 = sbr.rel (%p534) target = $region12
      $region11: #{chestcnn_forward.1} parent=5 // pred_region
        %s538 = ssub.s32 %s31, 1
        // Predicated region
        $region13: #{chestcnn_forward.1} parent=11 // pred_check
          %p539 = pneg %p78
        $region14: #{chestcnn_forward.1} parent=11 // pred_check_branch
          %541 = sbr.rel (%p539) target = $region16
        $region15: #{chestcnn_forward.1} parent=11 // pred_region
          _
        $region16: #{chestcnn_forward.1} parent=11 // pred_fallthru
          _
        // Predicated region
        $region17: #{chestcnn_forward.1} parent=11 // pred_check
          %p542 = pneg %p99
        $region18: #{chestcnn_forward.1} parent=11 // pred_check_branch
          %544 = sbr.rel (%p542) target = $region20
        $region19: #{chestcnn_forward.1} parent=11 // pred_region
          _
        $region20: #{chestcnn_forward.1} parent=11 // pred_fallthru
          _
        // Predicated region
        $region21: #{chestcnn_forward.1} parent=11 // pred_check
          %p545 = pneg %p120
        $region22: #{chestcnn_forward.1} parent=11 // pred_check_branch
          %547 = sbr.rel (%p545) target = $region24
        $region23: #{chestcnn_forward.1} parent=11 // pred_region
          _
        $region24: #{chestcnn_forward.1} parent=11 // pred_fallthru
          _
        // Predicated region
        $region25: #{chestcnn_forward.1} parent=11 // pred_check
          %p548 = pneg %p141
        $region26: #{chestcnn_forward.1} parent=11 // pred_check_branch
          %550 = sbr.rel (%p548) target = $region28
        $region27: #{chestcnn_forward.1} parent=11 // pred_region
          _
        $region28: #{chestcnn_forward.1} parent=11 // pred_fallthru
          _
        // Predicated region
        $region29: #{chestcnn_forward.1} parent=11 // pred_check
          %p551 = pneg %p162
        $region30: #{chestcnn_forward.1} parent=11 // pred_check_branch
          %553 = sbr.rel (%p551) target = $region32
        $region31: #{chestcnn_forward.1} parent=11 // pred_region
          _
        $region32: #{chestcnn_forward.1} parent=11 // pred_fallthru
          _
        // Predicated region
        $region33: #{chestcnn_forward.1} parent=11 // pred_check
          %p554 = pneg %p183
        $region34: #{chestcnn_forward.1} parent=11 // pred_check_branch
          %556 = sbr.rel (%p554) target = $region36
        $region35: #{chestcnn_forward.1} parent=11 // pred_region
          _
        $region36: #{chestcnn_forward.1} parent=11 // pred_fallthru
          _
        // Predicated region
        $region37: #{chestcnn_forward.1} parent=11 // pred_check
          %p557 = pneg %p204
        $region38: #{chestcnn_forward.1} parent=11 // pred_check_branch
          %559 = sbr.rel (%p557) target = $region40
        $region39: #{chestcnn_forward.1} parent=11 // pred_region
          _
        $region40: #{chestcnn_forward.1} parent=11 // pred_fallthru
          _
        // Predicated region
        $region41: #{chestcnn_forward.1} parent=11 // pred_check
          %p560 = pneg %p225
        $region42: #{chestcnn_forward.1} parent=11 // pred_check_branch
          %562 = sbr.rel (%p560) target = $region44
        $region43: #{chestcnn_forward.1} parent=11 // pred_region
          _
        $region44: #{chestcnn_forward.1} parent=11 // pred_fallthru
          _
        // Predicated region
        $region45: #{chestcnn_forward.1} parent=11 // pred_check
          %p563 = pneg %p246
        $region46: #{chestcnn_forward.1} parent=11 // pred_check_branch
          %565 = sbr.rel (%p563) target = $region48
        $region47: #{chestcnn_forward.1} parent=11 // pred_region
          _
        $region48: #{chestcnn_forward.1} parent=11 // pred_fallthru
          _
        // Predicated region
        $region49: #{chestcnn_forward.1} parent=11 // pred_check
          %p566 = pneg %p267
        $region50: #{chestcnn_forward.1} parent=11 // pred_check_branch
          %568 = sbr.rel (%p566) target = $region52
        $region51: #{chestcnn_forward.1} parent=11 // pred_region
          _
        $region52: #{chestcnn_forward.1} parent=11 // pred_fallthru
          _
        // Predicated region
        $region53: #{chestcnn_forward.1} parent=11 // pred_check
          %p569 = pneg %p288
        $region54: #{chestcnn_forward.1} parent=11 // pred_check_branch
          %571 = sbr.rel (%p569) target = $region56
        $region55: #{chestcnn_forward.1} parent=11 // pred_region
          _
        $region56: #{chestcnn_forward.1} parent=11 // pred_fallthru
          _
        // Predicated region
        $region57: #{chestcnn_forward.1} parent=11 // pred_check
          %p572 = pneg %p309
        $region58: #{chestcnn_forward.1} parent=11 // pred_check_branch
          %574 = sbr.rel (%p572) target = $region60
        $region59: #{chestcnn_forward.1} parent=11 // pred_region
          _
        $region60: #{chestcnn_forward.1} parent=11 // pred_fallthru
          _
        // Predicated region
        $region61: #{chestcnn_forward.1} parent=11 // pred_check
          %p575 = pneg %p330
        $region62: #{chestcnn_forward.1} parent=11 // pred_check_branch
          %577 = sbr.rel (%p575) target = $region64
        $region63: #{chestcnn_forward.1} parent=11 // pred_region
          _
        $region64: #{chestcnn_forward.1} parent=11 // pred_fallthru
          _
        // Predicated region
        $region65: #{chestcnn_forward.1} parent=11 // pred_check
          %p578 = pneg %p351
        $region66: #{chestcnn_forward.1} parent=11 // pred_check_branch
          %580 = sbr.rel (%p578) target = $region68
        $region67: #{chestcnn_forward.1} parent=11 // pred_region
          _
        $region68: #{chestcnn_forward.1} parent=11 // pred_fallthru
          _
        // Predicated region
        $region69: #{chestcnn_forward.1} parent=11 // pred_check
          %p581 = pneg %p372
        $region70: #{chestcnn_forward.1} parent=11 // pred_check_branch
          %583 = sbr.rel (%p581) target = $region72
        $region71: #{chestcnn_forward.1} parent=11 // pred_region
          _
        $region72: #{chestcnn_forward.1} parent=11 // pred_fallthru
          _
        // Predicated region
        $region73: #{chestcnn_forward.1} parent=11 // pred_check
          %p584 = pneg %p393
        $region74: #{chestcnn_forward.1} parent=11 // pred_check_branch
          %586 = sbr.rel (%p584) target = $region76
        $region75: #{chestcnn_forward.1} parent=11 // pred_region
          _
        $region76: #{chestcnn_forward.1} parent=11 // pred_fallthru
          _
        // Predicated region
        $region77: #{chestcnn_forward.1} parent=11 // pred_check
          %p587 = pneg %p414
        $region78: #{chestcnn_forward.1} parent=11 // pred_check_branch
          %589 = sbr.rel (%p587) target = $region80
        $region79: #{chestcnn_forward.1} parent=11 // pred_region
          _
        $region80: #{chestcnn_forward.1} parent=11 // pred_fallthru
          _
        // Predicated region
        $region81: #{chestcnn_forward.1} parent=11 // pred_check
          %p590 = pneg %p435
        $region82: #{chestcnn_forward.1} parent=11 // pred_check_branch
          %592 = sbr.rel (%p590) target = $region84
        $region83: #{chestcnn_forward.1} parent=11 // pred_region
          _
        $region84: #{chestcnn_forward.1} parent=11 // pred_fallthru
          _
        // Predicated region
        $region85: #{chestcnn_forward.1} parent=11 // pred_check
          %p593 = pneg %p456
        $region86: #{chestcnn_forward.1} parent=11 // pred_check_branch
          %595 = sbr.rel (%p593) target = $region88
        $region87: #{chestcnn_forward.1} parent=11 // pred_region
          _
        $region88: #{chestcnn_forward.1} parent=11 // pred_fallthru
          _
        // Predicated region
        $region89: #{chestcnn_forward.1} parent=11 // pred_check
          %p596 = pneg %p477
        $region90: #{chestcnn_forward.1} parent=11 // pred_check_branch
          %598 = sbr.rel (%p596) target = $region92
        $region91: #{chestcnn_forward.1} parent=11 // pred_region
          _
        $region92: #{chestcnn_forward.1} parent=11 // pred_fallthru
          _
        // Predicated region
        $region93: #{chestcnn_forward.1} parent=11 // pred_check
          %p599 = pneg %p498
        $region94: #{chestcnn_forward.1} parent=11 // pred_check_branch
          %601 = sbr.rel (%p599) target = $region96
        $region95: #{chestcnn_forward.1} parent=11 // pred_region
          _
        $region96: #{chestcnn_forward.1} parent=11 // pred_fallthru
          _
      $region12: #{chestcnn_forward.1} parent=5 // pred_fallthru
        _
      %p602 = scmp.lt.s32.totalorder %s31, 4
      // Predicated region
      $region97: #{chestcnn_forward.1} parent=5 // pred_check
        %p603 = pneg %p602
      $region98: #{chestcnn_forward.1} parent=5 // pred_check_branch
        %605 = sbr.rel (%p603) target = $region100
      $region99: #{chestcnn_forward.1} parent=5 // pred_region
        // Predicated region
        $region101: #{chestcnn_forward.1} parent=99 // pred_check
          %p606 = pneg %p51
        $region102: #{chestcnn_forward.1} parent=99 // pred_check_branch
          %608 = sbr.rel (%p606) target = $region104
        $region103: #{chestcnn_forward.1} parent=99 // pred_region
          %p609 = scmp.lt.s32.totalorder %s31, 3
          %s610 = scalar_select %p609, %s31, 3
          %s611 = smul.addr %s610, 104
          %s612 = smul.addr %s611, 8
          %s613 = scalar_lea.vmem %s0, %s612
        $region104: #{chestcnn_forward.1} parent=99 // pred_fallthru
          _
      $region100: #{chestcnn_forward.1} parent=5 // pred_fallthru
        _
      %p614 = scmp.le.s32.totalorder 1, %s31
      %p615 = scmp.lt.s32.totalorder %s31, 5
      %p616 = pnand %p614, %p615
      %p617 = pneg %p616
      // Predicated region
      $region105: #{chestcnn_forward.1} parent=5 // pred_check
        _
      $region106: #{chestcnn_forward.1} parent=5 // pred_check_branch
        %619 = sbr.rel (%p616) target = $region108
      $region107: #{chestcnn_forward.1} parent=5 // pred_region
        %s620 = ssub.s32 %s31, 1
        %p621 = scmp.lt.s32.totalorder %s36, 3
        %s622 = scalar_select %p621, %s36, 3
        %s623 = smul.addr %s622, 104
        %s624 = smul.addr %s623, 8
        %s625 = scalar_lea.vmem %s0, %s624
        %p626 = pneg %p57
        %p627 = pneg %p54
        %p628 = pneg %p78
        %p629 = pneg %p75
        %p630 = pneg %p99
        %p631 = pneg %p96
        %p632 = pneg %p120
        %p633 = pneg %p117
        %p634 = pneg %p141
        %p635 = pneg %p138
        %p636 = pneg %p162
        %p637 = pneg %p159
        %p638 = pneg %p183
        %p639 = pneg %p180
        %p640 = pneg %p204
        %p641 = pneg %p201
        %p642 = pneg %p225
        %p643 = pneg %p222
        %p644 = pneg %p246
        %p645 = pneg %p243
        %p646 = pneg %p267
        %p647 = pneg %p264
        %p648 = pneg %p288
        %p649 = pneg %p285
        %p650 = pneg %p309
        %p651 = pneg %p306
        %p652 = pneg %p330
        %p653 = pneg %p327
        %p654 = pneg %p351
        %p655 = pneg %p348
        %p656 = pneg %p372
        %p657 = pneg %p369
        %p658 = pneg %p393
        %p659 = pneg %p390
        %p660 = pneg %p414
        %p661 = pneg %p411
        %p662 = pneg %p435
        %p663 = pneg %p432
        %p664 = pneg %p456
        %p665 = pneg %p453
        %p666 = pneg %p477
        %p667 = pneg %p474
        %p668 = pneg %p498
        %p669 = pneg %p495
        %p670 = pneg %p524
        %p671 = pneg %p521
        %s672 = sand.u32 %s511, 1
        %s673 = scalar_lea.sflag [#allocation13], %s672
        %s674 = sand.u32 %s511, 1
        %s675 = scalar_lea.vmem [#allocation12], %s674
        %p676 = scmp.lt.s32.totalorder %s36, 3
        %s677 = scalar_select %p676, %s36, 3
        %s678 = smul.addr %s677, 104
        %s679 = smul.addr %s678, 8
        %s680 = scalar_lea.vmem %s0, %s679
        %v681 = vld [vmem:[%s2] sm:$0x1]
        %v682 = vld [vmem:[%s3] sm:$0x1]
        loop: start=0, step=1, limit=26
        $region109: #{chestcnn_forward.1} parent=107 // loop_pre_header
          _
        $region110: #{chestcnn_forward.1} parent=107 // loop_header
          %s684 = sphi 0, %s688
          %p685 = scmp.ge.s32.totalorder %s684, 26
        $region111: #{chestcnn_forward.1} parent=107 // loop_header_branch
          %687 = sbr.rel (%p685) target = $region115
        $region112: #{chestcnn_forward.1} parent=107 // loop_body
          %s689 = smul.u32 %s684, 32
          %s690 = scalar_lea.vmem %s680, %s689
          %v691 = vld [vmem:[%s690] sm:$0xff]
          %v692 = vld [vmem:[%s690 + $0x8] sm:$0xff]
          %v693 = vld [vmem:[%s690 + $0x10] sm:$0xff]
          %v694 = vld [vmem:[%s690 + $0x18] sm:$0x3]
          %v695 = vld [vmem:[%s1] sm:$0xff]
          %v696 = vld [vmem:[%s1 + $0x8] sm:$0x1]
          %vm697 = vcmask 72704
          %v699 = vsel %vm697, %v691, 0
          %v702 = vsel %vm697, %v692, 0
          %v705 = vsel %vm697, %v693, 0
          %v708 = vsel %vm697, %v694, 0
          %vm710 = vcmask 1040384
          %v712 = vsel %vm710, %v696, 0
          %714 = vmatprep.subr.mxu0 0.0
          %715 = vmatpush1.msra.mxu0 0.0
          %716 = vmatprep.subr.mxu0 0.0
          %717 = vmatpush1.msra.mxu0 0.0
          %718 = vmatprep.subr.mxu0 0.0
          %719 = vmatpush1.msra.mxu0 0.0
          %720 = vmatprep.subr.mxu0 0.0
          %721 = vmatpush1.msra.mxu0 0.0
          %722 = vmatprep.subr.mxu0 0.0
          %723 = vmatpush1.msra.mxu0 0.0
          %724 = vmatprep.subr.mxu0 0.0
          %725 = vmatpush1.msra.mxu0 0.0
          %726 = vmatprep.subr.mxu0 0.0
          %727 = vmatpush1.msra.mxu0 0.0
          %728 = vmatprep.subr.mxu0 0.0
          %729 = vmatpush1.msra.mxu0 0.0
          %730 = vmatprep.subr.mxu0 0.0
          %731 = vmatpush1.msra.mxu0 0.0
          %732 = vmatprep.subr.mxu0 0.0
          %733 = vmatpush1.msra.mxu0 0.0
          %734 = vmatprep.subr.mxu0 0.0
          %735 = vmatpush1.msra.mxu0 0.0
          %736 = vmatprep.subr.mxu0 0.0
          %737 = vmatpush1.msra.mxu0 0.0
          %738 = vmatprep.subr.mxu0 0.0
          %739 = vmatpush1.msra.mxu0 0.0
          %740 = vmatprep.subr.mxu0 0.0
          %741 = vmatpush1.msra.mxu0 0.0
          %742 = vmatprep.subr.mxu0 0.0
          %743 = vmatpush1.msra.mxu0 %v712
          %744 = vmatprep.subr.mxu0 0.0
          %745 = vmatpush1.msra.mxu0 %v695
          %746 = vmatprep.subr.mxu0 0.0
          %747 = vmatpush2.msra.mxu0 0.0
          %748 = vmatprep.subr.mxu0 0.0
          %749 = vmatpush2.msra.mxu0 0.0
          %750 = vmatprep.subr.mxu0 0.0
          %751 = vmatpush2.msra.mxu0 0.0
          %752 = vmatprep.subr.mxu0 0.0
          %753 = vmatpush2.msra.mxu0 0.0
          %754 = vmatprep.subr.mxu0 0.0
          %755 = vmatpush2.msra.mxu0 0.0
          %756 = vmatprep.subr.mxu0 0.0
          %757 = vmatpush2.msra.mxu0 0.0
          %758 = vmatprep.subr.mxu0 0.0
          %759 = vmatpush2.msra.mxu0 0.0
          %760 = vmatprep.subr.mxu0 0.0
          %761 = vmatpush2.msra.mxu0 0.0
          %762 = vmatprep.subr.mxu0 0.0
          %763 = vmatpush2.msra.mxu0 0.0
          %764 = vmatprep.subr.mxu0 0.0
          %765 = vmatpush2.msra.mxu0 0.0
          %766 = vmatprep.subr.mxu0 0.0
          %767 = vmatpush2.msra.mxu0 0.0
          %768 = vmatprep.subr.mxu0 0.0
          %769 = vmatpush2.msra.mxu0 0.0
          %770 = vmatprep.subr.mxu0 0.0
          %771 = vmatpush2.msra.mxu0 0.0
          %772 = vmatprep.subr.mxu0 0.0
          %773 = vmatpush2.msra.mxu0 0.0
          %774 = vmatprep.subr.mxu0 0.0
          %775 = vmatpush2.msra.mxu0 0.0
          %776 = vmatprep.subr.mxu0 0.0
          %777 = vmatpush2.msra.mxu0 0.0
          %778 = vmatprep.mubr.f32.mxu0 0.0
          %779 = vmatmul.mubr.f32.gmra.mxu0 %v699
          %v780 = vpop.f32.mrf.mxu0
          %v781 = vadd.f32 0.0, %v780
          %v782 = vpop.f32.mrf.mxu0
          %783 = vmatprep.mubr.f32.mxu0 0.0
          %784 = vmatmul.mubr.f32.gmra.mxu0 %v702
          %v785 = vpop.f32.mrf.mxu0
          %v786 = vadd.f32 0.0, %v785
          %v787 = vpop.f32.mrf.mxu0
          %788 = vmatprep.mubr.f32.mxu0 0.0
          %789 = vmatmul.mubr.f32.gmra.mxu0 %v705
          %v790 = vpop.f32.mrf.mxu0
          %v791 = vadd.f32 0.0, %v790
          %v792 = vpop.f32.mrf.mxu0
          %793 = vmatprep.mubr.f32.mxu0 0.0
          %794 = vmatmul.mubr.f32.gmra.mxu0 %v708
          %v795 = vpop.f32.mrf.mxu0
          %v796 = vadd.f32 0.0, %v795
          %v797 = vpop.f32.mrf.mxu0
          %798 = vdwg.mxu0
          %v800 = vlaneseq
          %v801 = vshrl.u32 %v800, 7
          %v802 = vsub.s32 0, %v801
          %v803 = vrot.slane %v681, %v802
          %v805 = vmul.f32 %v781, %v803
          %v806 = vmul.f32 %v786, %v803
          %v807 = vmul.f32 %v791, %v803
          %v808 = vmul.f32 %v796, %v803
          %v810 = vlaneseq
          %v811 = vshrl.u32 %v810, 7
          %v812 = vsub.s32 0, %v811
          %v813 = vrot.slane %v682, %v812
          %v815 = vadd.f32 %v805, %v813
          %v816 = vadd.f32 %v806, %v813
          %v817 = vadd.f32 %v807, %v813
          %v818 = vadd.f32 %v808, %v813
          %v819 = vmax.f32 %v815, 0.0
          %v820 = vmax.f32 %v816, 0.0
          %v821 = vmax.f32 %v817, 0.0
          %v822 = vmax.f32 %v818, 0.0
          %s823 = scalar_lea.vmem [#allocation2], %s689
          %vm824 = vcmask 130048
          %825 = vst.msk [vmem:[%s823] sm:$0xff] %vm824, %v819
          %826 = vst.msk [vmem:[%s823 + $0x8] sm:$0xff] %vm824, %v820
          %827 = vst.msk [vmem:[%s823 + $0x10] sm:$0xff] %vm824, %v821
          %vm828 = vcmask 123904
          %829 = vst.msk [vmem:[%s823 + $0x18] sm:$0x3] %vm828, %v822
        $region113: #{chestcnn_forward.1} parent=107 // loop_footer
          %s688 = sadd.s32 1, %s684
        $region114: #{chestcnn_forward.1} parent=107 // loop_footer_branch
          %683 = sbr.rel target = $region110
        $region115: #{chestcnn_forward.1} parent=107 // loop_exit
          _
        %v830 = vld [vmem:[%s5] sm:$0x1]
        %v831 = vld [vmem:[%s6] sm:$0x1]
        loop: start=0, step=1, limit=24
        $region116: #{chestcnn_forward.1} parent=107 // loop_pre_header
          _
        $region117: #{chestcnn_forward.1} parent=107 // loop_header
          %s833 = sphi 0, %s837
          %p834 = scmp.ge.s32.totalorder %s833, 24
        $region118: #{chestcnn_forward.1} parent=107 // loop_header_branch
          %836 = sbr.rel (%p834) target = $region122
        $region119: #{chestcnn_forward.1} parent=107 // loop_body
          %s838 = smul.u32 %s833, 32
          %s839 = scalar_lea.vmem [#allocation2], %s838
          %v840 = vld [vmem:[%s839] sm:$0xff]
          %v841 = vld [vmem:[%s839 + $0x8] sm:$0xff]
          %v842 = vld [vmem:[%s839 + $0x10] sm:$0xff]
          %v843 = vld [vmem:[%s839 + $0x18] sm:$0x3]
          %v844 = vld [vmem:[%s4] sm:$0xff]
          %v845 = vld [vmem:[%s4 + $0x8] sm:$0xff]
          %s846 = scalar_lea.vmem %s4, 16
          %v847 = vld [vmem:[%s846] sm:$0xff]
          %v848 = vld [vmem:[%s846 + $0x8] sm:$0xff]
          %vm853 = vcmask 1046528
          %v854 = vrot.slane %v840, 1
          %v855 = vrot.slane %v841, 1
          %v856 = vsel %vm853, %v854, %v855
          %v857 = vrot.slane %v842, 1
          %v858 = vsel %vm853, %v855, %v857
          %v859 = vrot.slane %v843, 1
          %v860 = vsel %vm853, %v857, %v859
          %vm861 = vcmask 130048
          %v862 = vsel %vm861, %v856, 0
          %v864 = vsel %vm861, %v858, 0
          %v866 = vsel %vm861, %v860, 0
          %868 = vmatprep.subr.mxu0 0.0
          %869 = vmatpush1.msra.mxu0 0.0
          %870 = vmatprep.subr.mxu0 0.0
          %871 = vmatpush1.msra.mxu0 0.0
          %872 = vmatprep.subr.mxu0 0.0
          %873 = vmatpush1.msra.mxu0 0.0
          %874 = vmatprep.subr.mxu0 0.0
          %875 = vmatpush1.msra.mxu0 0.0
          %876 = vmatprep.subr.mxu0 0.0
          %877 = vmatpush1.msra.mxu0 0.0
          %878 = vmatprep.subr.mxu0 0.0
          %879 = vmatpush1.msra.mxu0 0.0
          %880 = vmatprep.subr.mxu0 0.0
          %881 = vmatpush1.msra.mxu0 0.0
          %882 = vmatprep.subr.mxu0 0.0
          %883 = vmatpush1.msra.mxu0 0.0
          %884 = vmatprep.subr.mxu0 0.0
          %885 = vmatpush1.msra.mxu0 0.0
          %886 = vmatprep.subr.mxu0 0.0
          %887 = vmatpush1.msra.mxu0 0.0
          %888 = vmatprep.subr.mxu0 0.0
          %889 = vmatpush1.msra.mxu0 0.0
          %890 = vmatprep.subr.mxu0 0.0
          %891 = vmatpush1.msra.mxu0 0.0
          %892 = vmatprep.subr.mxu0 0.0
          %893 = vmatpush1.msra.mxu0 0.0
          %894 = vmatprep.subr.mxu0 0.0
          %895 = vmatpush1.msra.mxu0 0.0
          %896 = vmatprep.subr.mxu0 0.0
          %897 = vmatpush1.msra.mxu0 %v848
          %898 = vmatprep.subr.mxu0 0.0
          %899 = vmatpush1.msra.mxu0 %v847
          %900 = vmatprep.subr.mxu0 0.0
          %901 = vmatpush2.msra.mxu0 0.0
          %902 = vmatprep.subr.mxu0 0.0
          %903 = vmatpush2.msra.mxu0 0.0
          %904 = vmatprep.subr.mxu0 0.0
          %905 = vmatpush2.msra.mxu0 0.0
          %906 = vmatprep.subr.mxu0 0.0
          %907 = vmatpush2.msra.mxu0 0.0
          %908 = vmatprep.subr.mxu0 0.0
          %909 = vmatpush2.msra.mxu0 0.0
          %910 = vmatprep.subr.mxu0 0.0
          %911 = vmatpush2.msra.mxu0 0.0
          %912 = vmatprep.subr.mxu0 0.0
          %913 = vmatpush2.msra.mxu0 0.0
          %914 = vmatprep.subr.mxu0 0.0
          %915 = vmatpush2.msra.mxu0 0.0
          %916 = vmatprep.subr.mxu0 0.0
          %917 = vmatpush2.msra.mxu0 0.0
          %918 = vmatprep.subr.mxu0 0.0
          %919 = vmatpush2.msra.mxu0 0.0
          %920 = vmatprep.subr.mxu0 0.0
          %921 = vmatpush2.msra.mxu0 0.0
          %922 = vmatprep.subr.mxu0 0.0
          %923 = vmatpush2.msra.mxu0 0.0
          %924 = vmatprep.subr.mxu0 0.0
          %925 = vmatpush2.msra.mxu0 0.0
          %926 = vmatprep.subr.mxu0 0.0
          %927 = vmatpush2.msra.mxu0 0.0
          %928 = vmatprep.subr.mxu0 0.0
          %929 = vmatpush2.msra.mxu0 0.0
          %930 = vmatprep.subr.mxu0 0.0
          %931 = vmatpush2.msra.mxu0 0.0
          %932 = vmatprep.mubr.f32.mxu0 0.0
          %933 = vmatmul.mubr.f32.gmra.mxu0 %v862
          %v934 = vpop.f32.mrf.mxu0
          %v935 = vadd.f32 0.0, %v934
          %v936 = vpop.f32.mrf.mxu0
          %937 = vmatprep.mubr.f32.mxu0 0.0
          %938 = vmatmul.mubr.f32.gmra.mxu0 %v864
          %v939 = vpop.f32.mrf.mxu0
          %v940 = vadd.f32 0.0, %v939
          %v941 = vpop.f32.mrf.mxu0
          %942 = vmatprep.mubr.f32.mxu0 0.0
          %943 = vmatmul.mubr.f32.gmra.mxu0 %v866
          %v944 = vpop.f32.mrf.mxu0
          %v945 = vadd.f32 0.0, %v944
          %v946 = vpop.f32.mrf.mxu0
          %947 = vdwg.mxu0
          %v948 = vsel %vm861, %v840, 0
          %v950 = vsel %vm861, %v841, 0
          %v952 = vsel %vm861, %v842, 0
          %954 = vmatprep.subr.mxu0 0.0
          %955 = vmatpush1.msra.mxu0 0.0
          %956 = vmatprep.subr.mxu0 0.0
          %957 = vmatpush1.msra.mxu0 0.0
          %958 = vmatprep.subr.mxu0 0.0
          %959 = vmatpush1.msra.mxu0 0.0
          %960 = vmatprep.subr.mxu0 0.0
          %961 = vmatpush1.msra.mxu0 0.0
          %962 = vmatprep.subr.mxu0 0.0
          %963 = vmatpush1.msra.mxu0 0.0
          %964 = vmatprep.subr.mxu0 0.0
          %965 = vmatpush1.msra.mxu0 0.0
          %966 = vmatprep.subr.mxu0 0.0
          %967 = vmatpush1.msra.mxu0 0.0
          %968 = vmatprep.subr.mxu0 0.0
          %969 = vmatpush1.msra.mxu0 0.0
          %970 = vmatprep.subr.mxu0 0.0
          %971 = vmatpush1.msra.mxu0 0.0
          %972 = vmatprep.subr.mxu0 0.0
          %973 = vmatpush1.msra.mxu0 0.0
          %974 = vmatprep.subr.mxu0 0.0
          %975 = vmatpush1.msra.mxu0 0.0
          %976 = vmatprep.subr.mxu0 0.0
          %977 = vmatpush1.msra.mxu0 0.0
          %978 = vmatprep.subr.mxu0 0.0
          %979 = vmatpush1.msra.mxu0 0.0
          %980 = vmatprep.subr.mxu0 0.0
          %981 = vmatpush1.msra.mxu0 0.0
          %982 = vmatprep.subr.mxu0 0.0
          %983 = vmatpush1.msra.mxu0 %v845
          %984 = vmatprep.subr.mxu0 0.0
          %985 = vmatpush1.msra.mxu0 %v844
          %986 = vmatprep.subr.mxu0 0.0
          %987 = vmatpush2.msra.mxu0 0.0
          %988 = vmatprep.subr.mxu0 0.0
          %989 = vmatpush2.msra.mxu0 0.0
          %990 = vmatprep.subr.mxu0 0.0
          %991 = vmatpush2.msra.mxu0 0.0
          %992 = vmatprep.subr.mxu0 0.0
          %993 = vmatpush2.msra.mxu0 0.0
          %994 = vmatprep.subr.mxu0 0.0
          %995 = vmatpush2.msra.mxu0 0.0
          %996 = vmatprep.subr.mxu0 0.0
          %997 = vmatpush2.msra.mxu0 0.0
          %998 = vmatprep.subr.mxu0 0.0
          %999 = vmatpush2.msra.mxu0 0.0
          %1000 = vmatprep.subr.mxu0 0.0
          %1001 = vmatpush2.msra.mxu0 0.0
          %1002 = vmatprep.subr.mxu0 0.0
          %1003 = vmatpush2.msra.mxu0 0.0
          %1004 = vmatprep.subr.mxu0 0.0
          %1005 = vmatpush2.msra.mxu0 0.0
          %1006 = vmatprep.subr.mxu0 0.0
          %1007 = vmatpush2.msra.mxu0 0.0
          %1008 = vmatprep.subr.mxu0 0.0
          %1009 = vmatpush2.msra.mxu0 0.0
          %1010 = vmatprep.subr.mxu0 0.0
          %1011 = vmatpush2.msra.mxu0 0.0
          %1012 = vmatprep.subr.mxu0 0.0
          %1013 = vmatpush2.msra.mxu0 0.0
          %1014 = vmatprep.subr.mxu0 0.0
          %1015 = vmatpush2.msra.mxu0 0.0
          %1016 = vmatprep.subr.mxu0 0.0
          %1017 = vmatpush2.msra.mxu0 0.0
          %1018 = vmatprep.mubr.f32.mxu0 0.0
          %1019 = vmatmul.mubr.f32.gmra.mxu0 %v948
          %v1020 = vpop.f32.mrf.mxu0
          %v1021 = vadd.f32 %v935, %v1020
          %v1022 = vpop.f32.mrf.mxu0
          %1023 = vmatprep.mubr.f32.mxu0 0.0
          %1024 = vmatmul.mubr.f32.gmra.mxu0 %v950
          %v1025 = vpop.f32.mrf.mxu0
          %v1026 = vadd.f32 %v940, %v1025
          %v1027 = vpop.f32.mrf.mxu0
          %1028 = vmatprep.mubr.f32.mxu0 0.0
          %1029 = vmatmul.mubr.f32.gmra.mxu0 %v952
          %v1030 = vpop.f32.mrf.mxu0
          %v1031 = vadd.f32 %v945, %v1030
          %v1032 = vpop.f32.mrf.mxu0
          %1033 = vdwg.mxu0
          %s1034 = scalar_lea.vmem %s4, 32
          %v1035 = vld [vmem:[%s1034] sm:$0xff]
          %v1036 = vld [vmem:[%s1034 + $0x8] sm:$0xff]
          %vm1037 = vcmask 1045504
          %v1038 = vrot.slane %v840, 2
          %v1039 = vrot.slane %v841, 2
          %v1040 = vsel %vm1037, %v1038, %v1039
          %v1041 = vrot.slane %v842, 2
          %v1042 = vsel %vm1037, %v1039, %v1041
          %v1043 = vrot.slane %v843, 2
          %v1044 = vsel %vm1037, %v1041, %v1043
          %v1045 = vsel %vm861, %v1040, 0
          %v1047 = vsel %vm861, %v1042, 0
          %v1049 = vsel %vm861, %v1044, 0
          %1051 = vmatprep.subr.mxu0 0.0
          %1052 = vmatpush1.msra.mxu0 0.0
          %1053 = vmatprep.subr.mxu0 0.0
          %1054 = vmatpush1.msra.mxu0 0.0
          %1055 = vmatprep.subr.mxu0 0.0
          %1056 = vmatpush1.msra.mxu0 0.0
          %1057 = vmatprep.subr.mxu0 0.0
          %1058 = vmatpush1.msra.mxu0 0.0
          %1059 = vmatprep.subr.mxu0 0.0
          %1060 = vmatpush1.msra.mxu0 0.0
          %1061 = vmatprep.subr.mxu0 0.0
          %1062 = vmatpush1.msra.mxu0 0.0
          %1063 = vmatprep.subr.mxu0 0.0
          %1064 = vmatpush1.msra.mxu0 0.0
          %1065 = vmatprep.subr.mxu0 0.0
          %1066 = vmatpush1.msra.mxu0 0.0
          %1067 = vmatprep.subr.mxu0 0.0
          %1068 = vmatpush1.msra.mxu0 0.0
          %1069 = vmatprep.subr.mxu0 0.0
          %1070 = vmatpush1.msra.mxu0 0.0
          %1071 = vmatprep.subr.mxu0 0.0
          %1072 = vmatpush1.msra.mxu0 0.0
          %1073 = vmatprep.subr.mxu0 0.0
          %1074 = vmatpush1.msra.mxu0 0.0
          %1075 = vmatprep.subr.mxu0 0.0
          %1076 = vmatpush1.msra.mxu0 0.0
          %1077 = vmatprep.subr.mxu0 0.0
          %1078 = vmatpush1.msra.mxu0 0.0
          %1079 = vmatprep.subr.mxu0 0.0
          %1080 = vmatpush1.msra.mxu0 %v1036
          %1081 = vmatprep.subr.mxu0 0.0
          %1082 = vmatpush1.msra.mxu0 %v1035
          %1083 = vmatprep.subr.mxu0 0.0
          %1084 = vmatpush2.msra.mxu0 0.0
          %1085 = vmatprep.subr.mxu0 0.0
          %1086 = vmatpush2.msra.mxu0 0.0
          %1087 = vmatprep.subr.mxu0 0.0
          %1088 = vmatpush2.msra.mxu0 0.0
          %1089 = vmatprep.subr.mxu0 0.0
          %1090 = vmatpush2.msra.mxu0 0.0
          %1091 = vmatprep.subr.mxu0 0.0
          %1092 = vmatpush2.msra.mxu0 0.0
          %1093 = vmatprep.subr.mxu0 0.0
          %1094 = vmatpush2.msra.mxu0 0.0
          %1095 = vmatprep.subr.mxu0 0.0
          %1096 = vmatpush2.msra.mxu0 0.0
          %1097 = vmatprep.subr.mxu0 0.0
          %1098 = vmatpush2.msra.mxu0 0.0
          %1099 = vmatprep.subr.mxu0 0.0
          %1100 = vmatpush2.msra.mxu0 0.0
          %1101 = vmatprep.subr.mxu0 0.0
          %1102 = vmatpush2.msra.mxu0 0.0
          %1103 = vmatprep.subr.mxu0 0.0
          %1104 = vmatpush2.msra.mxu0 0.0
          %1105 = vmatprep.subr.mxu0 0.0
          %1106 = vmatpush2.msra.mxu0 0.0
          %1107 = vmatprep.subr.mxu0 0.0
          %1108 = vmatpush2.msra.mxu0 0.0
          %1109 = vmatprep.subr.mxu0 0.0
          %1110 = vmatpush2.msra.mxu0 0.0
          %1111 = vmatprep.subr.mxu0 0.0
          %1112 = vmatpush2.msra.mxu0 0.0
          %1113 = vmatprep.subr.mxu0 0.0
          %1114 = vmatpush2.msra.mxu0 0.0
          %1115 = vmatprep.mubr.f32.mxu0 0.0
          %1116 = vmatmul.mubr.f32.gmra.mxu0 %v1045
          %v1117 = vpop.f32.mrf.mxu0
          %v1118 = vadd.f32 0.0, %v1117
          %v1119 = vpop.f32.mrf.mxu0
          %1120 = vmatprep.mubr.f32.mxu0 0.0
          %1121 = vmatmul.mubr.f32.gmra.mxu0 %v1047
          %v1122 = vpop.f32.mrf.mxu0
          %v1123 = vadd.f32 0.0, %v1122
          %v1124 = vpop.f32.mrf.mxu0
          %1125 = vmatprep.mubr.f32.mxu0 0.0
          %1126 = vmatmul.mubr.f32.gmra.mxu0 %v1049
          %v1127 = vpop.f32.mrf.mxu0
          %v1128 = vadd.f32 0.0, %v1127
          %v1129 = vpop.f32.mrf.mxu0
          %1130 = vdwg.mxu0
          %v1131 = vadd.f32 %v1021, %v1118
          %v1132 = vadd.f32 %v1026, %v1123
          %v1133 = vadd.f32 %v1031, %v1128
          %s1134 = sadd.s32 %s833, 1
          %s1135 = smul.u32 %s1134, 32
          %s1136 = scalar_lea.vmem [#allocation2], %s1135
          %v1137 = vld [vmem:[%s1136] sm:$0xff]
          %v1138 = vld [vmem:[%s1136 + $0x8] sm:$0xff]
          %v1139 = vld [vmem:[%s1136 + $0x10] sm:$0xff]
          %v1140 = vld [vmem:[%s1136 + $0x18] sm:$0x3]
          %s1141 = scalar_lea.vmem %s4, 48
          %v1142 = vld [vmem:[%s1141] sm:$0xff]
          %v1143 = vld [vmem:[%s1141 + $0x8] sm:$0xff]
          %v1145 = vsel %vm861, %v1137, 0
          %v1148 = vsel %vm861, %v1138, 0
          %v1151 = vsel %vm861, %v1139, 0
          %1153 = vmatprep.subr.mxu0 0.0
          %1154 = vmatpush1.msra.mxu0 0.0
          %1155 = vmatprep.subr.mxu0 0.0
          %1156 = vmatpush1.msra.mxu0 0.0
          %1157 = vmatprep.subr.mxu0 0.0
          %1158 = vmatpush1.msra.mxu0 0.0
          %1159 = vmatprep.subr.mxu0 0.0
          %1160 = vmatpush1.msra.mxu0 0.0
          %1161 = vmatprep.subr.mxu0 0.0
          %1162 = vmatpush1.msra.mxu0 0.0
          %1163 = vmatprep.subr.mxu0 0.0
          %1164 = vmatpush1.msra.mxu0 0.0
          %1165 = vmatprep.subr.mxu0 0.0
          %1166 = vmatpush1.msra.mxu0 0.0
          %1167 = vmatprep.subr.mxu0 0.0
          %1168 = vmatpush1.msra.mxu0 0.0
          %1169 = vmatprep.subr.mxu0 0.0
          %1170 = vmatpush1.msra.mxu0 0.0
          %1171 = vmatprep.subr.mxu0 0.0
          %1172 = vmatpush1.msra.mxu0 0.0
          %1173 = vmatprep.subr.mxu0 0.0
          %1174 = vmatpush1.msra.mxu0 0.0
          %1175 = vmatprep.subr.mxu0 0.0
          %1176 = vmatpush1.msra.mxu0 0.0
          %1177 = vmatprep.subr.mxu0 0.0
          %1178 = vmatpush1.msra.mxu0 0.0
          %1179 = vmatprep.subr.mxu0 0.0
          %1180 = vmatpush1.msra.mxu0 0.0
          %1181 = vmatprep.subr.mxu0 0.0
          %1182 = vmatpush1.msra.mxu0 %v1143
          %1183 = vmatprep.subr.mxu0 0.0
          %1184 = vmatpush1.msra.mxu0 %v1142
          %1185 = vmatprep.subr.mxu0 0.0
          %1186 = vmatpush2.msra.mxu0 0.0
          %1187 = vmatprep.subr.mxu0 0.0
          %1188 = vmatpush2.msra.mxu0 0.0
          %1189 = vmatprep.subr.mxu0 0.0
          %1190 = vmatpush2.msra.mxu0 0.0
          %1191 = vmatprep.subr.mxu0 0.0
          %1192 = vmatpush2.msra.mxu0 0.0
          %1193 = vmatprep.subr.mxu0 0.0
          %1194 = vmatpush2.msra.mxu0 0.0
          %1195 = vmatprep.subr.mxu0 0.0
          %1196 = vmatpush2.msra.mxu0 0.0
          %1197 = vmatprep.subr.mxu0 0.0
          %1198 = vmatpush2.msra.mxu0 0.0
          %1199 = vmatprep.subr.mxu0 0.0
          %1200 = vmatpush2.msra.mxu0 0.0
          %1201 = vmatprep.subr.mxu0 0.0
          %1202 = vmatpush2.msra.mxu0 0.0
          %1203 = vmatprep.subr.mxu0 0.0
          %1204 = vmatpush2.msra.mxu0 0.0
          %1205 = vmatprep.subr.mxu0 0.0
          %1206 = vmatpush2.msra.mxu0 0.0
          %1207 = vmatprep.subr.mxu0 0.0
          %1208 = vmatpush2.msra.mxu0 0.0
          %1209 = vmatprep.subr.mxu0 0.0
          %1210 = vmatpush2.msra.mxu0 0.0
          %1211 = vmatprep.subr.mxu0 0.0
          %1212 = vmatpush2.msra.mxu0 0.0
          %1213 = vmatprep.subr.mxu0 0.0
          %1214 = vmatpush2.msra.mxu0 0.0
          %1215 = vmatprep.subr.mxu0 0.0
          %1216 = vmatpush2.msra.mxu0 0.0
          %1217 = vmatprep.mubr.f32.mxu0 0.0
          %1218 = vmatmul.mubr.f32.gmra.mxu0 %v1145
          %v1219 = vpop.f32.mrf.mxu0
          %v1220 = vadd.f32 0.0, %v1219
          %v1221 = vpop.f32.mrf.mxu0
          %1222 = vmatprep.mubr.f32.mxu0 0.0
          %1223 = vmatmul.mubr.f32.gmra.mxu0 %v1148
          %v1224 = vpop.f32.mrf.mxu0
          %v1225 = vadd.f32 0.0, %v1224
          %v1226 = vpop.f32.mrf.mxu0
          %1227 = vmatprep.mubr.f32.mxu0 0.0
          %1228 = vmatmul.mubr.f32.gmra.mxu0 %v1151
          %v1229 = vpop.f32.mrf.mxu0
          %v1230 = vadd.f32 0.0, %v1229
          %v1231 = vpop.f32.mrf.mxu0
          %1232 = vdwg.mxu0
          %v1233 = vadd.f32 %v1131, %v1220
          %v1234 = vadd.f32 %v1132, %v1225
          %v1235 = vadd.f32 %v1133, %v1230
          %s1236 = scalar_lea.vmem %s4, 64
          %v1237 = vld [vmem:[%s1236] sm:$0xff]
          %v1238 = vld [vmem:[%s1236 + $0x8] sm:$0xff]
          %v1240 = vrot.slane %v1137, 1
          %v1241 = vrot.slane %v1138, 1
          %v1242 = vsel %vm853, %v1240, %v1241
          %v1243 = vrot.slane %v1139, 1
          %v1244 = vsel %vm853, %v1241, %v1243
          %v1245 = vrot.slane %v1140, 1
          %v1246 = vsel %vm853, %v1243, %v1245
          %v1247 = vsel %vm861, %v1242, 0
          %v1249 = vsel %vm861, %v1244, 0
          %v1251 = vsel %vm861, %v1246, 0
          %1253 = vmatprep.subr.mxu0 0.0
          %1254 = vmatpush1.msra.mxu0 0.0
          %1255 = vmatprep.subr.mxu0 0.0
          %1256 = vmatpush1.msra.mxu0 0.0
          %1257 = vmatprep.subr.mxu0 0.0
          %1258 = vmatpush1.msra.mxu0 0.0
          %1259 = vmatprep.subr.mxu0 0.0
          %1260 = vmatpush1.msra.mxu0 0.0
          %1261 = vmatprep.subr.mxu0 0.0
          %1262 = vmatpush1.msra.mxu0 0.0
          %1263 = vmatprep.subr.mxu0 0.0
          %1264 = vmatpush1.msra.mxu0 0.0
          %1265 = vmatprep.subr.mxu0 0.0
          %1266 = vmatpush1.msra.mxu0 0.0
          %1267 = vmatprep.subr.mxu0 0.0
          %1268 = vmatpush1.msra.mxu0 0.0
          %1269 = vmatprep.subr.mxu0 0.0
          %1270 = vmatpush1.msra.mxu0 0.0
          %1271 = vmatprep.subr.mxu0 0.0
          %1272 = vmatpush1.msra.mxu0 0.0
          %1273 = vmatprep.subr.mxu0 0.0
          %1274 = vmatpush1.msra.mxu0 0.0
          %1275 = vmatprep.subr.mxu0 0.0
          %1276 = vmatpush1.msra.mxu0 0.0
          %1277 = vmatprep.subr.mxu0 0.0
          %1278 = vmatpush1.msra.mxu0 0.0
          %1279 = vmatprep.subr.mxu0 0.0
          %1280 = vmatpush1.msra.mxu0 0.0
          %1281 = vmatprep.subr.mxu0 0.0
          %1282 = vmatpush1.msra.mxu0 %v1238
          %1283 = vmatprep.subr.mxu0 0.0
          %1284 = vmatpush1.msra.mxu0 %v1237
          %1285 = vmatprep.subr.mxu0 0.0
          %1286 = vmatpush2.msra.mxu0 0.0
          %1287 = vmatprep.subr.mxu0 0.0
          %1288 = vmatpush2.msra.mxu0 0.0
          %1289 = vmatprep.subr.mxu0 0.0
          %1290 = vmatpush2.msra.mxu0 0.0
          %1291 = vmatprep.subr.mxu0 0.0
          %1292 = vmatpush2.msra.mxu0 0.0
          %1293 = vmatprep.subr.mxu0 0.0
          %1294 = vmatpush2.msra.mxu0 0.0
          %1295 = vmatprep.subr.mxu0 0.0
          %1296 = vmatpush2.msra.mxu0 0.0
          %1297 = vmatprep.subr.mxu0 0.0
          %1298 = vmatpush2.msra.mxu0 0.0
          %1299 = vmatprep.subr.mxu0 0.0
          %1300 = vmatpush2.msra.mxu0 0.0
          %1301 = vmatprep.subr.mxu0 0.0
          %1302 = vmatpush2.msra.mxu0 0.0
          %1303 = vmatprep.subr.mxu0 0.0
          %1304 = vmatpush2.msra.mxu0 0.0
          %1305 = vmatprep.subr.mxu0 0.0
          %1306 = vmatpush2.msra.mxu0 0.0
          %1307 = vmatprep.subr.mxu0 0.0
          %1308 = vmatpush2.msra.mxu0 0.0
          %1309 = vmatprep.subr.mxu0 0.0
          %1310 = vmatpush2.msra.mxu0 0.0
          %1311 = vmatprep.subr.mxu0 0.0
          %1312 = vmatpush2.msra.mxu0 0.0
          %1313 = vmatprep.subr.mxu0 0.0
          %1314 = vmatpush2.msra.mxu0 0.0
          %1315 = vmatprep.subr.mxu0 0.0
          %1316 = vmatpush2.msra.mxu0 0.0
          %1317 = vmatprep.mubr.f32.mxu0 0.0
          %1318 = vmatmul.mubr.f32.gmra.mxu0 %v1247
          %v1319 = vpop.f32.mrf.mxu0
          %v1320 = vadd.f32 0.0, %v1319
          %v1321 = vpop.f32.mrf.mxu0
          %1322 = vmatprep.mubr.f32.mxu0 0.0
          %1323 = vmatmul.mubr.f32.gmra.mxu0 %v1249
          %v1324 = vpop.f32.mrf.mxu0
          %v1325 = vadd.f32 0.0, %v1324
          %v1326 = vpop.f32.mrf.mxu0
          %1327 = vmatprep.mubr.f32.mxu0 0.0
          %1328 = vmatmul.mubr.f32.gmra.mxu0 %v1251
          %v1329 = vpop.f32.mrf.mxu0
          %v1330 = vadd.f32 0.0, %v1329
          %v1331 = vpop.f32.mrf.mxu0
          %1332 = vdwg.mxu0
          %v1333 = vadd.f32 %v1233, %v1320
          %v1334 = vadd.f32 %v1234, %v1325
          %v1335 = vadd.f32 %v1235, %v1330
          %s1336 = scalar_lea.vmem %s4, 80
          %v1337 = vld [vmem:[%s1336] sm:$0xff]
          %v1338 = vld [vmem:[%s1336 + $0x8] sm:$0xff]
          %v1339 = vrot.slane %v1137, 2
          %v1340 = vrot.slane %v1138, 2
          %v1341 = vsel %vm1037, %v1339, %v1340
          %v1342 = vrot.slane %v1139, 2
          %v1343 = vsel %vm1037, %v1340, %v1342
          %v1344 = vrot.slane %v1140, 2
          %v1345 = vsel %vm1037, %v1342, %v1344
          %v1346 = vsel %vm861, %v1341, 0
          %v1348 = vsel %vm861, %v1343, 0
          %v1350 = vsel %vm861, %v1345, 0
          %1352 = vmatprep.subr.mxu0 0.0
          %1353 = vmatpush1.msra.mxu0 0.0
          %1354 = vmatprep.subr.mxu0 0.0
          %1355 = vmatpush1.msra.mxu0 0.0
          %1356 = vmatprep.subr.mxu0 0.0
          %1357 = vmatpush1.msra.mxu0 0.0
          %1358 = vmatprep.subr.mxu0 0.0
          %1359 = vmatpush1.msra.mxu0 0.0
          %1360 = vmatprep.subr.mxu0 0.0
          %1361 = vmatpush1.msra.mxu0 0.0
          %1362 = vmatprep.subr.mxu0 0.0
          %1363 = vmatpush1.msra.mxu0 0.0
          %1364 = vmatprep.subr.mxu0 0.0
          %1365 = vmatpush1.msra.mxu0 0.0
          %1366 = vmatprep.subr.mxu0 0.0
          %1367 = vmatpush1.msra.mxu0 0.0
          %1368 = vmatprep.subr.mxu0 0.0
          %1369 = vmatpush1.msra.mxu0 0.0
          %1370 = vmatprep.subr.mxu0 0.0
          %1371 = vmatpush1.msra.mxu0 0.0
          %1372 = vmatprep.subr.mxu0 0.0
          %1373 = vmatpush1.msra.mxu0 0.0
          %1374 = vmatprep.subr.mxu0 0.0
          %1375 = vmatpush1.msra.mxu0 0.0
          %1376 = vmatprep.subr.mxu0 0.0
          %1377 = vmatpush1.msra.mxu0 0.0
          %1378 = vmatprep.subr.mxu0 0.0
          %1379 = vmatpush1.msra.mxu0 0.0
          %1380 = vmatprep.subr.mxu0 0.0
          %1381 = vmatpush1.msra.mxu0 %v1338
          %1382 = vmatprep.subr.mxu0 0.0
          %1383 = vmatpush1.msra.mxu0 %v1337
          %1384 = vmatprep.subr.mxu0 0.0
          %1385 = vmatpush2.msra.mxu0 0.0
          %1386 = vmatprep.subr.mxu0 0.0
          %1387 = vmatpush2.msra.mxu0 0.0
          %1388 = vmatprep.subr.mxu0 0.0
          %1389 = vmatpush2.msra.mxu0 0.0
          %1390 = vmatprep.subr.mxu0 0.0
          %1391 = vmatpush2.msra.mxu0 0.0
          %1392 = vmatprep.subr.mxu0 0.0
          %1393 = vmatpush2.msra.mxu0 0.0
          %1394 = vmatprep.subr.mxu0 0.0
          %1395 = vmatpush2.msra.mxu0 0.0
          %1396 = vmatprep.subr.mxu0 0.0
          %1397 = vmatpush2.msra.mxu0 0.0
          %1398 = vmatprep.subr.mxu0 0.0
          %1399 = vmatpush2.msra.mxu0 0.0
          %1400 = vmatprep.subr.mxu0 0.0
          %1401 = vmatpush2.msra.mxu0 0.0
          %1402 = vmatprep.subr.mxu0 0.0
          %1403 = vmatpush2.msra.mxu0 0.0
          %1404 = vmatprep.subr.mxu0 0.0
          %1405 = vmatpush2.msra.mxu0 0.0
          %1406 = vmatprep.subr.mxu0 0.0
          %1407 = vmatpush2.msra.mxu0 0.0
          %1408 = vmatprep.subr.mxu0 0.0
          %1409 = vmatpush2.msra.mxu0 0.0
          %1410 = vmatprep.subr.mxu0 0.0
          %1411 = vmatpush2.msra.mxu0 0.0
          %1412 = vmatprep.subr.mxu0 0.0
          %1413 = vmatpush2.msra.mxu0 0.0
          %1414 = vmatprep.subr.mxu0 0.0
          %1415 = vmatpush2.msra.mxu0 0.0
          %1416 = vmatprep.mubr.f32.mxu0 0.0
          %1417 = vmatmul.mubr.f32.gmra.mxu0 %v1346
          %v1418 = vpop.f32.mrf.mxu0
          %v1419 = vadd.f32 0.0, %v1418
          %v1420 = vpop.f32.mrf.mxu0
          %1421 = vmatprep.mubr.f32.mxu0 0.0
          %1422 = vmatmul.mubr.f32.gmra.mxu0 %v1348
          %v1423 = vpop.f32.mrf.mxu0
          %v1424 = vadd.f32 0.0, %v1423
          %v1425 = vpop.f32.mrf.mxu0
          %1426 = vmatprep.mubr.f32.mxu0 0.0
          %1427 = vmatmul.mubr.f32.gmra.mxu0 %v1350
          %v1428 = vpop.f32.mrf.mxu0
          %v1429 = vadd.f32 0.0, %v1428
          %v1430 = vpop.f32.mrf.mxu0
          %1431 = vdwg.mxu0
          %v1432 = vadd.f32 %v1333, %v1419
          %v1433 = vadd.f32 %v1334, %v1424
          %v1434 = vadd.f32 %v1335, %v1429
          %s1435 = sadd.s32 %s833, 2
          %s1436 = smul.u32 %s1435, 32
          %s1437 = scalar_lea.vmem [#allocation2], %s1436
          %v1438 = vld [vmem:[%s1437] sm:$0xff]
          %v1439 = vld [vmem:[%s1437 + $0x8] sm:$0xff]
          %v1440 = vld [vmem:[%s1437 + $0x10] sm:$0xff]
          %v1441 = vld [vmem:[%s1437 + $0x18] sm:$0x3]
          %s1442 = scalar_lea.vmem %s4, 96
          %v1443 = vld [vmem:[%s1442] sm:$0xff]
          %v1444 = vld [vmem:[%s1442 + $0x8] sm:$0xff]
          %v1446 = vsel %vm861, %v1438, 0
          %v1449 = vsel %vm861, %v1439, 0
          %v1452 = vsel %vm861, %v1440, 0
          %1454 = vmatprep.subr.mxu0 0.0
          %1455 = vmatpush1.msra.mxu0 0.0
          %1456 = vmatprep.subr.mxu0 0.0
          %1457 = vmatpush1.msra.mxu0 0.0
          %1458 = vmatprep.subr.mxu0 0.0
          %1459 = vmatpush1.msra.mxu0 0.0
          %1460 = vmatprep.subr.mxu0 0.0
          %1461 = vmatpush1.msra.mxu0 0.0
          %1462 = vmatprep.subr.mxu0 0.0
          %1463 = vmatpush1.msra.mxu0 0.0
          %1464 = vmatprep.subr.mxu0 0.0
          %1465 = vmatpush1.msra.mxu0 0.0
          %1466 = vmatprep.subr.mxu0 0.0
          %1467 = vmatpush1.msra.mxu0 0.0
          %1468 = vmatprep.subr.mxu0 0.0
          %1469 = vmatpush1.msra.mxu0 0.0
          %1470 = vmatprep.subr.mxu0 0.0
          %1471 = vmatpush1.msra.mxu0 0.0
          %1472 = vmatprep.subr.mxu0 0.0
          %1473 = vmatpush1.msra.mxu0 0.0
          %1474 = vmatprep.subr.mxu0 0.0
          %1475 = vmatpush1.msra.mxu0 0.0
          %1476 = vmatprep.subr.mxu0 0.0
          %1477 = vmatpush1.msra.mxu0 0.0
          %1478 = vmatprep.subr.mxu0 0.0
          %1479 = vmatpush1.msra.mxu0 0.0
          %1480 = vmatprep.subr.mxu0 0.0
          %1481 = vmatpush1.msra.mxu0 0.0
          %1482 = vmatprep.subr.mxu0 0.0
          %1483 = vmatpush1.msra.mxu0 %v1444
          %1484 = vmatprep.subr.mxu0 0.0
          %1485 = vmatpush1.msra.mxu0 %v1443
          %1486 = vmatprep.subr.mxu0 0.0
          %1487 = vmatpush2.msra.mxu0 0.0
          %1488 = vmatprep.subr.mxu0 0.0
          %1489 = vmatpush2.msra.mxu0 0.0
          %1490 = vmatprep.subr.mxu0 0.0
          %1491 = vmatpush2.msra.mxu0 0.0
          %1492 = vmatprep.subr.mxu0 0.0
          %1493 = vmatpush2.msra.mxu0 0.0
          %1494 = vmatprep.subr.mxu0 0.0
          %1495 = vmatpush2.msra.mxu0 0.0
          %1496 = vmatprep.subr.mxu0 0.0
          %1497 = vmatpush2.msra.mxu0 0.0
          %1498 = vmatprep.subr.mxu0 0.0
          %1499 = vmatpush2.msra.mxu0 0.0
          %1500 = vmatprep.subr.mxu0 0.0
          %1501 = vmatpush2.msra.mxu0 0.0
          %1502 = vmatprep.subr.mxu0 0.0
          %1503 = vmatpush2.msra.mxu0 0.0
          %1504 = vmatprep.subr.mxu0 0.0
          %1505 = vmatpush2.msra.mxu0 0.0
          %1506 = vmatprep.subr.mxu0 0.0
          %1507 = vmatpush2.msra.mxu0 0.0
          %1508 = vmatprep.subr.mxu0 0.0
          %1509 = vmatpush2.msra.mxu0 0.0
          %1510 = vmatprep.subr.mxu0 0.0
          %1511 = vmatpush2.msra.mxu0 0.0
          %1512 = vmatprep.subr.mxu0 0.0
          %1513 = vmatpush2.msra.mxu0 0.0
          %1514 = vmatprep.subr.mxu0 0.0
          %1515 = vmatpush2.msra.mxu0 0.0
          %1516 = vmatprep.subr.mxu0 0.0
          %1517 = vmatpush2.msra.mxu0 0.0
          %1518 = vmatprep.mubr.f32.mxu0 0.0
          %1519 = vmatmul.mubr.f32.gmra.mxu0 %v1446
          %v1520 = vpop.f32.mrf.mxu0
          %v1521 = vadd.f32 0.0, %v1520
          %v1522 = vpop.f32.mrf.mxu0
          %1523 = vmatprep.mubr.f32.mxu0 0.0
          %1524 = vmatmul.mubr.f32.gmra.mxu0 %v1449
          %v1525 = vpop.f32.mrf.mxu0
          %v1526 = vadd.f32 0.0, %v1525
          %v1527 = vpop.f32.mrf.mxu0
          %1528 = vmatprep.mubr.f32.mxu0 0.0
          %1529 = vmatmul.mubr.f32.gmra.mxu0 %v1452
          %v1530 = vpop.f32.mrf.mxu0
          %v1531 = vadd.f32 0.0, %v1530
          %v1532 = vpop.f32.mrf.mxu0
          %1533 = vdwg.mxu0
          %v1534 = vadd.f32 %v1432, %v1521
          %v1535 = vadd.f32 %v1433, %v1526
          %v1536 = vadd.f32 %v1434, %v1531
          %s1537 = scalar_lea.vmem %s4, 112
          %v1538 = vld [vmem:[%s1537] sm:$0xff]
          %v1539 = vld [vmem:[%s1537 + $0x8] sm:$0xff]
          %v1541 = vrot.slane %v1438, 1
          %v1542 = vrot.slane %v1439, 1
          %v1543 = vsel %vm853, %v1541, %v1542
          %v1544 = vrot.slane %v1440, 1
          %v1545 = vsel %vm853, %v1542, %v1544
          %v1546 = vrot.slane %v1441, 1
          %v1547 = vsel %vm853, %v1544, %v1546
          %v1548 = vsel %vm861, %v1543, 0
          %v1550 = vsel %vm861, %v1545, 0
          %v1552 = vsel %vm861, %v1547, 0
          %1554 = vmatprep.subr.mxu0 0.0
          %1555 = vmatpush1.msra.mxu0 0.0
          %1556 = vmatprep.subr.mxu0 0.0
          %1557 = vmatpush1.msra.mxu0 0.0
          %1558 = vmatprep.subr.mxu0 0.0
          %1559 = vmatpush1.msra.mxu0 0.0
          %1560 = vmatprep.subr.mxu0 0.0
          %1561 = vmatpush1.msra.mxu0 0.0
          %1562 = vmatprep.subr.mxu0 0.0
          %1563 = vmatpush1.msra.mxu0 0.0
          %1564 = vmatprep.subr.mxu0 0.0
          %1565 = vmatpush1.msra.mxu0 0.0
          %1566 = vmatprep.subr.mxu0 0.0
          %1567 = vmatpush1.msra.mxu0 0.0
          %1568 = vmatprep.subr.mxu0 0.0
          %1569 = vmatpush1.msra.mxu0 0.0
          %1570 = vmatprep.subr.mxu0 0.0
          %1571 = vmatpush1.msra.mxu0 0.0
          %1572 = vmatprep.subr.mxu0 0.0
          %1573 = vmatpush1.msra.mxu0 0.0
          %1574 = vmatprep.subr.mxu0 0.0
          %1575 = vmatpush1.msra.mxu0 0.0
          %1576 = vmatprep.subr.mxu0 0.0
          %1577 = vmatpush1.msra.mxu0 0.0
          %1578 = vmatprep.subr.mxu0 0.0
          %1579 = vmatpush1.msra.mxu0 0.0
          %1580 = vmatprep.subr.mxu0 0.0
          %1581 = vmatpush1.msra.mxu0 0.0
          %1582 = vmatprep.subr.mxu0 0.0
          %1583 = vmatpush1.msra.mxu0 %v1539
          %1584 = vmatprep.subr.mxu0 0.0
          %1585 = vmatpush1.msra.mxu0 %v1538
          %1586 = vmatprep.subr.mxu0 0.0
          %1587 = vmatpush2.msra.mxu0 0.0
          %1588 = vmatprep.subr.mxu0 0.0
          %1589 = vmatpush2.msra.mxu0 0.0
          %1590 = vmatprep.subr.mxu0 0.0
          %1591 = vmatpush2.msra.mxu0 0.0
          %1592 = vmatprep.subr.mxu0 0.0
          %1593 = vmatpush2.msra.mxu0 0.0
          %1594 = vmatprep.subr.mxu0 0.0
          %1595 = vmatpush2.msra.mxu0 0.0
          %1596 = vmatprep.subr.mxu0 0.0
          %1597 = vmatpush2.msra.mxu0 0.0
          %1598 = vmatprep.subr.mxu0 0.0
          %1599 = vmatpush2.msra.mxu0 0.0
          %1600 = vmatprep.subr.mxu0 0.0
          %1601 = vmatpush2.msra.mxu0 0.0
          %1602 = vmatprep.subr.mxu0 0.0
          %1603 = vmatpush2.msra.mxu0 0.0
          %1604 = vmatprep.subr.mxu0 0.0
          %1605 = vmatpush2.msra.mxu0 0.0
          %1606 = vmatprep.subr.mxu0 0.0
          %1607 = vmatpush2.msra.mxu0 0.0
          %1608 = vmatprep.subr.mxu0 0.0
          %1609 = vmatpush2.msra.mxu0 0.0
          %1610 = vmatprep.subr.mxu0 0.0
          %1611 = vmatpush2.msra.mxu0 0.0
          %1612 = vmatprep.subr.mxu0 0.0
          %1613 = vmatpush2.msra.mxu0 0.0
          %1614 = vmatprep.subr.mxu0 0.0
          %1615 = vmatpush2.msra.mxu0 0.0
          %1616 = vmatprep.subr.mxu0 0.0
          %1617 = vmatpush2.msra.mxu0 0.0
          %1618 = vmatprep.mubr.f32.mxu0 0.0
          %1619 = vmatmul.mubr.f32.gmra.mxu0 %v1548
          %v1620 = vpop.f32.mrf.mxu0
          %v1621 = vadd.f32 0.0, %v1620
          %v1622 = vpop.f32.mrf.mxu0
          %1623 = vmatprep.mubr.f32.mxu0 0.0
          %1624 = vmatmul.mubr.f32.gmra.mxu0 %v1550
          %v1625 = vpop.f32.mrf.mxu0
          %v1626 = vadd.f32 0.0, %v1625
          %v1627 = vpop.f32.mrf.mxu0
          %1628 = vmatprep.mubr.f32.mxu0 0.0
          %1629 = vmatmul.mubr.f32.gmra.mxu0 %v1552
          %v1630 = vpop.f32.mrf.mxu0
          %v1631 = vadd.f32 0.0, %v1630
          %v1632 = vpop.f32.mrf.mxu0
          %1633 = vdwg.mxu0
          %v1634 = vadd.f32 %v1534, %v1621
          %v1635 = vadd.f32 %v1535, %v1626
          %v1636 = vadd.f32 %v1536, %v1631
          %s1637 = scalar_lea.vmem %s4, 128
          %v1638 = vld [vmem:[%s1637] sm:$0xff]
          %v1639 = vld [vmem:[%s1637 + $0x8] sm:$0xff]
          %v1640 = vrot.slane %v1438, 2
          %v1641 = vrot.slane %v1439, 2
          %v1642 = vsel %vm1037, %v1640, %v1641
          %v1643 = vrot.slane %v1440, 2
          %v1644 = vsel %vm1037, %v1641, %v1643
          %v1645 = vrot.slane %v1441, 2
          %v1646 = vsel %vm1037, %v1643, %v1645
          %v1647 = vsel %vm861, %v1642, 0
          %v1649 = vsel %vm861, %v1644, 0
          %v1651 = vsel %vm861, %v1646, 0
          %1653 = vmatprep.subr.mxu0 0.0
          %1654 = vmatpush1.msra.mxu0 0.0
          %1655 = vmatprep.subr.mxu0 0.0
          %1656 = vmatpush1.msra.mxu0 0.0
          %1657 = vmatprep.subr.mxu0 0.0
          %1658 = vmatpush1.msra.mxu0 0.0
          %1659 = vmatprep.subr.mxu0 0.0
          %1660 = vmatpush1.msra.mxu0 0.0
          %1661 = vmatprep.subr.mxu0 0.0
          %1662 = vmatpush1.msra.mxu0 0.0
          %1663 = vmatprep.subr.mxu0 0.0
          %1664 = vmatpush1.msra.mxu0 0.0
          %1665 = vmatprep.subr.mxu0 0.0
          %1666 = vmatpush1.msra.mxu0 0.0
          %1667 = vmatprep.subr.mxu0 0.0
          %1668 = vmatpush1.msra.mxu0 0.0
          %1669 = vmatprep.subr.mxu0 0.0
          %1670 = vmatpush1.msra.mxu0 0.0
          %1671 = vmatprep.subr.mxu0 0.0
          %1672 = vmatpush1.msra.mxu0 0.0
          %1673 = vmatprep.subr.mxu0 0.0
          %1674 = vmatpush1.msra.mxu0 0.0
          %1675 = vmatprep.subr.mxu0 0.0
          %1676 = vmatpush1.msra.mxu0 0.0
          %1677 = vmatprep.subr.mxu0 0.0
          %1678 = vmatpush1.msra.mxu0 0.0
          %1679 = vmatprep.subr.mxu0 0.0
          %1680 = vmatpush1.msra.mxu0 0.0
          %1681 = vmatprep.subr.mxu0 0.0
          %1682 = vmatpush1.msra.mxu0 %v1639
          %1683 = vmatprep.subr.mxu0 0.0
          %1684 = vmatpush1.msra.mxu0 %v1638
          %1685 = vmatprep.subr.mxu0 0.0
          %1686 = vmatpush2.msra.mxu0 0.0
          %1687 = vmatprep.subr.mxu0 0.0
          %1688 = vmatpush2.msra.mxu0 0.0
          %1689 = vmatprep.subr.mxu0 0.0
          %1690 = vmatpush2.msra.mxu0 0.0
          %1691 = vmatprep.subr.mxu0 0.0
          %1692 = vmatpush2.msra.mxu0 0.0
          %1693 = vmatprep.subr.mxu0 0.0
          %1694 = vmatpush2.msra.mxu0 0.0
          %1695 = vmatprep.subr.mxu0 0.0
          %1696 = vmatpush2.msra.mxu0 0.0
          %1697 = vmatprep.subr.mxu0 0.0
          %1698 = vmatpush2.msra.mxu0 0.0
          %1699 = vmatprep.subr.mxu0 0.0
          %1700 = vmatpush2.msra.mxu0 0.0
          %1701 = vmatprep.subr.mxu0 0.0
          %1702 = vmatpush2.msra.mxu0 0.0
          %1703 = vmatprep.subr.mxu0 0.0
          %1704 = vmatpush2.msra.mxu0 0.0
          %1705 = vmatprep.subr.mxu0 0.0
          %1706 = vmatpush2.msra.mxu0 0.0
          %1707 = vmatprep.subr.mxu0 0.0
          %1708 = vmatpush2.msra.mxu0 0.0
          %1709 = vmatprep.subr.mxu0 0.0
          %1710 = vmatpush2.msra.mxu0 0.0
          %1711 = vmatprep.subr.mxu0 0.0
          %1712 = vmatpush2.msra.mxu0 0.0
          %1713 = vmatprep.subr.mxu0 0.0
          %1714 = vmatpush2.msra.mxu0 0.0
          %1715 = vmatprep.subr.mxu0 0.0
          %1716 = vmatpush2.msra.mxu0 0.0
          %1717 = vmatprep.mubr.f32.mxu0 0.0
          %1718 = vmatmul.mubr.f32.gmra.mxu0 %v1647
          %v1719 = vpop.f32.mrf.mxu0
          %v1720 = vadd.f32 0.0, %v1719
          %v1721 = vpop.f32.mrf.mxu0
          %1722 = vmatprep.mubr.f32.mxu0 0.0
          %1723 = vmatmul.mubr.f32.gmra.mxu0 %v1649
          %v1724 = vpop.f32.mrf.mxu0
          %v1725 = vadd.f32 0.0, %v1724
          %v1726 = vpop.f32.mrf.mxu0
          %1727 = vmatprep.mubr.f32.mxu0 0.0
          %1728 = vmatmul.mubr.f32.gmra.mxu0 %v1651
          %v1729 = vpop.f32.mrf.mxu0
          %v1730 = vadd.f32 0.0, %v1729
          %v1731 = vpop.f32.mrf.mxu0
          %1732 = vdwg.mxu0
          %v1733 = vadd.f32 %v1634, %v1720
          %v1734 = vadd.f32 %v1635, %v1725
          %v1735 = vadd.f32 %v1636, %v1730
          %v1737 = vlaneseq
          %v1738 = vshrl.u32 %v1737, 7
          %v1739 = vsub.s32 0, %v1738
          %v1740 = vrot.slane %v830, %v1739
          %v1742 = vmul.f32 %v1733, %v1740
          %v1743 = vmul.f32 %v1734, %v1740
          %v1744 = vmul.f32 %v1735, %v1740
          %v1746 = vlaneseq
          %v1747 = vshrl.u32 %v1746, 7
          %v1748 = vsub.s32 0, %v1747
          %v1749 = vrot.slane %v831, %v1748
          %v1751 = vadd.f32 %v1742, %v1749
          %v1752 = vadd.f32 %v1743, %v1749
          %v1753 = vadd.f32 %v1744, %v1749
          %v1754 = vmax.f32 %v1751, 0.0
          %v1755 = vmax.f32 %v1752, 0.0
          %v1756 = vmax.f32 %v1753, 0.0
          %s1757 = smul.u32 %s833, 24
          %s1758 = scalar_lea.vmem [#allocation3], %s1757
          %1759 = vst.msk [vmem:[%s1758] sm:$0xff] %vm861, %v1754
          %1760 = vst.msk [vmem:[%s1758 + $0x8] sm:$0xff] %vm861, %v1755
          %1761 = vst.msk [vmem:[%s1758 + $0x10] sm:$0xff] %vm861, %v1756
        $region120: #{chestcnn_forward.1} parent=107 // loop_footer
          %s837 = sadd.s32 1, %s833
        $region121: #{chestcnn_forward.1} parent=107 // loop_footer_branch
          %832 = sbr.rel target = $region117
        $region122: #{chestcnn_forward.1} parent=107 // loop_exit
          _
        loop: start=0, step=1, limit=12
        $region123: #{chestcnn_forward.1} parent=107 // loop_pre_header
          _
        $region124: #{chestcnn_forward.1} parent=107 // loop_header
          %s1763 = sphi 0, %s1767
          %p1764 = scmp.ge.s32.totalorder %s1763, 12
        $region125: #{chestcnn_forward.1} parent=107 // loop_header_branch
          %1766 = sbr.rel (%p1764) target = $region129
        $region126: #{chestcnn_forward.1} parent=107 // loop_body
          %s1768 = smul.u32 %s1763, 2
          %s1769 = smul.u32 %s1768, 24
          %s1770 = scalar_lea.vmem [#allocation3], %s1769
          %v1771 = vld [vmem:[%s1770] sm:$0xff]
          %v1772 = vld [vmem:[%s1770 + $0x8] sm:$0xff]
          %v1773 = vld [vmem:[%s1770 + $0x10] sm:$0xff]
          %s1774 = sadd.s32 %s1768, 1
          %s1775 = smul.u32 %s1774, 24
          %s1776 = scalar_lea.vmem [#allocation3], %s1775
          %v1777 = vld [vmem:[%s1776] sm:$0xff]
          %v1778 = vld [vmem:[%s1776 + $0x8] sm:$0xff]
          %v1779 = vld [vmem:[%s1776 + $0x10] sm:$0xff]
          %v1780 = vmax.f32 %v1771, %v1777
          %v1781 = vmax.f32 %v1772, %v1778
          %v1782 = vmax.f32 %v1773, %v1779
          %vm1783 = vcmask 130048
          %1784 = vst.msk [vmem:[#allocation10] sm:$0xff] %vm1783, %v1780
          %1785 = vst.msk [vmem:[#allocation10 + $0x8] sm:$0xff] %vm1783, %v1781
          %1786 = vst.msk [vmem:[#allocation10 + $0x10] sm:$0xff] %vm1783, %v1782
          %v1787 = vld [vmem:[#allocation10] ss:$2 sm:$0xff]
          %s1788 = scalar_lea.vmem [#allocation10], 16
          %v1789 = vld [vmem:[%s1788] ss:$2 sm:$0xf]
          %s1790 = scalar_lea.vmem [#allocation10], 1
          %v1791 = vld [vmem:[%s1790] ss:$2 sm:$0xff]
          %s1792 = scalar_lea.vmem [#allocation10], 17
          %v1793 = vld [vmem:[%s1792] ss:$2 sm:$0xf]
          %v1794 = vmax.f32 %v1787, %v1791
          %v1795 = vmax.f32 %v1789, %v1793
          %s1796 = smul.u32 %s1763, 16
          %s1797 = scalar_lea.vmem [#allocation4], %s1796
          %1798 = vst.msk [vmem:[%s1797] sm:$0xff] %vm1783, %v1794
          %vm1799 = vcmask 125952
          %1800 = vst.msk [vmem:[%s1797 + $0x8] sm:$0xf] %vm1799, %v1795
        $region127: #{chestcnn_forward.1} parent=107 // loop_footer
          %s1767 = sadd.s32 1, %s1763
        $region128: #{chestcnn_forward.1} parent=107 // loop_footer_branch
          %1762 = sbr.rel target = $region124
        $region129: #{chestcnn_forward.1} parent=107 // loop_exit
          _
        %v1801 = vld [vmem:[%s8] sm:$0x1]
        %v1802 = vld [vmem:[%s9] sm:$0x1]
        loop: start=0, step=1, limit=10
        $region130: #{chestcnn_forward.1} parent=107 // loop_pre_header
          _
        $region131: #{chestcnn_forward.1} parent=107 // loop_header
          %s1804 = sphi 0, %s1808
          %p1805 = scmp.ge.s32.totalorder %s1804, 10
        $region132: #{chestcnn_forward.1} parent=107 // loop_header_branch
          %1807 = sbr.rel (%p1805) target = $region136
        $region133: #{chestcnn_forward.1} parent=107 // loop_body
          %s1809 = smul.u32 %s1804, 16
          %s1810 = scalar_lea.vmem [#allocation4], %s1809
          %v1811 = vld [vmem:[%s1810] sm:$0xff]
          %v1812 = vld [vmem:[%s1810 + $0x8] sm:$0xf]
          %v1813 = vld [vmem:[%s7] sm:$0xff]
          %v1814 = vld [vmem:[%s7 + $0x8] sm:$0xff]
          %s1815 = scalar_lea.vmem %s7, 16
          %v1816 = vld [vmem:[%s1815] sm:$0xff]
          %v1817 = vld [vmem:[%s1815 + $0x8] sm:$0xff]
          %vm1820 = vcmask 1046528
          %v1821 = vrot.slane %v1811, 1
          %v1822 = vrot.slane %v1812, 1
          %v1823 = vsel %vm1820, %v1821, %v1822
          %vm1824 = vcmask 130048
          %v1825 = vsel %vm1824, %v1823, 0
          %v1827 = vsel %vm1824, %v1822, 0
          %1829 = vmatprep.subr.mxu0 0.0
          %1830 = vmatpush1.msra.mxu0 0.0
          %1831 = vmatprep.subr.mxu0 0.0
          %1832 = vmatpush1.msra.mxu0 0.0
          %1833 = vmatprep.subr.mxu0 0.0
          %1834 = vmatpush1.msra.mxu0 0.0
          %1835 = vmatprep.subr.mxu0 0.0
          %1836 = vmatpush1.msra.mxu0 0.0
          %1837 = vmatprep.subr.mxu0 0.0
          %1838 = vmatpush1.msra.mxu0 0.0
          %1839 = vmatprep.subr.mxu0 0.0
          %1840 = vmatpush1.msra.mxu0 0.0
          %1841 = vmatprep.subr.mxu0 0.0
          %1842 = vmatpush1.msra.mxu0 0.0
          %1843 = vmatprep.subr.mxu0 0.0
          %1844 = vmatpush1.msra.mxu0 0.0
          %1845 = vmatprep.subr.mxu0 0.0
          %1846 = vmatpush1.msra.mxu0 0.0
          %1847 = vmatprep.subr.mxu0 0.0
          %1848 = vmatpush1.msra.mxu0 0.0
          %1849 = vmatprep.subr.mxu0 0.0
          %1850 = vmatpush1.msra.mxu0 0.0
          %1851 = vmatprep.subr.mxu0 0.0
          %1852 = vmatpush1.msra.mxu0 0.0
          %1853 = vmatprep.subr.mxu0 0.0
          %1854 = vmatpush1.msra.mxu0 0.0
          %1855 = vmatprep.subr.mxu0 0.0
          %1856 = vmatpush1.msra.mxu0 0.0
          %1857 = vmatprep.subr.mxu0 0.0
          %1858 = vmatpush1.msra.mxu0 %v1817
          %1859 = vmatprep.subr.mxu0 0.0
          %1860 = vmatpush1.msra.mxu0 %v1816
          %1861 = vmatprep.subr.mxu0 0.0
          %1862 = vmatpush2.msra.mxu0 0.0
          %1863 = vmatprep.subr.mxu0 0.0
          %1864 = vmatpush2.msra.mxu0 0.0
          %1865 = vmatprep.subr.mxu0 0.0
          %1866 = vmatpush2.msra.mxu0 0.0
          %1867 = vmatprep.subr.mxu0 0.0
          %1868 = vmatpush2.msra.mxu0 0.0
          %1869 = vmatprep.subr.mxu0 0.0
          %1870 = vmatpush2.msra.mxu0 0.0
          %1871 = vmatprep.subr.mxu0 0.0
          %1872 = vmatpush2.msra.mxu0 0.0
          %1873 = vmatprep.subr.mxu0 0.0
          %1874 = vmatpush2.msra.mxu0 0.0
          %1875 = vmatprep.subr.mxu0 0.0
          %1876 = vmatpush2.msra.mxu0 0.0
          %1877 = vmatprep.subr.mxu0 0.0
          %1878 = vmatpush2.msra.mxu0 0.0
          %1879 = vmatprep.subr.mxu0 0.0
          %1880 = vmatpush2.msra.mxu0 0.0
          %1881 = vmatprep.subr.mxu0 0.0
          %1882 = vmatpush2.msra.mxu0 0.0
          %1883 = vmatprep.subr.mxu0 0.0
          %1884 = vmatpush2.msra.mxu0 0.0
          %1885 = vmatprep.subr.mxu0 0.0
          %1886 = vmatpush2.msra.mxu0 0.0
          %1887 = vmatprep.subr.mxu0 0.0
          %1888 = vmatpush2.msra.mxu0 0.0
          %1889 = vmatprep.subr.mxu0 0.0
          %1890 = vmatpush2.msra.mxu0 0.0
          %1891 = vmatprep.subr.mxu0 0.0
          %1892 = vmatpush2.msra.mxu0 0.0
          %1893 = vmatprep.mubr.f32.mxu0 0.0
          %1894 = vmatmul.mubr.f32.gmra.mxu0 %v1825
          %v1895 = vpop.f32.mrf.mxu0
          %v1896 = vadd.f32 0.0, %v1895
          %v1897 = vpop.f32.mrf.mxu0
          %1898 = vmatprep.mubr.f32.mxu0 0.0
          %1899 = vmatmul.mubr.f32.gmra.mxu0 %v1827
          %v1900 = vpop.f32.mrf.mxu0
          %v1901 = vadd.f32 0.0, %v1900
          %v1902 = vpop.f32.mrf.mxu0
          %1903 = vdwg.mxu0
          %v1904 = vsel %vm1824, %v1811, 0
          %v1906 = vsel %vm1824, %v1812, 0
          %1908 = vmatprep.subr.mxu0 0.0
          %1909 = vmatpush1.msra.mxu0 0.0
          %1910 = vmatprep.subr.mxu0 0.0
          %1911 = vmatpush1.msra.mxu0 0.0
          %1912 = vmatprep.subr.mxu0 0.0
          %1913 = vmatpush1.msra.mxu0 0.0
          %1914 = vmatprep.subr.mxu0 0.0
          %1915 = vmatpush1.msra.mxu0 0.0
          %1916 = vmatprep.subr.mxu0 0.0
          %1917 = vmatpush1.msra.mxu0 0.0
          %1918 = vmatprep.subr.mxu0 0.0
          %1919 = vmatpush1.msra.mxu0 0.0
          %1920 = vmatprep.subr.mxu0 0.0
          %1921 = vmatpush1.msra.mxu0 0.0
          %1922 = vmatprep.subr.mxu0 0.0
          %1923 = vmatpush1.msra.mxu0 0.0
          %1924 = vmatprep.subr.mxu0 0.0
          %1925 = vmatpush1.msra.mxu0 0.0
          %1926 = vmatprep.subr.mxu0 0.0
          %1927 = vmatpush1.msra.mxu0 0.0
          %1928 = vmatprep.subr.mxu0 0.0
          %1929 = vmatpush1.msra.mxu0 0.0
          %1930 = vmatprep.subr.mxu0 0.0
          %1931 = vmatpush1.msra.mxu0 0.0
          %1932 = vmatprep.subr.mxu0 0.0
          %1933 = vmatpush1.msra.mxu0 0.0
          %1934 = vmatprep.subr.mxu0 0.0
          %1935 = vmatpush1.msra.mxu0 0.0
          %1936 = vmatprep.subr.mxu0 0.0
          %1937 = vmatpush1.msra.mxu0 %v1814
          %1938 = vmatprep.subr.mxu0 0.0
          %1939 = vmatpush1.msra.mxu0 %v1813
          %1940 = vmatprep.subr.mxu0 0.0
          %1941 = vmatpush2.msra.mxu0 0.0
          %1942 = vmatprep.subr.mxu0 0.0
          %1943 = vmatpush2.msra.mxu0 0.0
          %1944 = vmatprep.subr.mxu0 0.0
          %1945 = vmatpush2.msra.mxu0 0.0
          %1946 = vmatprep.subr.mxu0 0.0
          %1947 = vmatpush2.msra.mxu0 0.0
          %1948 = vmatprep.subr.mxu0 0.0
          %1949 = vmatpush2.msra.mxu0 0.0
          %1950 = vmatprep.subr.mxu0 0.0
          %1951 = vmatpush2.msra.mxu0 0.0
          %1952 = vmatprep.subr.mxu0 0.0
          %1953 = vmatpush2.msra.mxu0 0.0
          %1954 = vmatprep.subr.mxu0 0.0
          %1955 = vmatpush2.msra.mxu0 0.0
          %1956 = vmatprep.subr.mxu0 0.0
          %1957 = vmatpush2.msra.mxu0 0.0
          %1958 = vmatprep.subr.mxu0 0.0
          %1959 = vmatpush2.msra.mxu0 0.0
          %1960 = vmatprep.subr.mxu0 0.0
          %1961 = vmatpush2.msra.mxu0 0.0
          %1962 = vmatprep.subr.mxu0 0.0
          %1963 = vmatpush2.msra.mxu0 0.0
          %1964 = vmatprep.subr.mxu0 0.0
          %1965 = vmatpush2.msra.mxu0 0.0
          %1966 = vmatprep.subr.mxu0 0.0
          %1967 = vmatpush2.msra.mxu0 0.0
          %1968 = vmatprep.subr.mxu0 0.0
          %1969 = vmatpush2.msra.mxu0 0.0
          %1970 = vmatprep.subr.mxu0 0.0
          %1971 = vmatpush2.msra.mxu0 0.0
          %1972 = vmatprep.mubr.f32.mxu0 0.0
          %1973 = vmatmul.mubr.f32.gmra.mxu0 %v1904
          %v1974 = vpop.f32.mrf.mxu0
          %v1975 = vadd.f32 %v1896, %v1974
          %v1976 = vpop.f32.mrf.mxu0
          %1977 = vmatprep.mubr.f32.mxu0 0.0
          %1978 = vmatmul.mubr.f32.gmra.mxu0 %v1906
          %v1979 = vpop.f32.mrf.mxu0
          %v1980 = vadd.f32 %v1901, %v1979
          %v1981 = vpop.f32.mrf.mxu0
          %1982 = vdwg.mxu0
          %s1983 = scalar_lea.vmem %s7, 32
          %v1984 = vld [vmem:[%s1983] sm:$0xff]
          %v1985 = vld [vmem:[%s1983 + $0x8] sm:$0xff]
          %vm1986 = vcmask 1045504
          %v1987 = vrot.slane %v1811, 2
          %v1988 = vrot.slane %v1812, 2
          %v1989 = vsel %vm1986, %v1987, %v1988
          %v1990 = vsel %vm1824, %v1989, 0
          %v1992 = vsel %vm1824, %v1988, 0
          %1994 = vmatprep.subr.mxu0 0.0
          %1995 = vmatpush1.msra.mxu0 0.0
          %1996 = vmatprep.subr.mxu0 0.0
          %1997 = vmatpush1.msra.mxu0 0.0
          %1998 = vmatprep.subr.mxu0 0.0
          %1999 = vmatpush1.msra.mxu0 0.0
          %2000 = vmatprep.subr.mxu0 0.0
          %2001 = vmatpush1.msra.mxu0 0.0
          %2002 = vmatprep.subr.mxu0 0.0
          %2003 = vmatpush1.msra.mxu0 0.0
          %2004 = vmatprep.subr.mxu0 0.0
          %2005 = vmatpush1.msra.mxu0 0.0
          %2006 = vmatprep.subr.mxu0 0.0
          %2007 = vmatpush1.msra.mxu0 0.0
          %2008 = vmatprep.subr.mxu0 0.0
          %2009 = vmatpush1.msra.mxu0 0.0
          %2010 = vmatprep.subr.mxu0 0.0
          %2011 = vmatpush1.msra.mxu0 0.0
          %2012 = vmatprep.subr.mxu0 0.0
          %2013 = vmatpush1.msra.mxu0 0.0
          %2014 = vmatprep.subr.mxu0 0.0
          %2015 = vmatpush1.msra.mxu0 0.0
          %2016 = vmatprep.subr.mxu0 0.0
          %2017 = vmatpush1.msra.mxu0 0.0
          %2018 = vmatprep.subr.mxu0 0.0
          %2019 = vmatpush1.msra.mxu0 0.0
          %2020 = vmatprep.subr.mxu0 0.0
          %2021 = vmatpush1.msra.mxu0 0.0
          %2022 = vmatprep.subr.mxu0 0.0
          %2023 = vmatpush1.msra.mxu0 %v1985
          %2024 = vmatprep.subr.mxu0 0.0
          %2025 = vmatpush1.msra.mxu0 %v1984
          %2026 = vmatprep.subr.mxu0 0.0
          %2027 = vmatpush2.msra.mxu0 0.0
          %2028 = vmatprep.subr.mxu0 0.0
          %2029 = vmatpush2.msra.mxu0 0.0
          %2030 = vmatprep.subr.mxu0 0.0
          %2031 = vmatpush2.msra.mxu0 0.0
          %2032 = vmatprep.subr.mxu0 0.0
          %2033 = vmatpush2.msra.mxu0 0.0
          %2034 = vmatprep.subr.mxu0 0.0
          %2035 = vmatpush2.msra.mxu0 0.0
          %2036 = vmatprep.subr.mxu0 0.0
          %2037 = vmatpush2.msra.mxu0 0.0
          %2038 = vmatprep.subr.mxu0 0.0
          %2039 = vmatpush2.msra.mxu0 0.0
          %2040 = vmatprep.subr.mxu0 0.0
          %2041 = vmatpush2.msra.mxu0 0.0
          %2042 = vmatprep.subr.mxu0 0.0
          %2043 = vmatpush2.msra.mxu0 0.0
          %2044 = vmatprep.subr.mxu0 0.0
          %2045 = vmatpush2.msra.mxu0 0.0
          %2046 = vmatprep.subr.mxu0 0.0
          %2047 = vmatpush2.msra.mxu0 0.0
          %2048 = vmatprep.subr.mxu0 0.0
          %2049 = vmatpush2.msra.mxu0 0.0
          %2050 = vmatprep.subr.mxu0 0.0
          %2051 = vmatpush2.msra.mxu0 0.0
          %2052 = vmatprep.subr.mxu0 0.0
          %2053 = vmatpush2.msra.mxu0 0.0
          %2054 = vmatprep.subr.mxu0 0.0
          %2055 = vmatpush2.msra.mxu0 0.0
          %2056 = vmatprep.subr.mxu0 0.0
          %2057 = vmatpush2.msra.mxu0 0.0
          %2058 = vmatprep.mubr.f32.mxu0 0.0
          %2059 = vmatmul.mubr.f32.gmra.mxu0 %v1990
          %v2060 = vpop.f32.mrf.mxu0
          %v2061 = vadd.f32 0.0, %v2060
          %v2062 = vpop.f32.mrf.mxu0
          %2063 = vmatprep.mubr.f32.mxu0 0.0
          %2064 = vmatmul.mubr.f32.gmra.mxu0 %v1992
          %v2065 = vpop.f32.mrf.mxu0
          %v2066 = vadd.f32 0.0, %v2065
          %v2067 = vpop.f32.mrf.mxu0
          %2068 = vdwg.mxu0
          %v2069 = vadd.f32 %v1975, %v2061
          %v2070 = vadd.f32 %v1980, %v2066
          %s2071 = sadd.s32 %s1804, 1
          %s2072 = smul.u32 %s2071, 16
          %s2073 = scalar_lea.vmem [#allocation4], %s2072
          %v2074 = vld [vmem:[%s2073] sm:$0xff]
          %v2075 = vld [vmem:[%s2073 + $0x8] sm:$0xf]
          %s2076 = scalar_lea.vmem %s7, 48
          %v2077 = vld [vmem:[%s2076] sm:$0xff]
          %v2078 = vld [vmem:[%s2076 + $0x8] sm:$0xff]
          %v2080 = vsel %vm1824, %v2074, 0
          %v2083 = vsel %vm1824, %v2075, 0
          %2085 = vmatprep.subr.mxu0 0.0
          %2086 = vmatpush1.msra.mxu0 0.0
          %2087 = vmatprep.subr.mxu0 0.0
          %2088 = vmatpush1.msra.mxu0 0.0
          %2089 = vmatprep.subr.mxu0 0.0
          %2090 = vmatpush1.msra.mxu0 0.0
          %2091 = vmatprep.subr.mxu0 0.0
          %2092 = vmatpush1.msra.mxu0 0.0
          %2093 = vmatprep.subr.mxu0 0.0
          %2094 = vmatpush1.msra.mxu0 0.0
          %2095 = vmatprep.subr.mxu0 0.0
          %2096 = vmatpush1.msra.mxu0 0.0
          %2097 = vmatprep.subr.mxu0 0.0
          %2098 = vmatpush1.msra.mxu0 0.0
          %2099 = vmatprep.subr.mxu0 0.0
          %2100 = vmatpush1.msra.mxu0 0.0
          %2101 = vmatprep.subr.mxu0 0.0
          %2102 = vmatpush1.msra.mxu0 0.0
          %2103 = vmatprep.subr.mxu0 0.0
          %2104 = vmatpush1.msra.mxu0 0.0
          %2105 = vmatprep.subr.mxu0 0.0
          %2106 = vmatpush1.msra.mxu0 0.0
          %2107 = vmatprep.subr.mxu0 0.0
          %2108 = vmatpush1.msra.mxu0 0.0
          %2109 = vmatprep.subr.mxu0 0.0
          %2110 = vmatpush1.msra.mxu0 0.0
          %2111 = vmatprep.subr.mxu0 0.0
          %2112 = vmatpush1.msra.mxu0 0.0
          %2113 = vmatprep.subr.mxu0 0.0
          %2114 = vmatpush1.msra.mxu0 %v2078
          %2115 = vmatprep.subr.mxu0 0.0
          %2116 = vmatpush1.msra.mxu0 %v2077
          %2117 = vmatprep.subr.mxu0 0.0
          %2118 = vmatpush2.msra.mxu0 0.0
          %2119 = vmatprep.subr.mxu0 0.0
          %2120 = vmatpush2.msra.mxu0 0.0
          %2121 = vmatprep.subr.mxu0 0.0
          %2122 = vmatpush2.msra.mxu0 0.0
          %2123 = vmatprep.subr.mxu0 0.0
          %2124 = vmatpush2.msra.mxu0 0.0
          %2125 = vmatprep.subr.mxu0 0.0
          %2126 = vmatpush2.msra.mxu0 0.0
          %2127 = vmatprep.subr.mxu0 0.0
          %2128 = vmatpush2.msra.mxu0 0.0
          %2129 = vmatprep.subr.mxu0 0.0
          %2130 = vmatpush2.msra.mxu0 0.0
          %2131 = vmatprep.subr.mxu0 0.0
          %2132 = vmatpush2.msra.mxu0 0.0
          %2133 = vmatprep.subr.mxu0 0.0
          %2134 = vmatpush2.msra.mxu0 0.0
          %2135 = vmatprep.subr.mxu0 0.0
          %2136 = vmatpush2.msra.mxu0 0.0
          %2137 = vmatprep.subr.mxu0 0.0
          %2138 = vmatpush2.msra.mxu0 0.0
          %2139 = vmatprep.subr.mxu0 0.0
          %2140 = vmatpush2.msra.mxu0 0.0
          %2141 = vmatprep.subr.mxu0 0.0
          %2142 = vmatpush2.msra.mxu0 0.0
          %2143 = vmatprep.subr.mxu0 0.0
          %2144 = vmatpush2.msra.mxu0 0.0
          %2145 = vmatprep.subr.mxu0 0.0
          %2146 = vmatpush2.msra.mxu0 0.0
          %2147 = vmatprep.subr.mxu0 0.0
          %2148 = vmatpush2.msra.mxu0 0.0
          %2149 = vmatprep.mubr.f32.mxu0 0.0
          %2150 = vmatmul.mubr.f32.gmra.mxu0 %v2080
          %v2151 = vpop.f32.mrf.mxu0
          %v2152 = vadd.f32 0.0, %v2151
          %v2153 = vpop.f32.mrf.mxu0
          %2154 = vmatprep.mubr.f32.mxu0 0.0
          %2155 = vmatmul.mubr.f32.gmra.mxu0 %v2083
          %v2156 = vpop.f32.mrf.mxu0
          %v2157 = vadd.f32 0.0, %v2156
          %v2158 = vpop.f32.mrf.mxu0
          %2159 = vdwg.mxu0
          %v2160 = vadd.f32 %v2069, %v2152
          %v2161 = vadd.f32 %v2070, %v2157
          %s2162 = scalar_lea.vmem %s7, 64
          %v2163 = vld [vmem:[%s2162] sm:$0xff]
          %v2164 = vld [vmem:[%s2162 + $0x8] sm:$0xff]
          %v2165 = vrot.slane %v2074, 1
          %v2166 = vrot.slane %v2075, 1
          %v2167 = vsel %vm1820, %v2165, %v2166
          %v2168 = vsel %vm1824, %v2167, 0
          %v2170 = vsel %vm1824, %v2166, 0
          %2172 = vmatprep.subr.mxu0 0.0
          %2173 = vmatpush1.msra.mxu0 0.0
          %2174 = vmatprep.subr.mxu0 0.0
          %2175 = vmatpush1.msra.mxu0 0.0
          %2176 = vmatprep.subr.mxu0 0.0
          %2177 = vmatpush1.msra.mxu0 0.0
          %2178 = vmatprep.subr.mxu0 0.0
          %2179 = vmatpush1.msra.mxu0 0.0
          %2180 = vmatprep.subr.mxu0 0.0
          %2181 = vmatpush1.msra.mxu0 0.0
          %2182 = vmatprep.subr.mxu0 0.0
          %2183 = vmatpush1.msra.mxu0 0.0
          %2184 = vmatprep.subr.mxu0 0.0
          %2185 = vmatpush1.msra.mxu0 0.0
          %2186 = vmatprep.subr.mxu0 0.0
          %2187 = vmatpush1.msra.mxu0 0.0
          %2188 = vmatprep.subr.mxu0 0.0
          %2189 = vmatpush1.msra.mxu0 0.0
          %2190 = vmatprep.subr.mxu0 0.0
          %2191 = vmatpush1.msra.mxu0 0.0
          %2192 = vmatprep.subr.mxu0 0.0
          %2193 = vmatpush1.msra.mxu0 0.0
          %2194 = vmatprep.subr.mxu0 0.0
          %2195 = vmatpush1.msra.mxu0 0.0
          %2196 = vmatprep.subr.mxu0 0.0
          %2197 = vmatpush1.msra.mxu0 0.0
          %2198 = vmatprep.subr.mxu0 0.0
          %2199 = vmatpush1.msra.mxu0 0.0
          %2200 = vmatprep.subr.mxu0 0.0
          %2201 = vmatpush1.msra.mxu0 %v2164
          %2202 = vmatprep.subr.mxu0 0.0
          %2203 = vmatpush1.msra.mxu0 %v2163
          %2204 = vmatprep.subr.mxu0 0.0
          %2205 = vmatpush2.msra.mxu0 0.0
          %2206 = vmatprep.subr.mxu0 0.0
          %2207 = vmatpush2.msra.mxu0 0.0
          %2208 = vmatprep.subr.mxu0 0.0
          %2209 = vmatpush2.msra.mxu0 0.0
          %2210 = vmatprep.subr.mxu0 0.0
          %2211 = vmatpush2.msra.mxu0 0.0
          %2212 = vmatprep.subr.mxu0 0.0
          %2213 = vmatpush2.msra.mxu0 0.0
          %2214 = vmatprep.subr.mxu0 0.0
          %2215 = vmatpush2.msra.mxu0 0.0
          %2216 = vmatprep.subr.mxu0 0.0
          %2217 = vmatpush2.msra.mxu0 0.0
          %2218 = vmatprep.subr.mxu0 0.0
          %2219 = vmatpush2.msra.mxu0 0.0
          %2220 = vmatprep.subr.mxu0 0.0
          %2221 = vmatpush2.msra.mxu0 0.0
          %2222 = vmatprep.subr.mxu0 0.0
          %2223 = vmatpush2.msra.mxu0 0.0
          %2224 = vmatprep.subr.mxu0 0.0
          %2225 = vmatpush2.msra.mxu0 0.0
          %2226 = vmatprep.subr.mxu0 0.0
          %2227 = vmatpush2.msra.mxu0 0.0
          %2228 = vmatprep.subr.mxu0 0.0
          %2229 = vmatpush2.msra.mxu0 0.0
          %2230 = vmatprep.subr.mxu0 0.0
          %2231 = vmatpush2.msra.mxu0 0.0
          %2232 = vmatprep.subr.mxu0 0.0
          %2233 = vmatpush2.msra.mxu0 0.0
          %2234 = vmatprep.subr.mxu0 0.0
          %2235 = vmatpush2.msra.mxu0 0.0
          %2236 = vmatprep.mubr.f32.mxu0 0.0
          %2237 = vmatmul.mubr.f32.gmra.mxu0 %v2168
          %v2238 = vpop.f32.mrf.mxu0
          %v2239 = vadd.f32 0.0, %v2238
          %v2240 = vpop.f32.mrf.mxu0
          %2241 = vmatprep.mubr.f32.mxu0 0.0
          %2242 = vmatmul.mubr.f32.gmra.mxu0 %v2170
          %v2243 = vpop.f32.mrf.mxu0
          %v2244 = vadd.f32 0.0, %v2243
          %v2245 = vpop.f32.mrf.mxu0
          %2246 = vdwg.mxu0
          %v2247 = vadd.f32 %v2160, %v2239
          %v2248 = vadd.f32 %v2161, %v2244
          %s2249 = scalar_lea.vmem %s7, 80
          %v2250 = vld [vmem:[%s2249] sm:$0xff]
          %v2251 = vld [vmem:[%s2249 + $0x8] sm:$0xff]
          %v2252 = vrot.slane %v2074, 2
          %v2253 = vrot.slane %v2075, 2
          %v2254 = vsel %vm1986, %v2252, %v2253
          %v2255 = vsel %vm1824, %v2254, 0
          %v2257 = vsel %vm1824, %v2253, 0
          %2259 = vmatprep.subr.mxu0 0.0
          %2260 = vmatpush1.msra.mxu0 0.0
          %2261 = vmatprep.subr.mxu0 0.0
          %2262 = vmatpush1.msra.mxu0 0.0
          %2263 = vmatprep.subr.mxu0 0.0
          %2264 = vmatpush1.msra.mxu0 0.0
          %2265 = vmatprep.subr.mxu0 0.0
          %2266 = vmatpush1.msra.mxu0 0.0
          %2267 = vmatprep.subr.mxu0 0.0
          %2268 = vmatpush1.msra.mxu0 0.0
          %2269 = vmatprep.subr.mxu0 0.0
          %2270 = vmatpush1.msra.mxu0 0.0
          %2271 = vmatprep.subr.mxu0 0.0
          %2272 = vmatpush1.msra.mxu0 0.0
          %2273 = vmatprep.subr.mxu0 0.0
          %2274 = vmatpush1.msra.mxu0 0.0
          %2275 = vmatprep.subr.mxu0 0.0
          %2276 = vmatpush1.msra.mxu0 0.0
          %2277 = vmatprep.subr.mxu0 0.0
          %2278 = vmatpush1.msra.mxu0 0.0
          %2279 = vmatprep.subr.mxu0 0.0
          %2280 = vmatpush1.msra.mxu0 0.0
          %2281 = vmatprep.subr.mxu0 0.0
          %2282 = vmatpush1.msra.mxu0 0.0
          %2283 = vmatprep.subr.mxu0 0.0
          %2284 = vmatpush1.msra.mxu0 0.0
          %2285 = vmatprep.subr.mxu0 0.0
          %2286 = vmatpush1.msra.mxu0 0.0
          %2287 = vmatprep.subr.mxu0 0.0
          %2288 = vmatpush1.msra.mxu0 %v2251
          %2289 = vmatprep.subr.mxu0 0.0
          %2290 = vmatpush1.msra.mxu0 %v2250
          %2291 = vmatprep.subr.mxu0 0.0
          %2292 = vmatpush2.msra.mxu0 0.0
          %2293 = vmatprep.subr.mxu0 0.0
          %2294 = vmatpush2.msra.mxu0 0.0
          %2295 = vmatprep.subr.mxu0 0.0
          %2296 = vmatpush2.msra.mxu0 0.0
          %2297 = vmatprep.subr.mxu0 0.0
          %2298 = vmatpush2.msra.mxu0 0.0
          %2299 = vmatprep.subr.mxu0 0.0
          %2300 = vmatpush2.msra.mxu0 0.0
          %2301 = vmatprep.subr.mxu0 0.0
          %2302 = vmatpush2.msra.mxu0 0.0
          %2303 = vmatprep.subr.mxu0 0.0
          %2304 = vmatpush2.msra.mxu0 0.0
          %2305 = vmatprep.subr.mxu0 0.0
          %2306 = vmatpush2.msra.mxu0 0.0
          %2307 = vmatprep.subr.mxu0 0.0
          %2308 = vmatpush2.msra.mxu0 0.0
          %2309 = vmatprep.subr.mxu0 0.0
          %2310 = vmatpush2.msra.mxu0 0.0
          %2311 = vmatprep.subr.mxu0 0.0
          %2312 = vmatpush2.msra.mxu0 0.0
          %2313 = vmatprep.subr.mxu0 0.0
          %2314 = vmatpush2.msra.mxu0 0.0
          %2315 = vmatprep.subr.mxu0 0.0
          %2316 = vmatpush2.msra.mxu0 0.0
          %2317 = vmatprep.subr.mxu0 0.0
          %2318 = vmatpush2.msra.mxu0 0.0
          %2319 = vmatprep.subr.mxu0 0.0
          %2320 = vmatpush2.msra.mxu0 0.0
          %2321 = vmatprep.subr.mxu0 0.0
          %2322 = vmatpush2.msra.mxu0 0.0
          %2323 = vmatprep.mubr.f32.mxu0 0.0
          %2324 = vmatmul.mubr.f32.gmra.mxu0 %v2255
          %v2325 = vpop.f32.mrf.mxu0
          %v2326 = vadd.f32 0.0, %v2325
          %v2327 = vpop.f32.mrf.mxu0
          %2328 = vmatprep.mubr.f32.mxu0 0.0
          %2329 = vmatmul.mubr.f32.gmra.mxu0 %v2257
          %v2330 = vpop.f32.mrf.mxu0
          %v2331 = vadd.f32 0.0, %v2330
          %v2332 = vpop.f32.mrf.mxu0
          %2333 = vdwg.mxu0
          %v2334 = vadd.f32 %v2247, %v2326
          %v2335 = vadd.f32 %v2248, %v2331
          %s2336 = sadd.s32 %s1804, 2
          %s2337 = smul.u32 %s2336, 16
          %s2338 = scalar_lea.vmem [#allocation4], %s2337
          %v2339 = vld [vmem:[%s2338] sm:$0xff]
          %v2340 = vld [vmem:[%s2338 + $0x8] sm:$0xf]
          %s2341 = scalar_lea.vmem %s7, 96
          %v2342 = vld [vmem:[%s2341] sm:$0xff]
          %v2343 = vld [vmem:[%s2341 + $0x8] sm:$0xff]
          %v2345 = vsel %vm1824, %v2339, 0
          %v2348 = vsel %vm1824, %v2340, 0
          %2350 = vmatprep.subr.mxu0 0.0
          %2351 = vmatpush1.msra.mxu0 0.0
          %2352 = vmatprep.subr.mxu0 0.0
          %2353 = vmatpush1.msra.mxu0 0.0
          %2354 = vmatprep.subr.mxu0 0.0
          %2355 = vmatpush1.msra.mxu0 0.0
          %2356 = vmatprep.subr.mxu0 0.0
          %2357 = vmatpush1.msra.mxu0 0.0
          %2358 = vmatprep.subr.mxu0 0.0
          %2359 = vmatpush1.msra.mxu0 0.0
          %2360 = vmatprep.subr.mxu0 0.0
          %2361 = vmatpush1.msra.mxu0 0.0
          %2362 = vmatprep.subr.mxu0 0.0
          %2363 = vmatpush1.msra.mxu0 0.0
          %2364 = vmatprep.subr.mxu0 0.0
          %2365 = vmatpush1.msra.mxu0 0.0
          %2366 = vmatprep.subr.mxu0 0.0
          %2367 = vmatpush1.msra.mxu0 0.0
          %2368 = vmatprep.subr.mxu0 0.0
          %2369 = vmatpush1.msra.mxu0 0.0
          %2370 = vmatprep.subr.mxu0 0.0
          %2371 = vmatpush1.msra.mxu0 0.0
          %2372 = vmatprep.subr.mxu0 0.0
          %2373 = vmatpush1.msra.mxu0 0.0
          %2374 = vmatprep.subr.mxu0 0.0
          %2375 = vmatpush1.msra.mxu0 0.0
          %2376 = vmatprep.subr.mxu0 0.0
          %2377 = vmatpush1.msra.mxu0 0.0
          %2378 = vmatprep.subr.mxu0 0.0
          %2379 = vmatpush1.msra.mxu0 %v2343
          %2380 = vmatprep.subr.mxu0 0.0
          %2381 = vmatpush1.msra.mxu0 %v2342
          %2382 = vmatprep.subr.mxu0 0.0
          %2383 = vmatpush2.msra.mxu0 0.0
          %2384 = vmatprep.subr.mxu0 0.0
          %2385 = vmatpush2.msra.mxu0 0.0
          %2386 = vmatprep.subr.mxu0 0.0
          %2387 = vmatpush2.msra.mxu0 0.0
          %2388 = vmatprep.subr.mxu0 0.0
          %2389 = vmatpush2.msra.mxu0 0.0
          %2390 = vmatprep.subr.mxu0 0.0
          %2391 = vmatpush2.msra.mxu0 0.0
          %2392 = vmatprep.subr.mxu0 0.0
          %2393 = vmatpush2.msra.mxu0 0.0
          %2394 = vmatprep.subr.mxu0 0.0
          %2395 = vmatpush2.msra.mxu0 0.0
          %2396 = vmatprep.subr.mxu0 0.0
          %2397 = vmatpush2.msra.mxu0 0.0
          %2398 = vmatprep.subr.mxu0 0.0
          %2399 = vmatpush2.msra.mxu0 0.0
          %2400 = vmatprep.subr.mxu0 0.0
          %2401 = vmatpush2.msra.mxu0 0.0
          %2402 = vmatprep.subr.mxu0 0.0
          %2403 = vmatpush2.msra.mxu0 0.0
          %2404 = vmatprep.subr.mxu0 0.0
          %2405 = vmatpush2.msra.mxu0 0.0
          %2406 = vmatprep.subr.mxu0 0.0
          %2407 = vmatpush2.msra.mxu0 0.0
          %2408 = vmatprep.subr.mxu0 0.0
          %2409 = vmatpush2.msra.mxu0 0.0
          %2410 = vmatprep.subr.mxu0 0.0
          %2411 = vmatpush2.msra.mxu0 0.0
          %2412 = vmatprep.subr.mxu0 0.0
          %2413 = vmatpush2.msra.mxu0 0.0
          %2414 = vmatprep.mubr.f32.mxu0 0.0
          %2415 = vmatmul.mubr.f32.gmra.mxu0 %v2345
          %v2416 = vpop.f32.mrf.mxu0
          %v2417 = vadd.f32 0.0, %v2416
          %v2418 = vpop.f32.mrf.mxu0
          %2419 = vmatprep.mubr.f32.mxu0 0.0
          %2420 = vmatmul.mubr.f32.gmra.mxu0 %v2348
          %v2421 = vpop.f32.mrf.mxu0
          %v2422 = vadd.f32 0.0, %v2421
          %v2423 = vpop.f32.mrf.mxu0
          %2424 = vdwg.mxu0
          %v2425 = vadd.f32 %v2334, %v2417
          %v2426 = vadd.f32 %v2335, %v2422
          %s2427 = scalar_lea.vmem %s7, 112
          %v2428 = vld [vmem:[%s2427] sm:$0xff]
          %v2429 = vld [vmem:[%s2427 + $0x8] sm:$0xff]
          %v2430 = vrot.slane %v2339, 1
          %v2431 = vrot.slane %v2340, 1
          %v2432 = vsel %vm1820, %v2430, %v2431
          %v2433 = vsel %vm1824, %v2432, 0
          %v2435 = vsel %vm1824, %v2431, 0
          %2437 = vmatprep.subr.mxu0 0.0
          %2438 = vmatpush1.msra.mxu0 0.0
          %2439 = vmatprep.subr.mxu0 0.0
          %2440 = vmatpush1.msra.mxu0 0.0
          %2441 = vmatprep.subr.mxu0 0.0
          %2442 = vmatpush1.msra.mxu0 0.0
          %2443 = vmatprep.subr.mxu0 0.0
          %2444 = vmatpush1.msra.mxu0 0.0
          %2445 = vmatprep.subr.mxu0 0.0
          %2446 = vmatpush1.msra.mxu0 0.0
          %2447 = vmatprep.subr.mxu0 0.0
          %2448 = vmatpush1.msra.mxu0 0.0
          %2449 = vmatprep.subr.mxu0 0.0
          %2450 = vmatpush1.msra.mxu0 0.0
          %2451 = vmatprep.subr.mxu0 0.0
          %2452 = vmatpush1.msra.mxu0 0.0
          %2453 = vmatprep.subr.mxu0 0.0
          %2454 = vmatpush1.msra.mxu0 0.0
          %2455 = vmatprep.subr.mxu0 0.0
          %2456 = vmatpush1.msra.mxu0 0.0
          %2457 = vmatprep.subr.mxu0 0.0
          %2458 = vmatpush1.msra.mxu0 0.0
          %2459 = vmatprep.subr.mxu0 0.0
          %2460 = vmatpush1.msra.mxu0 0.0
          %2461 = vmatprep.subr.mxu0 0.0
          %2462 = vmatpush1.msra.mxu0 0.0
          %2463 = vmatprep.subr.mxu0 0.0
          %2464 = vmatpush1.msra.mxu0 0.0
          %2465 = vmatprep.subr.mxu0 0.0
          %2466 = vmatpush1.msra.mxu0 %v2429
          %2467 = vmatprep.subr.mxu0 0.0
          %2468 = vmatpush1.msra.mxu0 %v2428
          %2469 = vmatprep.subr.mxu0 0.0
          %2470 = vmatpush2.msra.mxu0 0.0
          %2471 = vmatprep.subr.mxu0 0.0
          %2472 = vmatpush2.msra.mxu0 0.0
          %2473 = vmatprep.subr.mxu0 0.0
          %2474 = vmatpush2.msra.mxu0 0.0
          %2475 = vmatprep.subr.mxu0 0.0
          %2476 = vmatpush2.msra.mxu0 0.0
          %2477 = vmatprep.subr.mxu0 0.0
          %2478 = vmatpush2.msra.mxu0 0.0
          %2479 = vmatprep.subr.mxu0 0.0
          %2480 = vmatpush2.msra.mxu0 0.0
          %2481 = vmatprep.subr.mxu0 0.0
          %2482 = vmatpush2.msra.mxu0 0.0
          %2483 = vmatprep.subr.mxu0 0.0
          %2484 = vmatpush2.msra.mxu0 0.0
          %2485 = vmatprep.subr.mxu0 0.0
          %2486 = vmatpush2.msra.mxu0 0.0
          %2487 = vmatprep.subr.mxu0 0.0
          %2488 = vmatpush2.msra.mxu0 0.0
          %2489 = vmatprep.subr.mxu0 0.0
          %2490 = vmatpush2.msra.mxu0 0.0
          %2491 = vmatprep.subr.mxu0 0.0
          %2492 = vmatpush2.msra.mxu0 0.0
          %2493 = vmatprep.subr.mxu0 0.0
          %2494 = vmatpush2.msra.mxu0 0.0
          %2495 = vmatprep.subr.mxu0 0.0
          %2496 = vmatpush2.msra.mxu0 0.0
          %2497 = vmatprep.subr.mxu0 0.0
          %2498 = vmatpush2.msra.mxu0 0.0
          %2499 = vmatprep.subr.mxu0 0.0
          %2500 = vmatpush2.msra.mxu0 0.0
          %2501 = vmatprep.mubr.f32.mxu0 0.0
          %2502 = vmatmul.mubr.f32.gmra.mxu0 %v2433
          %v2503 = vpop.f32.mrf.mxu0
          %v2504 = vadd.f32 0.0, %v2503
          %v2505 = vpop.f32.mrf.mxu0
          %2506 = vmatprep.mubr.f32.mxu0 0.0
          %2507 = vmatmul.mubr.f32.gmra.mxu0 %v2435
          %v2508 = vpop.f32.mrf.mxu0
          %v2509 = vadd.f32 0.0, %v2508
          %v2510 = vpop.f32.mrf.mxu0
          %2511 = vdwg.mxu0
          %v2512 = vadd.f32 %v2425, %v2504
          %v2513 = vadd.f32 %v2426, %v2509
          %s2514 = scalar_lea.vmem %s7, 128
          %v2515 = vld [vmem:[%s2514] sm:$0xff]
          %v2516 = vld [vmem:[%s2514 + $0x8] sm:$0xff]
          %v2517 = vrot.slane %v2339, 2
          %v2518 = vrot.slane %v2340, 2
          %v2519 = vsel %vm1986, %v2517, %v2518
          %v2520 = vsel %vm1824, %v2519, 0
          %v2522 = vsel %vm1824, %v2518, 0
          %2524 = vmatprep.subr.mxu0 0.0
          %2525 = vmatpush1.msra.mxu0 0.0
          %2526 = vmatprep.subr.mxu0 0.0
          %2527 = vmatpush1.msra.mxu0 0.0
          %2528 = vmatprep.subr.mxu0 0.0
          %2529 = vmatpush1.msra.mxu0 0.0
          %2530 = vmatprep.subr.mxu0 0.0
          %2531 = vmatpush1.msra.mxu0 0.0
          %2532 = vmatprep.subr.mxu0 0.0
          %2533 = vmatpush1.msra.mxu0 0.0
          %2534 = vmatprep.subr.mxu0 0.0
          %2535 = vmatpush1.msra.mxu0 0.0
          %2536 = vmatprep.subr.mxu0 0.0
          %2537 = vmatpush1.msra.mxu0 0.0
          %2538 = vmatprep.subr.mxu0 0.0
          %2539 = vmatpush1.msra.mxu0 0.0
          %2540 = vmatprep.subr.mxu0 0.0
          %2541 = vmatpush1.msra.mxu0 0.0
          %2542 = vmatprep.subr.mxu0 0.0
          %2543 = vmatpush1.msra.mxu0 0.0
          %2544 = vmatprep.subr.mxu0 0.0
          %2545 = vmatpush1.msra.mxu0 0.0
          %2546 = vmatprep.subr.mxu0 0.0
          %2547 = vmatpush1.msra.mxu0 0.0
          %2548 = vmatprep.subr.mxu0 0.0
          %2549 = vmatpush1.msra.mxu0 0.0
          %2550 = vmatprep.subr.mxu0 0.0
          %2551 = vmatpush1.msra.mxu0 0.0
          %2552 = vmatprep.subr.mxu0 0.0
          %2553 = vmatpush1.msra.mxu0 %v2516
          %2554 = vmatprep.subr.mxu0 0.0
          %2555 = vmatpush1.msra.mxu0 %v2515
          %2556 = vmatprep.subr.mxu0 0.0
          %2557 = vmatpush2.msra.mxu0 0.0
          %2558 = vmatprep.subr.mxu0 0.0
          %2559 = vmatpush2.msra.mxu0 0.0
          %2560 = vmatprep.subr.mxu0 0.0
          %2561 = vmatpush2.msra.mxu0 0.0
          %2562 = vmatprep.subr.mxu0 0.0
          %2563 = vmatpush2.msra.mxu0 0.0
          %2564 = vmatprep.subr.mxu0 0.0
          %2565 = vmatpush2.msra.mxu0 0.0
          %2566 = vmatprep.subr.mxu0 0.0
          %2567 = vmatpush2.msra.mxu0 0.0
          %2568 = vmatprep.subr.mxu0 0.0
          %2569 = vmatpush2.msra.mxu0 0.0
          %2570 = vmatprep.subr.mxu0 0.0
          %2571 = vmatpush2.msra.mxu0 0.0
          %2572 = vmatprep.subr.mxu0 0.0
          %2573 = vmatpush2.msra.mxu0 0.0
          %2574 = vmatprep.subr.mxu0 0.0
          %2575 = vmatpush2.msra.mxu0 0.0
          %2576 = vmatprep.subr.mxu0 0.0
          %2577 = vmatpush2.msra.mxu0 0.0
          %2578 = vmatprep.subr.mxu0 0.0
          %2579 = vmatpush2.msra.mxu0 0.0
          %2580 = vmatprep.subr.mxu0 0.0
          %2581 = vmatpush2.msra.mxu0 0.0
          %2582 = vmatprep.subr.mxu0 0.0
          %2583 = vmatpush2.msra.mxu0 0.0
          %2584 = vmatprep.subr.mxu0 0.0
          %2585 = vmatpush2.msra.mxu0 0.0
          %2586 = vmatprep.subr.mxu0 0.0
          %2587 = vmatpush2.msra.mxu0 0.0
          %2588 = vmatprep.mubr.f32.mxu0 0.0
          %2589 = vmatmul.mubr.f32.gmra.mxu0 %v2520
          %v2590 = vpop.f32.mrf.mxu0
          %v2591 = vadd.f32 0.0, %v2590
          %v2592 = vpop.f32.mrf.mxu0
          %2593 = vmatprep.mubr.f32.mxu0 0.0
          %2594 = vmatmul.mubr.f32.gmra.mxu0 %v2522
          %v2595 = vpop.f32.mrf.mxu0
          %v2596 = vadd.f32 0.0, %v2595
          %v2597 = vpop.f32.mrf.mxu0
          %2598 = vdwg.mxu0
          %v2599 = vadd.f32 %v2512, %v2591
          %v2600 = vadd.f32 %v2513, %v2596
          %v2602 = vlaneseq
          %v2603 = vshrl.u32 %v2602, 7
          %v2604 = vsub.s32 0, %v2603
          %v2605 = vrot.slane %v1801, %v2604
          %v2607 = vmul.f32 %v2599, %v2605
          %v2608 = vmul.f32 %v2600, %v2605
          %v2610 = vlaneseq
          %v2611 = vshrl.u32 %v2610, 7
          %v2612 = vsub.s32 0, %v2611
          %v2613 = vrot.slane %v1802, %v2612
          %v2615 = vadd.f32 %v2607, %v2613
          %v2616 = vadd.f32 %v2608, %v2613
          %v2617 = vmax.f32 %v2615, 0.0
          %v2618 = vmax.f32 %v2616, 0.0
          %s2619 = scalar_lea.vmem [#allocation5], %s1809
          %vm2620 = vcmask 523264
          %2621 = vst.msk [vmem:[%s2619] sm:$0xff] %vm2620, %v2617
          %vm2622 = vcmask 517120
          %2623 = vst.msk [vmem:[%s2619 + $0x8] sm:$0x3] %vm2622, %v2618
        $region134: #{chestcnn_forward.1} parent=107 // loop_footer
          %s1808 = sadd.s32 1, %s1804
        $region135: #{chestcnn_forward.1} parent=107 // loop_footer_branch
          %1803 = sbr.rel target = $region131
        $region136: #{chestcnn_forward.1} parent=107 // loop_exit
          _
        %v2624 = vld [vmem:[%s11] sm:$0x1]
        %v2625 = vld [vmem:[%s12] sm:$0x1]
        loop: start=0, step=1, limit=8
        $region137: #{chestcnn_forward.1} parent=107 // loop_pre_header
          _
        $region138: #{chestcnn_forward.1} parent=107 // loop_header
          %s2627 = sphi 0, %s2631
          %p2628 = scmp.ge.s32.totalorder %s2627, 8
        $region139: #{chestcnn_forward.1} parent=107 // loop_header_branch
          %2630 = sbr.rel (%p2628) target = $region143
        $region140: #{chestcnn_forward.1} parent=107 // loop_body
          %s2632 = smul.u32 %s2627, 16
          %s2633 = scalar_lea.vmem [#allocation5], %s2632
          %v2634 = vld [vmem:[%s2633] sm:$0xff]
          %v2635 = vld [vmem:[%s2633 + $0x8] sm:$0x3]
          %v2636 = vld [vmem:[%s10] sm:$0xff]
          %v2637 = vld [vmem:[%s10 + $0x8] sm:$0xff]
          %v2638 = vld [vmem:[%s10 + $0x10] sm:$0xff]
          %v2639 = vld [vmem:[%s10 + $0x18] sm:$0xff]
          %v2640 = vld [vmem:[%s10 + $0x20] sm:$0xff]
          %v2641 = vld [vmem:[%s10 + $0x28] sm:$0xff]
          %v2642 = vld [vmem:[%s10 + $0x30] sm:$0xff]
          %v2643 = vld [vmem:[%s10 + $0x38] sm:$0xff]
          %s2644 = scalar_lea.vmem %s10, 64
          %v2645 = vld [vmem:[%s2644] sm:$0xff]
          %v2646 = vld [vmem:[%s2644 + $0x8] sm:$0xff]
          %v2647 = vld [vmem:[%s2644 + $0x10] sm:$0xff]
          %v2648 = vld [vmem:[%s2644 + $0x18] sm:$0xff]
          %v2649 = vld [vmem:[%s2644 + $0x20] sm:$0xff]
          %v2650 = vld [vmem:[%s2644 + $0x28] sm:$0xff]
          %v2651 = vld [vmem:[%s2644 + $0x30] sm:$0xff]
          %v2652 = vld [vmem:[%s2644 + $0x38] sm:$0xff]
          %vm2655 = vcmask 1046528
          %v2656 = vrot.slane %v2634, 1
          %v2657 = vrot.slane %v2635, 1
          %v2658 = vsel %vm2655, %v2656, %v2657
          %vm2659 = vcmask 523264
          %v2660 = vsel %vm2659, %v2658, 0
          %2662 = vmatprep.subr.mxu0 0.0
          %2663 = vmatpush1.msra.mxu0 0.0
          %2664 = vmatprep.subr.mxu0 0.0
          %2665 = vmatpush1.msra.mxu0 0.0
          %2666 = vmatprep.subr.mxu0 0.0
          %2667 = vmatpush1.msra.mxu0 0.0
          %2668 = vmatprep.subr.mxu0 0.0
          %2669 = vmatpush1.msra.mxu0 0.0
          %2670 = vmatprep.subr.mxu0 0.0
          %2671 = vmatpush1.msra.mxu0 0.0
          %2672 = vmatprep.subr.mxu0 0.0
          %2673 = vmatpush1.msra.mxu0 0.0
          %2674 = vmatprep.subr.mxu0 0.0
          %2675 = vmatpush1.msra.mxu0 0.0
          %2676 = vmatprep.subr.mxu0 0.0
          %2677 = vmatpush1.msra.mxu0 0.0
          %2678 = vmatprep.subr.mxu0 0.0
          %2679 = vmatpush1.msra.mxu0 %v2652
          %2680 = vmatprep.subr.mxu0 0.0
          %2681 = vmatpush1.msra.mxu0 %v2651
          %2682 = vmatprep.subr.mxu0 0.0
          %2683 = vmatpush1.msra.mxu0 %v2650
          %2684 = vmatprep.subr.mxu0 0.0
          %2685 = vmatpush1.msra.mxu0 %v2649
          %2686 = vmatprep.subr.mxu0 0.0
          %2687 = vmatpush1.msra.mxu0 %v2648
          %2688 = vmatprep.subr.mxu0 0.0
          %2689 = vmatpush1.msra.mxu0 %v2647
          %2690 = vmatprep.subr.mxu0 0.0
          %2691 = vmatpush1.msra.mxu0 %v2646
          %2692 = vmatprep.subr.mxu0 0.0
          %2693 = vmatpush1.msra.mxu0 %v2645
          %2694 = vmatprep.subr.mxu0 0.0
          %2695 = vmatpush2.msra.mxu0 0.0
          %2696 = vmatprep.subr.mxu0 0.0
          %2697 = vmatpush2.msra.mxu0 0.0
          %2698 = vmatprep.subr.mxu0 0.0
          %2699 = vmatpush2.msra.mxu0 0.0
          %2700 = vmatprep.subr.mxu0 0.0
          %2701 = vmatpush2.msra.mxu0 0.0
          %2702 = vmatprep.subr.mxu0 0.0
          %2703 = vmatpush2.msra.mxu0 0.0
          %2704 = vmatprep.subr.mxu0 0.0
          %2705 = vmatpush2.msra.mxu0 0.0
          %2706 = vmatprep.subr.mxu0 0.0
          %2707 = vmatpush2.msra.mxu0 0.0
          %2708 = vmatprep.subr.mxu0 0.0
          %2709 = vmatpush2.msra.mxu0 0.0
          %2710 = vmatprep.subr.mxu0 0.0
          %2711 = vmatpush2.msra.mxu0 0.0
          %2712 = vmatprep.subr.mxu0 0.0
          %2713 = vmatpush2.msra.mxu0 0.0
          %2714 = vmatprep.subr.mxu0 0.0
          %2715 = vmatpush2.msra.mxu0 0.0
          %2716 = vmatprep.subr.mxu0 0.0
          %2717 = vmatpush2.msra.mxu0 0.0
          %2718 = vmatprep.subr.mxu0 0.0
          %2719 = vmatpush2.msra.mxu0 0.0
          %2720 = vmatprep.subr.mxu0 0.0
          %2721 = vmatpush2.msra.mxu0 0.0
          %2722 = vmatprep.subr.mxu0 0.0
          %2723 = vmatpush2.msra.mxu0 0.0
          %2724 = vmatprep.subr.mxu0 0.0
          %2725 = vmatpush2.msra.mxu0 0.0
          %2726 = vmatprep.mubr.f32.mxu0 0.0
          %2727 = vmatmul.mubr.f32.gmra.mxu0 %v2660
          %v2728 = vpop.f32.mrf.mxu0
          %v2729 = vadd.f32 0.0, %v2728
          %v2730 = vpop.f32.mrf.mxu0
          %2731 = vdwg.mxu0
          %v2732 = vsel %vm2659, %v2634, 0
          %2734 = vmatprep.subr.mxu0 0.0
          %2735 = vmatpush1.msra.mxu0 0.0
          %2736 = vmatprep.subr.mxu0 0.0
          %2737 = vmatpush1.msra.mxu0 0.0
          %2738 = vmatprep.subr.mxu0 0.0
          %2739 = vmatpush1.msra.mxu0 0.0
          %2740 = vmatprep.subr.mxu0 0.0
          %2741 = vmatpush1.msra.mxu0 0.0
          %2742 = vmatprep.subr.mxu0 0.0
          %2743 = vmatpush1.msra.mxu0 0.0
          %2744 = vmatprep.subr.mxu0 0.0
          %2745 = vmatpush1.msra.mxu0 0.0
          %2746 = vmatprep.subr.mxu0 0.0
          %2747 = vmatpush1.msra.mxu0 0.0
          %2748 = vmatprep.subr.mxu0 0.0
          %2749 = vmatpush1.msra.mxu0 0.0
          %2750 = vmatprep.subr.mxu0 0.0
          %2751 = vmatpush1.msra.mxu0 %v2643
          %2752 = vmatprep.subr.mxu0 0.0
          %2753 = vmatpush1.msra.mxu0 %v2642
          %2754 = vmatprep.subr.mxu0 0.0
          %2755 = vmatpush1.msra.mxu0 %v2641
          %2756 = vmatprep.subr.mxu0 0.0
          %2757 = vmatpush1.msra.mxu0 %v2640
          %2758 = vmatprep.subr.mxu0 0.0
          %2759 = vmatpush1.msra.mxu0 %v2639
          %2760 = vmatprep.subr.mxu0 0.0
          %2761 = vmatpush1.msra.mxu0 %v2638
          %2762 = vmatprep.subr.mxu0 0.0
          %2763 = vmatpush1.msra.mxu0 %v2637
          %2764 = vmatprep.subr.mxu0 0.0
          %2765 = vmatpush1.msra.mxu0 %v2636
          %2766 = vmatprep.subr.mxu0 0.0
          %2767 = vmatpush2.msra.mxu0 0.0
          %2768 = vmatprep.subr.mxu0 0.0
          %2769 = vmatpush2.msra.mxu0 0.0
          %2770 = vmatprep.subr.mxu0 0.0
          %2771 = vmatpush2.msra.mxu0 0.0
          %2772 = vmatprep.subr.mxu0 0.0
          %2773 = vmatpush2.msra.mxu0 0.0
          %2774 = vmatprep.subr.mxu0 0.0
          %2775 = vmatpush2.msra.mxu0 0.0
          %2776 = vmatprep.subr.mxu0 0.0
          %2777 = vmatpush2.msra.mxu0 0.0
          %2778 = vmatprep.subr.mxu0 0.0
          %2779 = vmatpush2.msra.mxu0 0.0
          %2780 = vmatprep.subr.mxu0 0.0
          %2781 = vmatpush2.msra.mxu0 0.0
          %2782 = vmatprep.subr.mxu0 0.0
          %2783 = vmatpush2.msra.mxu0 0.0
          %2784 = vmatprep.subr.mxu0 0.0
          %2785 = vmatpush2.msra.mxu0 0.0
          %2786 = vmatprep.subr.mxu0 0.0
          %2787 = vmatpush2.msra.mxu0 0.0
          %2788 = vmatprep.subr.mxu0 0.0
          %2789 = vmatpush2.msra.mxu0 0.0
          %2790 = vmatprep.subr.mxu0 0.0
          %2791 = vmatpush2.msra.mxu0 0.0
          %2792 = vmatprep.subr.mxu0 0.0
          %2793 = vmatpush2.msra.mxu0 0.0
          %2794 = vmatprep.subr.mxu0 0.0
          %2795 = vmatpush2.msra.mxu0 0.0
          %2796 = vmatprep.subr.mxu0 0.0
          %2797 = vmatpush2.msra.mxu0 0.0
          %2798 = vmatprep.mubr.f32.mxu0 0.0
          %2799 = vmatmul.mubr.f32.gmra.mxu0 %v2732
          %v2800 = vpop.f32.mrf.mxu0
          %v2801 = vadd.f32 %v2729, %v2800
          %v2802 = vpop.f32.mrf.mxu0
          %2803 = vdwg.mxu0
          %s2804 = scalar_lea.vmem %s10, 128
          %v2805 = vld [vmem:[%s2804] sm:$0xff]
          %v2806 = vld [vmem:[%s2804 + $0x8] sm:$0xff]
          %v2807 = vld [vmem:[%s2804 + $0x10] sm:$0xff]
          %v2808 = vld [vmem:[%s2804 + $0x18] sm:$0xff]
          %v2809 = vld [vmem:[%s2804 + $0x20] sm:$0xff]
          %v2810 = vld [vmem:[%s2804 + $0x28] sm:$0xff]
          %v2811 = vld [vmem:[%s2804 + $0x30] sm:$0xff]
          %v2812 = vld [vmem:[%s2804 + $0x38] sm:$0xff]
          %vm2813 = vcmask 1045504
          %v2814 = vrot.slane %v2634, 2
          %v2815 = vrot.slane %v2635, 2
          %v2816 = vsel %vm2813, %v2814, %v2815
          %v2817 = vsel %vm2659, %v2816, 0
          %2819 = vmatprep.subr.mxu0 0.0
          %2820 = vmatpush1.msra.mxu0 0.0
          %2821 = vmatprep.subr.mxu0 0.0
          %2822 = vmatpush1.msra.mxu0 0.0
          %2823 = vmatprep.subr.mxu0 0.0
          %2824 = vmatpush1.msra.mxu0 0.0
          %2825 = vmatprep.subr.mxu0 0.0
          %2826 = vmatpush1.msra.mxu0 0.0
          %2827 = vmatprep.subr.mxu0 0.0
          %2828 = vmatpush1.msra.mxu0 0.0
          %2829 = vmatprep.subr.mxu0 0.0
          %2830 = vmatpush1.msra.mxu0 0.0
          %2831 = vmatprep.subr.mxu0 0.0
          %2832 = vmatpush1.msra.mxu0 0.0
          %2833 = vmatprep.subr.mxu0 0.0
          %2834 = vmatpush1.msra.mxu0 0.0
          %2835 = vmatprep.subr.mxu0 0.0
          %2836 = vmatpush1.msra.mxu0 %v2812
          %2837 = vmatprep.subr.mxu0 0.0
          %2838 = vmatpush1.msra.mxu0 %v2811
          %2839 = vmatprep.subr.mxu0 0.0
          %2840 = vmatpush1.msra.mxu0 %v2810
          %2841 = vmatprep.subr.mxu0 0.0
          %2842 = vmatpush1.msra.mxu0 %v2809
          %2843 = vmatprep.subr.mxu0 0.0
          %2844 = vmatpush1.msra.mxu0 %v2808
          %2845 = vmatprep.subr.mxu0 0.0
          %2846 = vmatpush1.msra.mxu0 %v2807
          %2847 = vmatprep.subr.mxu0 0.0
          %2848 = vmatpush1.msra.mxu0 %v2806
          %2849 = vmatprep.subr.mxu0 0.0
          %2850 = vmatpush1.msra.mxu0 %v2805
          %2851 = vmatprep.subr.mxu0 0.0
          %2852 = vmatpush2.msra.mxu0 0.0
          %2853 = vmatprep.subr.mxu0 0.0
          %2854 = vmatpush2.msra.mxu0 0.0
          %2855 = vmatprep.subr.mxu0 0.0
          %2856 = vmatpush2.msra.mxu0 0.0
          %2857 = vmatprep.subr.mxu0 0.0
          %2858 = vmatpush2.msra.mxu0 0.0
          %2859 = vmatprep.subr.mxu0 0.0
          %2860 = vmatpush2.msra.mxu0 0.0
          %2861 = vmatprep.subr.mxu0 0.0
          %2862 = vmatpush2.msra.mxu0 0.0
          %2863 = vmatprep.subr.mxu0 0.0
          %2864 = vmatpush2.msra.mxu0 0.0
          %2865 = vmatprep.subr.mxu0 0.0
          %2866 = vmatpush2.msra.mxu0 0.0
          %2867 = vmatprep.subr.mxu0 0.0
          %2868 = vmatpush2.msra.mxu0 0.0
          %2869 = vmatprep.subr.mxu0 0.0
          %2870 = vmatpush2.msra.mxu0 0.0
          %2871 = vmatprep.subr.mxu0 0.0
          %2872 = vmatpush2.msra.mxu0 0.0
          %2873 = vmatprep.subr.mxu0 0.0
          %2874 = vmatpush2.msra.mxu0 0.0
          %2875 = vmatprep.subr.mxu0 0.0
          %2876 = vmatpush2.msra.mxu0 0.0
          %2877 = vmatprep.subr.mxu0 0.0
          %2878 = vmatpush2.msra.mxu0 0.0
          %2879 = vmatprep.subr.mxu0 0.0
          %2880 = vmatpush2.msra.mxu0 0.0
          %2881 = vmatprep.subr.mxu0 0.0
          %2882 = vmatpush2.msra.mxu0 0.0
          %2883 = vmatprep.mubr.f32.mxu0 0.0
          %2884 = vmatmul.mubr.f32.gmra.mxu0 %v2817
          %v2885 = vpop.f32.mrf.mxu0
          %v2886 = vadd.f32 0.0, %v2885
          %v2887 = vpop.f32.mrf.mxu0
          %2888 = vdwg.mxu0
          %v2889 = vadd.f32 %v2801, %v2886
          %s2890 = sadd.s32 %s2627, 1
          %s2891 = smul.u32 %s2890, 16
          %s2892 = scalar_lea.vmem [#allocation5], %s2891
          %v2893 = vld [vmem:[%s2892] sm:$0xff]
          %v2894 = vld [vmem:[%s2892 + $0x8] sm:$0x3]
          %s2895 = scalar_lea.vmem %s10, 192
          %v2896 = vld [vmem:[%s2895] sm:$0xff]
          %v2897 = vld [vmem:[%s2895 + $0x8] sm:$0xff]
          %v2898 = vld [vmem:[%s2895 + $0x10] sm:$0xff]
          %v2899 = vld [vmem:[%s2895 + $0x18] sm:$0xff]
          %v2900 = vld [vmem:[%s2895 + $0x20] sm:$0xff]
          %v2901 = vld [vmem:[%s2895 + $0x28] sm:$0xff]
          %v2902 = vld [vmem:[%s2895 + $0x30] sm:$0xff]
          %v2903 = vld [vmem:[%s2895 + $0x38] sm:$0xff]
          %v2905 = vsel %vm2659, %v2893, 0
          %2907 = vmatprep.subr.mxu0 0.0
          %2908 = vmatpush1.msra.mxu0 0.0
          %2909 = vmatprep.subr.mxu0 0.0
          %2910 = vmatpush1.msra.mxu0 0.0
          %2911 = vmatprep.subr.mxu0 0.0
          %2912 = vmatpush1.msra.mxu0 0.0
          %2913 = vmatprep.subr.mxu0 0.0
          %2914 = vmatpush1.msra.mxu0 0.0
          %2915 = vmatprep.subr.mxu0 0.0
          %2916 = vmatpush1.msra.mxu0 0.0
          %2917 = vmatprep.subr.mxu0 0.0
          %2918 = vmatpush1.msra.mxu0 0.0
          %2919 = vmatprep.subr.mxu0 0.0
          %2920 = vmatpush1.msra.mxu0 0.0
          %2921 = vmatprep.subr.mxu0 0.0
          %2922 = vmatpush1.msra.mxu0 0.0
          %2923 = vmatprep.subr.mxu0 0.0
          %2924 = vmatpush1.msra.mxu0 %v2903
          %2925 = vmatprep.subr.mxu0 0.0
          %2926 = vmatpush1.msra.mxu0 %v2902
          %2927 = vmatprep.subr.mxu0 0.0
          %2928 = vmatpush1.msra.mxu0 %v2901
          %2929 = vmatprep.subr.mxu0 0.0
          %2930 = vmatpush1.msra.mxu0 %v2900
          %2931 = vmatprep.subr.mxu0 0.0
          %2932 = vmatpush1.msra.mxu0 %v2899
          %2933 = vmatprep.subr.mxu0 0.0
          %2934 = vmatpush1.msra.mxu0 %v2898
          %2935 = vmatprep.subr.mxu0 0.0
          %2936 = vmatpush1.msra.mxu0 %v2897
          %2937 = vmatprep.subr.mxu0 0.0
          %2938 = vmatpush1.msra.mxu0 %v2896
          %2939 = vmatprep.subr.mxu0 0.0
          %2940 = vmatpush2.msra.mxu0 0.0
          %2941 = vmatprep.subr.mxu0 0.0
          %2942 = vmatpush2.msra.mxu0 0.0
          %2943 = vmatprep.subr.mxu0 0.0
          %2944 = vmatpush2.msra.mxu0 0.0
          %2945 = vmatprep.subr.mxu0 0.0
          %2946 = vmatpush2.msra.mxu0 0.0
          %2947 = vmatprep.subr.mxu0 0.0
          %2948 = vmatpush2.msra.mxu0 0.0
          %2949 = vmatprep.subr.mxu0 0.0
          %2950 = vmatpush2.msra.mxu0 0.0
          %2951 = vmatprep.subr.mxu0 0.0
          %2952 = vmatpush2.msra.mxu0 0.0
          %2953 = vmatprep.subr.mxu0 0.0
          %2954 = vmatpush2.msra.mxu0 0.0
          %2955 = vmatprep.subr.mxu0 0.0
          %2956 = vmatpush2.msra.mxu0 0.0
          %2957 = vmatprep.subr.mxu0 0.0
          %2958 = vmatpush2.msra.mxu0 0.0
          %2959 = vmatprep.subr.mxu0 0.0
          %2960 = vmatpush2.msra.mxu0 0.0
          %2961 = vmatprep.subr.mxu0 0.0
          %2962 = vmatpush2.msra.mxu0 0.0
          %2963 = vmatprep.subr.mxu0 0.0
          %2964 = vmatpush2.msra.mxu0 0.0
          %2965 = vmatprep.subr.mxu0 0.0
          %2966 = vmatpush2.msra.mxu0 0.0
          %2967 = vmatprep.subr.mxu0 0.0
          %2968 = vmatpush2.msra.mxu0 0.0
          %2969 = vmatprep.subr.mxu0 0.0
          %2970 = vmatpush2.msra.mxu0 0.0
          %2971 = vmatprep.mubr.f32.mxu0 0.0
          %2972 = vmatmul.mubr.f32.gmra.mxu0 %v2905
          %v2973 = vpop.f32.mrf.mxu0
          %v2974 = vadd.f32 0.0, %v2973
          %v2975 = vpop.f32.mrf.mxu0
          %2976 = vdwg.mxu0
          %v2977 = vadd.f32 %v2889, %v2974
          %s2978 = scalar_lea.vmem %s10, 256
          %v2979 = vld [vmem:[%s2978] sm:$0xff]
          %v2980 = vld [vmem:[%s2978 + $0x8] sm:$0xff]
          %v2981 = vld [vmem:[%s2978 + $0x10] sm:$0xff]
          %v2982 = vld [vmem:[%s2978 + $0x18] sm:$0xff]
          %v2983 = vld [vmem:[%s2978 + $0x20] sm:$0xff]
          %v2984 = vld [vmem:[%s2978 + $0x28] sm:$0xff]
          %v2985 = vld [vmem:[%s2978 + $0x30] sm:$0xff]
          %v2986 = vld [vmem:[%s2978 + $0x38] sm:$0xff]
          %v2988 = vrot.slane %v2893, 1
          %v2989 = vrot.slane %v2894, 1
          %v2990 = vsel %vm2655, %v2988, %v2989
          %v2991 = vsel %vm2659, %v2990, 0
          %2993 = vmatprep.subr.mxu0 0.0
          %2994 = vmatpush1.msra.mxu0 0.0
          %2995 = vmatprep.subr.mxu0 0.0
          %2996 = vmatpush1.msra.mxu0 0.0
          %2997 = vmatprep.subr.mxu0 0.0
          %2998 = vmatpush1.msra.mxu0 0.0
          %2999 = vmatprep.subr.mxu0 0.0
          %3000 = vmatpush1.msra.mxu0 0.0
          %3001 = vmatprep.subr.mxu0 0.0
          %3002 = vmatpush1.msra.mxu0 0.0
          %3003 = vmatprep.subr.mxu0 0.0
          %3004 = vmatpush1.msra.mxu0 0.0
          %3005 = vmatprep.subr.mxu0 0.0
          %3006 = vmatpush1.msra.mxu0 0.0
          %3007 = vmatprep.subr.mxu0 0.0
          %3008 = vmatpush1.msra.mxu0 0.0
          %3009 = vmatprep.subr.mxu0 0.0
          %3010 = vmatpush1.msra.mxu0 %v2986
          %3011 = vmatprep.subr.mxu0 0.0
          %3012 = vmatpush1.msra.mxu0 %v2985
          %3013 = vmatprep.subr.mxu0 0.0
          %3014 = vmatpush1.msra.mxu0 %v2984
          %3015 = vmatprep.subr.mxu0 0.0
          %3016 = vmatpush1.msra.mxu0 %v2983
          %3017 = vmatprep.subr.mxu0 0.0
          %3018 = vmatpush1.msra.mxu0 %v2982
          %3019 = vmatprep.subr.mxu0 0.0
          %3020 = vmatpush1.msra.mxu0 %v2981
          %3021 = vmatprep.subr.mxu0 0.0
          %3022 = vmatpush1.msra.mxu0 %v2980
          %3023 = vmatprep.subr.mxu0 0.0
          %3024 = vmatpush1.msra.mxu0 %v2979
          %3025 = vmatprep.subr.mxu0 0.0
          %3026 = vmatpush2.msra.mxu0 0.0
          %3027 = vmatprep.subr.mxu0 0.0
          %3028 = vmatpush2.msra.mxu0 0.0
          %3029 = vmatprep.subr.mxu0 0.0
          %3030 = vmatpush2.msra.mxu0 0.0
          %3031 = vmatprep.subr.mxu0 0.0
          %3032 = vmatpush2.msra.mxu0 0.0
          %3033 = vmatprep.subr.mxu0 0.0
          %3034 = vmatpush2.msra.mxu0 0.0
          %3035 = vmatprep.subr.mxu0 0.0
          %3036 = vmatpush2.msra.mxu0 0.0
          %3037 = vmatprep.subr.mxu0 0.0
          %3038 = vmatpush2.msra.mxu0 0.0
          %3039 = vmatprep.subr.mxu0 0.0
          %3040 = vmatpush2.msra.mxu0 0.0
          %3041 = vmatprep.subr.mxu0 0.0
          %3042 = vmatpush2.msra.mxu0 0.0
          %3043 = vmatprep.subr.mxu0 0.0
          %3044 = vmatpush2.msra.mxu0 0.0
          %3045 = vmatprep.subr.mxu0 0.0
          %3046 = vmatpush2.msra.mxu0 0.0
          %3047 = vmatprep.subr.mxu0 0.0
          %3048 = vmatpush2.msra.mxu0 0.0
          %3049 = vmatprep.subr.mxu0 0.0
          %3050 = vmatpush2.msra.mxu0 0.0
          %3051 = vmatprep.subr.mxu0 0.0
          %3052 = vmatpush2.msra.mxu0 0.0
          %3053 = vmatprep.subr.mxu0 0.0
          %3054 = vmatpush2.msra.mxu0 0.0
          %3055 = vmatprep.subr.mxu0 0.0
          %3056 = vmatpush2.msra.mxu0 0.0
          %3057 = vmatprep.mubr.f32.mxu0 0.0
          %3058 = vmatmul.mubr.f32.gmra.mxu0 %v2991
          %v3059 = vpop.f32.mrf.mxu0
          %v3060 = vadd.f32 0.0, %v3059
          %v3061 = vpop.f32.mrf.mxu0
          %3062 = vdwg.mxu0
          %v3063 = vadd.f32 %v2977, %v3060
          %s3064 = scalar_lea.vmem %s10, 320
          %v3065 = vld [vmem:[%s3064] sm:$0xff]
          %v3066 = vld [vmem:[%s3064 + $0x8] sm:$0xff]
          %v3067 = vld [vmem:[%s3064 + $0x10] sm:$0xff]
          %v3068 = vld [vmem:[%s3064 + $0x18] sm:$0xff]
          %v3069 = vld [vmem:[%s3064 + $0x20] sm:$0xff]
          %v3070 = vld [vmem:[%s3064 + $0x28] sm:$0xff]
          %v3071 = vld [vmem:[%s3064 + $0x30] sm:$0xff]
          %v3072 = vld [vmem:[%s3064 + $0x38] sm:$0xff]
          %v3073 = vrot.slane %v2893, 2
          %v3074 = vrot.slane %v2894, 2
          %v3075 = vsel %vm2813, %v3073, %v3074
          %v3076 = vsel %vm2659, %v3075, 0
          %3078 = vmatprep.subr.mxu0 0.0
          %3079 = vmatpush1.msra.mxu0 0.0
          %3080 = vmatprep.subr.mxu0 0.0
          %3081 = vmatpush1.msra.mxu0 0.0
          %3082 = vmatprep.subr.mxu0 0.0
          %3083 = vmatpush1.msra.mxu0 0.0
          %3084 = vmatprep.subr.mxu0 0.0
          %3085 = vmatpush1.msra.mxu0 0.0
          %3086 = vmatprep.subr.mxu0 0.0
          %3087 = vmatpush1.msra.mxu0 0.0
          %3088 = vmatprep.subr.mxu0 0.0
          %3089 = vmatpush1.msra.mxu0 0.0
          %3090 = vmatprep.subr.mxu0 0.0
          %3091 = vmatpush1.msra.mxu0 0.0
          %3092 = vmatprep.subr.mxu0 0.0
          %3093 = vmatpush1.msra.mxu0 0.0
          %3094 = vmatprep.subr.mxu0 0.0
          %3095 = vmatpush1.msra.mxu0 %v3072
          %3096 = vmatprep.subr.mxu0 0.0
          %3097 = vmatpush1.msra.mxu0 %v3071
          %3098 = vmatprep.subr.mxu0 0.0
          %3099 = vmatpush1.msra.mxu0 %v3070
          %3100 = vmatprep.subr.mxu0 0.0
          %3101 = vmatpush1.msra.mxu0 %v3069
          %3102 = vmatprep.subr.mxu0 0.0
          %3103 = vmatpush1.msra.mxu0 %v3068
          %3104 = vmatprep.subr.mxu0 0.0
          %3105 = vmatpush1.msra.mxu0 %v3067
          %3106 = vmatprep.subr.mxu0 0.0
          %3107 = vmatpush1.msra.mxu0 %v3066
          %3108 = vmatprep.subr.mxu0 0.0
          %3109 = vmatpush1.msra.mxu0 %v3065
          %3110 = vmatprep.subr.mxu0 0.0
          %3111 = vmatpush2.msra.mxu0 0.0
          %3112 = vmatprep.subr.mxu0 0.0
          %3113 = vmatpush2.msra.mxu0 0.0
          %3114 = vmatprep.subr.mxu0 0.0
          %3115 = vmatpush2.msra.mxu0 0.0
          %3116 = vmatprep.subr.mxu0 0.0
          %3117 = vmatpush2.msra.mxu0 0.0
          %3118 = vmatprep.subr.mxu0 0.0
          %3119 = vmatpush2.msra.mxu0 0.0
          %3120 = vmatprep.subr.mxu0 0.0
          %3121 = vmatpush2.msra.mxu0 0.0
          %3122 = vmatprep.subr.mxu0 0.0
          %3123 = vmatpush2.msra.mxu0 0.0
          %3124 = vmatprep.subr.mxu0 0.0
          %3125 = vmatpush2.msra.mxu0 0.0
          %3126 = vmatprep.subr.mxu0 0.0
          %3127 = vmatpush2.msra.mxu0 0.0
          %3128 = vmatprep.subr.mxu0 0.0
          %3129 = vmatpush2.msra.mxu0 0.0
          %3130 = vmatprep.subr.mxu0 0.0
          %3131 = vmatpush2.msra.mxu0 0.0
          %3132 = vmatprep.subr.mxu0 0.0
          %3133 = vmatpush2.msra.mxu0 0.0
          %3134 = vmatprep.subr.mxu0 0.0
          %3135 = vmatpush2.msra.mxu0 0.0
          %3136 = vmatprep.subr.mxu0 0.0
          %3137 = vmatpush2.msra.mxu0 0.0
          %3138 = vmatprep.subr.mxu0 0.0
          %3139 = vmatpush2.msra.mxu0 0.0
          %3140 = vmatprep.subr.mxu0 0.0
          %3141 = vmatpush2.msra.mxu0 0.0
          %3142 = vmatprep.mubr.f32.mxu0 0.0
          %3143 = vmatmul.mubr.f32.gmra.mxu0 %v3076
          %v3144 = vpop.f32.mrf.mxu0
          %v3145 = vadd.f32 0.0, %v3144
          %v3146 = vpop.f32.mrf.mxu0
          %3147 = vdwg.mxu0
          %v3148 = vadd.f32 %v3063, %v3145
          %s3149 = sadd.s32 %s2627, 2
          %s3150 = smul.u32 %s3149, 16
          %s3151 = scalar_lea.vmem [#allocation5], %s3150
          %v3152 = vld [vmem:[%s3151] sm:$0xff]
          %v3153 = vld [vmem:[%s3151 + $0x8] sm:$0x3]
          %s3154 = scalar_lea.vmem %s10, 384
          %v3155 = vld [vmem:[%s3154] sm:$0xff]
          %v3156 = vld [vmem:[%s3154 + $0x8] sm:$0xff]
          %v3157 = vld [vmem:[%s3154 + $0x10] sm:$0xff]
          %v3158 = vld [vmem:[%s3154 + $0x18] sm:$0xff]
          %v3159 = vld [vmem:[%s3154 + $0x20] sm:$0xff]
          %v3160 = vld [vmem:[%s3154 + $0x28] sm:$0xff]
          %v3161 = vld [vmem:[%s3154 + $0x30] sm:$0xff]
          %v3162 = vld [vmem:[%s3154 + $0x38] sm:$0xff]
          %v3164 = vsel %vm2659, %v3152, 0
          %3166 = vmatprep.subr.mxu0 0.0
          %3167 = vmatpush1.msra.mxu0 0.0
          %3168 = vmatprep.subr.mxu0 0.0
          %3169 = vmatpush1.msra.mxu0 0.0
          %3170 = vmatprep.subr.mxu0 0.0
          %3171 = vmatpush1.msra.mxu0 0.0
          %3172 = vmatprep.subr.mxu0 0.0
          %3173 = vmatpush1.msra.mxu0 0.0
          %3174 = vmatprep.subr.mxu0 0.0
          %3175 = vmatpush1.msra.mxu0 0.0
          %3176 = vmatprep.subr.mxu0 0.0
          %3177 = vmatpush1.msra.mxu0 0.0
          %3178 = vmatprep.subr.mxu0 0.0
          %3179 = vmatpush1.msra.mxu0 0.0
          %3180 = vmatprep.subr.mxu0 0.0
          %3181 = vmatpush1.msra.mxu0 0.0
          %3182 = vmatprep.subr.mxu0 0.0
          %3183 = vmatpush1.msra.mxu0 %v3162
          %3184 = vmatprep.subr.mxu0 0.0
          %3185 = vmatpush1.msra.mxu0 %v3161
          %3186 = vmatprep.subr.mxu0 0.0
          %3187 = vmatpush1.msra.mxu0 %v3160
          %3188 = vmatprep.subr.mxu0 0.0
          %3189 = vmatpush1.msra.mxu0 %v3159
          %3190 = vmatprep.subr.mxu0 0.0
          %3191 = vmatpush1.msra.mxu0 %v3158
          %3192 = vmatprep.subr.mxu0 0.0
          %3193 = vmatpush1.msra.mxu0 %v3157
          %3194 = vmatprep.subr.mxu0 0.0
          %3195 = vmatpush1.msra.mxu0 %v3156
          %3196 = vmatprep.subr.mxu0 0.0
          %3197 = vmatpush1.msra.mxu0 %v3155
          %3198 = vmatprep.subr.mxu0 0.0
          %3199 = vmatpush2.msra.mxu0 0.0
          %3200 = vmatprep.subr.mxu0 0.0
          %3201 = vmatpush2.msra.mxu0 0.0
          %3202 = vmatprep.subr.mxu0 0.0
          %3203 = vmatpush2.msra.mxu0 0.0
          %3204 = vmatprep.subr.mxu0 0.0
          %3205 = vmatpush2.msra.mxu0 0.0
          %3206 = vmatprep.subr.mxu0 0.0
          %3207 = vmatpush2.msra.mxu0 0.0
          %3208 = vmatprep.subr.mxu0 0.0
          %3209 = vmatpush2.msra.mxu0 0.0
          %3210 = vmatprep.subr.mxu0 0.0
          %3211 = vmatpush2.msra.mxu0 0.0
          %3212 = vmatprep.subr.mxu0 0.0
          %3213 = vmatpush2.msra.mxu0 0.0
          %3214 = vmatprep.subr.mxu0 0.0
          %3215 = vmatpush2.msra.mxu0 0.0
          %3216 = vmatprep.subr.mxu0 0.0
          %3217 = vmatpush2.msra.mxu0 0.0
          %3218 = vmatprep.subr.mxu0 0.0
          %3219 = vmatpush2.msra.mxu0 0.0
          %3220 = vmatprep.subr.mxu0 0.0
          %3221 = vmatpush2.msra.mxu0 0.0
          %3222 = vmatprep.subr.mxu0 0.0
          %3223 = vmatpush2.msra.mxu0 0.0
          %3224 = vmatprep.subr.mxu0 0.0
          %3225 = vmatpush2.msra.mxu0 0.0
          %3226 = vmatprep.subr.mxu0 0.0
          %3227 = vmatpush2.msra.mxu0 0.0
          %3228 = vmatprep.subr.mxu0 0.0
          %3229 = vmatpush2.msra.mxu0 0.0
          %3230 = vmatprep.mubr.f32.mxu0 0.0
          %3231 = vmatmul.mubr.f32.gmra.mxu0 %v3164
          %v3232 = vpop.f32.mrf.mxu0
          %v3233 = vadd.f32 0.0, %v3232
          %v3234 = vpop.f32.mrf.mxu0
          %3235 = vdwg.mxu0
          %v3236 = vadd.f32 %v3148, %v3233
          %s3237 = scalar_lea.vmem %s10, 448
          %v3238 = vld [vmem:[%s3237] sm:$0xff]
          %v3239 = vld [vmem:[%s3237 + $0x8] sm:$0xff]
          %v3240 = vld [vmem:[%s3237 + $0x10] sm:$0xff]
          %v3241 = vld [vmem:[%s3237 + $0x18] sm:$0xff]
          %v3242 = vld [vmem:[%s3237 + $0x20] sm:$0xff]
          %v3243 = vld [vmem:[%s3237 + $0x28] sm:$0xff]
          %v3244 = vld [vmem:[%s3237 + $0x30] sm:$0xff]
          %v3245 = vld [vmem:[%s3237 + $0x38] sm:$0xff]
          %v3247 = vrot.slane %v3152, 1
          %v3248 = vrot.slane %v3153, 1
          %v3249 = vsel %vm2655, %v3247, %v3248
          %v3250 = vsel %vm2659, %v3249, 0
          %3252 = vmatprep.subr.mxu0 0.0
          %3253 = vmatpush1.msra.mxu0 0.0
          %3254 = vmatprep.subr.mxu0 0.0
          %3255 = vmatpush1.msra.mxu0 0.0
          %3256 = vmatprep.subr.mxu0 0.0
          %3257 = vmatpush1.msra.mxu0 0.0
          %3258 = vmatprep.subr.mxu0 0.0
          %3259 = vmatpush1.msra.mxu0 0.0
          %3260 = vmatprep.subr.mxu0 0.0
          %3261 = vmatpush1.msra.mxu0 0.0
          %3262 = vmatprep.subr.mxu0 0.0
          %3263 = vmatpush1.msra.mxu0 0.0
          %3264 = vmatprep.subr.mxu0 0.0
          %3265 = vmatpush1.msra.mxu0 0.0
          %3266 = vmatprep.subr.mxu0 0.0
          %3267 = vmatpush1.msra.mxu0 0.0
          %3268 = vmatprep.subr.mxu0 0.0
          %3269 = vmatpush1.msra.mxu0 %v3245
          %3270 = vmatprep.subr.mxu0 0.0
          %3271 = vmatpush1.msra.mxu0 %v3244
          %3272 = vmatprep.subr.mxu0 0.0
          %3273 = vmatpush1.msra.mxu0 %v3243
          %3274 = vmatprep.subr.mxu0 0.0
          %3275 = vmatpush1.msra.mxu0 %v3242
          %3276 = vmatprep.subr.mxu0 0.0
          %3277 = vmatpush1.msra.mxu0 %v3241
          %3278 = vmatprep.subr.mxu0 0.0
          %3279 = vmatpush1.msra.mxu0 %v3240
          %3280 = vmatprep.subr.mxu0 0.0
          %3281 = vmatpush1.msra.mxu0 %v3239
          %3282 = vmatprep.subr.mxu0 0.0
          %3283 = vmatpush1.msra.mxu0 %v3238
          %3284 = vmatprep.subr.mxu0 0.0
          %3285 = vmatpush2.msra.mxu0 0.0
          %3286 = vmatprep.subr.mxu0 0.0
          %3287 = vmatpush2.msra.mxu0 0.0
          %3288 = vmatprep.subr.mxu0 0.0
          %3289 = vmatpush2.msra.mxu0 0.0
          %3290 = vmatprep.subr.mxu0 0.0
          %3291 = vmatpush2.msra.mxu0 0.0
          %3292 = vmatprep.subr.mxu0 0.0
          %3293 = vmatpush2.msra.mxu0 0.0
          %3294 = vmatprep.subr.mxu0 0.0
          %3295 = vmatpush2.msra.mxu0 0.0
          %3296 = vmatprep.subr.mxu0 0.0
          %3297 = vmatpush2.msra.mxu0 0.0
          %3298 = vmatprep.subr.mxu0 0.0
          %3299 = vmatpush2.msra.mxu0 0.0
          %3300 = vmatprep.subr.mxu0 0.0
          %3301 = vmatpush2.msra.mxu0 0.0
          %3302 = vmatprep.subr.mxu0 0.0
          %3303 = vmatpush2.msra.mxu0 0.0
          %3304 = vmatprep.subr.mxu0 0.0
          %3305 = vmatpush2.msra.mxu0 0.0
          %3306 = vmatprep.subr.mxu0 0.0
          %3307 = vmatpush2.msra.mxu0 0.0
          %3308 = vmatprep.subr.mxu0 0.0
          %3309 = vmatpush2.msra.mxu0 0.0
          %3310 = vmatprep.subr.mxu0 0.0
          %3311 = vmatpush2.msra.mxu0 0.0
          %3312 = vmatprep.subr.mxu0 0.0
          %3313 = vmatpush2.msra.mxu0 0.0
          %3314 = vmatprep.subr.mxu0 0.0
          %3315 = vmatpush2.msra.mxu0 0.0
          %3316 = vmatprep.mubr.f32.mxu0 0.0
          %3317 = vmatmul.mubr.f32.gmra.mxu0 %v3250
          %v3318 = vpop.f32.mrf.mxu0
          %v3319 = vadd.f32 0.0, %v3318
          %v3320 = vpop.f32.mrf.mxu0
          %3321 = vdwg.mxu0
          %v3322 = vadd.f32 %v3236, %v3319
          %s3323 = scalar_lea.vmem %s10, 512
          %v3324 = vld [vmem:[%s3323] sm:$0xff]
          %v3325 = vld [vmem:[%s3323 + $0x8] sm:$0xff]
          %v3326 = vld [vmem:[%s3323 + $0x10] sm:$0xff]
          %v3327 = vld [vmem:[%s3323 + $0x18] sm:$0xff]
          %v3328 = vld [vmem:[%s3323 + $0x20] sm:$0xff]
          %v3329 = vld [vmem:[%s3323 + $0x28] sm:$0xff]
          %v3330 = vld [vmem:[%s3323 + $0x30] sm:$0xff]
          %v3331 = vld [vmem:[%s3323 + $0x38] sm:$0xff]
          %v3332 = vrot.slane %v3152, 2
          %v3333 = vrot.slane %v3153, 2
          %v3334 = vsel %vm2813, %v3332, %v3333
          %v3335 = vsel %vm2659, %v3334, 0
          %3337 = vmatprep.subr.mxu0 0.0
          %3338 = vmatpush1.msra.mxu0 0.0
          %3339 = vmatprep.subr.mxu0 0.0
          %3340 = vmatpush1.msra.mxu0 0.0
          %3341 = vmatprep.subr.mxu0 0.0
          %3342 = vmatpush1.msra.mxu0 0.0
          %3343 = vmatprep.subr.mxu0 0.0
          %3344 = vmatpush1.msra.mxu0 0.0
          %3345 = vmatprep.subr.mxu0 0.0
          %3346 = vmatpush1.msra.mxu0 0.0
          %3347 = vmatprep.subr.mxu0 0.0
          %3348 = vmatpush1.msra.mxu0 0.0
          %3349 = vmatprep.subr.mxu0 0.0
          %3350 = vmatpush1.msra.mxu0 0.0
          %3351 = vmatprep.subr.mxu0 0.0
          %3352 = vmatpush1.msra.mxu0 0.0
          %3353 = vmatprep.subr.mxu0 0.0
          %3354 = vmatpush1.msra.mxu0 %v3331
          %3355 = vmatprep.subr.mxu0 0.0
          %3356 = vmatpush1.msra.mxu0 %v3330
          %3357 = vmatprep.subr.mxu0 0.0
          %3358 = vmatpush1.msra.mxu0 %v3329
          %3359 = vmatprep.subr.mxu0 0.0
          %3360 = vmatpush1.msra.mxu0 %v3328
          %3361 = vmatprep.subr.mxu0 0.0
          %3362 = vmatpush1.msra.mxu0 %v3327
          %3363 = vmatprep.subr.mxu0 0.0
          %3364 = vmatpush1.msra.mxu0 %v3326
          %3365 = vmatprep.subr.mxu0 0.0
          %3366 = vmatpush1.msra.mxu0 %v3325
          %3367 = vmatprep.subr.mxu0 0.0
          %3368 = vmatpush1.msra.mxu0 %v3324
          %3369 = vmatprep.subr.mxu0 0.0
          %3370 = vmatpush2.msra.mxu0 0.0
          %3371 = vmatprep.subr.mxu0 0.0
          %3372 = vmatpush2.msra.mxu0 0.0
          %3373 = vmatprep.subr.mxu0 0.0
          %3374 = vmatpush2.msra.mxu0 0.0
          %3375 = vmatprep.subr.mxu0 0.0
          %3376 = vmatpush2.msra.mxu0 0.0
          %3377 = vmatprep.subr.mxu0 0.0
          %3378 = vmatpush2.msra.mxu0 0.0
          %3379 = vmatprep.subr.mxu0 0.0
          %3380 = vmatpush2.msra.mxu0 0.0
          %3381 = vmatprep.subr.mxu0 0.0
          %3382 = vmatpush2.msra.mxu0 0.0
          %3383 = vmatprep.subr.mxu0 0.0
          %3384 = vmatpush2.msra.mxu0 0.0
          %3385 = vmatprep.subr.mxu0 0.0
          %3386 = vmatpush2.msra.mxu0 0.0
          %3387 = vmatprep.subr.mxu0 0.0
          %3388 = vmatpush2.msra.mxu0 0.0
          %3389 = vmatprep.subr.mxu0 0.0
          %3390 = vmatpush2.msra.mxu0 0.0
          %3391 = vmatprep.subr.mxu0 0.0
          %3392 = vmatpush2.msra.mxu0 0.0
          %3393 = vmatprep.subr.mxu0 0.0
          %3394 = vmatpush2.msra.mxu0 0.0
          %3395 = vmatprep.subr.mxu0 0.0
          %3396 = vmatpush2.msra.mxu0 0.0
          %3397 = vmatprep.subr.mxu0 0.0
          %3398 = vmatpush2.msra.mxu0 0.0
          %3399 = vmatprep.subr.mxu0 0.0
          %3400 = vmatpush2.msra.mxu0 0.0
          %3401 = vmatprep.mubr.f32.mxu0 0.0
          %3402 = vmatmul.mubr.f32.gmra.mxu0 %v3335
          %v3403 = vpop.f32.mrf.mxu0
          %v3404 = vadd.f32 0.0, %v3403
          %v3405 = vpop.f32.mrf.mxu0
          %3406 = vdwg.mxu0
          %v3407 = vadd.f32 %v3322, %v3404
          %v3409 = vlaneseq
          %v3410 = vshrl.u32 %v3409, 7
          %v3411 = vsub.s32 0, %v3410
          %v3412 = vrot.slane %v2624, %v3411
          %v3414 = vmul.f32 %v3407, %v3412
          %v3416 = vlaneseq
          %v3417 = vshrl.u32 %v3416, 7
          %v3418 = vsub.s32 0, %v3417
          %v3419 = vrot.slane %v2625, %v3418
          %v3421 = vadd.f32 %v3414, %v3419
          %v3422 = vmax.f32 %v3421, 0.0
          %s3423 = smul.u32 %s2627, 8
          %s3424 = scalar_lea.vmem [#allocation6], %s3423
          %3425 = vst.msk [vmem:[%s3424] sm:$0xff] %vm2659, %v3422
        $region141: #{chestcnn_forward.1} parent=107 // loop_footer
          %s2631 = sadd.s32 1, %s2627
        $region142: #{chestcnn_forward.1} parent=107 // loop_footer_branch
          %2626 = sbr.rel target = $region138
        $region143: #{chestcnn_forward.1} parent=107 // loop_exit
          _
        %vm3426 = vcmask 523264
        %3427 = vst.msk [vmem:[#allocation7] sm:$0xff] %vm3426, 0.0
        %vm3428 = vcmask 517120
        %3429 = vst.msk [vmem:[#allocation7 + $0x8] sm:$0x3] %vm3428, 0.0
        %3430 = vst.msk [vmem:[#allocation7 + $0x10] sm:$0xff] %vm3426, 0.0
        %3431 = vst.msk [vmem:[#allocation7 + $0x18] sm:$0x3] %vm3428, 0.0
        %3432 = vst.msk [vmem:[#allocation7 + $0x20] sm:$0xff] %vm3426, 0.0
        %3433 = vst.msk [vmem:[#allocation7 + $0x28] sm:$0x3] %vm3428, 0.0
        %3434 = vst.msk [vmem:[#allocation7 + $0x30] sm:$0xff] %vm3426, 0.0
        %3435 = vst.msk [vmem:[#allocation7 + $0x38] sm:$0x3] %vm3428, 0.0
        %3436 = vst.msk [vmem:[#allocation7 + $0x40] sm:$0xff] %vm3426, 0.0
        %3437 = vst.msk [vmem:[#allocation7 + $0x48] sm:$0x3] %vm3428, 0.0
        %3438 = vst.msk [vmem:[#allocation7 + $0x50] sm:$0xff] %vm3426, 0.0
        %3439 = vst.msk [vmem:[#allocation7 + $0x58] sm:$0x3] %vm3428, 0.0
        %3440 = vst.msk [vmem:[#allocation7 + $0x60] sm:$0xff] %vm3426, 0.0
        %3441 = vst.msk [vmem:[#allocation7 + $0x68] sm:$0x3] %vm3428, 0.0
        %3442 = vst.msk [vmem:[#allocation7 + $0x70] sm:$0xff] %vm3426, 0.0
        %3443 = vst.msk [vmem:[#allocation7 + $0x78] sm:$0x3] %vm3428, 0.0
        %3444 = vst.msk [vmem:[#allocation7 + $0x80] sm:$0xff] %vm3426, 0.0
        %3445 = vst.msk [vmem:[#allocation7 + $0x88] sm:$0x3] %vm3428, 0.0
        %3446 = vst.msk [vmem:[#allocation7 + $0x90] sm:$0xff] %vm3426, 0.0
        %3447 = vst.msk [vmem:[#allocation7 + $0x98] sm:$0x3] %vm3428, 0.0
        %v3448 = vld [vmem:[#allocation6] sm:$0xff]
        %v3449 = vld [vmem:[#allocation6 + $0x8] sm:$0xff]
        %v3450 = vld [vmem:[#allocation6 + $0x10] sm:$0xff]
        %v3451 = vld [vmem:[#allocation6 + $0x18] sm:$0xff]
        %v3452 = vld [vmem:[#allocation6 + $0x20] sm:$0xff]
        %v3453 = vld [vmem:[#allocation6 + $0x28] sm:$0xff]
        %v3454 = vld [vmem:[#allocation6 + $0x30] sm:$0xff]
        %v3455 = vld [vmem:[#allocation6 + $0x38] sm:$0xff]
        %s3456 = scalar_lea.vmem [#allocation7], 16
        %3457 = vst.msk [vmem:[%s3456 + $0x1] sm:$0xff] %vm3426, %v3448
        %3458 = vst.msk [vmem:[%s3456 + $0x11] sm:$0xff] %vm3426, %v3449
        %3459 = vst.msk [vmem:[%s3456 + $0x21] sm:$0xff] %vm3426, %v3450
        %3460 = vst.msk [vmem:[%s3456 + $0x31] sm:$0xff] %vm3426, %v3451
        %3461 = vst.msk [vmem:[%s3456 + $0x41] sm:$0xff] %vm3426, %v3452
        %3462 = vst.msk [vmem:[%s3456 + $0x51] sm:$0xff] %vm3426, %v3453
        %3463 = vst.msk [vmem:[%s3456 + $0x61] sm:$0xff] %vm3426, %v3454
        %3464 = vst.msk [vmem:[%s3456 + $0x71] sm:$0xff] %vm3426, %v3455
        %v3465 = vld [vmem:[%s14] sm:$0x1]
        %v3466 = vld [vmem:[%s15] sm:$0x1]
        loop: start=0, step=1, limit=8
        $region144: #{chestcnn_forward.1} parent=107 // loop_pre_header
          _
        $region145: #{chestcnn_forward.1} parent=107 // loop_header
          %s3468 = sphi 0, %s3472
          %p3469 = scmp.ge.s32.totalorder %s3468, 8
        $region146: #{chestcnn_forward.1} parent=107 // loop_header_branch
          %3471 = sbr.rel (%p3469) target = $region150
        $region147: #{chestcnn_forward.1} parent=107 // loop_body
          %s3473 = smul.u32 %s3468, 16
          %s3474 = scalar_lea.vmem [#allocation7], %s3473
          %v3475 = vld [vmem:[%s3474] sm:$0xff]
          %v3476 = vld [vmem:[%s3474 + $0x8] sm:$0x3]
          %v3477 = vld [vmem:[%s13] sm:$0xff]
          %v3478 = vld [vmem:[%s13 + $0x8] sm:$0xff]
          %v3479 = vld [vmem:[%s13 + $0x10] sm:$0xff]
          %v3480 = vld [vmem:[%s13 + $0x18] sm:$0xff]
          %v3481 = vld [vmem:[%s13 + $0x20] sm:$0xff]
          %v3482 = vld [vmem:[%s13 + $0x28] sm:$0xff]
          %v3483 = vld [vmem:[%s13 + $0x30] sm:$0xff]
          %v3484 = vld [vmem:[%s13 + $0x38] sm:$0xff]
          %s3485 = scalar_lea.vmem %s13, 64
          %v3486 = vld [vmem:[%s3485] sm:$0xff]
          %v3487 = vld [vmem:[%s3485 + $0x8] sm:$0xff]
          %v3488 = vld [vmem:[%s3485 + $0x10] sm:$0xff]
          %v3489 = vld [vmem:[%s3485 + $0x18] sm:$0xff]
          %v3490 = vld [vmem:[%s3485 + $0x20] sm:$0xff]
          %v3491 = vld [vmem:[%s3485 + $0x28] sm:$0xff]
          %v3492 = vld [vmem:[%s3485 + $0x30] sm:$0xff]
          %v3493 = vld [vmem:[%s3485 + $0x38] sm:$0xff]
          %vm3496 = vcmask 1046528
          %v3497 = vrot.slane %v3475, 1
          %v3498 = vrot.slane %v3476, 1
          %v3499 = vsel %vm3496, %v3497, %v3498
          %v3500 = vsel %vm3426, %v3499, 0
          %3502 = vmatprep.subr.mxu0 0.0
          %3503 = vmatpush1.msra.mxu0 0.0
          %3504 = vmatprep.subr.mxu0 0.0
          %3505 = vmatpush1.msra.mxu0 0.0
          %3506 = vmatprep.subr.mxu0 0.0
          %3507 = vmatpush1.msra.mxu0 0.0
          %3508 = vmatprep.subr.mxu0 0.0
          %3509 = vmatpush1.msra.mxu0 0.0
          %3510 = vmatprep.subr.mxu0 0.0
          %3511 = vmatpush1.msra.mxu0 0.0
          %3512 = vmatprep.subr.mxu0 0.0
          %3513 = vmatpush1.msra.mxu0 0.0
          %3514 = vmatprep.subr.mxu0 0.0
          %3515 = vmatpush1.msra.mxu0 0.0
          %3516 = vmatprep.subr.mxu0 0.0
          %3517 = vmatpush1.msra.mxu0 0.0
          %3518 = vmatprep.subr.mxu0 0.0
          %3519 = vmatpush1.msra.mxu0 %v3493
          %3520 = vmatprep.subr.mxu0 0.0
          %3521 = vmatpush1.msra.mxu0 %v3492
          %3522 = vmatprep.subr.mxu0 0.0
          %3523 = vmatpush1.msra.mxu0 %v3491
          %3524 = vmatprep.subr.mxu0 0.0
          %3525 = vmatpush1.msra.mxu0 %v3490
          %3526 = vmatprep.subr.mxu0 0.0
          %3527 = vmatpush1.msra.mxu0 %v3489
          %3528 = vmatprep.subr.mxu0 0.0
          %3529 = vmatpush1.msra.mxu0 %v3488
          %3530 = vmatprep.subr.mxu0 0.0
          %3531 = vmatpush1.msra.mxu0 %v3487
          %3532 = vmatprep.subr.mxu0 0.0
          %3533 = vmatpush1.msra.mxu0 %v3486
          %3534 = vmatprep.subr.mxu0 0.0
          %3535 = vmatpush2.msra.mxu0 0.0
          %3536 = vmatprep.subr.mxu0 0.0
          %3537 = vmatpush2.msra.mxu0 0.0
          %3538 = vmatprep.subr.mxu0 0.0
          %3539 = vmatpush2.msra.mxu0 0.0
          %3540 = vmatprep.subr.mxu0 0.0
          %3541 = vmatpush2.msra.mxu0 0.0
          %3542 = vmatprep.subr.mxu0 0.0
          %3543 = vmatpush2.msra.mxu0 0.0
          %3544 = vmatprep.subr.mxu0 0.0
          %3545 = vmatpush2.msra.mxu0 0.0
          %3546 = vmatprep.subr.mxu0 0.0
          %3547 = vmatpush2.msra.mxu0 0.0
          %3548 = vmatprep.subr.mxu0 0.0
          %3549 = vmatpush2.msra.mxu0 0.0
          %3550 = vmatprep.subr.mxu0 0.0
          %3551 = vmatpush2.msra.mxu0 0.0
          %3552 = vmatprep.subr.mxu0 0.0
          %3553 = vmatpush2.msra.mxu0 0.0
          %3554 = vmatprep.subr.mxu0 0.0
          %3555 = vmatpush2.msra.mxu0 0.0
          %3556 = vmatprep.subr.mxu0 0.0
          %3557 = vmatpush2.msra.mxu0 0.0
          %3558 = vmatprep.subr.mxu0 0.0
          %3559 = vmatpush2.msra.mxu0 0.0
          %3560 = vmatprep.subr.mxu0 0.0
          %3561 = vmatpush2.msra.mxu0 0.0
          %3562 = vmatprep.subr.mxu0 0.0
          %3563 = vmatpush2.msra.mxu0 0.0
          %3564 = vmatprep.subr.mxu0 0.0
          %3565 = vmatpush2.msra.mxu0 0.0
          %3566 = vmatprep.mubr.f32.mxu0 0.0
          %3567 = vmatmul.mubr.f32.gmra.mxu0 %v3500
          %v3568 = vpop.f32.mrf.mxu0
          %v3569 = vadd.f32 0.0, %v3568
          %v3570 = vpop.f32.mrf.mxu0
          %3571 = vdwg.mxu0
          %v3572 = vsel %vm3426, %v3475, 0
          %3574 = vmatprep.subr.mxu0 0.0
          %3575 = vmatpush1.msra.mxu0 0.0
          %3576 = vmatprep.subr.mxu0 0.0
          %3577 = vmatpush1.msra.mxu0 0.0
          %3578 = vmatprep.subr.mxu0 0.0
          %3579 = vmatpush1.msra.mxu0 0.0
          %3580 = vmatprep.subr.mxu0 0.0
          %3581 = vmatpush1.msra.mxu0 0.0
          %3582 = vmatprep.subr.mxu0 0.0
          %3583 = vmatpush1.msra.mxu0 0.0
          %3584 = vmatprep.subr.mxu0 0.0
          %3585 = vmatpush1.msra.mxu0 0.0
          %3586 = vmatprep.subr.mxu0 0.0
          %3587 = vmatpush1.msra.mxu0 0.0
          %3588 = vmatprep.subr.mxu0 0.0
          %3589 = vmatpush1.msra.mxu0 0.0
          %3590 = vmatprep.subr.mxu0 0.0
          %3591 = vmatpush1.msra.mxu0 %v3484
          %3592 = vmatprep.subr.mxu0 0.0
          %3593 = vmatpush1.msra.mxu0 %v3483
          %3594 = vmatprep.subr.mxu0 0.0
          %3595 = vmatpush1.msra.mxu0 %v3482
          %3596 = vmatprep.subr.mxu0 0.0
          %3597 = vmatpush1.msra.mxu0 %v3481
          %3598 = vmatprep.subr.mxu0 0.0
          %3599 = vmatpush1.msra.mxu0 %v3480
          %3600 = vmatprep.subr.mxu0 0.0
          %3601 = vmatpush1.msra.mxu0 %v3479
          %3602 = vmatprep.subr.mxu0 0.0
          %3603 = vmatpush1.msra.mxu0 %v3478
          %3604 = vmatprep.subr.mxu0 0.0
          %3605 = vmatpush1.msra.mxu0 %v3477
          %3606 = vmatprep.subr.mxu0 0.0
          %3607 = vmatpush2.msra.mxu0 0.0
          %3608 = vmatprep.subr.mxu0 0.0
          %3609 = vmatpush2.msra.mxu0 0.0
          %3610 = vmatprep.subr.mxu0 0.0
          %3611 = vmatpush2.msra.mxu0 0.0
          %3612 = vmatprep.subr.mxu0 0.0
          %3613 = vmatpush2.msra.mxu0 0.0
          %3614 = vmatprep.subr.mxu0 0.0
          %3615 = vmatpush2.msra.mxu0 0.0
          %3616 = vmatprep.subr.mxu0 0.0
          %3617 = vmatpush2.msra.mxu0 0.0
          %3618 = vmatprep.subr.mxu0 0.0
          %3619 = vmatpush2.msra.mxu0 0.0
          %3620 = vmatprep.subr.mxu0 0.0
          %3621 = vmatpush2.msra.mxu0 0.0
          %3622 = vmatprep.subr.mxu0 0.0
          %3623 = vmatpush2.msra.mxu0 0.0
          %3624 = vmatprep.subr.mxu0 0.0
          %3625 = vmatpush2.msra.mxu0 0.0
          %3626 = vmatprep.subr.mxu0 0.0
          %3627 = vmatpush2.msra.mxu0 0.0
          %3628 = vmatprep.subr.mxu0 0.0
          %3629 = vmatpush2.msra.mxu0 0.0
          %3630 = vmatprep.subr.mxu0 0.0
          %3631 = vmatpush2.msra.mxu0 0.0
          %3632 = vmatprep.subr.mxu0 0.0
          %3633 = vmatpush2.msra.mxu0 0.0
          %3634 = vmatprep.subr.mxu0 0.0
          %3635 = vmatpush2.msra.mxu0 0.0
          %3636 = vmatprep.subr.mxu0 0.0
          %3637 = vmatpush2.msra.mxu0 0.0
          %3638 = vmatprep.mubr.f32.mxu0 0.0
          %3639 = vmatmul.mubr.f32.gmra.mxu0 %v3572
          %v3640 = vpop.f32.mrf.mxu0
          %v3641 = vadd.f32 %v3569, %v3640
          %v3642 = vpop.f32.mrf.mxu0
          %3643 = vdwg.mxu0
          %s3644 = scalar_lea.vmem %s13, 128
          %v3645 = vld [vmem:[%s3644] sm:$0xff]
          %v3646 = vld [vmem:[%s3644 + $0x8] sm:$0xff]
          %v3647 = vld [vmem:[%s3644 + $0x10] sm:$0xff]
          %v3648 = vld [vmem:[%s3644 + $0x18] sm:$0xff]
          %v3649 = vld [vmem:[%s3644 + $0x20] sm:$0xff]
          %v3650 = vld [vmem:[%s3644 + $0x28] sm:$0xff]
          %v3651 = vld [vmem:[%s3644 + $0x30] sm:$0xff]
          %v3652 = vld [vmem:[%s3644 + $0x38] sm:$0xff]
          %vm3653 = vcmask 1045504
          %v3654 = vrot.slane %v3475, 2
          %v3655 = vrot.slane %v3476, 2
          %v3656 = vsel %vm3653, %v3654, %v3655
          %v3657 = vsel %vm3426, %v3656, 0
          %3659 = vmatprep.subr.mxu0 0.0
          %3660 = vmatpush1.msra.mxu0 0.0
          %3661 = vmatprep.subr.mxu0 0.0
          %3662 = vmatpush1.msra.mxu0 0.0
          %3663 = vmatprep.subr.mxu0 0.0
          %3664 = vmatpush1.msra.mxu0 0.0
          %3665 = vmatprep.subr.mxu0 0.0
          %3666 = vmatpush1.msra.mxu0 0.0
          %3667 = vmatprep.subr.mxu0 0.0
          %3668 = vmatpush1.msra.mxu0 0.0
          %3669 = vmatprep.subr.mxu0 0.0
          %3670 = vmatpush1.msra.mxu0 0.0
          %3671 = vmatprep.subr.mxu0 0.0
          %3672 = vmatpush1.msra.mxu0 0.0
          %3673 = vmatprep.subr.mxu0 0.0
          %3674 = vmatpush1.msra.mxu0 0.0
          %3675 = vmatprep.subr.mxu0 0.0
          %3676 = vmatpush1.msra.mxu0 %v3652
          %3677 = vmatprep.subr.mxu0 0.0
          %3678 = vmatpush1.msra.mxu0 %v3651
          %3679 = vmatprep.subr.mxu0 0.0
          %3680 = vmatpush1.msra.mxu0 %v3650
          %3681 = vmatprep.subr.mxu0 0.0
          %3682 = vmatpush1.msra.mxu0 %v3649
          %3683 = vmatprep.subr.mxu0 0.0
          %3684 = vmatpush1.msra.mxu0 %v3648
          %3685 = vmatprep.subr.mxu0 0.0
          %3686 = vmatpush1.msra.mxu0 %v3647
          %3687 = vmatprep.subr.mxu0 0.0
          %3688 = vmatpush1.msra.mxu0 %v3646
          %3689 = vmatprep.subr.mxu0 0.0
          %3690 = vmatpush1.msra.mxu0 %v3645
          %3691 = vmatprep.subr.mxu0 0.0
          %3692 = vmatpush2.msra.mxu0 0.0
          %3693 = vmatprep.subr.mxu0 0.0
          %3694 = vmatpush2.msra.mxu0 0.0
          %3695 = vmatprep.subr.mxu0 0.0
          %3696 = vmatpush2.msra.mxu0 0.0
          %3697 = vmatprep.subr.mxu0 0.0
          %3698 = vmatpush2.msra.mxu0 0.0
          %3699 = vmatprep.subr.mxu0 0.0
          %3700 = vmatpush2.msra.mxu0 0.0
          %3701 = vmatprep.subr.mxu0 0.0
          %3702 = vmatpush2.msra.mxu0 0.0
          %3703 = vmatprep.subr.mxu0 0.0
          %3704 = vmatpush2.msra.mxu0 0.0
          %3705 = vmatprep.subr.mxu0 0.0
          %3706 = vmatpush2.msra.mxu0 0.0
          %3707 = vmatprep.subr.mxu0 0.0
          %3708 = vmatpush2.msra.mxu0 0.0
          %3709 = vmatprep.subr.mxu0 0.0
          %3710 = vmatpush2.msra.mxu0 0.0
          %3711 = vmatprep.subr.mxu0 0.0
          %3712 = vmatpush2.msra.mxu0 0.0
          %3713 = vmatprep.subr.mxu0 0.0
          %3714 = vmatpush2.msra.mxu0 0.0
          %3715 = vmatprep.subr.mxu0 0.0
          %3716 = vmatpush2.msra.mxu0 0.0
          %3717 = vmatprep.subr.mxu0 0.0
          %3718 = vmatpush2.msra.mxu0 0.0
          %3719 = vmatprep.subr.mxu0 0.0
          %3720 = vmatpush2.msra.mxu0 0.0
          %3721 = vmatprep.subr.mxu0 0.0
          %3722 = vmatpush2.msra.mxu0 0.0
          %3723 = vmatprep.mubr.f32.mxu0 0.0
          %3724 = vmatmul.mubr.f32.gmra.mxu0 %v3657
          %v3725 = vpop.f32.mrf.mxu0
          %v3726 = vadd.f32 0.0, %v3725
          %v3727 = vpop.f32.mrf.mxu0
          %3728 = vdwg.mxu0
          %v3729 = vadd.f32 %v3641, %v3726
          %s3730 = sadd.s32 %s3468, 1
          %s3731 = smul.u32 %s3730, 16
          %s3732 = scalar_lea.vmem [#allocation7], %s3731
          %v3733 = vld [vmem:[%s3732] sm:$0xff]
          %v3734 = vld [vmem:[%s3732 + $0x8] sm:$0x3]
          %s3735 = scalar_lea.vmem %s13, 192
          %v3736 = vld [vmem:[%s3735] sm:$0xff]
          %v3737 = vld [vmem:[%s3735 + $0x8] sm:$0xff]
          %v3738 = vld [vmem:[%s3735 + $0x10] sm:$0xff]
          %v3739 = vld [vmem:[%s3735 + $0x18] sm:$0xff]
          %v3740 = vld [vmem:[%s3735 + $0x20] sm:$0xff]
          %v3741 = vld [vmem:[%s3735 + $0x28] sm:$0xff]
          %v3742 = vld [vmem:[%s3735 + $0x30] sm:$0xff]
          %v3743 = vld [vmem:[%s3735 + $0x38] sm:$0xff]
          %v3745 = vsel %vm3426, %v3733, 0
          %3747 = vmatprep.subr.mxu0 0.0
          %3748 = vmatpush1.msra.mxu0 0.0
          %3749 = vmatprep.subr.mxu0 0.0
          %3750 = vmatpush1.msra.mxu0 0.0
          %3751 = vmatprep.subr.mxu0 0.0
          %3752 = vmatpush1.msra.mxu0 0.0
          %3753 = vmatprep.subr.mxu0 0.0
          %3754 = vmatpush1.msra.mxu0 0.0
          %3755 = vmatprep.subr.mxu0 0.0
          %3756 = vmatpush1.msra.mxu0 0.0
          %3757 = vmatprep.subr.mxu0 0.0
          %3758 = vmatpush1.msra.mxu0 0.0
          %3759 = vmatprep.subr.mxu0 0.0
          %3760 = vmatpush1.msra.mxu0 0.0
          %3761 = vmatprep.subr.mxu0 0.0
          %3762 = vmatpush1.msra.mxu0 0.0
          %3763 = vmatprep.subr.mxu0 0.0
          %3764 = vmatpush1.msra.mxu0 %v3743
          %3765 = vmatprep.subr.mxu0 0.0
          %3766 = vmatpush1.msra.mxu0 %v3742
          %3767 = vmatprep.subr.mxu0 0.0
          %3768 = vmatpush1.msra.mxu0 %v3741
          %3769 = vmatprep.subr.mxu0 0.0
          %3770 = vmatpush1.msra.mxu0 %v3740
          %3771 = vmatprep.subr.mxu0 0.0
          %3772 = vmatpush1.msra.mxu0 %v3739
          %3773 = vmatprep.subr.mxu0 0.0
          %3774 = vmatpush1.msra.mxu0 %v3738
          %3775 = vmatprep.subr.mxu0 0.0
          %3776 = vmatpush1.msra.mxu0 %v3737
          %3777 = vmatprep.subr.mxu0 0.0
          %3778 = vmatpush1.msra.mxu0 %v3736
          %3779 = vmatprep.subr.mxu0 0.0
          %3780 = vmatpush2.msra.mxu0 0.0
          %3781 = vmatprep.subr.mxu0 0.0
          %3782 = vmatpush2.msra.mxu0 0.0
          %3783 = vmatprep.subr.mxu0 0.0
          %3784 = vmatpush2.msra.mxu0 0.0
          %3785 = vmatprep.subr.mxu0 0.0
          %3786 = vmatpush2.msra.mxu0 0.0
          %3787 = vmatprep.subr.mxu0 0.0
          %3788 = vmatpush2.msra.mxu0 0.0
          %3789 = vmatprep.subr.mxu0 0.0
          %3790 = vmatpush2.msra.mxu0 0.0
          %3791 = vmatprep.subr.mxu0 0.0
          %3792 = vmatpush2.msra.mxu0 0.0
          %3793 = vmatprep.subr.mxu0 0.0
          %3794 = vmatpush2.msra.mxu0 0.0
          %3795 = vmatprep.subr.mxu0 0.0
          %3796 = vmatpush2.msra.mxu0 0.0
          %3797 = vmatprep.subr.mxu0 0.0
          %3798 = vmatpush2.msra.mxu0 0.0
          %3799 = vmatprep.subr.mxu0 0.0
          %3800 = vmatpush2.msra.mxu0 0.0
          %3801 = vmatprep.subr.mxu0 0.0
          %3802 = vmatpush2.msra.mxu0 0.0
          %3803 = vmatprep.subr.mxu0 0.0
          %3804 = vmatpush2.msra.mxu0 0.0
          %3805 = vmatprep.subr.mxu0 0.0
          %3806 = vmatpush2.msra.mxu0 0.0
          %3807 = vmatprep.subr.mxu0 0.0
          %3808 = vmatpush2.msra.mxu0 0.0
          %3809 = vmatprep.subr.mxu0 0.0
          %3810 = vmatpush2.msra.mxu0 0.0
          %3811 = vmatprep.mubr.f32.mxu0 0.0
          %3812 = vmatmul.mubr.f32.gmra.mxu0 %v3745
          %v3813 = vpop.f32.mrf.mxu0
          %v3814 = vadd.f32 0.0, %v3813
          %v3815 = vpop.f32.mrf.mxu0
          %3816 = vdwg.mxu0
          %v3817 = vadd.f32 %v3729, %v3814
          %s3818 = scalar_lea.vmem %s13, 256
          %v3819 = vld [vmem:[%s3818] sm:$0xff]
          %v3820 = vld [vmem:[%s3818 + $0x8] sm:$0xff]
          %v3821 = vld [vmem:[%s3818 + $0x10] sm:$0xff]
          %v3822 = vld [vmem:[%s3818 + $0x18] sm:$0xff]
          %v3823 = vld [vmem:[%s3818 + $0x20] sm:$0xff]
          %v3824 = vld [vmem:[%s3818 + $0x28] sm:$0xff]
          %v3825 = vld [vmem:[%s3818 + $0x30] sm:$0xff]
          %v3826 = vld [vmem:[%s3818 + $0x38] sm:$0xff]
          %v3828 = vrot.slane %v3733, 1
          %v3829 = vrot.slane %v3734, 1
          %v3830 = vsel %vm3496, %v3828, %v3829
          %v3831 = vsel %vm3426, %v3830, 0
          %3833 = vmatprep.subr.mxu0 0.0
          %3834 = vmatpush1.msra.mxu0 0.0
          %3835 = vmatprep.subr.mxu0 0.0
          %3836 = vmatpush1.msra.mxu0 0.0
          %3837 = vmatprep.subr.mxu0 0.0
          %3838 = vmatpush1.msra.mxu0 0.0
          %3839 = vmatprep.subr.mxu0 0.0
          %3840 = vmatpush1.msra.mxu0 0.0
          %3841 = vmatprep.subr.mxu0 0.0
          %3842 = vmatpush1.msra.mxu0 0.0
          %3843 = vmatprep.subr.mxu0 0.0
          %3844 = vmatpush1.msra.mxu0 0.0
          %3845 = vmatprep.subr.mxu0 0.0
          %3846 = vmatpush1.msra.mxu0 0.0
          %3847 = vmatprep.subr.mxu0 0.0
          %3848 = vmatpush1.msra.mxu0 0.0
          %3849 = vmatprep.subr.mxu0 0.0
          %3850 = vmatpush1.msra.mxu0 %v3826
          %3851 = vmatprep.subr.mxu0 0.0
          %3852 = vmatpush1.msra.mxu0 %v3825
          %3853 = vmatprep.subr.mxu0 0.0
          %3854 = vmatpush1.msra.mxu0 %v3824
          %3855 = vmatprep.subr.mxu0 0.0
          %3856 = vmatpush1.msra.mxu0 %v3823
          %3857 = vmatprep.subr.mxu0 0.0
          %3858 = vmatpush1.msra.mxu0 %v3822
          %3859 = vmatprep.subr.mxu0 0.0
          %3860 = vmatpush1.msra.mxu0 %v3821
          %3861 = vmatprep.subr.mxu0 0.0
          %3862 = vmatpush1.msra.mxu0 %v3820
          %3863 = vmatprep.subr.mxu0 0.0
          %3864 = vmatpush1.msra.mxu0 %v3819
          %3865 = vmatprep.subr.mxu0 0.0
          %3866 = vmatpush2.msra.mxu0 0.0
          %3867 = vmatprep.subr.mxu0 0.0
          %3868 = vmatpush2.msra.mxu0 0.0
          %3869 = vmatprep.subr.mxu0 0.0
          %3870 = vmatpush2.msra.mxu0 0.0
          %3871 = vmatprep.subr.mxu0 0.0
          %3872 = vmatpush2.msra.mxu0 0.0
          %3873 = vmatprep.subr.mxu0 0.0
          %3874 = vmatpush2.msra.mxu0 0.0
          %3875 = vmatprep.subr.mxu0 0.0
          %3876 = vmatpush2.msra.mxu0 0.0
          %3877 = vmatprep.subr.mxu0 0.0
          %3878 = vmatpush2.msra.mxu0 0.0
          %3879 = vmatprep.subr.mxu0 0.0
          %3880 = vmatpush2.msra.mxu0 0.0
          %3881 = vmatprep.subr.mxu0 0.0
          %3882 = vmatpush2.msra.mxu0 0.0
          %3883 = vmatprep.subr.mxu0 0.0
          %3884 = vmatpush2.msra.mxu0 0.0
          %3885 = vmatprep.subr.mxu0 0.0
          %3886 = vmatpush2.msra.mxu0 0.0
          %3887 = vmatprep.subr.mxu0 0.0
          %3888 = vmatpush2.msra.mxu0 0.0
          %3889 = vmatprep.subr.mxu0 0.0
          %3890 = vmatpush2.msra.mxu0 0.0
          %3891 = vmatprep.subr.mxu0 0.0
          %3892 = vmatpush2.msra.mxu0 0.0
          %3893 = vmatprep.subr.mxu0 0.0
          %3894 = vmatpush2.msra.mxu0 0.0
          %3895 = vmatprep.subr.mxu0 0.0
          %3896 = vmatpush2.msra.mxu0 0.0
          %3897 = vmatprep.mubr.f32.mxu0 0.0
          %3898 = vmatmul.mubr.f32.gmra.mxu0 %v3831
          %v3899 = vpop.f32.mrf.mxu0
          %v3900 = vadd.f32 0.0, %v3899
          %v3901 = vpop.f32.mrf.mxu0
          %3902 = vdwg.mxu0
          %v3903 = vadd.f32 %v3817, %v3900
          %s3904 = scalar_lea.vmem %s13, 320
          %v3905 = vld [vmem:[%s3904] sm:$0xff]
          %v3906 = vld [vmem:[%s3904 + $0x8] sm:$0xff]
          %v3907 = vld [vmem:[%s3904 + $0x10] sm:$0xff]
          %v3908 = vld [vmem:[%s3904 + $0x18] sm:$0xff]
          %v3909 = vld [vmem:[%s3904 + $0x20] sm:$0xff]
          %v3910 = vld [vmem:[%s3904 + $0x28] sm:$0xff]
          %v3911 = vld [vmem:[%s3904 + $0x30] sm:$0xff]
          %v3912 = vld [vmem:[%s3904 + $0x38] sm:$0xff]
          %v3913 = vrot.slane %v3733, 2
          %v3914 = vrot.slane %v3734, 2
          %v3915 = vsel %vm3653, %v3913, %v3914
          %v3916 = vsel %vm3426, %v3915, 0
          %3918 = vmatprep.subr.mxu0 0.0
          %3919 = vmatpush1.msra.mxu0 0.0
          %3920 = vmatprep.subr.mxu0 0.0
          %3921 = vmatpush1.msra.mxu0 0.0
          %3922 = vmatprep.subr.mxu0 0.0
          %3923 = vmatpush1.msra.mxu0 0.0
          %3924 = vmatprep.subr.mxu0 0.0
          %3925 = vmatpush1.msra.mxu0 0.0
          %3926 = vmatprep.subr.mxu0 0.0
          %3927 = vmatpush1.msra.mxu0 0.0
          %3928 = vmatprep.subr.mxu0 0.0
          %3929 = vmatpush1.msra.mxu0 0.0
          %3930 = vmatprep.subr.mxu0 0.0
          %3931 = vmatpush1.msra.mxu0 0.0
          %3932 = vmatprep.subr.mxu0 0.0
          %3933 = vmatpush1.msra.mxu0 0.0
          %3934 = vmatprep.subr.mxu0 0.0
          %3935 = vmatpush1.msra.mxu0 %v3912
          %3936 = vmatprep.subr.mxu0 0.0
          %3937 = vmatpush1.msra.mxu0 %v3911
          %3938 = vmatprep.subr.mxu0 0.0
          %3939 = vmatpush1.msra.mxu0 %v3910
          %3940 = vmatprep.subr.mxu0 0.0
          %3941 = vmatpush1.msra.mxu0 %v3909
          %3942 = vmatprep.subr.mxu0 0.0
          %3943 = vmatpush1.msra.mxu0 %v3908
          %3944 = vmatprep.subr.mxu0 0.0
          %3945 = vmatpush1.msra.mxu0 %v3907
          %3946 = vmatprep.subr.mxu0 0.0
          %3947 = vmatpush1.msra.mxu0 %v3906
          %3948 = vmatprep.subr.mxu0 0.0
          %3949 = vmatpush1.msra.mxu0 %v3905
          %3950 = vmatprep.subr.mxu0 0.0
          %3951 = vmatpush2.msra.mxu0 0.0
          %3952 = vmatprep.subr.mxu0 0.0
          %3953 = vmatpush2.msra.mxu0 0.0
          %3954 = vmatprep.subr.mxu0 0.0
          %3955 = vmatpush2.msra.mxu0 0.0
          %3956 = vmatprep.subr.mxu0 0.0
          %3957 = vmatpush2.msra.mxu0 0.0
          %3958 = vmatprep.subr.mxu0 0.0
          %3959 = vmatpush2.msra.mxu0 0.0
          %3960 = vmatprep.subr.mxu0 0.0
          %3961 = vmatpush2.msra.mxu0 0.0
          %3962 = vmatprep.subr.mxu0 0.0
          %3963 = vmatpush2.msra.mxu0 0.0
          %3964 = vmatprep.subr.mxu0 0.0
          %3965 = vmatpush2.msra.mxu0 0.0
          %3966 = vmatprep.subr.mxu0 0.0
          %3967 = vmatpush2.msra.mxu0 0.0
          %3968 = vmatprep.subr.mxu0 0.0
          %3969 = vmatpush2.msra.mxu0 0.0
          %3970 = vmatprep.subr.mxu0 0.0
          %3971 = vmatpush2.msra.mxu0 0.0
          %3972 = vmatprep.subr.mxu0 0.0
          %3973 = vmatpush2.msra.mxu0 0.0
          %3974 = vmatprep.subr.mxu0 0.0
          %3975 = vmatpush2.msra.mxu0 0.0
          %3976 = vmatprep.subr.mxu0 0.0
          %3977 = vmatpush2.msra.mxu0 0.0
          %3978 = vmatprep.subr.mxu0 0.0
          %3979 = vmatpush2.msra.mxu0 0.0
          %3980 = vmatprep.subr.mxu0 0.0
          %3981 = vmatpush2.msra.mxu0 0.0
          %3982 = vmatprep.mubr.f32.mxu0 0.0
          %3983 = vmatmul.mubr.f32.gmra.mxu0 %v3916
          %v3984 = vpop.f32.mrf.mxu0
          %v3985 = vadd.f32 0.0, %v3984
          %v3986 = vpop.f32.mrf.mxu0
          %3987 = vdwg.mxu0
          %v3988 = vadd.f32 %v3903, %v3985
          %s3989 = sadd.s32 %s3468, 2
          %s3990 = smul.u32 %s3989, 16
          %s3991 = scalar_lea.vmem [#allocation7], %s3990
          %v3992 = vld [vmem:[%s3991] sm:$0xff]
          %v3993 = vld [vmem:[%s3991 + $0x8] sm:$0x3]
          %s3994 = scalar_lea.vmem %s13, 384
          %v3995 = vld [vmem:[%s3994] sm:$0xff]
          %v3996 = vld [vmem:[%s3994 + $0x8] sm:$0xff]
          %v3997 = vld [vmem:[%s3994 + $0x10] sm:$0xff]
          %v3998 = vld [vmem:[%s3994 + $0x18] sm:$0xff]
          %v3999 = vld [vmem:[%s3994 + $0x20] sm:$0xff]
          %v4000 = vld [vmem:[%s3994 + $0x28] sm:$0xff]
          %v4001 = vld [vmem:[%s3994 + $0x30] sm:$0xff]
          %v4002 = vld [vmem:[%s3994 + $0x38] sm:$0xff]
          %v4004 = vsel %vm3426, %v3992, 0
          %4006 = vmatprep.subr.mxu0 0.0
          %4007 = vmatpush1.msra.mxu0 0.0
          %4008 = vmatprep.subr.mxu0 0.0
          %4009 = vmatpush1.msra.mxu0 0.0
          %4010 = vmatprep.subr.mxu0 0.0
          %4011 = vmatpush1.msra.mxu0 0.0
          %4012 = vmatprep.subr.mxu0 0.0
          %4013 = vmatpush1.msra.mxu0 0.0
          %4014 = vmatprep.subr.mxu0 0.0
          %4015 = vmatpush1.msra.mxu0 0.0
          %4016 = vmatprep.subr.mxu0 0.0
          %4017 = vmatpush1.msra.mxu0 0.0
          %4018 = vmatprep.subr.mxu0 0.0
          %4019 = vmatpush1.msra.mxu0 0.0
          %4020 = vmatprep.subr.mxu0 0.0
          %4021 = vmatpush1.msra.mxu0 0.0
          %4022 = vmatprep.subr.mxu0 0.0
          %4023 = vmatpush1.msra.mxu0 %v4002
          %4024 = vmatprep.subr.mxu0 0.0
          %4025 = vmatpush1.msra.mxu0 %v4001
          %4026 = vmatprep.subr.mxu0 0.0
          %4027 = vmatpush1.msra.mxu0 %v4000
          %4028 = vmatprep.subr.mxu0 0.0
          %4029 = vmatpush1.msra.mxu0 %v3999
          %4030 = vmatprep.subr.mxu0 0.0
          %4031 = vmatpush1.msra.mxu0 %v3998
          %4032 = vmatprep.subr.mxu0 0.0
          %4033 = vmatpush1.msra.mxu0 %v3997
          %4034 = vmatprep.subr.mxu0 0.0
          %4035 = vmatpush1.msra.mxu0 %v3996
          %4036 = vmatprep.subr.mxu0 0.0
          %4037 = vmatpush1.msra.mxu0 %v3995
          %4038 = vmatprep.subr.mxu0 0.0
          %4039 = vmatpush2.msra.mxu0 0.0
          %4040 = vmatprep.subr.mxu0 0.0
          %4041 = vmatpush2.msra.mxu0 0.0
          %4042 = vmatprep.subr.mxu0 0.0
          %4043 = vmatpush2.msra.mxu0 0.0
          %4044 = vmatprep.subr.mxu0 0.0
          %4045 = vmatpush2.msra.mxu0 0.0
          %4046 = vmatprep.subr.mxu0 0.0
          %4047 = vmatpush2.msra.mxu0 0.0
          %4048 = vmatprep.subr.mxu0 0.0
          %4049 = vmatpush2.msra.mxu0 0.0
          %4050 = vmatprep.subr.mxu0 0.0
          %4051 = vmatpush2.msra.mxu0 0.0
          %4052 = vmatprep.subr.mxu0 0.0
          %4053 = vmatpush2.msra.mxu0 0.0
          %4054 = vmatprep.subr.mxu0 0.0
          %4055 = vmatpush2.msra.mxu0 0.0
          %4056 = vmatprep.subr.mxu0 0.0
          %4057 = vmatpush2.msra.mxu0 0.0
          %4058 = vmatprep.subr.mxu0 0.0
          %4059 = vmatpush2.msra.mxu0 0.0
          %4060 = vmatprep.subr.mxu0 0.0
          %4061 = vmatpush2.msra.mxu0 0.0
          %4062 = vmatprep.subr.mxu0 0.0
          %4063 = vmatpush2.msra.mxu0 0.0
          %4064 = vmatprep.subr.mxu0 0.0
          %4065 = vmatpush2.msra.mxu0 0.0
          %4066 = vmatprep.subr.mxu0 0.0
          %4067 = vmatpush2.msra.mxu0 0.0
          %4068 = vmatprep.subr.mxu0 0.0
          %4069 = vmatpush2.msra.mxu0 0.0
          %4070 = vmatprep.mubr.f32.mxu0 0.0
          %4071 = vmatmul.mubr.f32.gmra.mxu0 %v4004
          %v4072 = vpop.f32.mrf.mxu0
          %v4073 = vadd.f32 0.0, %v4072
          %v4074 = vpop.f32.mrf.mxu0
          %4075 = vdwg.mxu0
          %v4076 = vadd.f32 %v3988, %v4073
          %s4077 = scalar_lea.vmem %s13, 448
          %v4078 = vld [vmem:[%s4077] sm:$0xff]
          %v4079 = vld [vmem:[%s4077 + $0x8] sm:$0xff]
          %v4080 = vld [vmem:[%s4077 + $0x10] sm:$0xff]
          %v4081 = vld [vmem:[%s4077 + $0x18] sm:$0xff]
          %v4082 = vld [vmem:[%s4077 + $0x20] sm:$0xff]
          %v4083 = vld [vmem:[%s4077 + $0x28] sm:$0xff]
          %v4084 = vld [vmem:[%s4077 + $0x30] sm:$0xff]
          %v4085 = vld [vmem:[%s4077 + $0x38] sm:$0xff]
          %v4087 = vrot.slane %v3992, 1
          %v4088 = vrot.slane %v3993, 1
          %v4089 = vsel %vm3496, %v4087, %v4088
          %v4090 = vsel %vm3426, %v4089, 0
          %4092 = vmatprep.subr.mxu0 0.0
          %4093 = vmatpush1.msra.mxu0 0.0
          %4094 = vmatprep.subr.mxu0 0.0
          %4095 = vmatpush1.msra.mxu0 0.0
          %4096 = vmatprep.subr.mxu0 0.0
          %4097 = vmatpush1.msra.mxu0 0.0
          %4098 = vmatprep.subr.mxu0 0.0
          %4099 = vmatpush1.msra.mxu0 0.0
          %4100 = vmatprep.subr.mxu0 0.0
          %4101 = vmatpush1.msra.mxu0 0.0
          %4102 = vmatprep.subr.mxu0 0.0
          %4103 = vmatpush1.msra.mxu0 0.0
          %4104 = vmatprep.subr.mxu0 0.0
          %4105 = vmatpush1.msra.mxu0 0.0
          %4106 = vmatprep.subr.mxu0 0.0
          %4107 = vmatpush1.msra.mxu0 0.0
          %4108 = vmatprep.subr.mxu0 0.0
          %4109 = vmatpush1.msra.mxu0 %v4085
          %4110 = vmatprep.subr.mxu0 0.0
          %4111 = vmatpush1.msra.mxu0 %v4084
          %4112 = vmatprep.subr.mxu0 0.0
          %4113 = vmatpush1.msra.mxu0 %v4083
          %4114 = vmatprep.subr.mxu0 0.0
          %4115 = vmatpush1.msra.mxu0 %v4082
          %4116 = vmatprep.subr.mxu0 0.0
          %4117 = vmatpush1.msra.mxu0 %v4081
          %4118 = vmatprep.subr.mxu0 0.0
          %4119 = vmatpush1.msra.mxu0 %v4080
          %4120 = vmatprep.subr.mxu0 0.0
          %4121 = vmatpush1.msra.mxu0 %v4079
          %4122 = vmatprep.subr.mxu0 0.0
          %4123 = vmatpush1.msra.mxu0 %v4078
          %4124 = vmatprep.subr.mxu0 0.0
          %4125 = vmatpush2.msra.mxu0 0.0
          %4126 = vmatprep.subr.mxu0 0.0
          %4127 = vmatpush2.msra.mxu0 0.0
          %4128 = vmatprep.subr.mxu0 0.0
          %4129 = vmatpush2.msra.mxu0 0.0
          %4130 = vmatprep.subr.mxu0 0.0
          %4131 = vmatpush2.msra.mxu0 0.0
          %4132 = vmatprep.subr.mxu0 0.0
          %4133 = vmatpush2.msra.mxu0 0.0
          %4134 = vmatprep.subr.mxu0 0.0
          %4135 = vmatpush2.msra.mxu0 0.0
          %4136 = vmatprep.subr.mxu0 0.0
          %4137 = vmatpush2.msra.mxu0 0.0
          %4138 = vmatprep.subr.mxu0 0.0
          %4139 = vmatpush2.msra.mxu0 0.0
          %4140 = vmatprep.subr.mxu0 0.0
          %4141 = vmatpush2.msra.mxu0 0.0
          %4142 = vmatprep.subr.mxu0 0.0
          %4143 = vmatpush2.msra.mxu0 0.0
          %4144 = vmatprep.subr.mxu0 0.0
          %4145 = vmatpush2.msra.mxu0 0.0
          %4146 = vmatprep.subr.mxu0 0.0
          %4147 = vmatpush2.msra.mxu0 0.0
          %4148 = vmatprep.subr.mxu0 0.0
          %4149 = vmatpush2.msra.mxu0 0.0
          %4150 = vmatprep.subr.mxu0 0.0
          %4151 = vmatpush2.msra.mxu0 0.0
          %4152 = vmatprep.subr.mxu0 0.0
          %4153 = vmatpush2.msra.mxu0 0.0
          %4154 = vmatprep.subr.mxu0 0.0
          %4155 = vmatpush2.msra.mxu0 0.0
          %4156 = vmatprep.mubr.f32.mxu0 0.0
          %4157 = vmatmul.mubr.f32.gmra.mxu0 %v4090
          %v4158 = vpop.f32.mrf.mxu0
          %v4159 = vadd.f32 0.0, %v4158
          %v4160 = vpop.f32.mrf.mxu0
          %4161 = vdwg.mxu0
          %v4162 = vadd.f32 %v4076, %v4159
          %s4163 = scalar_lea.vmem %s13, 512
          %v4164 = vld [vmem:[%s4163] sm:$0xff]
          %v4165 = vld [vmem:[%s4163 + $0x8] sm:$0xff]
          %v4166 = vld [vmem:[%s4163 + $0x10] sm:$0xff]
          %v4167 = vld [vmem:[%s4163 + $0x18] sm:$0xff]
          %v4168 = vld [vmem:[%s4163 + $0x20] sm:$0xff]
          %v4169 = vld [vmem:[%s4163 + $0x28] sm:$0xff]
          %v4170 = vld [vmem:[%s4163 + $0x30] sm:$0xff]
          %v4171 = vld [vmem:[%s4163 + $0x38] sm:$0xff]
          %v4172 = vrot.slane %v3992, 2
          %v4173 = vrot.slane %v3993, 2
          %v4174 = vsel %vm3653, %v4172, %v4173
          %v4175 = vsel %vm3426, %v4174, 0
          %4177 = vmatprep.subr.mxu0 0.0
          %4178 = vmatpush1.msra.mxu0 0.0
          %4179 = vmatprep.subr.mxu0 0.0
          %4180 = vmatpush1.msra.mxu0 0.0
          %4181 = vmatprep.subr.mxu0 0.0
          %4182 = vmatpush1.msra.mxu0 0.0
          %4183 = vmatprep.subr.mxu0 0.0
          %4184 = vmatpush1.msra.mxu0 0.0
          %4185 = vmatprep.subr.mxu0 0.0
          %4186 = vmatpush1.msra.mxu0 0.0
          %4187 = vmatprep.subr.mxu0 0.0
          %4188 = vmatpush1.msra.mxu0 0.0
          %4189 = vmatprep.subr.mxu0 0.0
          %4190 = vmatpush1.msra.mxu0 0.0
          %4191 = vmatprep.subr.mxu0 0.0
          %4192 = vmatpush1.msra.mxu0 0.0
          %4193 = vmatprep.subr.mxu0 0.0
          %4194 = vmatpush1.msra.mxu0 %v4171
          %4195 = vmatprep.subr.mxu0 0.0
          %4196 = vmatpush1.msra.mxu0 %v4170
          %4197 = vmatprep.subr.mxu0 0.0
          %4198 = vmatpush1.msra.mxu0 %v4169
          %4199 = vmatprep.subr.mxu0 0.0
          %4200 = vmatpush1.msra.mxu0 %v4168
          %4201 = vmatprep.subr.mxu0 0.0
          %4202 = vmatpush1.msra.mxu0 %v4167
          %4203 = vmatprep.subr.mxu0 0.0
          %4204 = vmatpush1.msra.mxu0 %v4166
          %4205 = vmatprep.subr.mxu0 0.0
          %4206 = vmatpush1.msra.mxu0 %v4165
          %4207 = vmatprep.subr.mxu0 0.0
          %4208 = vmatpush1.msra.mxu0 %v4164
          %4209 = vmatprep.subr.mxu0 0.0
          %4210 = vmatpush2.msra.mxu0 0.0
          %4211 = vmatprep.subr.mxu0 0.0
          %4212 = vmatpush2.msra.mxu0 0.0
          %4213 = vmatprep.subr.mxu0 0.0
          %4214 = vmatpush2.msra.mxu0 0.0
          %4215 = vmatprep.subr.mxu0 0.0
          %4216 = vmatpush2.msra.mxu0 0.0
          %4217 = vmatprep.subr.mxu0 0.0
          %4218 = vmatpush2.msra.mxu0 0.0
          %4219 = vmatprep.subr.mxu0 0.0
          %4220 = vmatpush2.msra.mxu0 0.0
          %4221 = vmatprep.subr.mxu0 0.0
          %4222 = vmatpush2.msra.mxu0 0.0
          %4223 = vmatprep.subr.mxu0 0.0
          %4224 = vmatpush2.msra.mxu0 0.0
          %4225 = vmatprep.subr.mxu0 0.0
          %4226 = vmatpush2.msra.mxu0 0.0
          %4227 = vmatprep.subr.mxu0 0.0
          %4228 = vmatpush2.msra.mxu0 0.0
          %4229 = vmatprep.subr.mxu0 0.0
          %4230 = vmatpush2.msra.mxu0 0.0
          %4231 = vmatprep.subr.mxu0 0.0
          %4232 = vmatpush2.msra.mxu0 0.0
          %4233 = vmatprep.subr.mxu0 0.0
          %4234 = vmatpush2.msra.mxu0 0.0
          %4235 = vmatprep.subr.mxu0 0.0
          %4236 = vmatpush2.msra.mxu0 0.0
          %4237 = vmatprep.subr.mxu0 0.0
          %4238 = vmatpush2.msra.mxu0 0.0
          %4239 = vmatprep.subr.mxu0 0.0
          %4240 = vmatpush2.msra.mxu0 0.0
          %4241 = vmatprep.mubr.f32.mxu0 0.0
          %4242 = vmatmul.mubr.f32.gmra.mxu0 %v4175
          %v4243 = vpop.f32.mrf.mxu0
          %v4244 = vadd.f32 0.0, %v4243
          %v4245 = vpop.f32.mrf.mxu0
          %4246 = vdwg.mxu0
          %v4247 = vadd.f32 %v4162, %v4244
          %v4249 = vlaneseq
          %v4250 = vshrl.u32 %v4249, 7
          %v4251 = vsub.s32 0, %v4250
          %v4252 = vrot.slane %v3465, %v4251
          %v4254 = vmul.f32 %v4247, %v4252
          %v4256 = vlaneseq
          %v4257 = vshrl.u32 %v4256, 7
          %v4258 = vsub.s32 0, %v4257
          %v4259 = vrot.slane %v3466, %v4258
          %v4261 = vadd.f32 %v4254, %v4259
          %v4262 = vmax.f32 %v4261, 0.0
          %s4263 = smul.u32 %s3468, 8
          %s4264 = scalar_lea.vmem [#allocation8], %s4263
          %4265 = vst.msk [vmem:[%s4264] sm:$0xff] %vm3426, %v4262
        $region148: #{chestcnn_forward.1} parent=107 // loop_footer
          %s3472 = sadd.s32 1, %s3468
        $region149: #{chestcnn_forward.1} parent=107 // loop_footer_branch
          %3467 = sbr.rel target = $region145
        $region150: #{chestcnn_forward.1} parent=107 // loop_exit
          _
        loop: start=0, step=1, limit=4
        $region151: #{chestcnn_forward.1} parent=107 // loop_pre_header
          _
        $region152: #{chestcnn_forward.1} parent=107 // loop_header
          %s4267 = sphi 0, %s4271
          %p4268 = scmp.ge.s32.totalorder %s4267, 4
        $region153: #{chestcnn_forward.1} parent=107 // loop_header_branch
          %4270 = sbr.rel (%p4268) target = $region157
        $region154: #{chestcnn_forward.1} parent=107 // loop_body
          %s4272 = smul.u32 %s4267, 2
          %s4273 = smul.u32 %s4272, 8
          %s4274 = scalar_lea.vmem [#allocation8], %s4273
          %v4275 = vld [vmem:[%s4274] sm:$0xff]
          %s4276 = sadd.s32 %s4272, 1
          %s4277 = smul.u32 %s4276, 8
          %s4278 = scalar_lea.vmem [#allocation8], %s4277
          %v4279 = vld [vmem:[%s4278] sm:$0xff]
          %v4280 = vmax.f32 %v4275, %v4279
          %4281 = vst.msk [vmem:[#allocation11] sm:$0xff] %vm3426, %v4280
          %v4282 = vld [vmem:[#allocation11] ss:$2 sm:$0xf]
          %s4283 = scalar_lea.vmem [#allocation11], 1
          %v4284 = vld [vmem:[%s4283] ss:$2 sm:$0xf]
          %v4285 = vmax.f32 %v4282, %v4284
          %s4286 = smul.u32 %s4267, 4
          %s4287 = scalar_lea.vmem [#allocation9], %s4286
          %vm4288 = vcmask 519168
          %4289 = vst.msk [vmem:[%s4287] sm:$0xf] %vm4288, %v4285
        $region155: #{chestcnn_forward.1} parent=107 // loop_footer
          %s4271 = sadd.s32 1, %s4267
        $region156: #{chestcnn_forward.1} parent=107 // loop_footer_branch
          %4266 = sbr.rel target = $region152
        $region157: #{chestcnn_forward.1} parent=107 // loop_exit
          _
        %v4290 = vld [vmem:[%s17] sm:$0x1]
        %v4291 = vld [vmem:[#allocation9] sm:$0x1]
        %v4292 = vld [vmem:[%s16] sm:$0xff]
        %v4293 = vld [vmem:[%s16 + $0x8] sm:$0xff]
        %v4294 = vld [vmem:[%s16 + $0x10] sm:$0xff]
        %v4295 = vld [vmem:[%s16 + $0x18] sm:$0xff]
        %v4296 = vld [vmem:[%s16 + $0x20] sm:$0xff]
        %v4297 = vld [vmem:[%s16 + $0x28] sm:$0xff]
        %v4298 = vld [vmem:[%s16 + $0x30] sm:$0xff]
        %v4299 = vld [vmem:[%s16 + $0x38] sm:$0xff]
        %v4301 = vsel %vm3426, %v4291, 0
        %4303 = vmatprep.subr.mxu0 0.0
        %4304 = vmatpush1.msra.mxu0 0.0
        %4305 = vmatprep.subr.mxu0 0.0
        %4306 = vmatpush1.msra.mxu0 0.0
        %4307 = vmatprep.subr.mxu0 0.0
        %4308 = vmatpush1.msra.mxu0 0.0
        %4309 = vmatprep.subr.mxu0 0.0
        %4310 = vmatpush1.msra.mxu0 0.0
        %4311 = vmatprep.subr.mxu0 0.0
        %4312 = vmatpush1.msra.mxu0 0.0
        %4313 = vmatprep.subr.mxu0 0.0
        %4314 = vmatpush1.msra.mxu0 0.0
        %4315 = vmatprep.subr.mxu0 0.0
        %4316 = vmatpush1.msra.mxu0 0.0
        %4317 = vmatprep.subr.mxu0 0.0
        %4318 = vmatpush1.msra.mxu0 0.0
        %4319 = vmatprep.subr.mxu0 0.0
        %4320 = vmatpush1.msra.mxu0 %v4299
        %4321 = vmatprep.subr.mxu0 0.0
        %4322 = vmatpush1.msra.mxu0 %v4298
        %4323 = vmatprep.subr.mxu0 0.0
        %4324 = vmatpush1.msra.mxu0 %v4297
        %4325 = vmatprep.subr.mxu0 0.0
        %4326 = vmatpush1.msra.mxu0 %v4296
        %4327 = vmatprep.subr.mxu0 0.0
        %4328 = vmatpush1.msra.mxu0 %v4295
        %4329 = vmatprep.subr.mxu0 0.0
        %4330 = vmatpush1.msra.mxu0 %v4294
        %4331 = vmatprep.subr.mxu0 0.0
        %4332 = vmatpush1.msra.mxu0 %v4293
        %4333 = vmatprep.subr.mxu0 0.0
        %4334 = vmatpush1.msra.mxu0 %v4292
        %4335 = vmatprep.subr.mxu0 0.0
        %4336 = vmatpush2.msra.mxu0 0.0
        %4337 = vmatprep.subr.mxu0 0.0
        %4338 = vmatpush2.msra.mxu0 0.0
        %4339 = vmatprep.subr.mxu0 0.0
        %4340 = vmatpush2.msra.mxu0 0.0
        %4341 = vmatprep.subr.mxu0 0.0
        %4342 = vmatpush2.msra.mxu0 0.0
        %4343 = vmatprep.subr.mxu0 0.0
        %4344 = vmatpush2.msra.mxu0 0.0
        %4345 = vmatprep.subr.mxu0 0.0
        %4346 = vmatpush2.msra.mxu0 0.0
        %4347 = vmatprep.subr.mxu0 0.0
        %4348 = vmatpush2.msra.mxu0 0.0
        %4349 = vmatprep.subr.mxu0 0.0
        %4350 = vmatpush2.msra.mxu0 0.0
        %4351 = vmatprep.subr.mxu0 0.0
        %4352 = vmatpush2.msra.mxu0 0.0
        %4353 = vmatprep.subr.mxu0 0.0
        %4354 = vmatpush2.msra.mxu0 0.0
        %4355 = vmatprep.subr.mxu0 0.0
        %4356 = vmatpush2.msra.mxu0 0.0
        %4357 = vmatprep.subr.mxu0 0.0
        %4358 = vmatpush2.msra.mxu0 0.0
        %4359 = vmatprep.subr.mxu0 0.0
        %4360 = vmatpush2.msra.mxu0 0.0
        %4361 = vmatprep.subr.mxu0 0.0
        %4362 = vmatpush2.msra.mxu0 0.0
        %4363 = vmatprep.subr.mxu0 0.0
        %4364 = vmatpush2.msra.mxu0 0.0
        %4365 = vmatprep.subr.mxu0 0.0
        %4366 = vmatpush2.msra.mxu0 0.0
        %4367 = vmatprep.mubr.f32.mxu0 0.0
        %4368 = vmatmul.mubr.f32.gmra.mxu0 %v4301
        %v4369 = vpop.f32.mrf.mxu0
        %v4370 = vadd.f32 0.0, %v4369
        %v4371 = vpop.f32.mrf.mxu0
        %4372 = vdwg.mxu0
        %v4373 = vadd.f32 %v4290, %v4370
        %v4374 = vld [vmem:[#allocation9 + $0x1] sm:$0x1]
        %s4375 = scalar_lea.vmem %s16, 64
        %v4376 = vld [vmem:[%s4375] sm:$0xff]
        %v4377 = vld [vmem:[%s4375 + $0x8] sm:$0xff]
        %v4378 = vld [vmem:[%s4375 + $0x10] sm:$0xff]
        %v4379 = vld [vmem:[%s4375 + $0x18] sm:$0xff]
        %v4380 = vld [vmem:[%s4375 + $0x20] sm:$0xff]
        %v4381 = vld [vmem:[%s4375 + $0x28] sm:$0xff]
        %v4382 = vld [vmem:[%s4375 + $0x30] sm:$0xff]
        %v4383 = vld [vmem:[%s4375 + $0x38] sm:$0xff]
        %v4385 = vsel %vm3426, %v4374, 0
        %4387 = vmatprep.subr.mxu0 0.0
        %4388 = vmatpush1.msra.mxu0 0.0
        %4389 = vmatprep.subr.mxu0 0.0
        %4390 = vmatpush1.msra.mxu0 0.0
        %4391 = vmatprep.subr.mxu0 0.0
        %4392 = vmatpush1.msra.mxu0 0.0
        %4393 = vmatprep.subr.mxu0 0.0
        %4394 = vmatpush1.msra.mxu0 0.0
        %4395 = vmatprep.subr.mxu0 0.0
        %4396 = vmatpush1.msra.mxu0 0.0
        %4397 = vmatprep.subr.mxu0 0.0
        %4398 = vmatpush1.msra.mxu0 0.0
        %4399 = vmatprep.subr.mxu0 0.0
        %4400 = vmatpush1.msra.mxu0 0.0
        %4401 = vmatprep.subr.mxu0 0.0
        %4402 = vmatpush1.msra.mxu0 0.0
        %4403 = vmatprep.subr.mxu0 0.0
        %4404 = vmatpush1.msra.mxu0 %v4383
        %4405 = vmatprep.subr.mxu0 0.0
        %4406 = vmatpush1.msra.mxu0 %v4382
        %4407 = vmatprep.subr.mxu0 0.0
        %4408 = vmatpush1.msra.mxu0 %v4381
        %4409 = vmatprep.subr.mxu0 0.0
        %4410 = vmatpush1.msra.mxu0 %v4380
        %4411 = vmatprep.subr.mxu0 0.0
        %4412 = vmatpush1.msra.mxu0 %v4379
        %4413 = vmatprep.subr.mxu0 0.0
        %4414 = vmatpush1.msra.mxu0 %v4378
        %4415 = vmatprep.subr.mxu0 0.0
        %4416 = vmatpush1.msra.mxu0 %v4377
        %4417 = vmatprep.subr.mxu0 0.0
        %4418 = vmatpush1.msra.mxu0 %v4376
        %4419 = vmatprep.subr.mxu0 0.0
        %4420 = vmatpush2.msra.mxu0 0.0
        %4421 = vmatprep.subr.mxu0 0.0
        %4422 = vmatpush2.msra.mxu0 0.0
        %4423 = vmatprep.subr.mxu0 0.0
        %4424 = vmatpush2.msra.mxu0 0.0
        %4425 = vmatprep.subr.mxu0 0.0
        %4426 = vmatpush2.msra.mxu0 0.0
        %4427 = vmatprep.subr.mxu0 0.0
        %4428 = vmatpush2.msra.mxu0 0.0
        %4429 = vmatprep.subr.mxu0 0.0
        %4430 = vmatpush2.msra.mxu0 0.0
        %4431 = vmatprep.subr.mxu0 0.0
        %4432 = vmatpush2.msra.mxu0 0.0
        %4433 = vmatprep.subr.mxu0 0.0
        %4434 = vmatpush2.msra.mxu0 0.0
        %4435 = vmatprep.subr.mxu0 0.0
        %4436 = vmatpush2.msra.mxu0 0.0
        %4437 = vmatprep.subr.mxu0 0.0
        %4438 = vmatpush2.msra.mxu0 0.0
        %4439 = vmatprep.subr.mxu0 0.0
        %4440 = vmatpush2.msra.mxu0 0.0
        %4441 = vmatprep.subr.mxu0 0.0
        %4442 = vmatpush2.msra.mxu0 0.0
        %4443 = vmatprep.subr.mxu0 0.0
        %4444 = vmatpush2.msra.mxu0 0.0
        %4445 = vmatprep.subr.mxu0 0.0
        %4446 = vmatpush2.msra.mxu0 0.0
        %4447 = vmatprep.subr.mxu0 0.0
        %4448 = vmatpush2.msra.mxu0 0.0
        %4449 = vmatprep.subr.mxu0 0.0
        %4450 = vmatpush2.msra.mxu0 0.0
        %4451 = vmatprep.mubr.f32.mxu0 0.0
        %4452 = vmatmul.mubr.f32.gmra.mxu0 %v4385
        %v4453 = vpop.f32.mrf.mxu0
        %v4454 = vadd.f32 0.0, %v4453
        %v4455 = vpop.f32.mrf.mxu0
        %4456 = vdwg.mxu0
        %v4457 = vadd.f32 %v4373, %v4454
        %v4458 = vld [vmem:[#allocation9 + $0x2] sm:$0x1]
        %s4459 = scalar_lea.vmem %s16, 128
        %v4460 = vld [vmem:[%s4459] sm:$0xff]
        %v4461 = vld [vmem:[%s4459 + $0x8] sm:$0xff]
        %v4462 = vld [vmem:[%s4459 + $0x10] sm:$0xff]
        %v4463 = vld [vmem:[%s4459 + $0x18] sm:$0xff]
        %v4464 = vld [vmem:[%s4459 + $0x20] sm:$0xff]
        %v4465 = vld [vmem:[%s4459 + $0x28] sm:$0xff]
        %v4466 = vld [vmem:[%s4459 + $0x30] sm:$0xff]
        %v4467 = vld [vmem:[%s4459 + $0x38] sm:$0xff]
        %v4469 = vsel %vm3426, %v4458, 0
        %4471 = vmatprep.subr.mxu0 0.0
        %4472 = vmatpush1.msra.mxu0 0.0
        %4473 = vmatprep.subr.mxu0 0.0
        %4474 = vmatpush1.msra.mxu0 0.0
        %4475 = vmatprep.subr.mxu0 0.0
        %4476 = vmatpush1.msra.mxu0 0.0
        %4477 = vmatprep.subr.mxu0 0.0
        %4478 = vmatpush1.msra.mxu0 0.0
        %4479 = vmatprep.subr.mxu0 0.0
        %4480 = vmatpush1.msra.mxu0 0.0
        %4481 = vmatprep.subr.mxu0 0.0
        %4482 = vmatpush1.msra.mxu0 0.0
        %4483 = vmatprep.subr.mxu0 0.0
        %4484 = vmatpush1.msra.mxu0 0.0
        %4485 = vmatprep.subr.mxu0 0.0
        %4486 = vmatpush1.msra.mxu0 0.0
        %4487 = vmatprep.subr.mxu0 0.0
        %4488 = vmatpush1.msra.mxu0 %v4467
        %4489 = vmatprep.subr.mxu0 0.0
        %4490 = vmatpush1.msra.mxu0 %v4466
        %4491 = vmatprep.subr.mxu0 0.0
        %4492 = vmatpush1.msra.mxu0 %v4465
        %4493 = vmatprep.subr.mxu0 0.0
        %4494 = vmatpush1.msra.mxu0 %v4464
        %4495 = vmatprep.subr.mxu0 0.0
        %4496 = vmatpush1.msra.mxu0 %v4463
        %4497 = vmatprep.subr.mxu0 0.0
        %4498 = vmatpush1.msra.mxu0 %v4462
        %4499 = vmatprep.subr.mxu0 0.0
        %4500 = vmatpush1.msra.mxu0 %v4461
        %4501 = vmatprep.subr.mxu0 0.0
        %4502 = vmatpush1.msra.mxu0 %v4460
        %4503 = vmatprep.subr.mxu0 0.0
        %4504 = vmatpush2.msra.mxu0 0.0
        %4505 = vmatprep.subr.mxu0 0.0
        %4506 = vmatpush2.msra.mxu0 0.0
        %4507 = vmatprep.subr.mxu0 0.0
        %4508 = vmatpush2.msra.mxu0 0.0
        %4509 = vmatprep.subr.mxu0 0.0
        %4510 = vmatpush2.msra.mxu0 0.0
        %4511 = vmatprep.subr.mxu0 0.0
        %4512 = vmatpush2.msra.mxu0 0.0
        %4513 = vmatprep.subr.mxu0 0.0
        %4514 = vmatpush2.msra.mxu0 0.0
        %4515 = vmatprep.subr.mxu0 0.0
        %4516 = vmatpush2.msra.mxu0 0.0
        %4517 = vmatprep.subr.mxu0 0.0
        %4518 = vmatpush2.msra.mxu0 0.0
        %4519 = vmatprep.subr.mxu0 0.0
        %4520 = vmatpush2.msra.mxu0 0.0
        %4521 = vmatprep.subr.mxu0 0.0
        %4522 = vmatpush2.msra.mxu0 0.0
        %4523 = vmatprep.subr.mxu0 0.0
        %4524 = vmatpush2.msra.mxu0 0.0
        %4525 = vmatprep.subr.mxu0 0.0
        %4526 = vmatpush2.msra.mxu0 0.0
        %4527 = vmatprep.subr.mxu0 0.0
        %4528 = vmatpush2.msra.mxu0 0.0
        %4529 = vmatprep.subr.mxu0 0.0
        %4530 = vmatpush2.msra.mxu0 0.0
        %4531 = vmatprep.subr.mxu0 0.0
        %4532 = vmatpush2.msra.mxu0 0.0
        %4533 = vmatprep.subr.mxu0 0.0
        %4534 = vmatpush2.msra.mxu0 0.0
        %4535 = vmatprep.mubr.f32.mxu0 0.0
        %4536 = vmatmul.mubr.f32.gmra.mxu0 %v4469
        %v4537 = vpop.f32.mrf.mxu0
        %v4538 = vadd.f32 0.0, %v4537
        %v4539 = vpop.f32.mrf.mxu0
        %4540 = vdwg.mxu0
        %v4541 = vadd.f32 %v4457, %v4538
        %v4542 = vld [vmem:[#allocation9 + $0x3] sm:$0x1]
        %s4543 = scalar_lea.vmem %s16, 192
        %v4544 = vld [vmem:[%s4543] sm:$0xff]
        %v4545 = vld [vmem:[%s4543 + $0x8] sm:$0xff]
        %v4546 = vld [vmem:[%s4543 + $0x10] sm:$0xff]
        %v4547 = vld [vmem:[%s4543 + $0x18] sm:$0xff]
        %v4548 = vld [vmem:[%s4543 + $0x20] sm:$0xff]
        %v4549 = vld [vmem:[%s4543 + $0x28] sm:$0xff]
        %v4550 = vld [vmem:[%s4543 + $0x30] sm:$0xff]
        %v4551 = vld [vmem:[%s4543 + $0x38] sm:$0xff]
        %v4553 = vsel %vm3426, %v4542, 0
        %4555 = vmatprep.subr.mxu0 0.0
        %4556 = vmatpush1.msra.mxu0 0.0
        %4557 = vmatprep.subr.mxu0 0.0
        %4558 = vmatpush1.msra.mxu0 0.0
        %4559 = vmatprep.subr.mxu0 0.0
        %4560 = vmatpush1.msra.mxu0 0.0
        %4561 = vmatprep.subr.mxu0 0.0
        %4562 = vmatpush1.msra.mxu0 0.0
        %4563 = vmatprep.subr.mxu0 0.0
        %4564 = vmatpush1.msra.mxu0 0.0
        %4565 = vmatprep.subr.mxu0 0.0
        %4566 = vmatpush1.msra.mxu0 0.0
        %4567 = vmatprep.subr.mxu0 0.0
        %4568 = vmatpush1.msra.mxu0 0.0
        %4569 = vmatprep.subr.mxu0 0.0
        %4570 = vmatpush1.msra.mxu0 0.0
        %4571 = vmatprep.subr.mxu0 0.0
        %4572 = vmatpush1.msra.mxu0 %v4551
        %4573 = vmatprep.subr.mxu0 0.0
        %4574 = vmatpush1.msra.mxu0 %v4550
        %4575 = vmatprep.subr.mxu0 0.0
        %4576 = vmatpush1.msra.mxu0 %v4549
        %4577 = vmatprep.subr.mxu0 0.0
        %4578 = vmatpush1.msra.mxu0 %v4548
        %4579 = vmatprep.subr.mxu0 0.0
        %4580 = vmatpush1.msra.mxu0 %v4547
        %4581 = vmatprep.subr.mxu0 0.0
        %4582 = vmatpush1.msra.mxu0 %v4546
        %4583 = vmatprep.subr.mxu0 0.0
        %4584 = vmatpush1.msra.mxu0 %v4545
        %4585 = vmatprep.subr.mxu0 0.0
        %4586 = vmatpush1.msra.mxu0 %v4544
        %4587 = vmatprep.subr.mxu0 0.0
        %4588 = vmatpush2.msra.mxu0 0.0
        %4589 = vmatprep.subr.mxu0 0.0
        %4590 = vmatpush2.msra.mxu0 0.0
        %4591 = vmatprep.subr.mxu0 0.0
        %4592 = vmatpush2.msra.mxu0 0.0
        %4593 = vmatprep.subr.mxu0 0.0
        %4594 = vmatpush2.msra.mxu0 0.0
        %4595 = vmatprep.subr.mxu0 0.0
        %4596 = vmatpush2.msra.mxu0 0.0
        %4597 = vmatprep.subr.mxu0 0.0
        %4598 = vmatpush2.msra.mxu0 0.0
        %4599 = vmatprep.subr.mxu0 0.0
        %4600 = vmatpush2.msra.mxu0 0.0
        %4601 = vmatprep.subr.mxu0 0.0
        %4602 = vmatpush2.msra.mxu0 0.0
        %4603 = vmatprep.subr.mxu0 0.0
        %4604 = vmatpush2.msra.mxu0 0.0
        %4605 = vmatprep.subr.mxu0 0.0
        %4606 = vmatpush2.msra.mxu0 0.0
        %4607 = vmatprep.subr.mxu0 0.0
        %4608 = vmatpush2.msra.mxu0 0.0
        %4609 = vmatprep.subr.mxu0 0.0
        %4610 = vmatpush2.msra.mxu0 0.0
        %4611 = vmatprep.subr.mxu0 0.0
        %4612 = vmatpush2.msra.mxu0 0.0
        %4613 = vmatprep.subr.mxu0 0.0
        %4614 = vmatpush2.msra.mxu0 0.0
        %4615 = vmatprep.subr.mxu0 0.0
        %4616 = vmatpush2.msra.mxu0 0.0
        %4617 = vmatprep.subr.mxu0 0.0
        %4618 = vmatpush2.msra.mxu0 0.0
        %4619 = vmatprep.mubr.f32.mxu0 0.0
        %4620 = vmatmul.mubr.f32.gmra.mxu0 %v4553
        %v4621 = vpop.f32.mrf.mxu0
        %v4622 = vadd.f32 0.0, %v4621
        %v4623 = vpop.f32.mrf.mxu0
        %4624 = vdwg.mxu0
        %v4625 = vadd.f32 %v4541, %v4622
        %s4626 = scalar_lea.vmem [#allocation9], 4
        %v4627 = vld [vmem:[%s4626] sm:$0x1]
        %s4628 = scalar_lea.vmem %s16, 256
        %v4629 = vld [vmem:[%s4628] sm:$0xff]
        %v4630 = vld [vmem:[%s4628 + $0x8] sm:$0xff]
        %v4631 = vld [vmem:[%s4628 + $0x10] sm:$0xff]
        %v4632 = vld [vmem:[%s4628 + $0x18] sm:$0xff]
        %v4633 = vld [vmem:[%s4628 + $0x20] sm:$0xff]
        %v4634 = vld [vmem:[%s4628 + $0x28] sm:$0xff]
        %v4635 = vld [vmem:[%s4628 + $0x30] sm:$0xff]
        %v4636 = vld [vmem:[%s4628 + $0x38] sm:$0xff]
        %v4638 = vsel %vm3426, %v4627, 0
        %4640 = vmatprep.subr.mxu0 0.0
        %4641 = vmatpush1.msra.mxu0 0.0
        %4642 = vmatprep.subr.mxu0 0.0
        %4643 = vmatpush1.msra.mxu0 0.0
        %4644 = vmatprep.subr.mxu0 0.0
        %4645 = vmatpush1.msra.mxu0 0.0
        %4646 = vmatprep.subr.mxu0 0.0
        %4647 = vmatpush1.msra.mxu0 0.0
        %4648 = vmatprep.subr.mxu0 0.0
        %4649 = vmatpush1.msra.mxu0 0.0
        %4650 = vmatprep.subr.mxu0 0.0
        %4651 = vmatpush1.msra.mxu0 0.0
        %4652 = vmatprep.subr.mxu0 0.0
        %4653 = vmatpush1.msra.mxu0 0.0
        %4654 = vmatprep.subr.mxu0 0.0
        %4655 = vmatpush1.msra.mxu0 0.0
        %4656 = vmatprep.subr.mxu0 0.0
        %4657 = vmatpush1.msra.mxu0 %v4636
        %4658 = vmatprep.subr.mxu0 0.0
        %4659 = vmatpush1.msra.mxu0 %v4635
        %4660 = vmatprep.subr.mxu0 0.0
        %4661 = vmatpush1.msra.mxu0 %v4634
        %4662 = vmatprep.subr.mxu0 0.0
        %4663 = vmatpush1.msra.mxu0 %v4633
        %4664 = vmatprep.subr.mxu0 0.0
        %4665 = vmatpush1.msra.mxu0 %v4632
        %4666 = vmatprep.subr.mxu0 0.0
        %4667 = vmatpush1.msra.mxu0 %v4631
        %4668 = vmatprep.subr.mxu0 0.0
        %4669 = vmatpush1.msra.mxu0 %v4630
        %4670 = vmatprep.subr.mxu0 0.0
        %4671 = vmatpush1.msra.mxu0 %v4629
        %4672 = vmatprep.subr.mxu0 0.0
        %4673 = vmatpush2.msra.mxu0 0.0
        %4674 = vmatprep.subr.mxu0 0.0
        %4675 = vmatpush2.msra.mxu0 0.0
        %4676 = vmatprep.subr.mxu0 0.0
        %4677 = vmatpush2.msra.mxu0 0.0
        %4678 = vmatprep.subr.mxu0 0.0
        %4679 = vmatpush2.msra.mxu0 0.0
        %4680 = vmatprep.subr.mxu0 0.0
        %4681 = vmatpush2.msra.mxu0 0.0
        %4682 = vmatprep.subr.mxu0 0.0
        %4683 = vmatpush2.msra.mxu0 0.0
        %4684 = vmatprep.subr.mxu0 0.0
        %4685 = vmatpush2.msra.mxu0 0.0
        %4686 = vmatprep.subr.mxu0 0.0
        %4687 = vmatpush2.msra.mxu0 0.0
        %4688 = vmatprep.subr.mxu0 0.0
        %4689 = vmatpush2.msra.mxu0 0.0
        %4690 = vmatprep.subr.mxu0 0.0
        %4691 = vmatpush2.msra.mxu0 0.0
        %4692 = vmatprep.subr.mxu0 0.0
        %4693 = vmatpush2.msra.mxu0 0.0
        %4694 = vmatprep.subr.mxu0 0.0
        %4695 = vmatpush2.msra.mxu0 0.0
        %4696 = vmatprep.subr.mxu0 0.0
        %4697 = vmatpush2.msra.mxu0 0.0
        %4698 = vmatprep.subr.mxu0 0.0
        %4699 = vmatpush2.msra.mxu0 0.0
        %4700 = vmatprep.subr.mxu0 0.0
        %4701 = vmatpush2.msra.mxu0 0.0
        %4702 = vmatprep.subr.mxu0 0.0
        %4703 = vmatpush2.msra.mxu0 0.0
        %4704 = vmatprep.mubr.f32.mxu0 0.0
        %4705 = vmatmul.mubr.f32.gmra.mxu0 %v4638
        %v4706 = vpop.f32.mrf.mxu0
        %v4707 = vadd.f32 0.0, %v4706
        %v4708 = vpop.f32.mrf.mxu0
        %4709 = vdwg.mxu0
        %v4710 = vadd.f32 %v4625, %v4707
        %v4711 = vld [vmem:[%s4626 + $0x1] sm:$0x1]
        %s4712 = scalar_lea.vmem %s16, 320
        %v4713 = vld [vmem:[%s4712] sm:$0xff]
        %v4714 = vld [vmem:[%s4712 + $0x8] sm:$0xff]
        %v4715 = vld [vmem:[%s4712 + $0x10] sm:$0xff]
        %v4716 = vld [vmem:[%s4712 + $0x18] sm:$0xff]
        %v4717 = vld [vmem:[%s4712 + $0x20] sm:$0xff]
        %v4718 = vld [vmem:[%s4712 + $0x28] sm:$0xff]
        %v4719 = vld [vmem:[%s4712 + $0x30] sm:$0xff]
        %v4720 = vld [vmem:[%s4712 + $0x38] sm:$0xff]
        %v4722 = vsel %vm3426, %v4711, 0
        %4724 = vmatprep.subr.mxu0 0.0
        %4725 = vmatpush1.msra.mxu0 0.0
        %4726 = vmatprep.subr.mxu0 0.0
        %4727 = vmatpush1.msra.mxu0 0.0
        %4728 = vmatprep.subr.mxu0 0.0
        %4729 = vmatpush1.msra.mxu0 0.0
        %4730 = vmatprep.subr.mxu0 0.0
        %4731 = vmatpush1.msra.mxu0 0.0
        %4732 = vmatprep.subr.mxu0 0.0
        %4733 = vmatpush1.msra.mxu0 0.0
        %4734 = vmatprep.subr.mxu0 0.0
        %4735 = vmatpush1.msra.mxu0 0.0
        %4736 = vmatprep.subr.mxu0 0.0
        %4737 = vmatpush1.msra.mxu0 0.0
        %4738 = vmatprep.subr.mxu0 0.0
        %4739 = vmatpush1.msra.mxu0 0.0
        %4740 = vmatprep.subr.mxu0 0.0
        %4741 = vmatpush1.msra.mxu0 %v4720
        %4742 = vmatprep.subr.mxu0 0.0
        %4743 = vmatpush1.msra.mxu0 %v4719
        %4744 = vmatprep.subr.mxu0 0.0
        %4745 = vmatpush1.msra.mxu0 %v4718
        %4746 = vmatprep.subr.mxu0 0.0
        %4747 = vmatpush1.msra.mxu0 %v4717
        %4748 = vmatprep.subr.mxu0 0.0
        %4749 = vmatpush1.msra.mxu0 %v4716
        %4750 = vmatprep.subr.mxu0 0.0
        %4751 = vmatpush1.msra.mxu0 %v4715
        %4752 = vmatprep.subr.mxu0 0.0
        %4753 = vmatpush1.msra.mxu0 %v4714
        %4754 = vmatprep.subr.mxu0 0.0
        %4755 = vmatpush1.msra.mxu0 %v4713
        %4756 = vmatprep.subr.mxu0 0.0
        %4757 = vmatpush2.msra.mxu0 0.0
        %4758 = vmatprep.subr.mxu0 0.0
        %4759 = vmatpush2.msra.mxu0 0.0
        %4760 = vmatprep.subr.mxu0 0.0
        %4761 = vmatpush2.msra.mxu0 0.0
        %4762 = vmatprep.subr.mxu0 0.0
        %4763 = vmatpush2.msra.mxu0 0.0
        %4764 = vmatprep.subr.mxu0 0.0
        %4765 = vmatpush2.msra.mxu0 0.0
        %4766 = vmatprep.subr.mxu0 0.0
        %4767 = vmatpush2.msra.mxu0 0.0
        %4768 = vmatprep.subr.mxu0 0.0
        %4769 = vmatpush2.msra.mxu0 0.0
        %4770 = vmatprep.subr.mxu0 0.0
        %4771 = vmatpush2.msra.mxu0 0.0
        %4772 = vmatprep.subr.mxu0 0.0
        %4773 = vmatpush2.msra.mxu0 0.0
        %4774 = vmatprep.subr.mxu0 0.0
        %4775 = vmatpush2.msra.mxu0 0.0
        %4776 = vmatprep.subr.mxu0 0.0
        %4777 = vmatpush2.msra.mxu0 0.0
        %4778 = vmatprep.subr.mxu0 0.0
        %4779 = vmatpush2.msra.mxu0 0.0
        %4780 = vmatprep.subr.mxu0 0.0
        %4781 = vmatpush2.msra.mxu0 0.0
        %4782 = vmatprep.subr.mxu0 0.0
        %4783 = vmatpush2.msra.mxu0 0.0
        %4784 = vmatprep.subr.mxu0 0.0
        %4785 = vmatpush2.msra.mxu0 0.0
        %4786 = vmatprep.subr.mxu0 0.0
        %4787 = vmatpush2.msra.mxu0 0.0
        %4788 = vmatprep.mubr.f32.mxu0 0.0
        %4789 = vmatmul.mubr.f32.gmra.mxu0 %v4722
        %v4790 = vpop.f32.mrf.mxu0
        %v4791 = vadd.f32 0.0, %v4790
        %v4792 = vpop.f32.mrf.mxu0
        %4793 = vdwg.mxu0
        %v4794 = vadd.f32 %v4710, %v4791
        %v4795 = vld [vmem:[%s4626 + $0x2] sm:$0x1]
        %s4796 = scalar_lea.vmem %s16, 384
        %v4797 = vld [vmem:[%s4796] sm:$0xff]
        %v4798 = vld [vmem:[%s4796 + $0x8] sm:$0xff]
        %v4799 = vld [vmem:[%s4796 + $0x10] sm:$0xff]
        %v4800 = vld [vmem:[%s4796 + $0x18] sm:$0xff]
        %v4801 = vld [vmem:[%s4796 + $0x20] sm:$0xff]
        %v4802 = vld [vmem:[%s4796 + $0x28] sm:$0xff]
        %v4803 = vld [vmem:[%s4796 + $0x30] sm:$0xff]
        %v4804 = vld [vmem:[%s4796 + $0x38] sm:$0xff]
        %v4806 = vsel %vm3426, %v4795, 0
        %4808 = vmatprep.subr.mxu0 0.0
        %4809 = vmatpush1.msra.mxu0 0.0
        %4810 = vmatprep.subr.mxu0 0.0
        %4811 = vmatpush1.msra.mxu0 0.0
        %4812 = vmatprep.subr.mxu0 0.0
        %4813 = vmatpush1.msra.mxu0 0.0
        %4814 = vmatprep.subr.mxu0 0.0
        %4815 = vmatpush1.msra.mxu0 0.0
        %4816 = vmatprep.subr.mxu0 0.0
        %4817 = vmatpush1.msra.mxu0 0.0
        %4818 = vmatprep.subr.mxu0 0.0
        %4819 = vmatpush1.msra.mxu0 0.0
        %4820 = vmatprep.subr.mxu0 0.0
        %4821 = vmatpush1.msra.mxu0 0.0
        %4822 = vmatprep.subr.mxu0 0.0
        %4823 = vmatpush1.msra.mxu0 0.0
        %4824 = vmatprep.subr.mxu0 0.0
        %4825 = vmatpush1.msra.mxu0 %v4804
        %4826 = vmatprep.subr.mxu0 0.0
        %4827 = vmatpush1.msra.mxu0 %v4803
        %4828 = vmatprep.subr.mxu0 0.0
        %4829 = vmatpush1.msra.mxu0 %v4802
        %4830 = vmatprep.subr.mxu0 0.0
        %4831 = vmatpush1.msra.mxu0 %v4801
        %4832 = vmatprep.subr.mxu0 0.0
        %4833 = vmatpush1.msra.mxu0 %v4800
        %4834 = vmatprep.subr.mxu0 0.0
        %4835 = vmatpush1.msra.mxu0 %v4799
        %4836 = vmatprep.subr.mxu0 0.0
        %4837 = vmatpush1.msra.mxu0 %v4798
        %4838 = vmatprep.subr.mxu0 0.0
        %4839 = vmatpush1.msra.mxu0 %v4797
        %4840 = vmatprep.subr.mxu0 0.0
        %4841 = vmatpush2.msra.mxu0 0.0
        %4842 = vmatprep.subr.mxu0 0.0
        %4843 = vmatpush2.msra.mxu0 0.0
        %4844 = vmatprep.subr.mxu0 0.0
        %4845 = vmatpush2.msra.mxu0 0.0
        %4846 = vmatprep.subr.mxu0 0.0
        %4847 = vmatpush2.msra.mxu0 0.0
        %4848 = vmatprep.subr.mxu0 0.0
        %4849 = vmatpush2.msra.mxu0 0.0
        %4850 = vmatprep.subr.mxu0 0.0
        %4851 = vmatpush2.msra.mxu0 0.0
        %4852 = vmatprep.subr.mxu0 0.0
        %4853 = vmatpush2.msra.mxu0 0.0
        %4854 = vmatprep.subr.mxu0 0.0
        %4855 = vmatpush2.msra.mxu0 0.0
        %4856 = vmatprep.subr.mxu0 0.0
        %4857 = vmatpush2.msra.mxu0 0.0
        %4858 = vmatprep.subr.mxu0 0.0
        %4859 = vmatpush2.msra.mxu0 0.0
        %4860 = vmatprep.subr.mxu0 0.0
        %4861 = vmatpush2.msra.mxu0 0.0
        %4862 = vmatprep.subr.mxu0 0.0
        %4863 = vmatpush2.msra.mxu0 0.0
        %4864 = vmatprep.subr.mxu0 0.0
        %4865 = vmatpush2.msra.mxu0 0.0
        %4866 = vmatprep.subr.mxu0 0.0
        %4867 = vmatpush2.msra.mxu0 0.0
        %4868 = vmatprep.subr.mxu0 0.0
        %4869 = vmatpush2.msra.mxu0 0.0
        %4870 = vmatprep.subr.mxu0 0.0
        %4871 = vmatpush2.msra.mxu0 0.0
        %4872 = vmatprep.mubr.f32.mxu0 0.0
        %4873 = vmatmul.mubr.f32.gmra.mxu0 %v4806
        %v4874 = vpop.f32.mrf.mxu0
        %v4875 = vadd.f32 0.0, %v4874
        %v4876 = vpop.f32.mrf.mxu0
        %4877 = vdwg.mxu0
        %v4878 = vadd.f32 %v4794, %v4875
        %v4879 = vld [vmem:[%s4626 + $0x3] sm:$0x1]
        %s4880 = scalar_lea.vmem %s16, 448
        %v4881 = vld [vmem:[%s4880] sm:$0xff]
        %v4882 = vld [vmem:[%s4880 + $0x8] sm:$0xff]
        %v4883 = vld [vmem:[%s4880 + $0x10] sm:$0xff]
        %v4884 = vld [vmem:[%s4880 + $0x18] sm:$0xff]
        %v4885 = vld [vmem:[%s4880 + $0x20] sm:$0xff]
        %v4886 = vld [vmem:[%s4880 + $0x28] sm:$0xff]
        %v4887 = vld [vmem:[%s4880 + $0x30] sm:$0xff]
        %v4888 = vld [vmem:[%s4880 + $0x38] sm:$0xff]
        %v4890 = vsel %vm3426, %v4879, 0
        %4892 = vmatprep.subr.mxu0 0.0
        %4893 = vmatpush1.msra.mxu0 0.0
        %4894 = vmatprep.subr.mxu0 0.0
        %4895 = vmatpush1.msra.mxu0 0.0
        %4896 = vmatprep.subr.mxu0 0.0
        %4897 = vmatpush1.msra.mxu0 0.0
        %4898 = vmatprep.subr.mxu0 0.0
        %4899 = vmatpush1.msra.mxu0 0.0
        %4900 = vmatprep.subr.mxu0 0.0
        %4901 = vmatpush1.msra.mxu0 0.0
        %4902 = vmatprep.subr.mxu0 0.0
        %4903 = vmatpush1.msra.mxu0 0.0
        %4904 = vmatprep.subr.mxu0 0.0
        %4905 = vmatpush1.msra.mxu0 0.0
        %4906 = vmatprep.subr.mxu0 0.0
        %4907 = vmatpush1.msra.mxu0 0.0
        %4908 = vmatprep.subr.mxu0 0.0
        %4909 = vmatpush1.msra.mxu0 %v4888
        %4910 = vmatprep.subr.mxu0 0.0
        %4911 = vmatpush1.msra.mxu0 %v4887
        %4912 = vmatprep.subr.mxu0 0.0
        %4913 = vmatpush1.msra.mxu0 %v4886
        %4914 = vmatprep.subr.mxu0 0.0
        %4915 = vmatpush1.msra.mxu0 %v4885
        %4916 = vmatprep.subr.mxu0 0.0
        %4917 = vmatpush1.msra.mxu0 %v4884
        %4918 = vmatprep.subr.mxu0 0.0
        %4919 = vmatpush1.msra.mxu0 %v4883
        %4920 = vmatprep.subr.mxu0 0.0
        %4921 = vmatpush1.msra.mxu0 %v4882
        %4922 = vmatprep.subr.mxu0 0.0
        %4923 = vmatpush1.msra.mxu0 %v4881
        %4924 = vmatprep.subr.mxu0 0.0
        %4925 = vmatpush2.msra.mxu0 0.0
        %4926 = vmatprep.subr.mxu0 0.0
        %4927 = vmatpush2.msra.mxu0 0.0
        %4928 = vmatprep.subr.mxu0 0.0
        %4929 = vmatpush2.msra.mxu0 0.0
        %4930 = vmatprep.subr.mxu0 0.0
        %4931 = vmatpush2.msra.mxu0 0.0
        %4932 = vmatprep.subr.mxu0 0.0
        %4933 = vmatpush2.msra.mxu0 0.0
        %4934 = vmatprep.subr.mxu0 0.0
        %4935 = vmatpush2.msra.mxu0 0.0
        %4936 = vmatprep.subr.mxu0 0.0
        %4937 = vmatpush2.msra.mxu0 0.0
        %4938 = vmatprep.subr.mxu0 0.0
        %4939 = vmatpush2.msra.mxu0 0.0
        %4940 = vmatprep.subr.mxu0 0.0
        %4941 = vmatpush2.msra.mxu0 0.0
        %4942 = vmatprep.subr.mxu0 0.0
        %4943 = vmatpush2.msra.mxu0 0.0
        %4944 = vmatprep.subr.mxu0 0.0
        %4945 = vmatpush2.msra.mxu0 0.0
        %4946 = vmatprep.subr.mxu0 0.0
        %4947 = vmatpush2.msra.mxu0 0.0
        %4948 = vmatprep.subr.mxu0 0.0
        %4949 = vmatpush2.msra.mxu0 0.0
        %4950 = vmatprep.subr.mxu0 0.0
        %4951 = vmatpush2.msra.mxu0 0.0
        %4952 = vmatprep.subr.mxu0 0.0
        %4953 = vmatpush2.msra.mxu0 0.0
        %4954 = vmatprep.subr.mxu0 0.0
        %4955 = vmatpush2.msra.mxu0 0.0
        %4956 = vmatprep.mubr.f32.mxu0 0.0
        %4957 = vmatmul.mubr.f32.gmra.mxu0 %v4890
        %v4958 = vpop.f32.mrf.mxu0
        %v4959 = vadd.f32 0.0, %v4958
        %v4960 = vpop.f32.mrf.mxu0
        %4961 = vdwg.mxu0
        %v4962 = vadd.f32 %v4878, %v4959
        %s4963 = scalar_lea.vmem [#allocation9], 8
        %v4964 = vld [vmem:[%s4963] sm:$0x1]
        %s4965 = scalar_lea.vmem %s16, 512
        %v4966 = vld [vmem:[%s4965] sm:$0xff]
        %v4967 = vld [vmem:[%s4965 + $0x8] sm:$0xff]
        %v4968 = vld [vmem:[%s4965 + $0x10] sm:$0xff]
        %v4969 = vld [vmem:[%s4965 + $0x18] sm:$0xff]
        %v4970 = vld [vmem:[%s4965 + $0x20] sm:$0xff]
        %v4971 = vld [vmem:[%s4965 + $0x28] sm:$0xff]
        %v4972 = vld [vmem:[%s4965 + $0x30] sm:$0xff]
        %v4973 = vld [vmem:[%s4965 + $0x38] sm:$0xff]
        %v4975 = vsel %vm3426, %v4964, 0
        %4977 = vmatprep.subr.mxu0 0.0
        %4978 = vmatpush1.msra.mxu0 0.0
        %4979 = vmatprep.subr.mxu0 0.0
        %4980 = vmatpush1.msra.mxu0 0.0
        %4981 = vmatprep.subr.mxu0 0.0
        %4982 = vmatpush1.msra.mxu0 0.0
        %4983 = vmatprep.subr.mxu0 0.0
        %4984 = vmatpush1.msra.mxu0 0.0
        %4985 = vmatprep.subr.mxu0 0.0
        %4986 = vmatpush1.msra.mxu0 0.0
        %4987 = vmatprep.subr.mxu0 0.0
        %4988 = vmatpush1.msra.mxu0 0.0
        %4989 = vmatprep.subr.mxu0 0.0
        %4990 = vmatpush1.msra.mxu0 0.0
        %4991 = vmatprep.subr.mxu0 0.0
        %4992 = vmatpush1.msra.mxu0 0.0
        %4993 = vmatprep.subr.mxu0 0.0
        %4994 = vmatpush1.msra.mxu0 %v4973
        %4995 = vmatprep.subr.mxu0 0.0
        %4996 = vmatpush1.msra.mxu0 %v4972
        %4997 = vmatprep.subr.mxu0 0.0
        %4998 = vmatpush1.msra.mxu0 %v4971
        %4999 = vmatprep.subr.mxu0 0.0
        %5000 = vmatpush1.msra.mxu0 %v4970
        %5001 = vmatprep.subr.mxu0 0.0
        %5002 = vmatpush1.msra.mxu0 %v4969
        %5003 = vmatprep.subr.mxu0 0.0
        %5004 = vmatpush1.msra.mxu0 %v4968
        %5005 = vmatprep.subr.mxu0 0.0
        %5006 = vmatpush1.msra.mxu0 %v4967
        %5007 = vmatprep.subr.mxu0 0.0
        %5008 = vmatpush1.msra.mxu0 %v4966
        %5009 = vmatprep.subr.mxu0 0.0
        %5010 = vmatpush2.msra.mxu0 0.0
        %5011 = vmatprep.subr.mxu0 0.0
        %5012 = vmatpush2.msra.mxu0 0.0
        %5013 = vmatprep.subr.mxu0 0.0
        %5014 = vmatpush2.msra.mxu0 0.0
        %5015 = vmatprep.subr.mxu0 0.0
        %5016 = vmatpush2.msra.mxu0 0.0
        %5017 = vmatprep.subr.mxu0 0.0
        %5018 = vmatpush2.msra.mxu0 0.0
        %5019 = vmatprep.subr.mxu0 0.0
        %5020 = vmatpush2.msra.mxu0 0.0
        %5021 = vmatprep.subr.mxu0 0.0
        %5022 = vmatpush2.msra.mxu0 0.0
        %5023 = vmatprep.subr.mxu0 0.0
        %5024 = vmatpush2.msra.mxu0 0.0
        %5025 = vmatprep.subr.mxu0 0.0
        %5026 = vmatpush2.msra.mxu0 0.0
        %5027 = vmatprep.subr.mxu0 0.0
        %5028 = vmatpush2.msra.mxu0 0.0
        %5029 = vmatprep.subr.mxu0 0.0
        %5030 = vmatpush2.msra.mxu0 0.0
        %5031 = vmatprep.subr.mxu0 0.0
        %5032 = vmatpush2.msra.mxu0 0.0
        %5033 = vmatprep.subr.mxu0 0.0
        %5034 = vmatpush2.msra.mxu0 0.0
        %5035 = vmatprep.subr.mxu0 0.0
        %5036 = vmatpush2.msra.mxu0 0.0
        %5037 = vmatprep.subr.mxu0 0.0
        %5038 = vmatpush2.msra.mxu0 0.0
        %5039 = vmatprep.subr.mxu0 0.0
        %5040 = vmatpush2.msra.mxu0 0.0
        %5041 = vmatprep.mubr.f32.mxu0 0.0
        %5042 = vmatmul.mubr.f32.gmra.mxu0 %v4975
        %v5043 = vpop.f32.mrf.mxu0
        %v5044 = vadd.f32 0.0, %v5043
        %v5045 = vpop.f32.mrf.mxu0
        %5046 = vdwg.mxu0
        %v5047 = vadd.f32 %v4962, %v5044
        %v5048 = vld [vmem:[%s4963 + $0x1] sm:$0x1]
        %s5049 = scalar_lea.vmem %s16, 576
        %v5050 = vld [vmem:[%s5049] sm:$0xff]
        %v5051 = vld [vmem:[%s5049 + $0x8] sm:$0xff]
        %v5052 = vld [vmem:[%s5049 + $0x10] sm:$0xff]
        %v5053 = vld [vmem:[%s5049 + $0x18] sm:$0xff]
        %v5054 = vld [vmem:[%s5049 + $0x20] sm:$0xff]
        %v5055 = vld [vmem:[%s5049 + $0x28] sm:$0xff]
        %v5056 = vld [vmem:[%s5049 + $0x30] sm:$0xff]
        %v5057 = vld [vmem:[%s5049 + $0x38] sm:$0xff]
        %v5059 = vsel %vm3426, %v5048, 0
        %5061 = vmatprep.subr.mxu0 0.0
        %5062 = vmatpush1.msra.mxu0 0.0
        %5063 = vmatprep.subr.mxu0 0.0
        %5064 = vmatpush1.msra.mxu0 0.0
        %5065 = vmatprep.subr.mxu0 0.0
        %5066 = vmatpush1.msra.mxu0 0.0
        %5067 = vmatprep.subr.mxu0 0.0
        %5068 = vmatpush1.msra.mxu0 0.0
        %5069 = vmatprep.subr.mxu0 0.0
        %5070 = vmatpush1.msra.mxu0 0.0
        %5071 = vmatprep.subr.mxu0 0.0
        %5072 = vmatpush1.msra.mxu0 0.0
        %5073 = vmatprep.subr.mxu0 0.0
        %5074 = vmatpush1.msra.mxu0 0.0
        %5075 = vmatprep.subr.mxu0 0.0
        %5076 = vmatpush1.msra.mxu0 0.0
        %5077 = vmatprep.subr.mxu0 0.0
        %5078 = vmatpush1.msra.mxu0 %v5057
        %5079 = vmatprep.subr.mxu0 0.0
        %5080 = vmatpush1.msra.mxu0 %v5056
        %5081 = vmatprep.subr.mxu0 0.0
        %5082 = vmatpush1.msra.mxu0 %v5055
        %5083 = vmatprep.subr.mxu0 0.0
        %5084 = vmatpush1.msra.mxu0 %v5054
        %5085 = vmatprep.subr.mxu0 0.0
        %5086 = vmatpush1.msra.mxu0 %v5053
        %5087 = vmatprep.subr.mxu0 0.0
        %5088 = vmatpush1.msra.mxu0 %v5052
        %5089 = vmatprep.subr.mxu0 0.0
        %5090 = vmatpush1.msra.mxu0 %v5051
        %5091 = vmatprep.subr.mxu0 0.0
        %5092 = vmatpush1.msra.mxu0 %v5050
        %5093 = vmatprep.subr.mxu0 0.0
        %5094 = vmatpush2.msra.mxu0 0.0
        %5095 = vmatprep.subr.mxu0 0.0
        %5096 = vmatpush2.msra.mxu0 0.0
        %5097 = vmatprep.subr.mxu0 0.0
        %5098 = vmatpush2.msra.mxu0 0.0
        %5099 = vmatprep.subr.mxu0 0.0
        %5100 = vmatpush2.msra.mxu0 0.0
        %5101 = vmatprep.subr.mxu0 0.0
        %5102 = vmatpush2.msra.mxu0 0.0
        %5103 = vmatprep.subr.mxu0 0.0
        %5104 = vmatpush2.msra.mxu0 0.0
        %5105 = vmatprep.subr.mxu0 0.0
        %5106 = vmatpush2.msra.mxu0 0.0
        %5107 = vmatprep.subr.mxu0 0.0
        %5108 = vmatpush2.msra.mxu0 0.0
        %5109 = vmatprep.subr.mxu0 0.0
        %5110 = vmatpush2.msra.mxu0 0.0
        %5111 = vmatprep.subr.mxu0 0.0
        %5112 = vmatpush2.msra.mxu0 0.0
        %5113 = vmatprep.subr.mxu0 0.0
        %5114 = vmatpush2.msra.mxu0 0.0
        %5115 = vmatprep.subr.mxu0 0.0
        %5116 = vmatpush2.msra.mxu0 0.0
        %5117 = vmatprep.subr.mxu0 0.0
        %5118 = vmatpush2.msra.mxu0 0.0
        %5119 = vmatprep.subr.mxu0 0.0
        %5120 = vmatpush2.msra.mxu0 0.0
        %5121 = vmatprep.subr.mxu0 0.0
        %5122 = vmatpush2.msra.mxu0 0.0
        %5123 = vmatprep.subr.mxu0 0.0
        %5124 = vmatpush2.msra.mxu0 0.0
        %5125 = vmatprep.mubr.f32.mxu0 0.0
        %5126 = vmatmul.mubr.f32.gmra.mxu0 %v5059
        %v5127 = vpop.f32.mrf.mxu0
        %v5128 = vadd.f32 0.0, %v5127
        %v5129 = vpop.f32.mrf.mxu0
        %5130 = vdwg.mxu0
        %v5131 = vadd.f32 %v5047, %v5128
        %v5132 = vld [vmem:[%s4963 + $0x2] sm:$0x1]
        %s5133 = scalar_lea.vmem %s16, 640
        %v5134 = vld [vmem:[%s5133] sm:$0xff]
        %v5135 = vld [vmem:[%s5133 + $0x8] sm:$0xff]
        %v5136 = vld [vmem:[%s5133 + $0x10] sm:$0xff]
        %v5137 = vld [vmem:[%s5133 + $0x18] sm:$0xff]
        %v5138 = vld [vmem:[%s5133 + $0x20] sm:$0xff]
        %v5139 = vld [vmem:[%s5133 + $0x28] sm:$0xff]
        %v5140 = vld [vmem:[%s5133 + $0x30] sm:$0xff]
        %v5141 = vld [vmem:[%s5133 + $0x38] sm:$0xff]
        %v5143 = vsel %vm3426, %v5132, 0
        %5145 = vmatprep.subr.mxu0 0.0
        %5146 = vmatpush1.msra.mxu0 0.0
        %5147 = vmatprep.subr.mxu0 0.0
        %5148 = vmatpush1.msra.mxu0 0.0
        %5149 = vmatprep.subr.mxu0 0.0
        %5150 = vmatpush1.msra.mxu0 0.0
        %5151 = vmatprep.subr.mxu0 0.0
        %5152 = vmatpush1.msra.mxu0 0.0
        %5153 = vmatprep.subr.mxu0 0.0
        %5154 = vmatpush1.msra.mxu0 0.0
        %5155 = vmatprep.subr.mxu0 0.0
        %5156 = vmatpush1.msra.mxu0 0.0
        %5157 = vmatprep.subr.mxu0 0.0
        %5158 = vmatpush1.msra.mxu0 0.0
        %5159 = vmatprep.subr.mxu0 0.0
        %5160 = vmatpush1.msra.mxu0 0.0
        %5161 = vmatprep.subr.mxu0 0.0
        %5162 = vmatpush1.msra.mxu0 %v5141
        %5163 = vmatprep.subr.mxu0 0.0
        %5164 = vmatpush1.msra.mxu0 %v5140
        %5165 = vmatprep.subr.mxu0 0.0
        %5166 = vmatpush1.msra.mxu0 %v5139
        %5167 = vmatprep.subr.mxu0 0.0
        %5168 = vmatpush1.msra.mxu0 %v5138
        %5169 = vmatprep.subr.mxu0 0.0
        %5170 = vmatpush1.msra.mxu0 %v5137
        %5171 = vmatprep.subr.mxu0 0.0
        %5172 = vmatpush1.msra.mxu0 %v5136
        %5173 = vmatprep.subr.mxu0 0.0
        %5174 = vmatpush1.msra.mxu0 %v5135
        %5175 = vmatprep.subr.mxu0 0.0
        %5176 = vmatpush1.msra.mxu0 %v5134
        %5177 = vmatprep.subr.mxu0 0.0
        %5178 = vmatpush2.msra.mxu0 0.0
        %5179 = vmatprep.subr.mxu0 0.0
        %5180 = vmatpush2.msra.mxu0 0.0
        %5181 = vmatprep.subr.mxu0 0.0
        %5182 = vmatpush2.msra.mxu0 0.0
        %5183 = vmatprep.subr.mxu0 0.0
        %5184 = vmatpush2.msra.mxu0 0.0
        %5185 = vmatprep.subr.mxu0 0.0
        %5186 = vmatpush2.msra.mxu0 0.0
        %5187 = vmatprep.subr.mxu0 0.0
        %5188 = vmatpush2.msra.mxu0 0.0
        %5189 = vmatprep.subr.mxu0 0.0
        %5190 = vmatpush2.msra.mxu0 0.0
        %5191 = vmatprep.subr.mxu0 0.0
        %5192 = vmatpush2.msra.mxu0 0.0
        %5193 = vmatprep.subr.mxu0 0.0
        %5194 = vmatpush2.msra.mxu0 0.0
        %5195 = vmatprep.subr.mxu0 0.0
        %5196 = vmatpush2.msra.mxu0 0.0
        %5197 = vmatprep.subr.mxu0 0.0
        %5198 = vmatpush2.msra.mxu0 0.0
        %5199 = vmatprep.subr.mxu0 0.0
        %5200 = vmatpush2.msra.mxu0 0.0
        %5201 = vmatprep.subr.mxu0 0.0
        %5202 = vmatpush2.msra.mxu0 0.0
        %5203 = vmatprep.subr.mxu0 0.0
        %5204 = vmatpush2.msra.mxu0 0.0
        %5205 = vmatprep.subr.mxu0 0.0
        %5206 = vmatpush2.msra.mxu0 0.0
        %5207 = vmatprep.subr.mxu0 0.0
        %5208 = vmatpush2.msra.mxu0 0.0
        %5209 = vmatprep.mubr.f32.mxu0 0.0
        %5210 = vmatmul.mubr.f32.gmra.mxu0 %v5143
        %v5211 = vpop.f32.mrf.mxu0
        %v5212 = vadd.f32 0.0, %v5211
        %v5213 = vpop.f32.mrf.mxu0
        %5214 = vdwg.mxu0
        %v5215 = vadd.f32 %v5131, %v5212
        %v5216 = vld [vmem:[%s4963 + $0x3] sm:$0x1]
        %s5217 = scalar_lea.vmem %s16, 704
        %v5218 = vld [vmem:[%s5217] sm:$0xff]
        %v5219 = vld [vmem:[%s5217 + $0x8] sm:$0xff]
        %v5220 = vld [vmem:[%s5217 + $0x10] sm:$0xff]
        %v5221 = vld [vmem:[%s5217 + $0x18] sm:$0xff]
        %v5222 = vld [vmem:[%s5217 + $0x20] sm:$0xff]
        %v5223 = vld [vmem:[%s5217 + $0x28] sm:$0xff]
        %v5224 = vld [vmem:[%s5217 + $0x30] sm:$0xff]
        %v5225 = vld [vmem:[%s5217 + $0x38] sm:$0xff]
        %v5227 = vsel %vm3426, %v5216, 0
        %5229 = vmatprep.subr.mxu0 0.0
        %5230 = vmatpush1.msra.mxu0 0.0
        %5231 = vmatprep.subr.mxu0 0.0
        %5232 = vmatpush1.msra.mxu0 0.0
        %5233 = vmatprep.subr.mxu0 0.0
        %5234 = vmatpush1.msra.mxu0 0.0
        %5235 = vmatprep.subr.mxu0 0.0
        %5236 = vmatpush1.msra.mxu0 0.0
        %5237 = vmatprep.subr.mxu0 0.0
        %5238 = vmatpush1.msra.mxu0 0.0
        %5239 = vmatprep.subr.mxu0 0.0
        %5240 = vmatpush1.msra.mxu0 0.0
        %5241 = vmatprep.subr.mxu0 0.0
        %5242 = vmatpush1.msra.mxu0 0.0
        %5243 = vmatprep.subr.mxu0 0.0
        %5244 = vmatpush1.msra.mxu0 0.0
        %5245 = vmatprep.subr.mxu0 0.0
        %5246 = vmatpush1.msra.mxu0 %v5225
        %5247 = vmatprep.subr.mxu0 0.0
        %5248 = vmatpush1.msra.mxu0 %v5224
        %5249 = vmatprep.subr.mxu0 0.0
        %5250 = vmatpush1.msra.mxu0 %v5223
        %5251 = vmatprep.subr.mxu0 0.0
        %5252 = vmatpush1.msra.mxu0 %v5222
        %5253 = vmatprep.subr.mxu0 0.0
        %5254 = vmatpush1.msra.mxu0 %v5221
        %5255 = vmatprep.subr.mxu0 0.0
        %5256 = vmatpush1.msra.mxu0 %v5220
        %5257 = vmatprep.subr.mxu0 0.0
        %5258 = vmatpush1.msra.mxu0 %v5219
        %5259 = vmatprep.subr.mxu0 0.0
        %5260 = vmatpush1.msra.mxu0 %v5218
        %5261 = vmatprep.subr.mxu0 0.0
        %5262 = vmatpush2.msra.mxu0 0.0
        %5263 = vmatprep.subr.mxu0 0.0
        %5264 = vmatpush2.msra.mxu0 0.0
        %5265 = vmatprep.subr.mxu0 0.0
        %5266 = vmatpush2.msra.mxu0 0.0
        %5267 = vmatprep.subr.mxu0 0.0
        %5268 = vmatpush2.msra.mxu0 0.0
        %5269 = vmatprep.subr.mxu0 0.0
        %5270 = vmatpush2.msra.mxu0 0.0
        %5271 = vmatprep.subr.mxu0 0.0
        %5272 = vmatpush2.msra.mxu0 0.0
        %5273 = vmatprep.subr.mxu0 0.0
        %5274 = vmatpush2.msra.mxu0 0.0
        %5275 = vmatprep.subr.mxu0 0.0
        %5276 = vmatpush2.msra.mxu0 0.0
        %5277 = vmatprep.subr.mxu0 0.0
        %5278 = vmatpush2.msra.mxu0 0.0
        %5279 = vmatprep.subr.mxu0 0.0
        %5280 = vmatpush2.msra.mxu0 0.0
        %5281 = vmatprep.subr.mxu0 0.0
        %5282 = vmatpush2.msra.mxu0 0.0
        %5283 = vmatprep.subr.mxu0 0.0
        %5284 = vmatpush2.msra.mxu0 0.0
        %5285 = vmatprep.subr.mxu0 0.0
        %5286 = vmatpush2.msra.mxu0 0.0
        %5287 = vmatprep.subr.mxu0 0.0
        %5288 = vmatpush2.msra.mxu0 0.0
        %5289 = vmatprep.subr.mxu0 0.0
        %5290 = vmatpush2.msra.mxu0 0.0
        %5291 = vmatprep.subr.mxu0 0.0
        %5292 = vmatpush2.msra.mxu0 0.0
        %5293 = vmatprep.mubr.f32.mxu0 0.0
        %5294 = vmatmul.mubr.f32.gmra.mxu0 %v5227
        %v5295 = vpop.f32.mrf.mxu0
        %v5296 = vadd.f32 0.0, %v5295
        %v5297 = vpop.f32.mrf.mxu0
        %5298 = vdwg.mxu0
        %v5299 = vadd.f32 %v5215, %v5296
        %s5300 = scalar_lea.vmem [#allocation9], 12
        %v5301 = vld [vmem:[%s5300] sm:$0x1]
        %s5302 = scalar_lea.vmem %s16, 768
        %v5303 = vld [vmem:[%s5302] sm:$0xff]
        %v5304 = vld [vmem:[%s5302 + $0x8] sm:$0xff]
        %v5305 = vld [vmem:[%s5302 + $0x10] sm:$0xff]
        %v5306 = vld [vmem:[%s5302 + $0x18] sm:$0xff]
        %v5307 = vld [vmem:[%s5302 + $0x20] sm:$0xff]
        %v5308 = vld [vmem:[%s5302 + $0x28] sm:$0xff]
        %v5309 = vld [vmem:[%s5302 + $0x30] sm:$0xff]
        %v5310 = vld [vmem:[%s5302 + $0x38] sm:$0xff]
        %v5312 = vsel %vm3426, %v5301, 0
        %5314 = vmatprep.subr.mxu0 0.0
        %5315 = vmatpush1.msra.mxu0 0.0
        %5316 = vmatprep.subr.mxu0 0.0
        %5317 = vmatpush1.msra.mxu0 0.0
        %5318 = vmatprep.subr.mxu0 0.0
        %5319 = vmatpush1.msra.mxu0 0.0
        %5320 = vmatprep.subr.mxu0 0.0
        %5321 = vmatpush1.msra.mxu0 0.0
        %5322 = vmatprep.subr.mxu0 0.0
        %5323 = vmatpush1.msra.mxu0 0.0
        %5324 = vmatprep.subr.mxu0 0.0
        %5325 = vmatpush1.msra.mxu0 0.0
        %5326 = vmatprep.subr.mxu0 0.0
        %5327 = vmatpush1.msra.mxu0 0.0
        %5328 = vmatprep.subr.mxu0 0.0
        %5329 = vmatpush1.msra.mxu0 0.0
        %5330 = vmatprep.subr.mxu0 0.0
        %5331 = vmatpush1.msra.mxu0 %v5310
        %5332 = vmatprep.subr.mxu0 0.0
        %5333 = vmatpush1.msra.mxu0 %v5309
        %5334 = vmatprep.subr.mxu0 0.0
        %5335 = vmatpush1.msra.mxu0 %v5308
        %5336 = vmatprep.subr.mxu0 0.0
        %5337 = vmatpush1.msra.mxu0 %v5307
        %5338 = vmatprep.subr.mxu0 0.0
        %5339 = vmatpush1.msra.mxu0 %v5306
        %5340 = vmatprep.subr.mxu0 0.0
        %5341 = vmatpush1.msra.mxu0 %v5305
        %5342 = vmatprep.subr.mxu0 0.0
        %5343 = vmatpush1.msra.mxu0 %v5304
        %5344 = vmatprep.subr.mxu0 0.0
        %5345 = vmatpush1.msra.mxu0 %v5303
        %5346 = vmatprep.subr.mxu0 0.0
        %5347 = vmatpush2.msra.mxu0 0.0
        %5348 = vmatprep.subr.mxu0 0.0
        %5349 = vmatpush2.msra.mxu0 0.0
        %5350 = vmatprep.subr.mxu0 0.0
        %5351 = vmatpush2.msra.mxu0 0.0
        %5352 = vmatprep.subr.mxu0 0.0
        %5353 = vmatpush2.msra.mxu0 0.0
        %5354 = vmatprep.subr.mxu0 0.0
        %5355 = vmatpush2.msra.mxu0 0.0
        %5356 = vmatprep.subr.mxu0 0.0
        %5357 = vmatpush2.msra.mxu0 0.0
        %5358 = vmatprep.subr.mxu0 0.0
        %5359 = vmatpush2.msra.mxu0 0.0
        %5360 = vmatprep.subr.mxu0 0.0
        %5361 = vmatpush2.msra.mxu0 0.0
        %5362 = vmatprep.subr.mxu0 0.0
        %5363 = vmatpush2.msra.mxu0 0.0
        %5364 = vmatprep.subr.mxu0 0.0
        %5365 = vmatpush2.msra.mxu0 0.0
        %5366 = vmatprep.subr.mxu0 0.0
        %5367 = vmatpush2.msra.mxu0 0.0
        %5368 = vmatprep.subr.mxu0 0.0
        %5369 = vmatpush2.msra.mxu0 0.0
        %5370 = vmatprep.subr.mxu0 0.0
        %5371 = vmatpush2.msra.mxu0 0.0
        %5372 = vmatprep.subr.mxu0 0.0
        %5373 = vmatpush2.msra.mxu0 0.0
        %5374 = vmatprep.subr.mxu0 0.0
        %5375 = vmatpush2.msra.mxu0 0.0
        %5376 = vmatprep.subr.mxu0 0.0
        %5377 = vmatpush2.msra.mxu0 0.0
        %5378 = vmatprep.mubr.f32.mxu0 0.0
        %5379 = vmatmul.mubr.f32.gmra.mxu0 %v5312
        %v5380 = vpop.f32.mrf.mxu0
        %v5381 = vadd.f32 0.0, %v5380
        %v5382 = vpop.f32.mrf.mxu0
        %5383 = vdwg.mxu0
        %v5384 = vadd.f32 %v5299, %v5381
        %v5385 = vld [vmem:[%s5300 + $0x1] sm:$0x1]
        %s5386 = scalar_lea.vmem %s16, 832
        %v5387 = vld [vmem:[%s5386] sm:$0xff]
        %v5388 = vld [vmem:[%s5386 + $0x8] sm:$0xff]
        %v5389 = vld [vmem:[%s5386 + $0x10] sm:$0xff]
        %v5390 = vld [vmem:[%s5386 + $0x18] sm:$0xff]
        %v5391 = vld [vmem:[%s5386 + $0x20] sm:$0xff]
        %v5392 = vld [vmem:[%s5386 + $0x28] sm:$0xff]
        %v5393 = vld [vmem:[%s5386 + $0x30] sm:$0xff]
        %v5394 = vld [vmem:[%s5386 + $0x38] sm:$0xff]
        %v5396 = vsel %vm3426, %v5385, 0
        %5398 = vmatprep.subr.mxu0 0.0
        %5399 = vmatpush1.msra.mxu0 0.0
        %5400 = vmatprep.subr.mxu0 0.0
        %5401 = vmatpush1.msra.mxu0 0.0
        %5402 = vmatprep.subr.mxu0 0.0
        %5403 = vmatpush1.msra.mxu0 0.0
        %5404 = vmatprep.subr.mxu0 0.0
        %5405 = vmatpush1.msra.mxu0 0.0
        %5406 = vmatprep.subr.mxu0 0.0
        %5407 = vmatpush1.msra.mxu0 0.0
        %5408 = vmatprep.subr.mxu0 0.0
        %5409 = vmatpush1.msra.mxu0 0.0
        %5410 = vmatprep.subr.mxu0 0.0
        %5411 = vmatpush1.msra.mxu0 0.0
        %5412 = vmatprep.subr.mxu0 0.0
        %5413 = vmatpush1.msra.mxu0 0.0
        %5414 = vmatprep.subr.mxu0 0.0
        %5415 = vmatpush1.msra.mxu0 %v5394
        %5416 = vmatprep.subr.mxu0 0.0
        %5417 = vmatpush1.msra.mxu0 %v5393
        %5418 = vmatprep.subr.mxu0 0.0
        %5419 = vmatpush1.msra.mxu0 %v5392
        %5420 = vmatprep.subr.mxu0 0.0
        %5421 = vmatpush1.msra.mxu0 %v5391
        %5422 = vmatprep.subr.mxu0 0.0
        %5423 = vmatpush1.msra.mxu0 %v5390
        %5424 = vmatprep.subr.mxu0 0.0
        %5425 = vmatpush1.msra.mxu0 %v5389
        %5426 = vmatprep.subr.mxu0 0.0
        %5427 = vmatpush1.msra.mxu0 %v5388
        %5428 = vmatprep.subr.mxu0 0.0
        %5429 = vmatpush1.msra.mxu0 %v5387
        %5430 = vmatprep.subr.mxu0 0.0
        %5431 = vmatpush2.msra.mxu0 0.0
        %5432 = vmatprep.subr.mxu0 0.0
        %5433 = vmatpush2.msra.mxu0 0.0
        %5434 = vmatprep.subr.mxu0 0.0
        %5435 = vmatpush2.msra.mxu0 0.0
        %5436 = vmatprep.subr.mxu0 0.0
        %5437 = vmatpush2.msra.mxu0 0.0
        %5438 = vmatprep.subr.mxu0 0.0
        %5439 = vmatpush2.msra.mxu0 0.0
        %5440 = vmatprep.subr.mxu0 0.0
        %5441 = vmatpush2.msra.mxu0 0.0
        %5442 = vmatprep.subr.mxu0 0.0
        %5443 = vmatpush2.msra.mxu0 0.0
        %5444 = vmatprep.subr.mxu0 0.0
        %5445 = vmatpush2.msra.mxu0 0.0
        %5446 = vmatprep.subr.mxu0 0.0
        %5447 = vmatpush2.msra.mxu0 0.0
        %5448 = vmatprep.subr.mxu0 0.0
        %5449 = vmatpush2.msra.mxu0 0.0
        %5450 = vmatprep.subr.mxu0 0.0
        %5451 = vmatpush2.msra.mxu0 0.0
        %5452 = vmatprep.subr.mxu0 0.0
        %5453 = vmatpush2.msra.mxu0 0.0
        %5454 = vmatprep.subr.mxu0 0.0
        %5455 = vmatpush2.msra.mxu0 0.0
        %5456 = vmatprep.subr.mxu0 0.0
        %5457 = vmatpush2.msra.mxu0 0.0
        %5458 = vmatprep.subr.mxu0 0.0
        %5459 = vmatpush2.msra.mxu0 0.0
        %5460 = vmatprep.subr.mxu0 0.0
        %5461 = vmatpush2.msra.mxu0 0.0
        %5462 = vmatprep.mubr.f32.mxu0 0.0
        %5463 = vmatmul.mubr.f32.gmra.mxu0 %v5396
        %v5464 = vpop.f32.mrf.mxu0
        %v5465 = vadd.f32 0.0, %v5464
        %v5466 = vpop.f32.mrf.mxu0
        %5467 = vdwg.mxu0
        %v5468 = vadd.f32 %v5384, %v5465
        %v5469 = vld [vmem:[%s5300 + $0x2] sm:$0x1]
        %s5470 = scalar_lea.vmem %s16, 896
        %v5471 = vld [vmem:[%s5470] sm:$0xff]
        %v5472 = vld [vmem:[%s5470 + $0x8] sm:$0xff]
        %v5473 = vld [vmem:[%s5470 + $0x10] sm:$0xff]
        %v5474 = vld [vmem:[%s5470 + $0x18] sm:$0xff]
        %v5475 = vld [vmem:[%s5470 + $0x20] sm:$0xff]
        %v5476 = vld [vmem:[%s5470 + $0x28] sm:$0xff]
        %v5477 = vld [vmem:[%s5470 + $0x30] sm:$0xff]
        %v5478 = vld [vmem:[%s5470 + $0x38] sm:$0xff]
        %v5480 = vsel %vm3426, %v5469, 0
        %5482 = vmatprep.subr.mxu0 0.0
        %5483 = vmatpush1.msra.mxu0 0.0
        %5484 = vmatprep.subr.mxu0 0.0
        %5485 = vmatpush1.msra.mxu0 0.0
        %5486 = vmatprep.subr.mxu0 0.0
        %5487 = vmatpush1.msra.mxu0 0.0
        %5488 = vmatprep.subr.mxu0 0.0
        %5489 = vmatpush1.msra.mxu0 0.0
        %5490 = vmatprep.subr.mxu0 0.0
        %5491 = vmatpush1.msra.mxu0 0.0
        %5492 = vmatprep.subr.mxu0 0.0
        %5493 = vmatpush1.msra.mxu0 0.0
        %5494 = vmatprep.subr.mxu0 0.0
        %5495 = vmatpush1.msra.mxu0 0.0
        %5496 = vmatprep.subr.mxu0 0.0
        %5497 = vmatpush1.msra.mxu0 0.0
        %5498 = vmatprep.subr.mxu0 0.0
        %5499 = vmatpush1.msra.mxu0 %v5478
        %5500 = vmatprep.subr.mxu0 0.0
        %5501 = vmatpush1.msra.mxu0 %v5477
        %5502 = vmatprep.subr.mxu0 0.0
        %5503 = vmatpush1.msra.mxu0 %v5476
        %5504 = vmatprep.subr.mxu0 0.0
        %5505 = vmatpush1.msra.mxu0 %v5475
        %5506 = vmatprep.subr.mxu0 0.0
        %5507 = vmatpush1.msra.mxu0 %v5474
        %5508 = vmatprep.subr.mxu0 0.0
        %5509 = vmatpush1.msra.mxu0 %v5473
        %5510 = vmatprep.subr.mxu0 0.0
        %5511 = vmatpush1.msra.mxu0 %v5472
        %5512 = vmatprep.subr.mxu0 0.0
        %5513 = vmatpush1.msra.mxu0 %v5471
        %5514 = vmatprep.subr.mxu0 0.0
        %5515 = vmatpush2.msra.mxu0 0.0
        %5516 = vmatprep.subr.mxu0 0.0
        %5517 = vmatpush2.msra.mxu0 0.0
        %5518 = vmatprep.subr.mxu0 0.0
        %5519 = vmatpush2.msra.mxu0 0.0
        %5520 = vmatprep.subr.mxu0 0.0
        %5521 = vmatpush2.msra.mxu0 0.0
        %5522 = vmatprep.subr.mxu0 0.0
        %5523 = vmatpush2.msra.mxu0 0.0
        %5524 = vmatprep.subr.mxu0 0.0
        %5525 = vmatpush2.msra.mxu0 0.0
        %5526 = vmatprep.subr.mxu0 0.0
        %5527 = vmatpush2.msra.mxu0 0.0
        %5528 = vmatprep.subr.mxu0 0.0
        %5529 = vmatpush2.msra.mxu0 0.0
        %5530 = vmatprep.subr.mxu0 0.0
        %5531 = vmatpush2.msra.mxu0 0.0
        %5532 = vmatprep.subr.mxu0 0.0
        %5533 = vmatpush2.msra.mxu0 0.0
        %5534 = vmatprep.subr.mxu0 0.0
        %5535 = vmatpush2.msra.mxu0 0.0
        %5536 = vmatprep.subr.mxu0 0.0
        %5537 = vmatpush2.msra.mxu0 0.0
        %5538 = vmatprep.subr.mxu0 0.0
        %5539 = vmatpush2.msra.mxu0 0.0
        %5540 = vmatprep.subr.mxu0 0.0
        %5541 = vmatpush2.msra.mxu0 0.0
        %5542 = vmatprep.subr.mxu0 0.0
        %5543 = vmatpush2.msra.mxu0 0.0
        %5544 = vmatprep.subr.mxu0 0.0
        %5545 = vmatpush2.msra.mxu0 0.0
        %5546 = vmatprep.mubr.f32.mxu0 0.0
        %5547 = vmatmul.mubr.f32.gmra.mxu0 %v5480
        %v5548 = vpop.f32.mrf.mxu0
        %v5549 = vadd.f32 0.0, %v5548
        %v5550 = vpop.f32.mrf.mxu0
        %5551 = vdwg.mxu0
        %v5552 = vadd.f32 %v5468, %v5549
        %v5553 = vld [vmem:[%s5300 + $0x3] sm:$0x1]
        %s5554 = scalar_lea.vmem %s16, 960
        %v5555 = vld [vmem:[%s5554] sm:$0xff]
        %v5556 = vld [vmem:[%s5554 + $0x8] sm:$0xff]
        %v5557 = vld [vmem:[%s5554 + $0x10] sm:$0xff]
        %v5558 = vld [vmem:[%s5554 + $0x18] sm:$0xff]
        %v5559 = vld [vmem:[%s5554 + $0x20] sm:$0xff]
        %v5560 = vld [vmem:[%s5554 + $0x28] sm:$0xff]
        %v5561 = vld [vmem:[%s5554 + $0x30] sm:$0xff]
        %v5562 = vld [vmem:[%s5554 + $0x38] sm:$0xff]
        %v5564 = vsel %vm3426, %v5553, 0
        %5566 = vmatprep.subr.mxu0 0.0
        %5567 = vmatpush1.msra.mxu0 0.0
        %5568 = vmatprep.subr.mxu0 0.0
        %5569 = vmatpush1.msra.mxu0 0.0
        %5570 = vmatprep.subr.mxu0 0.0
        %5571 = vmatpush1.msra.mxu0 0.0
        %5572 = vmatprep.subr.mxu0 0.0
        %5573 = vmatpush1.msra.mxu0 0.0
        %5574 = vmatprep.subr.mxu0 0.0
        %5575 = vmatpush1.msra.mxu0 0.0
        %5576 = vmatprep.subr.mxu0 0.0
        %5577 = vmatpush1.msra.mxu0 0.0
        %5578 = vmatprep.subr.mxu0 0.0
        %5579 = vmatpush1.msra.mxu0 0.0
        %5580 = vmatprep.subr.mxu0 0.0
        %5581 = vmatpush1.msra.mxu0 0.0
        %5582 = vmatprep.subr.mxu0 0.0
        %5583 = vmatpush1.msra.mxu0 %v5562
        %5584 = vmatprep.subr.mxu0 0.0
        %5585 = vmatpush1.msra.mxu0 %v5561
        %5586 = vmatprep.subr.mxu0 0.0
        %5587 = vmatpush1.msra.mxu0 %v5560
        %5588 = vmatprep.subr.mxu0 0.0
        %5589 = vmatpush1.msra.mxu0 %v5559
        %5590 = vmatprep.subr.mxu0 0.0
        %5591 = vmatpush1.msra.mxu0 %v5558
        %5592 = vmatprep.subr.mxu0 0.0
        %5593 = vmatpush1.msra.mxu0 %v5557
        %5594 = vmatprep.subr.mxu0 0.0
        %5595 = vmatpush1.msra.mxu0 %v5556
        %5596 = vmatprep.subr.mxu0 0.0
        %5597 = vmatpush1.msra.mxu0 %v5555
        %5598 = vmatprep.subr.mxu0 0.0
        %5599 = vmatpush2.msra.mxu0 0.0
        %5600 = vmatprep.subr.mxu0 0.0
        %5601 = vmatpush2.msra.mxu0 0.0
        %5602 = vmatprep.subr.mxu0 0.0
        %5603 = vmatpush2.msra.mxu0 0.0
        %5604 = vmatprep.subr.mxu0 0.0
        %5605 = vmatpush2.msra.mxu0 0.0
        %5606 = vmatprep.subr.mxu0 0.0
        %5607 = vmatpush2.msra.mxu0 0.0
        %5608 = vmatprep.subr.mxu0 0.0
        %5609 = vmatpush2.msra.mxu0 0.0
        %5610 = vmatprep.subr.mxu0 0.0
        %5611 = vmatpush2.msra.mxu0 0.0
        %5612 = vmatprep.subr.mxu0 0.0
        %5613 = vmatpush2.msra.mxu0 0.0
        %5614 = vmatprep.subr.mxu0 0.0
        %5615 = vmatpush2.msra.mxu0 0.0
        %5616 = vmatprep.subr.mxu0 0.0
        %5617 = vmatpush2.msra.mxu0 0.0
        %5618 = vmatprep.subr.mxu0 0.0
        %5619 = vmatpush2.msra.mxu0 0.0
        %5620 = vmatprep.subr.mxu0 0.0
        %5621 = vmatpush2.msra.mxu0 0.0
        %5622 = vmatprep.subr.mxu0 0.0
        %5623 = vmatpush2.msra.mxu0 0.0
        %5624 = vmatprep.subr.mxu0 0.0
        %5625 = vmatpush2.msra.mxu0 0.0
        %5626 = vmatprep.subr.mxu0 0.0
        %5627 = vmatpush2.msra.mxu0 0.0
        %5628 = vmatprep.subr.mxu0 0.0
        %5629 = vmatpush2.msra.mxu0 0.0
        %5630 = vmatprep.mubr.f32.mxu0 0.0
        %5631 = vmatmul.mubr.f32.gmra.mxu0 %v5564
        %v5632 = vpop.f32.mrf.mxu0
        %v5633 = vadd.f32 0.0, %v5632
        %v5634 = vpop.f32.mrf.mxu0
        %5635 = vdwg.mxu0
        %v5636 = vadd.f32 %v5552, %v5633
        %v5637 = vmax.f32 %v5636, 0.0
        %v5638 = vld [vmem:[%s18] sm:$0xff]
        %v5639 = vld [vmem:[%s18 + $0x8] sm:$0xff]
        %v5640 = vld [vmem:[%s18 + $0x10] sm:$0xff]
        %v5641 = vld [vmem:[%s18 + $0x18] sm:$0xff]
        %v5642 = vld [vmem:[%s18 + $0x20] sm:$0xff]
        %v5643 = vld [vmem:[%s18 + $0x28] sm:$0xff]
        %v5644 = vld [vmem:[%s18 + $0x30] sm:$0xff]
        %v5645 = vld [vmem:[%s18 + $0x38] sm:$0xff]
        %v5646 = vld [vmem:[%s18 + $0x40] sm:$0xff]
        %v5647 = vld [vmem:[%s18 + $0x48] sm:$0xff]
        %v5648 = vld [vmem:[%s18 + $0x50] sm:$0xff]
        %v5649 = vld [vmem:[%s18 + $0x58] sm:$0xff]
        %v5650 = vld [vmem:[%s18 + $0x60] sm:$0xff]
        %v5651 = vld [vmem:[%s18 + $0x68] sm:$0xff]
        %v5652 = vld [vmem:[%s18 + $0x70] sm:$0xff]
        %v5653 = vld [vmem:[%s18 + $0x78] sm:$0xff]
        %v5654 = vld [vmem:[%s19] sm:$0x1]
        %5655 = vmatprep.subr.mxu0 0.0
        %5656 = vmatpush1.msra.mxu0 %v5653
        %5657 = vmatprep.subr.mxu0 0.0
        %5658 = vmatpush1.msra.mxu0 %v5652
        %5659 = vmatprep.subr.mxu0 0.0
        %5660 = vmatpush1.msra.mxu0 %v5651
        %5661 = vmatprep.subr.mxu0 0.0
        %5662 = vmatpush1.msra.mxu0 %v5650
        %5663 = vmatprep.subr.mxu0 0.0
        %5664 = vmatpush1.msra.mxu0 %v5649
        %5665 = vmatprep.subr.mxu0 0.0
        %5666 = vmatpush1.msra.mxu0 %v5648
        %5667 = vmatprep.subr.mxu0 0.0
        %5668 = vmatpush1.msra.mxu0 %v5647
        %5669 = vmatprep.subr.mxu0 0.0
        %5670 = vmatpush1.msra.mxu0 %v5646
        %5671 = vmatprep.subr.mxu0 0.0
        %5672 = vmatpush1.msra.mxu0 %v5645
        %5673 = vmatprep.subr.mxu0 0.0
        %5674 = vmatpush1.msra.mxu0 %v5644
        %5675 = vmatprep.subr.mxu0 0.0
        %5676 = vmatpush1.msra.mxu0 %v5643
        %5677 = vmatprep.subr.mxu0 0.0
        %5678 = vmatpush1.msra.mxu0 %v5642
        %5679 = vmatprep.subr.mxu0 0.0
        %5680 = vmatpush1.msra.mxu0 %v5641
        %5681 = vmatprep.subr.mxu0 0.0
        %5682 = vmatpush1.msra.mxu0 %v5640
        %5683 = vmatprep.subr.mxu0 0.0
        %5684 = vmatpush1.msra.mxu0 %v5639
        %5685 = vmatprep.subr.mxu0 0.0
        %5686 = vmatpush1.msra.mxu0 %v5638
        %5687 = vmatprep.subr.mxu0 0.0
        %5688 = vmatpush2.msra.mxu0 0.0
        %5689 = vmatprep.subr.mxu0 0.0
        %5690 = vmatpush2.msra.mxu0 0.0
        %5691 = vmatprep.subr.mxu0 0.0
        %5692 = vmatpush2.msra.mxu0 0.0
        %5693 = vmatprep.subr.mxu0 0.0
        %5694 = vmatpush2.msra.mxu0 0.0
        %5695 = vmatprep.subr.mxu0 0.0
        %5696 = vmatpush2.msra.mxu0 0.0
        %5697 = vmatprep.subr.mxu0 0.0
        %5698 = vmatpush2.msra.mxu0 0.0
        %5699 = vmatprep.subr.mxu0 0.0
        %5700 = vmatpush2.msra.mxu0 0.0
        %5701 = vmatprep.subr.mxu0 0.0
        %5702 = vmatpush2.msra.mxu0 0.0
        %5703 = vmatprep.subr.mxu0 0.0
        %5704 = vmatpush2.msra.mxu0 0.0
        %5705 = vmatprep.subr.mxu0 0.0
        %5706 = vmatpush2.msra.mxu0 0.0
        %5707 = vmatprep.subr.mxu0 0.0
        %5708 = vmatpush2.msra.mxu0 0.0
        %5709 = vmatprep.subr.mxu0 0.0
        %5710 = vmatpush2.msra.mxu0 0.0
        %5711 = vmatprep.subr.mxu0 0.0
        %5712 = vmatpush2.msra.mxu0 0.0
        %5713 = vmatprep.subr.mxu0 0.0
        %5714 = vmatpush2.msra.mxu0 0.0
        %5715 = vmatprep.subr.mxu0 0.0
        %5716 = vmatpush2.msra.mxu0 0.0
        %5717 = vmatprep.subr.mxu0 0.0
        %5718 = vmatpush2.msra.mxu0 0.0
        %5719 = vmatprep.mubr.f32.mxu0 0.0
        %5720 = vmatmul.mubr.f32.gmra.mxu0 %v5637
        %v5721 = vpop.f32.mrf.mxu0
        %v5722 = vadd.f32 %v5654, %v5721
        %v5723 = vpop.f32.mrf.mxu0
        %5724 = vdwg.mxu0
        %v5725 = vmax.f32 %v5722, 0.0
        %v5726 = vld [vmem:[%s20] sm:$0xff]
        %v5727 = vld [vmem:[%s20 + $0x8] sm:$0xff]
        %v5728 = vld [vmem:[%s20 + $0x10] sm:$0xff]
        %v5729 = vld [vmem:[%s20 + $0x18] sm:$0xff]
        %v5730 = vld [vmem:[%s20 + $0x20] sm:$0xff]
        %v5731 = vld [vmem:[%s20 + $0x28] sm:$0xff]
        %v5732 = vld [vmem:[%s20 + $0x30] sm:$0xff]
        %v5733 = vld [vmem:[%s20 + $0x38] sm:$0xff]
        %v5734 = vld [vmem:[%s20 + $0x40] sm:$0xff]
        %v5735 = vld [vmem:[%s20 + $0x48] sm:$0xff]
        %v5736 = vld [vmem:[%s20 + $0x50] sm:$0xff]
        %v5737 = vld [vmem:[%s20 + $0x58] sm:$0xff]
        %v5738 = vld [vmem:[%s20 + $0x60] sm:$0xff]
        %v5739 = vld [vmem:[%s20 + $0x68] sm:$0xff]
        %v5740 = vld [vmem:[%s20 + $0x70] sm:$0xff]
        %v5741 = vld [vmem:[%s20 + $0x78] sm:$0xff]
        %v5742 = vld [vmem:[%s21] sm:$0x1]
        %5743 = vmatprep.subr.mxu0 0.0
        %5744 = vmatpush1.msra.mxu0 %v5741
        %5745 = vmatprep.subr.mxu0 0.0
        %5746 = vmatpush1.msra.mxu0 %v5740
        %5747 = vmatprep.subr.mxu0 0.0
        %5748 = vmatpush1.msra.mxu0 %v5739
        %5749 = vmatprep.subr.mxu0 0.0
        %5750 = vmatpush1.msra.mxu0 %v5738
        %5751 = vmatprep.subr.mxu0 0.0
        %5752 = vmatpush1.msra.mxu0 %v5737
        %5753 = vmatprep.subr.mxu0 0.0
        %5754 = vmatpush1.msra.mxu0 %v5736
        %5755 = vmatprep.subr.mxu0 0.0
        %5756 = vmatpush1.msra.mxu0 %v5735
        %5757 = vmatprep.subr.mxu0 0.0
        %5758 = vmatpush1.msra.mxu0 %v5734
        %5759 = vmatprep.subr.mxu0 0.0
        %5760 = vmatpush1.msra.mxu0 %v5733
        %5761 = vmatprep.subr.mxu0 0.0
        %5762 = vmatpush1.msra.mxu0 %v5732
        %5763 = vmatprep.subr.mxu0 0.0
        %5764 = vmatpush1.msra.mxu0 %v5731
        %5765 = vmatprep.subr.mxu0 0.0
        %5766 = vmatpush1.msra.mxu0 %v5730
        %5767 = vmatprep.subr.mxu0 0.0
        %5768 = vmatpush1.msra.mxu0 %v5729
        %5769 = vmatprep.subr.mxu0 0.0
        %5770 = vmatpush1.msra.mxu0 %v5728
        %5771 = vmatprep.subr.mxu0 0.0
        %5772 = vmatpush1.msra.mxu0 %v5727
        %5773 = vmatprep.subr.mxu0 0.0
        %5774 = vmatpush1.msra.mxu0 %v5726
        %5775 = vmatprep.subr.mxu0 0.0
        %5776 = vmatpush2.msra.mxu0 0.0
        %5777 = vmatprep.subr.mxu0 0.0
        %5778 = vmatpush2.msra.mxu0 0.0
        %5779 = vmatprep.subr.mxu0 0.0
        %5780 = vmatpush2.msra.mxu0 0.0
        %5781 = vmatprep.subr.mxu0 0.0
        %5782 = vmatpush2.msra.mxu0 0.0
        %5783 = vmatprep.subr.mxu0 0.0
        %5784 = vmatpush2.msra.mxu0 0.0
        %5785 = vmatprep.subr.mxu0 0.0
        %5786 = vmatpush2.msra.mxu0 0.0
        %5787 = vmatprep.subr.mxu0 0.0
        %5788 = vmatpush2.msra.mxu0 0.0
        %5789 = vmatprep.subr.mxu0 0.0
        %5790 = vmatpush2.msra.mxu0 0.0
        %5791 = vmatprep.subr.mxu0 0.0
        %5792 = vmatpush2.msra.mxu0 0.0
        %5793 = vmatprep.subr.mxu0 0.0
        %5794 = vmatpush2.msra.mxu0 0.0
        %5795 = vmatprep.subr.mxu0 0.0
        %5796 = vmatpush2.msra.mxu0 0.0
        %5797 = vmatprep.subr.mxu0 0.0
        %5798 = vmatpush2.msra.mxu0 0.0
        %5799 = vmatprep.subr.mxu0 0.0
        %5800 = vmatpush2.msra.mxu0 0.0
        %5801 = vmatprep.subr.mxu0 0.0
        %5802 = vmatpush2.msra.mxu0 0.0
        %5803 = vmatprep.subr.mxu0 0.0
        %5804 = vmatpush2.msra.mxu0 0.0
        %5805 = vmatprep.subr.mxu0 0.0
        %5806 = vmatpush2.msra.mxu0 0.0
        %5807 = vmatprep.mubr.f32.mxu0 0.0
        %5808 = vmatmul.mubr.f32.gmra.mxu0 %v5725
        %v5809 = vpop.f32.mrf.mxu0
        %v5810 = vadd.f32 %v5742, %v5809
        %v5811 = vpop.f32.mrf.mxu0
        %5812 = vdwg.mxu0
        %vm5813 = vcmask 106496
        %5814 = vst.msk [vmem:[%s675] sm:$0x1] %vm5813, %v5810
        %s5815 = sand.u32 %s511, 1
        %s5816 = scalar_lea.sflag [#allocation13], %s5815
        %s5817 = sand.u32 %s511, 1
        %s5818 = scalar_lea.vmem [#allocation12], %s5817
        // Predicated region
        $region158: #{chestcnn_forward.1} parent=107 // pred_check
          %p5819 = pneg %p521
        $region159: #{chestcnn_forward.1} parent=107 // pred_check_branch
          %5821 = sbr.rel (%p5819) target = $region161
        $region160: #{chestcnn_forward.1} parent=107 // pred_region
          %s5823 = ssub.s32 16, 16
          %5824 = vsyncadd %s5816, %s5823
          %s5825 = smul.addr %s36, 16
          %s5826 = scalar_lea.hbm %s22, %s5825
          %s5828 = sshll.u32 %s5818, 4
          %s5829 = int_to_ptr.vmem [resolvable:$true] %s5828
          %5831 = dma.vmem_to_hbm [thread:$0]  %s5829, 16, %s5826, %s5816
        $region161: #{chestcnn_forward.1} parent=107 // pred_fallthru
          _
      $region108: #{chestcnn_forward.1} parent=5 // pred_fallthru
        _
      %p5832 = scmp.le.s32.totalorder 2, %s31
      // Predicated region
      $region162: #{chestcnn_forward.1} parent=5 // pred_check
        %p5833 = pneg %p5832
      $region163: #{chestcnn_forward.1} parent=5 // pred_check_branch
        %5835 = sbr.rel (%p5833) target = $region165
      $region164: #{chestcnn_forward.1} parent=5 // pred_region
        %s5836 = ssub.s32 %s31, 2
        // Predicated region
        $region166: #{chestcnn_forward.1} parent=164 // pred_check
          %p5837 = pneg %p527
        $region167: #{chestcnn_forward.1} parent=164 // pred_check_branch
          %5839 = sbr.rel (%p5837) target = $region169
        $region168: #{chestcnn_forward.1} parent=164 // pred_region
          %s5840 = sand.u32 %s512, 1
          %s5841 = scalar_lea.sflag [#allocation13], %s5840
          %s5842 = sand.u32 %s512, 1
          %s5843 = scalar_lea.vmem [#allocation12], %s5842
          %5844 = dma.done %s5841, 16
        $region169: #{chestcnn_forward.1} parent=164 // pred_fallthru
          _
      $region165: #{chestcnn_forward.1} parent=5 // pred_fallthru
        _
    $region6: #{chestcnn_forward.1} parent=1 // loop_footer
      %s35 = sadd.s32 1, %s31
    $region7: #{chestcnn_forward.1} parent=1 // loop_footer_branch
      %30 = sbr.rel target = $region3
    $region8: #{chestcnn_forward.1} parent=1 // loop_exit
      _
    %5845 = vsyncpa [#allocation13], 1
    %s5846 = scalar_lea.sflag [#allocation13], 1
    %5847 = vsyncpa %s5846, 1

</llo_original>
